<compile_context>
chip_gen: v7x
topology: tpu7x:2x2x1
jax: 0.10.0
libtpu: 0.0.40
codegen_flags: <defaults>
</compile_context>

<pallas_src>
import math

import jax
import jax.numpy as jnp
from jax import lax
from jax.experimental import pallas as pl
from jax.experimental.pallas import tpu as pltpu

# ---- hyper-parameters (forced by the reference forward, see header) ----
L = 37                        # sequence length
C_IN = 1                      # value channels
NUM_KERNELS = 74              # TokenEmbedding default
KH, KW = 8, 3                 # TokenEmbedding default kernel_size
N_OUT = C_IN * (NUM_KERNELS - 1) + 1        # 74 per-(channel,kernel) conv outputs
H_OUT = 3 * L + 1                           # 112 rows of each conv output
D_MODEL = (H_OUT * N_OUT) // L              # 224 (reshape constraint)
assert H_OUT * N_OUT == L * D_MODEL and D_MODEL % 2 == 0

# value[l, d] = sum_j padded[3l + (2l+d)//N_OUT + j] * k_mid[(2l+d)%N_OUT, j]
#            = sum_s padded[3l + s] * W[s, l, d]   with an 11-wide window per row.
S_WIN = KH + (2 * (L - 1) + (D_MODEL - 1)) // N_OUT     # 11
PAD_LEN = KW * L + 2 * (KH // 2)                        # 119
assert 3 * (L - 1) + S_WIN <= PAD_LEN

HOUR, WEEKDAY, DAY, MONTH = 24, 7, 32, 13
TBL = HOUR + WEEKDAY + DAY + MONTH          # 76 rows of the fused temporal table

B_BLK = 8                                   # sequences per grid step
RB = B_BLK * L                              # 296 rows per block (multiple of 8)


# ---------------------------------------------------------------------------
# Fused Pallas kernel: B_BLK sequences (RB rows) per grid step, single store
# ---------------------------------------------------------------------------
def _fused_kernel(e_ref, w_ref, pe_ref, idx_ref, tbl_ref, o_ref):
    # --- TokenEmbedding (value): S_WIN unrolled broadcast-FMAs on the VPU.
    #     The conv2d + stack(-1) + reshape of the reference is pre-folded into w_ref.
    acc = pe_ref[...]                                     # start from PositionalEmbedding
    for s in range(S_WIN):                                # static unroll, tiny
        acc = acc + e_ref[:, s:s + 1] * w_ref[s]          # (RB,1) * (RB,D_MODEL)

    # --- TemporalEmbedding: 4 fixed-table lookups fused as one-hot-sum @ table (MXU).
    idx = idx_ref[...]                                    # (RB, 4) offsets into fused table
    j = lax.broadcasted_iota(jnp.int32, (RB, TBL), 1)
    mh = jnp.zeros((RB, TBL), jnp.float32)
    for f in range(4):
        mh = mh + (idx[:, f:f + 1] == j).astype(jnp.float32)
    acc = acc + jnp.dot(mh, tbl_ref[...], preferred_element_type=jnp.float32)

    o_ref[...] = acc                                      # Dropout(p=0.1): identity (eval)


# ---------------------------------------------------------------------------
# Parameter construction (PositionalEmbedding / FixedEmbedding tables, folded conv weights)
# ---------------------------------------------------------------------------
def _sinusoid_table(n_pos, d_model):
    position = jnp.arange(n_pos, dtype=jnp.float32)[:, None]
    div_term = jnp.exp(jnp.arange(0, d_model, 2, dtype=jnp.float32)
                       * -(math.log(10000.0) / d_model))
    tbl = jnp.zeros((n_pos, d_model), jnp.float32)
    tbl = tbl.at[:, 0::2].set(jnp.sin(position * div_term))
    tbl = tbl.at[:, 1::2].set(jnp.cos(position * div_term))
    return tbl


def _value_weights(kernels):
    """Fold TokenEmbedding's conv2d + stack(-1) + reshape into W[s, l, d] such that
       value[l, d] = sum_s padded[3l + s] * W[s, l, d]  (padded = H-zero-padded data)."""
    k_mid = kernels[:, :, KW // 2]          # (N_OUT, KH): only the middle kernel column
                                            # survives the W-direction zero padding (W == 1)
    lpos = jnp.arange(L)[None, :, None]
    s = jnp.arange(S_WIN)[:, None, None]
    d = jnp.arange(D_MODEL)[None, None, :]
    m = 2 * lpos + d                        # flat offset inside row l's 4-row band
    q, n = m // N_OUT, m % N_OUT
    j = s - q
    valid = (j >= 0) & (j < KH)
    return jnp.where(valid, k_mid[n, jnp.clip(j, 0, KH - 1)], 0.0).astype(jnp.float32)


def make_params(key):
    kernels = jax.random.normal(key, (NUM_KERNELS, KH, KW), jnp.float32)  # nn.Parameter(randn)
    value_w = _value_weights(kernels)                                     # (S_WIN, L, D_MODEL)
    pe = _sinusoid_table(L, D_MODEL)                                      # PositionalEmbedding[:L]
    tbl = jnp.concatenate([_sinusoid_table(HOUR, D_MODEL),
                           _sinusoid_table(WEEKDAY, D_MODEL),
                           _sinusoid_table(DAY, D_MODEL),
                           _sinusoid_table(MONTH, D_MODEL)], axis=0)      # fused FixedEmbeddings
    return kernels, value_w, pe, tbl


# ---------------------------------------------------------------------------
# Wrapper: ONE pallas_call, grid over row blocks of B_BLK sequences
# ---------------------------------------------------------------------------
@jax.jit
def data_embedding(x, x_mark, value_w, pe, tbl):
    nb = x.shape[0]
    nb_pad = ((nb + B_BLK - 1) // B_BLK) * B_BLK          # pad batch to a multiple of B_BLK

    # TokenEmbedding's "input_vectors" construction + conv H-padding (pure layout, in XLA):
    data = x[:, :, 0, 0]                                                  # (NB, L)
    t_idx = jnp.minimum(jnp.arange(L)[:, None] + jnp.arange(KW)[None, :], L - 1)
    data_h = data[:, t_idx].reshape(nb, KW * L)                           # (NB, 3L)
    padded = jnp.pad(data_h, ((0, 0), (KH // 2, KH // 2)))                # (NB, 119)
    win = 3 * jnp.arange(L)[:, None] + jnp.arange(S_WIN)[None, :]         # (L, S_WIN)
    e = padded[:, win]                                                    # (NB, L, S_WIN)

    # Temporal indices -> offsets into the fused sin/cos table.
    # x_mark columns are [month, day, weekday, hour] (TemporalEmbedding.forward indexing).
    xm = x_mark.astype(jnp.int32)
    idx_off = jnp.stack([xm[..., 3],                                  # hour    -> [0, 24)
                         xm[..., 2] + HOUR,                           # weekday -> [24, 31)
                         xm[..., 1] + HOUR + WEEKDAY,                 # day     -> [31, 63)
                         xm[..., 0] + HOUR + WEEKDAY + DAY],          # month   -> [63, 76)
                        axis=-1)                                      # (NB, L, 4)

    # Flatten batch to rows (B_BLK sequences per grid step -> sublane-aligned RB=296 rows).
    pad_b = nb_pad - nb
    e_rows = jnp.pad(e, ((0, pad_b), (0, 0), (0, 0))).reshape(nb_pad * L, S_WIN)
    idx_rows = jnp.pad(idx_off, ((0, pad_b), (0, 0), (0, 0))).reshape(nb_pad * L, 4)

    # Replicate the per-position constants across the B_BLK sequences of a block.
    w_tiled = jnp.tile(value_w, (1, B_BLK, 1))                            # (S_WIN, RB, D_MODEL)
    pe_tiled = jnp.tile(pe, (B_BLK, 1))                                   # (RB, D_MODEL)

    out_rows = pl.pallas_call(
        _fused_kernel,
        out_shape=jax.ShapeDtypeStruct((nb_pad * L, D_MODEL), jnp.float32),
        grid=(nb_pad // B_BLK,),
        in_specs=[
            pl.BlockSpec((RB, S_WIN), lambda r: (r, 0)),                  # per-block window
            pl.BlockSpec((S_WIN, RB, D_MODEL), lambda r: (0, 0, 0)),      # constant: DMA'd once
            pl.BlockSpec((RB, D_MODEL), lambda r: (0, 0)),                # constant
            pl.BlockSpec((RB, 4), lambda r: (r, 0)),                      # per-block indices
            pl.BlockSpec((TBL, D_MODEL), lambda r: (0, 0)),               # constant
        ],
        out_specs=pl.BlockSpec((RB, D_MODEL), lambda r: (r, 0)),
        compiler_params=pltpu.CompilerParams(dimension_semantics=("parallel",)),
    )(e_rows, w_tiled, pe_tiled, idx_rows, tbl)

    # Dropout(p=0.1): identity (inference semantics).
    # TODO(synk): training-mode dropout uses torch RNG; not reproduced.
    return out_rows.reshape(nb_pad, L, D_MODEL)[:nb]


# ---------------------------------------------------------------------------
# Non-circular pure-JAX reference (real 2-D convolution, literal torch index logic)
# ---------------------------------------------------------------------------
def reference(x, x_mark, kernels, pe, tbl):
    nb = x.shape[0]
    # TokenEmbedding, literal port (c_in=1, so the 'random_channel' pick is channel 0):
    gather = []
    for t in range(L):                                  # exact torch index construction
        idxs = [t + i for i in range(KW) if t + i < L]
        idxs += [L - 1] * (KW - len(idxs))
        gather.extend(idxs)
    inp = x[:, :, 0, 0][:, jnp.array(gather, dtype=jnp.int32)]            # (NB, 3L)
    conv = lax.conv_general_dilated(
        inp[:, None, :, None],                          # NCHW: (NB, 1, 3L, 1)
        kernels[:, None, :, :],                         # OIHW: (74, 1, 8, 3)
        window_strides=(1, 1),
        padding=((KH // 2, KH // 2), (KW // 2, KW // 2)),
        dimension_numbers=('NCHW', 'OIHW', 'NCHW'),
        precision=lax.Precision.HIGHEST)                # (NB, 74, 3L+1, 1)
    value = jnp.transpose(conv[..., 0], (0, 2, 1)).reshape(nb, L, D_MODEL)

    xm = x_mark.astype(jnp.int32)
    hour_t, wd_t, day_t, mo_t = jnp.split(
        tbl, [HOUR, HOUR + WEEKDAY, HOUR + WEEKDAY + DAY], axis=0)
    temporal = hour_t[xm[..., 3]] + wd_t[xm[..., 2]] + day_t[xm[..., 1]] + mo_t[xm[..., 0]]
    return value + pe[None] + temporal                  # dropout = identity


if __name__ == "__main__":
    key = jax.random.PRNGKey(0)
    k_param, k_x, k_mark = jax.random.split(key, 3)
    kernels, value_w, pe, tbl = make_params(k_param)

    NB = 4                                              # independent B=1 sequences per call
    x = jax.random.normal(k_x, (NB, L, C_IN, 1), jnp.float32)
    km = jax.random.split(k_mark, 4)
    x_mark = jnp.stack([
        jax.random.randint(km[0], (NB, L), 0, MONTH),   # month
        jax.random.randint(km[1], (NB, L), 0, DAY),     # day
        jax.random.randint(km[2], (NB, L), 0, WEEKDAY), # weekday
        jax.random.randint(km[3], (NB, L), 0, HOUR),    # hour
    ], axis=-1).astype(jnp.int32)                       # (NB, L, 4)

    out = jax.block_until_ready(data_embedding(x, x_mark, value_w, pe, tbl))
    ref = reference(x, x_mark, kernels, pe, tbl)
    assert out.shape == (NB, L, D_MODEL)
    err = float(jnp.max(jnp.abs(out - ref)))
    assert jnp.allclose(out, ref, rtol=2e-2, atol=5e-2), err
    print("KERNEL_OK")
</pallas_src>

<mosaic_0001>
module attributes {stable_mosaic.version = 11 : i64} {
  func.func @_fused_kernel(%arg0: i32, %arg1: memref<296x11xf32, #tpu.memory_space<vmem>>, %arg2: memref<11x296x224xf32, #tpu.memory_space<vmem>>, %arg3: memref<296x224xf32, #tpu.memory_space<vmem>>, %arg4: memref<296x4xi32, #tpu.memory_space<vmem>>, %arg5: memref<76x224xf32, #tpu.memory_space<vmem>>, %arg6: memref<296x224xf32, #tpu.memory_space<vmem>>) attributes {dimension_semantics = [#tpu.dimension_semantics<parallel>], iteration_bounds = array<i64: 1>, scalar_prefetch = 0 : i64, scratch_operands = 0 : i64, tpu.core_type = #tpu.core_type<tc>, window_params = [{transform_indices = @transform_0, window_bounds = array<i64: 296, 11>}, {pipeline_mode = #tpu.pipeline_mode<synchronous>, transform_indices = @transform_1, window_bounds = array<i64: 11, 296, 224>}, {pipeline_mode = #tpu.pipeline_mode<synchronous>, transform_indices = @transform_2, window_bounds = array<i64: 296, 224>}, {transform_indices = @transform_3, window_bounds = array<i64: 296, 4>}, {pipeline_mode = #tpu.pipeline_mode<synchronous>, transform_indices = @transform_4, window_bounds = array<i64: 76, 224>}, {transform_indices = @transform_5, window_bounds = array<i64: 296, 224>}]} {
    %c0 = arith.constant 0 : index
    %c0_0 = arith.constant 0 : index
    %0 = vector.load %arg3[%c0, %c0_0] : memref<296x224xf32, #tpu.memory_space<vmem>>, vector<296x224xf32>
    %c0_1 = arith.constant 0 : index
    %c0_2 = arith.constant 0 : index
    %1 = vector.load %arg1[%c0_1, %c0_2] : memref<296x11xf32, #tpu.memory_space<vmem>>, vector<296x1xf32>
    %c0_3 = arith.constant 0 : index
    %c0_4 = arith.constant 0 : index
    %c0_5 = arith.constant 0 : index
    %2 = vector.load %arg2[%c0_3, %c0_4, %c0_5] : memref<11x296x224xf32, #tpu.memory_space<vmem>>, vector<1x296x224xf32>
    %3 = vector.shape_cast %2 : vector<1x296x224xf32> to vector<296x224xf32>
    %4 = vector.broadcast %1 : vector<296x1xf32> to vector<296x224xf32>
    %5 = arith.mulf %4, %3 : vector<296x224xf32>
    %6 = arith.addf %0, %5 : vector<296x224xf32>
    %c0_6 = arith.constant 0 : index
    %c1 = arith.constant 1 : index
    %7 = vector.load %arg1[%c0_6, %c1] : memref<296x11xf32, #tpu.memory_space<vmem>>, vector<296x1xf32>
    %c1_7 = arith.constant 1 : index
    %c0_8 = arith.constant 0 : index
    %c0_9 = arith.constant 0 : index
    %8 = vector.load %arg2[%c1_7, %c0_8, %c0_9] : memref<11x296x224xf32, #tpu.memory_space<vmem>>, vector<1x296x224xf32>
    %9 = vector.shape_cast %8 : vector<1x296x224xf32> to vector<296x224xf32>
    %10 = vector.broadcast %7 : vector<296x1xf32> to vector<296x224xf32>
    %11 = arith.mulf %10, %9 : vector<296x224xf32>
    %12 = arith.addf %6, %11 : vector<296x224xf32>
    %c0_10 = arith.constant 0 : index
    %c2 = arith.constant 2 : index
    %13 = vector.load %arg1[%c0_10, %c2] : memref<296x11xf32, #tpu.memory_space<vmem>>, vector<296x1xf32>
    %c2_11 = arith.constant 2 : index
    %c0_12 = arith.constant 0 : index
    %c0_13 = arith.constant 0 : index
    %14 = vector.load %arg2[%c2_11, %c0_12, %c0_13] : memref<11x296x224xf32, #tpu.memory_space<vmem>>, vector<1x296x224xf32>
    %15 = vector.shape_cast %14 : vector<1x296x224xf32> to vector<296x224xf32>
    %16 = vector.broadcast %13 : vector<296x1xf32> to vector<296x224xf32>
    %17 = arith.mulf %16, %15 : vector<296x224xf32>
    %18 = arith.addf %12, %17 : vector<296x224xf32>
    %c0_14 = arith.constant 0 : index
    %c3 = arith.constant 3 : index
    %19 = vector.load %arg1[%c0_14, %c3] : memref<296x11xf32, #tpu.memory_space<vmem>>, vector<296x1xf32>
    %c3_15 = arith.constant 3 : index
    %c0_16 = arith.constant 0 : index
    %c0_17 = arith.constant 0 : index
    %20 = vector.load %arg2[%c3_15, %c0_16, %c0_17] : memref<11x296x224xf32, #tpu.memory_space<vmem>>, vector<1x296x224xf32>
    %21 = vector.shape_cast %20 : vector<1x296x224xf32> to vector<296x224xf32>
    %22 = vector.broadcast %19 : vector<296x1xf32> to vector<296x224xf32>
    %23 = arith.mulf %22, %21 : vector<296x224xf32>
    %24 = arith.addf %18, %23 : vector<296x224xf32>
    %c0_18 = arith.constant 0 : index
    %c4 = arith.constant 4 : index
    %25 = vector.load %arg1[%c0_18, %c4] : memref<296x11xf32, #tpu.memory_space<vmem>>, vector<296x1xf32>
    %c4_19 = arith.constant 4 : index
    %c0_20 = arith.constant 0 : index
    %c0_21 = arith.constant 0 : index
    %26 = vector.load %arg2[%c4_19, %c0_20, %c0_21] : memref<11x296x224xf32, #tpu.memory_space<vmem>>, vector<1x296x224xf32>
    %27 = vector.shape_cast %26 : vector<1x296x224xf32> to vector<296x224xf32>
    %28 = vector.broadcast %25 : vector<296x1xf32> to vector<296x224xf32>
    %29 = arith.mulf %28, %27 : vector<296x224xf32>
    %30 = arith.addf %24, %29 : vector<296x224xf32>
    %c0_22 = arith.constant 0 : index
    %c5 = arith.constant 5 : index
    %31 = vector.load %arg1[%c0_22, %c5] : memref<296x11xf32, #tpu.memory_space<vmem>>, vector<296x1xf32>
    %c5_23 = arith.constant 5 : index
    %c0_24 = arith.constant 0 : index
    %c0_25 = arith.constant 0 : index
    %32 = vector.load %arg2[%c5_23, %c0_24, %c0_25] : memref<11x296x224xf32, #tpu.memory_space<vmem>>, vector<1x296x224xf32>
    %33 = vector.shape_cast %32 : vector<1x296x224xf32> to vector<296x224xf32>
    %34 = vector.broadcast %31 : vector<296x1xf32> to vector<296x224xf32>
    %35 = arith.mulf %34, %33 : vector<296x224xf32>
    %36 = arith.addf %30, %35 : vector<296x224xf32>
    %c0_26 = arith.constant 0 : index
    %c6 = arith.constant 6 : index
    %37 = vector.load %arg1[%c0_26, %c6] : memref<296x11xf32, #tpu.memory_space<vmem>>, vector<296x1xf32>
    %c6_27 = arith.constant 6 : index
    %c0_28 = arith.constant 0 : index
    %c0_29 = arith.constant 0 : index
    %38 = vector.load %arg2[%c6_27, %c0_28, %c0_29] : memref<11x296x224xf32, #tpu.memory_space<vmem>>, vector<1x296x224xf32>
    %39 = vector.shape_cast %38 : vector<1x296x224xf32> to vector<296x224xf32>
    %40 = vector.broadcast %37 : vector<296x1xf32> to vector<296x224xf32>
    %41 = arith.mulf %40, %39 : vector<296x224xf32>
    %42 = arith.addf %36, %41 : vector<296x224xf32>
    %c0_30 = arith.constant 0 : index
    %c7 = arith.constant 7 : index
    %43 = vector.load %arg1[%c0_30, %c7] : memref<296x11xf32, #tpu.memory_space<vmem>>, vector<296x1xf32>
    %c7_31 = arith.constant 7 : index
    %c0_32 = arith.constant 0 : index
    %c0_33 = arith.constant 0 : index
    %44 = vector.load %arg2[%c7_31, %c0_32, %c0_33] : memref<11x296x224xf32, #tpu.memory_space<vmem>>, vector<1x296x224xf32>
    %45 = vector.shape_cast %44 : vector<1x296x224xf32> to vector<296x224xf32>
    %46 = vector.broadcast %43 : vector<296x1xf32> to vector<296x224xf32>
    %47 = arith.mulf %46, %45 : vector<296x224xf32>
    %48 = arith.addf %42, %47 : vector<296x224xf32>
    %c0_34 = arith.constant 0 : index
    %c8 = arith.constant 8 : index
    %49 = vector.load %arg1[%c0_34, %c8] : memref<296x11xf32, #tpu.memory_space<vmem>>, vector<296x1xf32>
    %c8_35 = arith.constant 8 : index
    %c0_36 = arith.constant 0 : index
    %c0_37 = arith.constant 0 : index
    %50 = vector.load %arg2[%c8_35, %c0_36, %c0_37] : memref<11x296x224xf32, #tpu.memory_space<vmem>>, vector<1x296x224xf32>
    %51 = vector.shape_cast %50 : vector<1x296x224xf32> to vector<296x224xf32>
    %52 = vector.broadcast %49 : vector<296x1xf32> to vector<296x224xf32>
    %53 = arith.mulf %52, %51 : vector<296x224xf32>
    %54 = arith.addf %48, %53 : vector<296x224xf32>
    %c0_38 = arith.constant 0 : index
    %c9 = arith.constant 9 : index
    %55 = vector.load %arg1[%c0_38, %c9] : memref<296x11xf32, #tpu.memory_space<vmem>>, vector<296x1xf32>
    %c9_39 = arith.constant 9 : index
    %c0_40 = arith.constant 0 : index
    %c0_41 = arith.constant 0 : index
    %56 = vector.load %arg2[%c9_39, %c0_40, %c0_41] : memref<11x296x224xf32, #tpu.memory_space<vmem>>, vector<1x296x224xf32>
    %57 = vector.shape_cast %56 : vector<1x296x224xf32> to vector<296x224xf32>
    %58 = vector.broadcast %55 : vector<296x1xf32> to vector<296x224xf32>
    %59 = arith.mulf %58, %57 : vector<296x224xf32>
    %60 = arith.addf %54, %59 : vector<296x224xf32>
    %c0_42 = arith.constant 0 : index
    %c10 = arith.constant 10 : index
    %61 = vector.load %arg1[%c0_42, %c10] : memref<296x11xf32, #tpu.memory_space<vmem>>, vector<296x1xf32>
    %c10_43 = arith.constant 10 : index
    %c0_44 = arith.constant 0 : index
    %c0_45 = arith.constant 0 : index
    %62 = vector.load %arg2[%c10_43, %c0_44, %c0_45] : memref<11x296x224xf32, #tpu.memory_space<vmem>>, vector<1x296x224xf32>
    %63 = vector.shape_cast %62 : vector<1x296x224xf32> to vector<296x224xf32>
    %64 = vector.broadcast %61 : vector<296x1xf32> to vector<296x224xf32>
    %65 = arith.mulf %64, %63 : vector<296x224xf32>
    %66 = arith.addf %60, %65 : vector<296x224xf32>
    %c0_46 = arith.constant 0 : index
    %c0_47 = arith.constant 0 : index
    %67 = vector.load %arg4[%c0_46, %c0_47] : memref<296x4xi32, #tpu.memory_space<vmem>>, vector<296x4xi32>
    %68 = tpu.iota {dimensions = array<i32: 1>} : vector<296x76xi32>
    %cst = arith.constant 0.000000e+00 : f32
    %69 = vector.broadcast %cst : f32 to vector<296x76xf32>
    %70 = vector.extract_strided_slice %67 {offsets = [0, 0], sizes = [296, 1], strides = [1, 1]} : vector<296x4xi32> to vector<296x1xi32>
    %71 = vector.broadcast %70 : vector<296x1xi32> to vector<296x76xi32>
    %72 = arith.cmpi eq, %71, %68 : vector<296x76xi32>
    %73 = arith.extui %72 : vector<296x76xi1> to vector<296x76xi32>
    %74 = arith.sitofp %73 : vector<296x76xi32> to vector<296x76xf32>
    %75 = arith.addf %69, %74 : vector<296x76xf32>
    %76 = vector.extract_strided_slice %67 {offsets = [0, 1], sizes = [296, 1], strides = [1, 1]} : vector<296x4xi32> to vector<296x1xi32>
    %77 = vector.broadcast %76 : vector<296x1xi32> to vector<296x76xi32>
    %78 = arith.cmpi eq, %77, %68 : vector<296x76xi32>
    %79 = arith.extui %78 : vector<296x76xi1> to vector<296x76xi32>
    %80 = arith.sitofp %79 : vector<296x76xi32> to vector<296x76xf32>
    %81 = arith.addf %75, %80 : vector<296x76xf32>
    %82 = vector.extract_strided_slice %67 {offsets = [0, 2], sizes = [296, 1], strides = [1, 1]} : vector<296x4xi32> to vector<296x1xi32>
    %83 = vector.broadcast %82 : vector<296x1xi32> to vector<296x76xi32>
    %84 = arith.cmpi eq, %83, %68 : vector<296x76xi32>
    %85 = arith.extui %84 : vector<296x76xi1> to vector<296x76xi32>
    %86 = arith.sitofp %85 : vector<296x76xi32> to vector<296x76xf32>
    %87 = arith.addf %81, %86 : vector<296x76xf32>
    %88 = vector.extract_strided_slice %67 {offsets = [0, 3], sizes = [296, 1], strides = [1, 1]} : vector<296x4xi32> to vector<296x1xi32>
    %89 = vector.broadcast %88 : vector<296x1xi32> to vector<296x76xi32>
    %90 = arith.cmpi eq, %89, %68 : vector<296x76xi32>
    %91 = arith.extui %90 : vector<296x76xi1> to vector<296x76xi32>
    %92 = arith.sitofp %91 : vector<296x76xi32> to vector<296x76xf32>
    %93 = arith.addf %87, %92 : vector<296x76xf32>
    %c0_48 = arith.constant 0 : index
    %c0_49 = arith.constant 0 : index
    %94 = vector.load %arg5[%c0_48, %c0_49] : memref<76x224xf32, #tpu.memory_space<vmem>>, vector<76x224xf32>
    %cst_50 = arith.constant dense<0.000000e+00> : vector<296x224xf32>
    %95 = tpu.matmul %93, %94, %cst_50 {dimension_numbers = #tpu.dot_dimension_numbers<[1], [0], [0], [1], [0, 0, 1, 1], [], []>} : vector<296x76xf32>, vector<76x224xf32>, vector<296x224xf32> -> vector<296x224xf32>
    %96 = arith.addf %66, %95 : vector<296x224xf32>
    %c0_51 = arith.constant 0 : index
    %c0_52 = arith.constant 0 : index
    %97 = vector.load %arg6[%c0_51, %c0_52] : memref<296x224xf32, #tpu.memory_space<vmem>>, vector<296x224xf32>
    tpu.vector_store %arg6[%c0_51, %c0_52], %96 {strides = array<i32>} : memref<296x224xf32, #tpu.memory_space<vmem>>, vector<296x224xf32>,
    return
  }
  func.func @transform_0(%arg0: i32) -> (i32, i32) {
    %c0_i32 = arith.constant 0 : i32
    %c0_i32_0 = arith.constant 0 : i32
    return %arg0, %c0_i32 : i32, i32
  }
  func.func @transform_1(%arg0: i32) -> (i32, i32, i32) {
    %c0_i32 = arith.constant 0 : i32
    %c0_i32_0 = arith.constant 0 : i32
    %c0_i32_1 = arith.constant 0 : i32
    %c0_i32_2 = arith.constant 0 : i32
    return %c0_i32, %c0_i32_0, %c0_i32_1 : i32, i32, i32
  }
  func.func @transform_2(%arg0: i32) -> (i32, i32) {
    %c0_i32 = arith.constant 0 : i32
    %c0_i32_0 = arith.constant 0 : i32
    %c0_i32_1 = arith.constant 0 : i32
    return %c0_i32, %c0_i32_0 : i32, i32
  }
  func.func @transform_3(%arg0: i32) -> (i32, i32) {
    %c0_i32 = arith.constant 0 : i32
    %c0_i32_0 = arith.constant 0 : i32
    return %arg0, %c0_i32 : i32, i32
  }
  func.func @transform_4(%arg0: i32) -> (i32, i32) {
    %c0_i32 = arith.constant 0 : i32
    %c0_i32_0 = arith.constant 0 : i32
    %c0_i32_1 = arith.constant 0 : i32
    return %c0_i32, %c0_i32_0 : i32, i32
  }
  func.func @transform_5(%arg0: i32) -> (i32, i32) {
    %c0_i32 = arith.constant 0 : i32
    %c0_i32_0 = arith.constant 0 : i32
    return %arg0, %c0_i32 : i32, i32
  }
}

</mosaic_0001>

<llo_original>
// kernel: tile.14
$region0: #{tile.14}
  %s0 = inlined_call_operand.vmem [shape: f32[11,8,37,224], index: 0, kind: input, shape index: {}]
  %s1 = inlined_call_operand.vmem [shape: f32[11,296,224], index: 1, kind: output, shape index: {}]
  %s2 = scalar_lea.vmem %s0, 8
  %v3 = vld [vmem:[%s2] sm:$0xff]
  %vm4 = vcmask 785408
  %s5 = scalar_lea.vmem %s1, 8
  %6 = vst.msk [vmem:[%s5] sm:$0xff] %vm4, %v3
  %s7 = scalar_lea.vmem %s0, 24
  %v8 = vld [vmem:[%s7] sm:$0xff]
  %vm9 = vcmask 785408
  %s10 = scalar_lea.vmem %s1, 24
  %11 = vst.msk [vmem:[%s10] sm:$0xff] %vm9, %v8
  %s12 = scalar_lea.vmem %s0, 40
  %v13 = vld [vmem:[%s12] sm:$0xff]
  %vm14 = vcmask 785408
  %s15 = scalar_lea.vmem %s1, 40
  %16 = vst.msk [vmem:[%s15] sm:$0xff] %vm14, %v13
  %s17 = scalar_lea.vmem %s0, 56
  %v18 = vld [vmem:[%s17] sm:$0xff]
  %vm19 = vcmask 785408
  %s20 = scalar_lea.vmem %s1, 56
  %21 = vst.msk [vmem:[%s20] sm:$0xff] %vm19, %v18
  %s22 = scalar_lea.vmem %s0, 72
  %v23 = vld [vmem:[%s22] sm:$0x1f]
  %vm24 = vcmask 785408
  %s25 = scalar_lea.vmem %s1, 72
  %26 = vst.msk [vmem:[%s25] sm:$0x1f] %vm24, %v23
  %s27 = scalar_lea.vmem %s0, 88
  %v28 = vld [vmem:[%s27] sm:$0xff]
  %vm29 = vcmask 785408
  %s30 = scalar_lea.vmem %s1, 77
  %31 = vst.msk [vmem:[%s30] sm:$0x7] %vm29, %v28
  %s32 = scalar_lea.vmem %s1, 85
  %33 = vst.msk [vmem:[%s32] sm:$0xf8] %vm29, %v28
  %s34 = scalar_lea.vmem %s0, 104
  %v35 = vld [vmem:[%s34] sm:$0xff]
  %vm36 = vcmask 785408
  %s37 = scalar_lea.vmem %s1, 93
  %38 = vst.msk [vmem:[%s37] sm:$0x7] %vm36, %v35
  %s39 = scalar_lea.vmem %s1, 101
  %40 = vst.msk [vmem:[%s39] sm:$0xf8] %vm36, %v35
  %s41 = scalar_lea.vmem %s0, 120
  %v42 = vld [vmem:[%s41] sm:$0xff]
  %vm43 = vcmask 785408
  %s44 = scalar_lea.vmem %s1, 109
  %45 = vst.msk [vmem:[%s44] sm:$0x7] %vm43, %v42
  %s46 = scalar_lea.vmem %s1, 117
  %47 = vst.msk [vmem:[%s46] sm:$0xf8] %vm43, %v42
  %s48 = scalar_lea.vmem %s0, 136
  %v49 = vld [vmem:[%s48] sm:$0xff]
  %vm50 = vcmask 785408
  %s51 = scalar_lea.vmem %s1, 125
  %52 = vst.msk [vmem:[%s51] sm:$0x7] %vm50, %v49
  %s53 = scalar_lea.vmem %s1, 133
  %54 = vst.msk [vmem:[%s53] sm:$0xf8] %vm50, %v49
  %s55 = scalar_lea.vmem %s0, 152
  %v56 = vld [vmem:[%s55] sm:$0x1f]
  %vm57 = vcmask 785408
  %s58 = scalar_lea.vmem %s1, 141
  %59 = vst.msk [vmem:[%s58] sm:$0x7] %vm57, %v56
  %s60 = scalar_lea.vmem %s1, 149
  %61 = vst.msk [vmem:[%s60] sm:$0x18] %vm57, %v56
  %s62 = scalar_lea.vmem %s0, 168
  %v63 = vld [vmem:[%s62] sm:$0xff]
  %vm64 = vcmask 785408
  %s65 = scalar_lea.vmem %s1, 154
  %66 = vst.msk [vmem:[%s65] sm:$0x3f] %vm64, %v63
  %s67 = scalar_lea.vmem %s1, 162
  %68 = vst.msk [vmem:[%s67] sm:$0xc0] %vm64, %v63
  %s69 = scalar_lea.vmem %s0, 184
  %v70 = vld [vmem:[%s69] sm:$0xff]
  %vm71 = vcmask 785408
  %s72 = scalar_lea.vmem %s1, 170
  %73 = vst.msk [vmem:[%s72] sm:$0x3f] %vm71, %v70
  %s74 = scalar_lea.vmem %s1, 178
  %75 = vst.msk [vmem:[%s74] sm:$0xc0] %vm71, %v70
  %s76 = scalar_lea.vmem %s0, 200
  %v77 = vld [vmem:[%s76] sm:$0xff]
  %vm78 = vcmask 785408
  %s79 = scalar_lea.vmem %s1, 186
  %80 = vst.msk [vmem:[%s79] sm:$0x3f] %vm78, %v77
  %s81 = scalar_lea.vmem %s1, 194
  %82 = vst.msk [vmem:[%s81] sm:$0xc0] %vm78, %v77
  %s83 = scalar_lea.vmem %s0, 216
  %v84 = vld [vmem:[%s83] sm:$0xff]
  %vm85 = vcmask 785408
  %s86 = scalar_lea.vmem %s1, 202
  %87 = vst.msk [vmem:[%s86] sm:$0x3f] %vm85, %v84
  %s88 = scalar_lea.vmem %s1, 210
  %89 = vst.msk [vmem:[%s88] sm:$0xc0] %vm85, %v84
  %s90 = scalar_lea.vmem %s0, 232
  %v91 = vld [vmem:[%s90] sm:$0x1f]
  %vm92 = vcmask 785408
  %s93 = scalar_lea.vmem %s1, 218
  %94 = vst.msk [vmem:[%s93] sm:$0x1f] %vm92, %v91
  %s95 = scalar_lea.vmem %s0, 248
  %v96 = vld [vmem:[%s95] sm:$0xff]
  %vm97 = vcmask 785408
  %s98 = scalar_lea.vmem %s1, 223
  %99 = vst.msk [vmem:[%s98] ss:$9 sm:$0x3] %vm97, %v96
  %s100 = scalar_lea.vmem %s1, 231
  %101 = vst.msk [vmem:[%s100] sm:$0xfc] %vm97, %v96
  %s102 = scalar_lea.vmem %s0, 264
  %v103 = vld [vmem:[%s102] sm:$0xff]
  %vm104 = vcmask 785408
  %s105 = scalar_lea.vmem %s1, 239
  %106 = vst.msk [vmem:[%s105] ss:$9 sm:$0x3] %vm104, %v103
  %s107 = scalar_lea.vmem %s1, 247
  %108 = vst.msk [vmem:[%s107] sm:$0xfc] %vm104, %v103
  %s109 = scalar_lea.vmem %s0, 280
  %v110 = vld [vmem:[%s109] sm:$0xff]
  %vm111 = vcmask 785408
  %s112 = scalar_lea.vmem %s1, 255
  %113 = vst.msk [vmem:[%s112] ss:$9 sm:$0x3] %vm111, %v110
  %s114 = scalar_lea.vmem %s1, 263
  %115 = vst.msk [vmem:[%s114] sm:$0xfc] %vm111, %v110
  %s116 = scalar_lea.vmem %s0, 296
  %v117 = vld [vmem:[%s116] sm:$0xff]
  %vm118 = vcmask 785408
  %s119 = scalar_lea.vmem %s1, 271
  %120 = vst.msk [vmem:[%s119] ss:$9 sm:$0x3] %vm118, %v117
  %s121 = scalar_lea.vmem %s1, 279
  %122 = vst.msk [vmem:[%s121] sm:$0xfc] %vm118, %v117
  %s123 = scalar_lea.vmem %s0, 312
  %v124 = vld [vmem:[%s123] sm:$0x1f]
  %vm125 = vcmask 785408
  %s126 = scalar_lea.vmem %s1, 287
  %127 = vst.msk [vmem:[%s126] ss:$9 sm:$0x3] %vm125, %v124
  %s128 = scalar_lea.vmem %s1, 295
  %129 = vst.msk [vmem:[%s128] sm:$0x1c] %vm125, %v124
  %s130 = scalar_lea.vmem %s0, 328
  %v131 = vld [vmem:[%s130] sm:$0xff]
  %vm132 = vcmask 785408
  %s133 = scalar_lea.vmem %s1, 300
  %134 = vst.msk [vmem:[%s133] sm:$0xf] %vm132, %v131
  %s135 = scalar_lea.vmem %s1, 308
  %136 = vst.msk [vmem:[%s135] sm:$0xf0] %vm132, %v131
  %s137 = scalar_lea.vmem %s0, 344
  %v138 = vld [vmem:[%s137] sm:$0xff]
  %vm139 = vcmask 785408
  %s140 = scalar_lea.vmem %s1, 316
  %141 = vst.msk [vmem:[%s140] sm:$0xf] %vm139, %v138
  %s142 = scalar_lea.vmem %s1, 324
  %143 = vst.msk [vmem:[%s142] sm:$0xf0] %vm139, %v138
  %s144 = scalar_lea.vmem %s0, 360
  %v145 = vld [vmem:[%s144] sm:$0xff]
  %vm146 = vcmask 785408
  %s147 = scalar_lea.vmem %s1, 332
  %148 = vst.msk [vmem:[%s147] sm:$0xf] %vm146, %v145
  %s149 = scalar_lea.vmem %s1, 340
  %150 = vst.msk [vmem:[%s149] sm:$0xf0] %vm146, %v145
  %s151 = scalar_lea.vmem %s0, 376
  %v152 = vld [vmem:[%s151] sm:$0xff]
  %vm153 = vcmask 785408
  %s154 = scalar_lea.vmem %s1, 348
  %155 = vst.msk [vmem:[%s154] sm:$0xf] %vm153, %v152
  %s156 = scalar_lea.vmem %s1, 356
  %157 = vst.msk [vmem:[%s156] sm:$0xf0] %vm153, %v152
  %s158 = scalar_lea.vmem %s0, 392
  %v159 = vld [vmem:[%s158] sm:$0x1f]
  %vm160 = vcmask 785408
  %s161 = scalar_lea.vmem %s1, 364
  %162 = vst.msk [vmem:[%s161] sm:$0xf] %vm160, %v159
  %s163 = scalar_lea.vmem %s1, 372
  %164 = vst.msk [vmem:[%s163] sm:$0x10] %vm160, %v159
  %s165 = scalar_lea.vmem %s0, 408
  %v166 = vld [vmem:[%s165] sm:$0xff]
  %vm167 = vcmask 785408
  %s168 = scalar_lea.vmem %s1, 377
  %169 = vst.msk [vmem:[%s168] sm:$0x7f] %vm167, %v166
  %s170 = scalar_lea.vmem %s1, 385
  %171 = vst.msk [vmem:[%s170] sm:$0x80] %vm167, %v166
  %s172 = scalar_lea.vmem %s0, 424
  %v173 = vld [vmem:[%s172] sm:$0xff]
  %vm174 = vcmask 785408
  %s175 = scalar_lea.vmem %s1, 393
  %176 = vst.msk [vmem:[%s175] sm:$0x7f] %vm174, %v173
  %s177 = scalar_lea.vmem %s1, 401
  %178 = vst.msk [vmem:[%s177] sm:$0x80] %vm174, %v173
  %s179 = scalar_lea.vmem %s0, 440
  %v180 = vld [vmem:[%s179] sm:$0xff]
  %vm181 = vcmask 785408
  %s182 = scalar_lea.vmem %s1, 409
  %183 = vst.msk [vmem:[%s182] sm:$0x7f] %vm181, %v180
  %s184 = scalar_lea.vmem %s1, 417
  %185 = vst.msk [vmem:[%s184] sm:$0x80] %vm181, %v180
  %s186 = scalar_lea.vmem %s0, 456
  %v187 = vld [vmem:[%s186] sm:$0xff]
  %vm188 = vcmask 785408
  %s189 = scalar_lea.vmem %s1, 425
  %190 = vst.msk [vmem:[%s189] sm:$0x7f] %vm188, %v187
  %s191 = scalar_lea.vmem %s1, 433
  %192 = vst.msk [vmem:[%s191] sm:$0x80] %vm188, %v187
  %s193 = scalar_lea.vmem %s0, 472
  %v194 = vld [vmem:[%s193] sm:$0x1f]
  %vm195 = vcmask 785408
  %s196 = scalar_lea.vmem %s1, 441
  %197 = vst.msk [vmem:[%s196] sm:$0x1f] %vm195, %v194
  %s198 = scalar_lea.vmem %s0, 488
  %v199 = vld [vmem:[%s198] sm:$0xff]
  %vm200 = vcmask 785408
  %s201 = scalar_lea.vmem %s1, 446
  %202 = vst.msk [vmem:[%s201] sm:$0x3] %vm200, %v199
  %s203 = scalar_lea.vmem %s1, 454
  %204 = vst.msk [vmem:[%s203] sm:$0xfc] %vm200, %v199
  %s205 = scalar_lea.vmem %s0, 504
  %v206 = vld [vmem:[%s205] sm:$0xff]
  %vm207 = vcmask 785408
  %s208 = scalar_lea.vmem %s1, 462
  %209 = vst.msk [vmem:[%s208] sm:$0x3] %vm207, %v206
  %s210 = scalar_lea.vmem %s1, 470
  %211 = vst.msk [vmem:[%s210] sm:$0xfc] %vm207, %v206
  %s212 = scalar_lea.vmem %s0, 520
  %v213 = vld [vmem:[%s212] sm:$0xff]
  %vm214 = vcmask 785408
  %s215 = scalar_lea.vmem %s1, 478
  %216 = vst.msk [vmem:[%s215] sm:$0x3] %vm214, %v213
  %s217 = scalar_lea.vmem %s1, 486
  %218 = vst.msk [vmem:[%s217] sm:$0xfc] %vm214, %v213
  %s219 = scalar_lea.vmem %s0, 536
  %v220 = vld [vmem:[%s219] sm:$0xff]
  %vm221 = vcmask 785408
  %s222 = scalar_lea.vmem %s1, 494
  %223 = vst.msk [vmem:[%s222] sm:$0x3] %vm221, %v220
  %s224 = scalar_lea.vmem %s1, 502
  %225 = vst.msk [vmem:[%s224] sm:$0xfc] %vm221, %v220
  %s226 = scalar_lea.vmem %s0, 552
  %v227 = vld [vmem:[%s226] sm:$0x1f]
  %vm228 = vcmask 785408
  %s229 = scalar_lea.vmem %s1, 510
  %230 = vst.msk [vmem:[%s229] sm:$0x3] %vm228, %v227
  %s231 = scalar_lea.vmem %s1, 518
  %232 = vst.msk [vmem:[%s231] sm:$0x1c] %vm228, %v227
  %s233 = scalar_lea.vmem %s0, 568
  %v234 = vld [vmem:[%s233] sm:$0xff]
  %vm235 = vcmask 785408
  %s236 = scalar_lea.vmem %s1, 523
  %237 = vst.msk [vmem:[%s236] sm:$0x1f] %vm235, %v234
  %s238 = scalar_lea.vmem %s1, 531
  %239 = vst.msk [vmem:[%s238] sm:$0xe0] %vm235, %v234
  %s240 = scalar_lea.vmem %s0, 584
  %v241 = vld [vmem:[%s240] sm:$0xff]
  %vm242 = vcmask 785408
  %s243 = scalar_lea.vmem %s1, 539
  %244 = vst.msk [vmem:[%s243] sm:$0x1f] %vm242, %v241
  %s245 = scalar_lea.vmem %s1, 547
  %246 = vst.msk [vmem:[%s245] sm:$0xe0] %vm242, %v241
  %s247 = scalar_lea.vmem %s0, 600
  %v248 = vld [vmem:[%s247] sm:$0xff]
  %vm249 = vcmask 785408
  %s250 = scalar_lea.vmem %s1, 555
  %251 = vst.msk [vmem:[%s250] sm:$0x1f] %vm249, %v248
  %s252 = scalar_lea.vmem %s1, 563
  %253 = vst.msk [vmem:[%s252] sm:$0xe0] %vm249, %v248
  %s254 = scalar_lea.vmem %s0, 616
  %v255 = vld [vmem:[%s254] sm:$0xff]
  %vm256 = vcmask 785408
  %s257 = scalar_lea.vmem %s1, 571
  %258 = vst.msk [vmem:[%s257] sm:$0x1f] %vm256, %v255
  %s259 = scalar_lea.vmem %s1, 579
  %260 = vst.msk [vmem:[%s259] sm:$0xe0] %vm256, %v255
  %s261 = scalar_lea.vmem %s0, 632
  %v262 = vld [vmem:[%s261] sm:$0x1f]
  %vm263 = vcmask 785408
  %s264 = scalar_lea.vmem %s1, 587
  %265 = vst.msk [vmem:[%s264] sm:$0x1f] %vm263, %v262
  %s266 = scalar_lea.vmem %s0, 648
  %v267 = vld [vmem:[%s266] sm:$0xff]
  %vm268 = vcmask 785408
  %s269 = scalar_lea.vmem %s1, 600
  %270 = vst.msk [vmem:[%s269] sm:$0xff] %vm268, %v267
  %s271 = scalar_lea.vmem %s0, 664
  %v272 = vld [vmem:[%s271] sm:$0xff]
  %vm273 = vcmask 785408
  %s274 = scalar_lea.vmem %s1, 616
  %275 = vst.msk [vmem:[%s274] sm:$0xff] %vm273, %v272
  %s276 = scalar_lea.vmem %s0, 680
  %v277 = vld [vmem:[%s276] sm:$0xff]
  %vm278 = vcmask 785408
  %s279 = scalar_lea.vmem %s1, 632
  %280 = vst.msk [vmem:[%s279] sm:$0xff] %vm278, %v277
  %s281 = scalar_lea.vmem %s0, 696
  %v282 = vld [vmem:[%s281] sm:$0xff]
  %vm283 = vcmask 785408
  %s284 = scalar_lea.vmem %s1, 648
  %285 = vst.msk [vmem:[%s284] sm:$0xff] %vm283, %v282
  %s286 = scalar_lea.vmem %s0, 712
  %v287 = vld [vmem:[%s286] sm:$0x1f]
  %vm288 = vcmask 785408
  %s289 = scalar_lea.vmem %s1, 664
  %290 = vst.msk [vmem:[%s289] sm:$0x1f] %vm288, %v287
  %s291 = scalar_lea.vmem %s0, 728
  %v292 = vld [vmem:[%s291] sm:$0xff]
  %vm293 = vcmask 785408
  %s294 = scalar_lea.vmem %s1, 669
  %295 = vst.msk [vmem:[%s294] sm:$0x7] %vm293, %v292
  %s296 = scalar_lea.vmem %s1, 677
  %297 = vst.msk [vmem:[%s296] sm:$0xf8] %vm293, %v292
  %s298 = scalar_lea.vmem %s0, 744
  %v299 = vld [vmem:[%s298] sm:$0xff]
  %vm300 = vcmask 785408
  %s301 = scalar_lea.vmem %s1, 685
  %302 = vst.msk [vmem:[%s301] sm:$0x7] %vm300, %v299
  %s303 = scalar_lea.vmem %s1, 693
  %304 = vst.msk [vmem:[%s303] sm:$0xf8] %vm300, %v299
  %s305 = scalar_lea.vmem %s0, 760
  %v306 = vld [vmem:[%s305] sm:$0xff]
  %vm307 = vcmask 785408
  %s308 = scalar_lea.vmem %s1, 701
  %309 = vst.msk [vmem:[%s308] sm:$0x7] %vm307, %v306
  %s310 = scalar_lea.vmem %s1, 709
  %311 = vst.msk [vmem:[%s310] sm:$0xf8] %vm307, %v306
  %s312 = scalar_lea.vmem %s0, 776
  %v313 = vld [vmem:[%s312] sm:$0xff]
  %vm314 = vcmask 785408
  %s315 = scalar_lea.vmem %s1, 717
  %316 = vst.msk [vmem:[%s315] sm:$0x7] %vm314, %v313
  %s317 = scalar_lea.vmem %s1, 725
  %318 = vst.msk [vmem:[%s317] sm:$0xf8] %vm314, %v313
  %s319 = scalar_lea.vmem %s0, 792
  %v320 = vld [vmem:[%s319] sm:$0x1f]
  %vm321 = vcmask 785408
  %s322 = scalar_lea.vmem %s1, 733
  %323 = vst.msk [vmem:[%s322] sm:$0x7] %vm321, %v320
  %s324 = scalar_lea.vmem %s1, 741
  %325 = vst.msk [vmem:[%s324] sm:$0x18] %vm321, %v320
  %s326 = scalar_lea.vmem %s0, 808
  %v327 = vld [vmem:[%s326] sm:$0xff]
  %vm328 = vcmask 785408
  %s329 = scalar_lea.vmem %s1, 746
  %330 = vst.msk [vmem:[%s329] sm:$0x3f] %vm328, %v327
  %s331 = scalar_lea.vmem %s1, 754
  %332 = vst.msk [vmem:[%s331] sm:$0xc0] %vm328, %v327
  %s333 = scalar_lea.vmem %s0, 824
  %v334 = vld [vmem:[%s333] sm:$0xff]
  %vm335 = vcmask 785408
  %s336 = scalar_lea.vmem %s1, 762
  %337 = vst.msk [vmem:[%s336] sm:$0x3f] %vm335, %v334
  %s338 = scalar_lea.vmem %s1, 770
  %339 = vst.msk [vmem:[%s338] sm:$0xc0] %vm335, %v334
  %s340 = scalar_lea.vmem %s0, 840
  %v341 = vld [vmem:[%s340] sm:$0xff]
  %vm342 = vcmask 785408
  %s343 = scalar_lea.vmem %s1, 778
  %344 = vst.msk [vmem:[%s343] sm:$0x3f] %vm342, %v341
  %s345 = scalar_lea.vmem %s1, 786
  %346 = vst.msk [vmem:[%s345] sm:$0xc0] %vm342, %v341
  %s347 = scalar_lea.vmem %s0, 856
  %v348 = vld [vmem:[%s347] sm:$0xff]
  %vm349 = vcmask 785408
  %s350 = scalar_lea.vmem %s1, 794
  %351 = vst.msk [vmem:[%s350] sm:$0x3f] %vm349, %v348
  %s352 = scalar_lea.vmem %s1, 802
  %353 = vst.msk [vmem:[%s352] sm:$0xc0] %vm349, %v348
  %s354 = scalar_lea.vmem %s0, 872
  %v355 = vld [vmem:[%s354] sm:$0x1f]
  %vm356 = vcmask 785408
  %s357 = scalar_lea.vmem %s1, 810
  %358 = vst.msk [vmem:[%s357] sm:$0x1f] %vm356, %v355
  %s359 = scalar_lea.vmem %s0, 888
  %v360 = vld [vmem:[%s359] sm:$0xff]
  %vm361 = vcmask 785408
  %s362 = scalar_lea.vmem %s1, 815
  %363 = vst.msk [vmem:[%s362] ss:$9 sm:$0x3] %vm361, %v360
  %s364 = scalar_lea.vmem %s1, 823
  %365 = vst.msk [vmem:[%s364] sm:$0xfc] %vm361, %v360
  %s366 = scalar_lea.vmem %s0, 904
  %v367 = vld [vmem:[%s366] sm:$0xff]
  %vm368 = vcmask 785408
  %s369 = scalar_lea.vmem %s1, 831
  %370 = vst.msk [vmem:[%s369] ss:$9 sm:$0x3] %vm368, %v367
  %s371 = scalar_lea.vmem %s1, 839
  %372 = vst.msk [vmem:[%s371] sm:$0xfc] %vm368, %v367
  %s373 = scalar_lea.vmem %s0, 920
  %v374 = vld [vmem:[%s373] sm:$0xff]
  %vm375 = vcmask 785408
  %s376 = scalar_lea.vmem %s1, 847
  %377 = vst.msk [vmem:[%s376] ss:$9 sm:$0x3] %vm375, %v374
  %s378 = scalar_lea.vmem %s1, 855
  %379 = vst.msk [vmem:[%s378] sm:$0xfc] %vm375, %v374
  %s380 = scalar_lea.vmem %s0, 936
  %v381 = vld [vmem:[%s380] sm:$0xff]
  %vm382 = vcmask 785408
  %s383 = scalar_lea.vmem %s1, 863
  %384 = vst.msk [vmem:[%s383] ss:$9 sm:$0x3] %vm382, %v381
  %s385 = scalar_lea.vmem %s1, 871
  %386 = vst.msk [vmem:[%s385] sm:$0xfc] %vm382, %v381
  %s387 = scalar_lea.vmem %s0, 952
  %v388 = vld [vmem:[%s387] sm:$0x1f]
  %vm389 = vcmask 785408
  %s390 = scalar_lea.vmem %s1, 879
  %391 = vst.msk [vmem:[%s390] ss:$9 sm:$0x3] %vm389, %v388
  %s392 = scalar_lea.vmem %s1, 887
  %393 = vst.msk [vmem:[%s392] sm:$0x1c] %vm389, %v388
  %s394 = scalar_lea.vmem %s0, 968
  %v395 = vld [vmem:[%s394] sm:$0xff]
  %vm396 = vcmask 785408
  %s397 = scalar_lea.vmem %s1, 892
  %398 = vst.msk [vmem:[%s397] sm:$0xf] %vm396, %v395
  %s399 = scalar_lea.vmem %s1, 900
  %400 = vst.msk [vmem:[%s399] sm:$0xf0] %vm396, %v395
  %s401 = scalar_lea.vmem %s0, 984
  %v402 = vld [vmem:[%s401] sm:$0xff]
  %vm403 = vcmask 785408
  %s404 = scalar_lea.vmem %s1, 908
  %405 = vst.msk [vmem:[%s404] sm:$0xf] %vm403, %v402
  %s406 = scalar_lea.vmem %s1, 916
  %407 = vst.msk [vmem:[%s406] sm:$0xf0] %vm403, %v402
  %s408 = scalar_lea.vmem %s0, 1000
  %v409 = vld [vmem:[%s408] sm:$0xff]
  %vm410 = vcmask 785408
  %s411 = scalar_lea.vmem %s1, 924
  %412 = vst.msk [vmem:[%s411] sm:$0xf] %vm410, %v409
  %s413 = scalar_lea.vmem %s1, 932
  %414 = vst.msk [vmem:[%s413] sm:$0xf0] %vm410, %v409
  %s415 = scalar_lea.vmem %s0, 1016
  %v416 = vld [vmem:[%s415] sm:$0xff]
  %vm417 = vcmask 785408
  %s418 = scalar_lea.vmem %s1, 940
  %419 = vst.msk [vmem:[%s418] sm:$0xf] %vm417, %v416
  %s420 = scalar_lea.vmem %s1, 948
  %421 = vst.msk [vmem:[%s420] sm:$0xf0] %vm417, %v416
  %s422 = scalar_lea.vmem %s0, 1032
  %v423 = vld [vmem:[%s422] sm:$0x1f]
  %vm424 = vcmask 785408
  %s425 = scalar_lea.vmem %s1, 956
  %426 = vst.msk [vmem:[%s425] sm:$0xf] %vm424, %v423
  %s427 = scalar_lea.vmem %s1, 964
  %428 = vst.msk [vmem:[%s427] sm:$0x10] %vm424, %v423
  %s429 = scalar_lea.vmem %s0, 1048
  %v430 = vld [vmem:[%s429] sm:$0xff]
  %vm431 = vcmask 785408
  %s432 = scalar_lea.vmem %s1, 969
  %433 = vst.msk [vmem:[%s432] sm:$0x7f] %vm431, %v430
  %s434 = scalar_lea.vmem %s1, 977
  %435 = vst.msk [vmem:[%s434] sm:$0x80] %vm431, %v430
  %s436 = scalar_lea.vmem %s0, 1064
  %v437 = vld [vmem:[%s436] sm:$0xff]
  %vm438 = vcmask 785408
  %s439 = scalar_lea.vmem %s1, 985
  %440 = vst.msk [vmem:[%s439] sm:$0x7f] %vm438, %v437
  %s441 = scalar_lea.vmem %s1, 993
  %442 = vst.msk [vmem:[%s441] sm:$0x80] %vm438, %v437
  %s443 = scalar_lea.vmem %s0, 1080
  %v444 = vld [vmem:[%s443] sm:$0xff]
  %vm445 = vcmask 785408
  %s446 = scalar_lea.vmem %s1, 1001
  %447 = vst.msk [vmem:[%s446] sm:$0x7f] %vm445, %v444
  %s448 = scalar_lea.vmem %s1, 1009
  %449 = vst.msk [vmem:[%s448] sm:$0x80] %vm445, %v444
  %s450 = scalar_lea.vmem %s0, 1096
  %v451 = vld [vmem:[%s450] sm:$0xff]
  %vm452 = vcmask 785408
  %s453 = scalar_lea.vmem %s1, 1017
  %454 = vst.msk [vmem:[%s453] sm:$0x7f] %vm452, %v451
  %s455 = scalar_lea.vmem %s1, 1025
  %456 = vst.msk [vmem:[%s455] sm:$0x80] %vm452, %v451
  %s457 = scalar_lea.vmem %s0, 1112
  %v458 = vld [vmem:[%s457] sm:$0x1f]
  %vm459 = vcmask 785408
  %s460 = scalar_lea.vmem %s1, 1033
  %461 = vst.msk [vmem:[%s460] sm:$0x1f] %vm459, %v458
  %s462 = scalar_lea.vmem %s0, 1128
  %v463 = vld [vmem:[%s462] sm:$0xff]
  %vm464 = vcmask 785408
  %s465 = scalar_lea.vmem %s1, 1038
  %466 = vst.msk [vmem:[%s465] sm:$0x3] %vm464, %v463
  %s467 = scalar_lea.vmem %s1, 1046
  %468 = vst.msk [vmem:[%s467] sm:$0xfc] %vm464, %v463
  %s469 = scalar_lea.vmem %s0, 1144
  %v470 = vld [vmem:[%s469] sm:$0xff]
  %vm471 = vcmask 785408
  %s472 = scalar_lea.vmem %s1, 1054
  %473 = vst.msk [vmem:[%s472] sm:$0x3] %vm471, %v470
  %s474 = scalar_lea.vmem %s1, 1062
  %475 = vst.msk [vmem:[%s474] sm:$0xfc] %vm471, %v470
  %s476 = scalar_lea.vmem %s0, 1160
  %v477 = vld [vmem:[%s476] sm:$0xff]
  %vm478 = vcmask 785408
  %s479 = scalar_lea.vmem %s1, 1070
  %480 = vst.msk [vmem:[%s479] sm:$0x3] %vm478, %v477
  %s481 = scalar_lea.vmem %s1, 1078
  %482 = vst.msk [vmem:[%s481] sm:$0xfc] %vm478, %v477
  %s483 = scalar_lea.vmem %s0, 1176
  %v484 = vld [vmem:[%s483] sm:$0xff]
  %vm485 = vcmask 785408
  %s486 = scalar_lea.vmem %s1, 1086
  %487 = vst.msk [vmem:[%s486] sm:$0x3] %vm485, %v484
  %s488 = scalar_lea.vmem %s1, 1094
  %489 = vst.msk [vmem:[%s488] sm:$0xfc] %vm485, %v484
  %s490 = scalar_lea.vmem %s0, 1192
  %v491 = vld [vmem:[%s490] sm:$0x1f]
  %vm492 = vcmask 785408
  %s493 = scalar_lea.vmem %s1, 1102
  %494 = vst.msk [vmem:[%s493] sm:$0x3] %vm492, %v491
  %s495 = scalar_lea.vmem %s1, 1110
  %496 = vst.msk [vmem:[%s495] sm:$0x1c] %vm492, %v491
  %s497 = scalar_lea.vmem %s0, 1208
  %v498 = vld [vmem:[%s497] sm:$0xff]
  %vm499 = vcmask 785408
  %s500 = scalar_lea.vmem %s1, 1115
  %501 = vst.msk [vmem:[%s500] sm:$0x1f] %vm499, %v498
  %s502 = scalar_lea.vmem %s1, 1123
  %503 = vst.msk [vmem:[%s502] sm:$0xe0] %vm499, %v498
  %s504 = scalar_lea.vmem %s0, 1224
  %v505 = vld [vmem:[%s504] sm:$0xff]
  %vm506 = vcmask 785408
  %s507 = scalar_lea.vmem %s1, 1131
  %508 = vst.msk [vmem:[%s507] sm:$0x1f] %vm506, %v505
  %s509 = scalar_lea.vmem %s1, 1139
  %510 = vst.msk [vmem:[%s509] sm:$0xe0] %vm506, %v505
  %s511 = scalar_lea.vmem %s0, 1240
  %v512 = vld [vmem:[%s511] sm:$0xff]
  %vm513 = vcmask 785408
  %s514 = scalar_lea.vmem %s1, 1147
  %515 = vst.msk [vmem:[%s514] sm:$0x1f] %vm513, %v512
  %s516 = scalar_lea.vmem %s1, 1155
  %517 = vst.msk [vmem:[%s516] sm:$0xe0] %vm513, %v512
  %s518 = scalar_lea.vmem %s0, 1256
  %v519 = vld [vmem:[%s518] sm:$0xff]
  %vm520 = vcmask 785408
  %s521 = scalar_lea.vmem %s1, 1163
  %522 = vst.msk [vmem:[%s521] sm:$0x1f] %vm520, %v519
  %s523 = scalar_lea.vmem %s1, 1171
  %524 = vst.msk [vmem:[%s523] sm:$0xe0] %vm520, %v519
  %s525 = scalar_lea.vmem %s0, 1272
  %v526 = vld [vmem:[%s525] sm:$0x1f]
  %vm527 = vcmask 785408
  %s528 = scalar_lea.vmem %s1, 1179
  %529 = vst.msk [vmem:[%s528] sm:$0x1f] %vm527, %v526
  %s530 = scalar_lea.vmem %s0, 1288
  %v531 = vld [vmem:[%s530] sm:$0xff]
  %vm532 = vcmask 785408
  %s533 = scalar_lea.vmem %s1, 1192
  %534 = vst.msk [vmem:[%s533] sm:$0xff] %vm532, %v531
  %s535 = scalar_lea.vmem %s0, 1304
  %v536 = vld [vmem:[%s535] sm:$0xff]
  %vm537 = vcmask 785408
  %s538 = scalar_lea.vmem %s1, 1208
  %539 = vst.msk [vmem:[%s538] sm:$0xff] %vm537, %v536
  %s540 = scalar_lea.vmem %s0, 1320
  %v541 = vld [vmem:[%s540] sm:$0xff]
  %vm542 = vcmask 785408
  %s543 = scalar_lea.vmem %s1, 1224
  %544 = vst.msk [vmem:[%s543] sm:$0xff] %vm542, %v541
  %s545 = scalar_lea.vmem %s0, 1336
  %v546 = vld [vmem:[%s545] sm:$0xff]
  %vm547 = vcmask 785408
  %s548 = scalar_lea.vmem %s1, 1240
  %549 = vst.msk [vmem:[%s548] sm:$0xff] %vm547, %v546
  %s550 = scalar_lea.vmem %s0, 1352
  %v551 = vld [vmem:[%s550] sm:$0x1f]
  %vm552 = vcmask 785408
  %s553 = scalar_lea.vmem %s1, 1256
  %554 = vst.msk [vmem:[%s553] sm:$0x1f] %vm552, %v551
  %s555 = scalar_lea.vmem %s0, 1368
  %v556 = vld [vmem:[%s555] sm:$0xff]
  %vm557 = vcmask 785408
  %s558 = scalar_lea.vmem %s1, 1261
  %559 = vst.msk [vmem:[%s558] sm:$0x7] %vm557, %v556
  %s560 = scalar_lea.vmem %s1, 1269
  %561 = vst.msk [vmem:[%s560] sm:$0xf8] %vm557, %v556
  %s562 = scalar_lea.vmem %s0, 1384
  %v563 = vld [vmem:[%s562] sm:$0xff]
  %vm564 = vcmask 785408
  %s565 = scalar_lea.vmem %s1, 1277
  %566 = vst.msk [vmem:[%s565] sm:$0x7] %vm564, %v563
  %s567 = scalar_lea.vmem %s1, 1285
  %568 = vst.msk [vmem:[%s567] sm:$0xf8] %vm564, %v563
  %s569 = scalar_lea.vmem %s0, 1400
  %v570 = vld [vmem:[%s569] sm:$0xff]
  %vm571 = vcmask 785408
  %s572 = scalar_lea.vmem %s1, 1293
  %573 = vst.msk [vmem:[%s572] sm:$0x7] %vm571, %v570
  %s574 = scalar_lea.vmem %s1, 1301
  %575 = vst.msk [vmem:[%s574] sm:$0xf8] %vm571, %v570
  %s576 = scalar_lea.vmem %s0, 1416
  %v577 = vld [vmem:[%s576] sm:$0xff]
  %vm578 = vcmask 785408
  %s579 = scalar_lea.vmem %s1, 1309
  %580 = vst.msk [vmem:[%s579] sm:$0x7] %vm578, %v577
  %s581 = scalar_lea.vmem %s1, 1317
  %582 = vst.msk [vmem:[%s581] sm:$0xf8] %vm578, %v577
  %s583 = scalar_lea.vmem %s0, 1432
  %v584 = vld [vmem:[%s583] sm:$0x1f]
  %vm585 = vcmask 785408
  %s586 = scalar_lea.vmem %s1, 1325
  %587 = vst.msk [vmem:[%s586] sm:$0x7] %vm585, %v584
  %s588 = scalar_lea.vmem %s1, 1333
  %589 = vst.msk [vmem:[%s588] sm:$0x18] %vm585, %v584
  %s590 = scalar_lea.vmem %s0, 1448
  %v591 = vld [vmem:[%s590] sm:$0xff]
  %vm592 = vcmask 785408
  %s593 = scalar_lea.vmem %s1, 1338
  %594 = vst.msk [vmem:[%s593] sm:$0x3f] %vm592, %v591
  %s595 = scalar_lea.vmem %s1, 1346
  %596 = vst.msk [vmem:[%s595] sm:$0xc0] %vm592, %v591
  %s597 = scalar_lea.vmem %s0, 1464
  %v598 = vld [vmem:[%s597] sm:$0xff]
  %vm599 = vcmask 785408
  %s600 = scalar_lea.vmem %s1, 1354
  %601 = vst.msk [vmem:[%s600] sm:$0x3f] %vm599, %v598
  %s602 = scalar_lea.vmem %s1, 1362
  %603 = vst.msk [vmem:[%s602] sm:$0xc0] %vm599, %v598
  %s604 = scalar_lea.vmem %s0, 1480
  %v605 = vld [vmem:[%s604] sm:$0xff]
  %vm606 = vcmask 785408
  %s607 = scalar_lea.vmem %s1, 1370
  %608 = vst.msk [vmem:[%s607] sm:$0x3f] %vm606, %v605
  %s609 = scalar_lea.vmem %s1, 1378
  %610 = vst.msk [vmem:[%s609] sm:$0xc0] %vm606, %v605
  %s611 = scalar_lea.vmem %s0, 1496
  %v612 = vld [vmem:[%s611] sm:$0xff]
  %vm613 = vcmask 785408
  %s614 = scalar_lea.vmem %s1, 1386
  %615 = vst.msk [vmem:[%s614] sm:$0x3f] %vm613, %v612
  %s616 = scalar_lea.vmem %s1, 1394
  %617 = vst.msk [vmem:[%s616] sm:$0xc0] %vm613, %v612
  %s618 = scalar_lea.vmem %s0, 1512
  %v619 = vld [vmem:[%s618] sm:$0x1f]
  %vm620 = vcmask 785408
  %s621 = scalar_lea.vmem %s1, 1402
  %622 = vst.msk [vmem:[%s621] sm:$0x1f] %vm620, %v619
  %s623 = scalar_lea.vmem %s0, 1528
  %v624 = vld [vmem:[%s623] sm:$0xff]
  %vm625 = vcmask 785408
  %s626 = scalar_lea.vmem %s1, 1407
  %627 = vst.msk [vmem:[%s626] ss:$9 sm:$0x3] %vm625, %v624
  %s628 = scalar_lea.vmem %s1, 1415
  %629 = vst.msk [vmem:[%s628] sm:$0xfc] %vm625, %v624
  %s630 = scalar_lea.vmem %s0, 1544
  %v631 = vld [vmem:[%s630] sm:$0xff]
  %vm632 = vcmask 785408
  %s633 = scalar_lea.vmem %s1, 1423
  %634 = vst.msk [vmem:[%s633] ss:$9 sm:$0x3] %vm632, %v631
  %s635 = scalar_lea.vmem %s1, 1431
  %636 = vst.msk [vmem:[%s635] sm:$0xfc] %vm632, %v631
  %s637 = scalar_lea.vmem %s0, 1560
  %v638 = vld [vmem:[%s637] sm:$0xff]
  %vm639 = vcmask 785408
  %s640 = scalar_lea.vmem %s1, 1439
  %641 = vst.msk [vmem:[%s640] ss:$9 sm:$0x3] %vm639, %v638
  %s642 = scalar_lea.vmem %s1, 1447
  %643 = vst.msk [vmem:[%s642] sm:$0xfc] %vm639, %v638
  %s644 = scalar_lea.vmem %s0, 1576
  %v645 = vld [vmem:[%s644] sm:$0xff]
  %vm646 = vcmask 785408
  %s647 = scalar_lea.vmem %s1, 1455
  %648 = vst.msk [vmem:[%s647] ss:$9 sm:$0x3] %vm646, %v645
  %s649 = scalar_lea.vmem %s1, 1463
  %650 = vst.msk [vmem:[%s649] sm:$0xfc] %vm646, %v645
  %s651 = scalar_lea.vmem %s0, 1592
  %v652 = vld [vmem:[%s651] sm:$0x1f]
  %vm653 = vcmask 785408
  %s654 = scalar_lea.vmem %s1, 1471
  %655 = vst.msk [vmem:[%s654] ss:$9 sm:$0x3] %vm653, %v652
  %s656 = scalar_lea.vmem %s1, 1479
  %657 = vst.msk [vmem:[%s656] sm:$0x1c] %vm653, %v652
  %s658 = scalar_lea.vmem %s0, 1608
  %v659 = vld [vmem:[%s658] sm:$0xff]
  %vm660 = vcmask 785408
  %s661 = scalar_lea.vmem %s1, 1484
  %662 = vst.msk [vmem:[%s661] sm:$0xf] %vm660, %v659
  %s663 = scalar_lea.vmem %s1, 1492
  %664 = vst.msk [vmem:[%s663] sm:$0xf0] %vm660, %v659
  %s665 = scalar_lea.vmem %s0, 1624
  %v666 = vld [vmem:[%s665] sm:$0xff]
  %vm667 = vcmask 785408
  %s668 = scalar_lea.vmem %s1, 1500
  %669 = vst.msk [vmem:[%s668] sm:$0xf] %vm667, %v666
  %s670 = scalar_lea.vmem %s1, 1508
  %671 = vst.msk [vmem:[%s670] sm:$0xf0] %vm667, %v666
  %s672 = scalar_lea.vmem %s0, 1640
  %v673 = vld [vmem:[%s672] sm:$0xff]
  %vm674 = vcmask 785408
  %s675 = scalar_lea.vmem %s1, 1516
  %676 = vst.msk [vmem:[%s675] sm:$0xf] %vm674, %v673
  %s677 = scalar_lea.vmem %s1, 1524
  %678 = vst.msk [vmem:[%s677] sm:$0xf0] %vm674, %v673
  %s679 = scalar_lea.vmem %s0, 1656
  %v680 = vld [vmem:[%s679] sm:$0xff]
  %vm681 = vcmask 785408
  %s682 = scalar_lea.vmem %s1, 1532
  %683 = vst.msk [vmem:[%s682] sm:$0xf] %vm681, %v680
  %s684 = scalar_lea.vmem %s1, 1540
  %685 = vst.msk [vmem:[%s684] sm:$0xf0] %vm681, %v680
  %s686 = scalar_lea.vmem %s0, 1672
  %v687 = vld [vmem:[%s686] sm:$0x1f]
  %vm688 = vcmask 785408
  %s689 = scalar_lea.vmem %s1, 1548
  %690 = vst.msk [vmem:[%s689] sm:$0xf] %vm688, %v687
  %s691 = scalar_lea.vmem %s1, 1556
  %692 = vst.msk [vmem:[%s691] sm:$0x10] %vm688, %v687
  %s693 = scalar_lea.vmem %s0, 1688
  %v694 = vld [vmem:[%s693] sm:$0xff]
  %vm695 = vcmask 785408
  %s696 = scalar_lea.vmem %s1, 1561
  %697 = vst.msk [vmem:[%s696] sm:$0x7f] %vm695, %v694
  %s698 = scalar_lea.vmem %s1, 1569
  %699 = vst.msk [vmem:[%s698] sm:$0x80] %vm695, %v694
  %s700 = scalar_lea.vmem %s0, 1704
  %v701 = vld [vmem:[%s700] sm:$0xff]
  %vm702 = vcmask 785408
  %s703 = scalar_lea.vmem %s1, 1577
  %704 = vst.msk [vmem:[%s703] sm:$0x7f] %vm702, %v701
  %s705 = scalar_lea.vmem %s1, 1585
  %706 = vst.msk [vmem:[%s705] sm:$0x80] %vm702, %v701
  %s707 = scalar_lea.vmem %s0, 1720
  %v708 = vld [vmem:[%s707] sm:$0xff]
  %vm709 = vcmask 785408
  %s710 = scalar_lea.vmem %s1, 1593
  %711 = vst.msk [vmem:[%s710] sm:$0x7f] %vm709, %v708
  %s712 = scalar_lea.vmem %s1, 1601
  %713 = vst.msk [vmem:[%s712] sm:$0x80] %vm709, %v708
  %s714 = scalar_lea.vmem %s0, 1736
  %v715 = vld [vmem:[%s714] sm:$0xff]
  %vm716 = vcmask 785408
  %s717 = scalar_lea.vmem %s1, 1609
  %718 = vst.msk [vmem:[%s717] sm:$0x7f] %vm716, %v715
  %s719 = scalar_lea.vmem %s1, 1617
  %720 = vst.msk [vmem:[%s719] sm:$0x80] %vm716, %v715
  %s721 = scalar_lea.vmem %s0, 1752
  %v722 = vld [vmem:[%s721] sm:$0x1f]
  %vm723 = vcmask 785408
  %s724 = scalar_lea.vmem %s1, 1625
  %725 = vst.msk [vmem:[%s724] sm:$0x1f] %vm723, %v722
  %s726 = scalar_lea.vmem %s0, 1768
  %v727 = vld [vmem:[%s726] sm:$0xff]
  %vm728 = vcmask 785408
  %s729 = scalar_lea.vmem %s1, 1630
  %730 = vst.msk [vmem:[%s729] sm:$0x3] %vm728, %v727
  %s731 = scalar_lea.vmem %s1, 1638
  %732 = vst.msk [vmem:[%s731] sm:$0xfc] %vm728, %v727
  %s733 = scalar_lea.vmem %s0, 1784
  %v734 = vld [vmem:[%s733] sm:$0xff]
  %vm735 = vcmask 785408
  %s736 = scalar_lea.vmem %s1, 1646
  %737 = vst.msk [vmem:[%s736] sm:$0x3] %vm735, %v734
  %s738 = scalar_lea.vmem %s1, 1654
  %739 = vst.msk [vmem:[%s738] sm:$0xfc] %vm735, %v734
  %s740 = scalar_lea.vmem %s0, 1800
  %v741 = vld [vmem:[%s740] sm:$0xff]
  %vm742 = vcmask 785408
  %s743 = scalar_lea.vmem %s1, 1662
  %744 = vst.msk [vmem:[%s743] sm:$0x3] %vm742, %v741
  %s745 = scalar_lea.vmem %s1, 1670
  %746 = vst.msk [vmem:[%s745] sm:$0xfc] %vm742, %v741
  %s747 = scalar_lea.vmem %s0, 1816
  %v748 = vld [vmem:[%s747] sm:$0xff]
  %vm749 = vcmask 785408
  %s750 = scalar_lea.vmem %s1, 1678
  %751 = vst.msk [vmem:[%s750] sm:$0x3] %vm749, %v748
  %s752 = scalar_lea.vmem %s1, 1686
  %753 = vst.msk [vmem:[%s752] sm:$0xfc] %vm749, %v748
  %s754 = scalar_lea.vmem %s0, 1832
  %v755 = vld [vmem:[%s754] sm:$0x1f]
  %vm756 = vcmask 785408
  %s757 = scalar_lea.vmem %s1, 1694
  %758 = vst.msk [vmem:[%s757] sm:$0x3] %vm756, %v755
  %s759 = scalar_lea.vmem %s1, 1702
  %760 = vst.msk [vmem:[%s759] sm:$0x1c] %vm756, %v755
  %s761 = scalar_lea.vmem %s0, 1848
  %v762 = vld [vmem:[%s761] sm:$0xff]
  %vm763 = vcmask 785408
  %s764 = scalar_lea.vmem %s1, 1707
  %765 = vst.msk [vmem:[%s764] sm:$0x1f] %vm763, %v762
  %s766 = scalar_lea.vmem %s1, 1715
  %767 = vst.msk [vmem:[%s766] sm:$0xe0] %vm763, %v762
  %s768 = scalar_lea.vmem %s0, 1864
  %v769 = vld [vmem:[%s768] sm:$0xff]
  %vm770 = vcmask 785408
  %s771 = scalar_lea.vmem %s1, 1723
  %772 = vst.msk [vmem:[%s771] sm:$0x1f] %vm770, %v769
  %s773 = scalar_lea.vmem %s1, 1731
  %774 = vst.msk [vmem:[%s773] sm:$0xe0] %vm770, %v769
  %s775 = scalar_lea.vmem %s0, 1880
  %v776 = vld [vmem:[%s775] sm:$0xff]
  %vm777 = vcmask 785408
  %s778 = scalar_lea.vmem %s1, 1739
  %779 = vst.msk [vmem:[%s778] sm:$0x1f] %vm777, %v776
  %s780 = scalar_lea.vmem %s1, 1747
  %781 = vst.msk [vmem:[%s780] sm:$0xe0] %vm777, %v776
  %s782 = scalar_lea.vmem %s0, 1896
  %v783 = vld [vmem:[%s782] sm:$0xff]
  %vm784 = vcmask 785408
  %s785 = scalar_lea.vmem %s1, 1755
  %786 = vst.msk [vmem:[%s785] sm:$0x1f] %vm784, %v783
  %s787 = scalar_lea.vmem %s1, 1763
  %788 = vst.msk [vmem:[%s787] sm:$0xe0] %vm784, %v783
  %s789 = scalar_lea.vmem %s0, 1912
  %v790 = vld [vmem:[%s789] sm:$0x1f]
  %vm791 = vcmask 785408
  %s792 = scalar_lea.vmem %s1, 1771
  %793 = vst.msk [vmem:[%s792] sm:$0x1f] %vm791, %v790
  %s794 = scalar_lea.vmem %s0, 1928
  %v795 = vld [vmem:[%s794] sm:$0xff]
  %vm796 = vcmask 785408
  %s797 = scalar_lea.vmem %s1, 1784
  %798 = vst.msk [vmem:[%s797] sm:$0xff] %vm796, %v795
  %s799 = scalar_lea.vmem %s0, 1944
  %v800 = vld [vmem:[%s799] sm:$0xff]
  %vm801 = vcmask 785408
  %s802 = scalar_lea.vmem %s1, 1800
  %803 = vst.msk [vmem:[%s802] sm:$0xff] %vm801, %v800
  %s804 = scalar_lea.vmem %s0, 1960
  %v805 = vld [vmem:[%s804] sm:$0xff]
  %vm806 = vcmask 785408
  %s807 = scalar_lea.vmem %s1, 1816
  %808 = vst.msk [vmem:[%s807] sm:$0xff] %vm806, %v805
  %s809 = scalar_lea.vmem %s0, 1976
  %v810 = vld [vmem:[%s809] sm:$0xff]
  %vm811 = vcmask 785408
  %s812 = scalar_lea.vmem %s1, 1832
  %813 = vst.msk [vmem:[%s812] sm:$0xff] %vm811, %v810
  %s814 = scalar_lea.vmem %s0, 1992
  %v815 = vld [vmem:[%s814] sm:$0x1f]
  %vm816 = vcmask 785408
  %s817 = scalar_lea.vmem %s1, 1848
  %818 = vst.msk [vmem:[%s817] sm:$0x1f] %vm816, %v815
  %s819 = scalar_lea.vmem %s0, 2008
  %v820 = vld [vmem:[%s819] sm:$0xff]
  %vm821 = vcmask 785408
  %s822 = scalar_lea.vmem %s1, 1853
  %823 = vst.msk [vmem:[%s822] sm:$0x7] %vm821, %v820
  %s824 = scalar_lea.vmem %s1, 1861
  %825 = vst.msk [vmem:[%s824] sm:$0xf8] %vm821, %v820
  %s826 = scalar_lea.vmem %s0, 2024
  %v827 = vld [vmem:[%s826] sm:$0xff]
  %vm828 = vcmask 785408
  %s829 = scalar_lea.vmem %s1, 1869
  %830 = vst.msk [vmem:[%s829] sm:$0x7] %vm828, %v827
  %s831 = scalar_lea.vmem %s1, 1877
  %832 = vst.msk [vmem:[%s831] sm:$0xf8] %vm828, %v827
  %s833 = scalar_lea.vmem %s0, 2040
  %v834 = vld [vmem:[%s833] sm:$0xff]
  %vm835 = vcmask 785408
  %s836 = scalar_lea.vmem %s1, 1885
  %837 = vst.msk [vmem:[%s836] sm:$0x7] %vm835, %v834
  %s838 = scalar_lea.vmem %s1, 1893
  %839 = vst.msk [vmem:[%s838] sm:$0xf8] %vm835, %v834
  %s840 = scalar_lea.vmem %s0, 2056
  %v841 = vld [vmem:[%s840] sm:$0xff]
  %vm842 = vcmask 785408
  %s843 = scalar_lea.vmem %s1, 1901
  %844 = vst.msk [vmem:[%s843] sm:$0x7] %vm842, %v841
  %s845 = scalar_lea.vmem %s1, 1909
  %846 = vst.msk [vmem:[%s845] sm:$0xf8] %vm842, %v841
  %s847 = scalar_lea.vmem %s0, 2072
  %v848 = vld [vmem:[%s847] sm:$0x1f]
  %vm849 = vcmask 785408
  %s850 = scalar_lea.vmem %s1, 1917
  %851 = vst.msk [vmem:[%s850] sm:$0x7] %vm849, %v848
  %s852 = scalar_lea.vmem %s1, 1925
  %853 = vst.msk [vmem:[%s852] sm:$0x18] %vm849, %v848
  %s854 = scalar_lea.vmem %s0, 2088
  %v855 = vld [vmem:[%s854] sm:$0xff]
  %vm856 = vcmask 785408
  %s857 = scalar_lea.vmem %s1, 1930
  %858 = vst.msk [vmem:[%s857] sm:$0x3f] %vm856, %v855
  %s859 = scalar_lea.vmem %s1, 1938
  %860 = vst.msk [vmem:[%s859] sm:$0xc0] %vm856, %v855
  %s861 = scalar_lea.vmem %s0, 2104
  %v862 = vld [vmem:[%s861] sm:$0xff]
  %vm863 = vcmask 785408
  %s864 = scalar_lea.vmem %s1, 1946
  %865 = vst.msk [vmem:[%s864] sm:$0x3f] %vm863, %v862
  %s866 = scalar_lea.vmem %s1, 1954
  %867 = vst.msk [vmem:[%s866] sm:$0xc0] %vm863, %v862
  %s868 = scalar_lea.vmem %s0, 2120
  %v869 = vld [vmem:[%s868] sm:$0xff]
  %vm870 = vcmask 785408
  %s871 = scalar_lea.vmem %s1, 1962
  %872 = vst.msk [vmem:[%s871] sm:$0x3f] %vm870, %v869
  %s873 = scalar_lea.vmem %s1, 1970
  %874 = vst.msk [vmem:[%s873] sm:$0xc0] %vm870, %v869
  %s875 = scalar_lea.vmem %s0, 2136
  %v876 = vld [vmem:[%s875] sm:$0xff]
  %vm877 = vcmask 785408
  %s878 = scalar_lea.vmem %s1, 1978
  %879 = vst.msk [vmem:[%s878] sm:$0x3f] %vm877, %v876
  %s880 = scalar_lea.vmem %s1, 1986
  %881 = vst.msk [vmem:[%s880] sm:$0xc0] %vm877, %v876
  %s882 = scalar_lea.vmem %s0, 2152
  %v883 = vld [vmem:[%s882] sm:$0x1f]
  %vm884 = vcmask 785408
  %s885 = scalar_lea.vmem %s1, 1994
  %886 = vst.msk [vmem:[%s885] sm:$0x1f] %vm884, %v883
  %s887 = scalar_lea.vmem %s0, 2168
  %v888 = vld [vmem:[%s887] sm:$0xff]
  %vm889 = vcmask 785408
  %s890 = scalar_lea.vmem %s1, 1999
  %891 = vst.msk [vmem:[%s890] ss:$9 sm:$0x3] %vm889, %v888
  %s892 = scalar_lea.vmem %s1, 2007
  %893 = vst.msk [vmem:[%s892] sm:$0xfc] %vm889, %v888
  %s894 = scalar_lea.vmem %s0, 2184
  %v895 = vld [vmem:[%s894] sm:$0xff]
  %vm896 = vcmask 785408
  %s897 = scalar_lea.vmem %s1, 2015
  %898 = vst.msk [vmem:[%s897] ss:$9 sm:$0x3] %vm896, %v895
  %s899 = scalar_lea.vmem %s1, 2023
  %900 = vst.msk [vmem:[%s899] sm:$0xfc] %vm896, %v895
  %s901 = scalar_lea.vmem %s0, 2200
  %v902 = vld [vmem:[%s901] sm:$0xff]
  %vm903 = vcmask 785408
  %s904 = scalar_lea.vmem %s1, 2031
  %905 = vst.msk [vmem:[%s904] ss:$9 sm:$0x3] %vm903, %v902
  %s906 = scalar_lea.vmem %s1, 2039
  %907 = vst.msk [vmem:[%s906] sm:$0xfc] %vm903, %v902
  %s908 = scalar_lea.vmem %s0, 2216
  %v909 = vld [vmem:[%s908] sm:$0xff]
  %vm910 = vcmask 785408
  %s911 = scalar_lea.vmem %s1, 2047
  %912 = vst.msk [vmem:[%s911] ss:$9 sm:$0x3] %vm910, %v909
  %s913 = scalar_lea.vmem %s1, 2055
  %914 = vst.msk [vmem:[%s913] sm:$0xfc] %vm910, %v909
  %s915 = scalar_lea.vmem %s0, 2232
  %v916 = vld [vmem:[%s915] sm:$0x1f]
  %vm917 = vcmask 785408
  %s918 = scalar_lea.vmem %s1, 2063
  %919 = vst.msk [vmem:[%s918] ss:$9 sm:$0x3] %vm917, %v916
  %s920 = scalar_lea.vmem %s1, 2071
  %921 = vst.msk [vmem:[%s920] sm:$0x1c] %vm917, %v916
  %s922 = scalar_lea.vmem %s0, 2248
  %v923 = vld [vmem:[%s922] sm:$0xff]
  %vm924 = vcmask 785408
  %s925 = scalar_lea.vmem %s1, 2076
  %926 = vst.msk [vmem:[%s925] sm:$0xf] %vm924, %v923
  %s927 = scalar_lea.vmem %s1, 2084
  %928 = vst.msk [vmem:[%s927] sm:$0xf0] %vm924, %v923
  %s929 = scalar_lea.vmem %s0, 2264
  %v930 = vld [vmem:[%s929] sm:$0xff]
  %vm931 = vcmask 785408
  %s932 = scalar_lea.vmem %s1, 2092
  %933 = vst.msk [vmem:[%s932] sm:$0xf] %vm931, %v930
  %s934 = scalar_lea.vmem %s1, 2100
  %935 = vst.msk [vmem:[%s934] sm:$0xf0] %vm931, %v930
  %s936 = scalar_lea.vmem %s0, 2280
  %v937 = vld [vmem:[%s936] sm:$0xff]
  %vm938 = vcmask 785408
  %s939 = scalar_lea.vmem %s1, 2108
  %940 = vst.msk [vmem:[%s939] sm:$0xf] %vm938, %v937
  %s941 = scalar_lea.vmem %s1, 2116
  %942 = vst.msk [vmem:[%s941] sm:$0xf0] %vm938, %v937
  %s943 = scalar_lea.vmem %s0, 2296
  %v944 = vld [vmem:[%s943] sm:$0xff]
  %vm945 = vcmask 785408
  %s946 = scalar_lea.vmem %s1, 2124
  %947 = vst.msk [vmem:[%s946] sm:$0xf] %vm945, %v944
  %s948 = scalar_lea.vmem %s1, 2132
  %949 = vst.msk [vmem:[%s948] sm:$0xf0] %vm945, %v944
  %s950 = scalar_lea.vmem %s0, 2312
  %v951 = vld [vmem:[%s950] sm:$0x1f]
  %vm952 = vcmask 785408
  %s953 = scalar_lea.vmem %s1, 2140
  %954 = vst.msk [vmem:[%s953] sm:$0xf] %vm952, %v951
  %s955 = scalar_lea.vmem %s1, 2148
  %956 = vst.msk [vmem:[%s955] sm:$0x10] %vm952, %v951
  %s957 = scalar_lea.vmem %s0, 2328
  %v958 = vld [vmem:[%s957] sm:$0xff]
  %vm959 = vcmask 785408
  %s960 = scalar_lea.vmem %s1, 2153
  %961 = vst.msk [vmem:[%s960] sm:$0x7f] %vm959, %v958
  %s962 = scalar_lea.vmem %s1, 2161
  %963 = vst.msk [vmem:[%s962] sm:$0x80] %vm959, %v958
  %s964 = scalar_lea.vmem %s0, 2344
  %v965 = vld [vmem:[%s964] sm:$0xff]
  %vm966 = vcmask 785408
  %s967 = scalar_lea.vmem %s1, 2169
  %968 = vst.msk [vmem:[%s967] sm:$0x7f] %vm966, %v965
  %s969 = scalar_lea.vmem %s1, 2177
  %970 = vst.msk [vmem:[%s969] sm:$0x80] %vm966, %v965
  %s971 = scalar_lea.vmem %s0, 2360
  %v972 = vld [vmem:[%s971] sm:$0xff]
  %vm973 = vcmask 785408
  %s974 = scalar_lea.vmem %s1, 2185
  %975 = vst.msk [vmem:[%s974] sm:$0x7f] %vm973, %v972
  %s976 = scalar_lea.vmem %s1, 2193
  %977 = vst.msk [vmem:[%s976] sm:$0x80] %vm973, %v972
  %s978 = scalar_lea.vmem %s0, 2376
  %v979 = vld [vmem:[%s978] sm:$0xff]
  %vm980 = vcmask 785408
  %s981 = scalar_lea.vmem %s1, 2201
  %982 = vst.msk [vmem:[%s981] sm:$0x7f] %vm980, %v979
  %s983 = scalar_lea.vmem %s1, 2209
  %984 = vst.msk [vmem:[%s983] sm:$0x80] %vm980, %v979
  %s985 = scalar_lea.vmem %s0, 2392
  %v986 = vld [vmem:[%s985] sm:$0x1f]
  %vm987 = vcmask 785408
  %s988 = scalar_lea.vmem %s1, 2217
  %989 = vst.msk [vmem:[%s988] sm:$0x1f] %vm987, %v986
  %s990 = scalar_lea.vmem %s0, 2408
  %v991 = vld [vmem:[%s990] sm:$0xff]
  %vm992 = vcmask 785408
  %s993 = scalar_lea.vmem %s1, 2222
  %994 = vst.msk [vmem:[%s993] sm:$0x3] %vm992, %v991
  %s995 = scalar_lea.vmem %s1, 2230
  %996 = vst.msk [vmem:[%s995] sm:$0xfc] %vm992, %v991
  %s997 = scalar_lea.vmem %s0, 2424
  %v998 = vld [vmem:[%s997] sm:$0xff]
  %vm999 = vcmask 785408
  %s1000 = scalar_lea.vmem %s1, 2238
  %1001 = vst.msk [vmem:[%s1000] sm:$0x3] %vm999, %v998
  %s1002 = scalar_lea.vmem %s1, 2246
  %1003 = vst.msk [vmem:[%s1002] sm:$0xfc] %vm999, %v998
  %s1004 = scalar_lea.vmem %s0, 2440
  %v1005 = vld [vmem:[%s1004] sm:$0xff]
  %vm1006 = vcmask 785408
  %s1007 = scalar_lea.vmem %s1, 2254
  %1008 = vst.msk [vmem:[%s1007] sm:$0x3] %vm1006, %v1005
  %s1009 = scalar_lea.vmem %s1, 2262
  %1010 = vst.msk [vmem:[%s1009] sm:$0xfc] %vm1006, %v1005
  %s1011 = scalar_lea.vmem %s0, 2456
  %v1012 = vld [vmem:[%s1011] sm:$0xff]
  %vm1013 = vcmask 785408
  %s1014 = scalar_lea.vmem %s1, 2270
  %1015 = vst.msk [vmem:[%s1014] sm:$0x3] %vm1013, %v1012
  %s1016 = scalar_lea.vmem %s1, 2278
  %1017 = vst.msk [vmem:[%s1016] sm:$0xfc] %vm1013, %v1012
  %s1018 = scalar_lea.vmem %s0, 2472
  %v1019 = vld [vmem:[%s1018] sm:$0x1f]
  %vm1020 = vcmask 785408
  %s1021 = scalar_lea.vmem %s1, 2286
  %1022 = vst.msk [vmem:[%s1021] sm:$0x3] %vm1020, %v1019
  %s1023 = scalar_lea.vmem %s1, 2294
  %1024 = vst.msk [vmem:[%s1023] sm:$0x1c] %vm1020, %v1019
  %s1025 = scalar_lea.vmem %s0, 2488
  %v1026 = vld [vmem:[%s1025] sm:$0xff]
  %vm1027 = vcmask 785408
  %s1028 = scalar_lea.vmem %s1, 2299
  %1029 = vst.msk [vmem:[%s1028] sm:$0x1f] %vm1027, %v1026
  %s1030 = scalar_lea.vmem %s1, 2307
  %1031 = vst.msk [vmem:[%s1030] sm:$0xe0] %vm1027, %v1026
  %s1032 = scalar_lea.vmem %s0, 2504
  %v1033 = vld [vmem:[%s1032] sm:$0xff]
  %vm1034 = vcmask 785408
  %s1035 = scalar_lea.vmem %s1, 2315
  %1036 = vst.msk [vmem:[%s1035] sm:$0x1f] %vm1034, %v1033
  %s1037 = scalar_lea.vmem %s1, 2323
  %1038 = vst.msk [vmem:[%s1037] sm:$0xe0] %vm1034, %v1033
  %s1039 = scalar_lea.vmem %s0, 2520
  %v1040 = vld [vmem:[%s1039] sm:$0xff]
  %vm1041 = vcmask 785408
  %s1042 = scalar_lea.vmem %s1, 2331
  %1043 = vst.msk [vmem:[%s1042] sm:$0x1f] %vm1041, %v1040
  %s1044 = scalar_lea.vmem %s1, 2339
  %1045 = vst.msk [vmem:[%s1044] sm:$0xe0] %vm1041, %v1040
  %s1046 = scalar_lea.vmem %s0, 2536
  %v1047 = vld [vmem:[%s1046] sm:$0xff]
  %vm1048 = vcmask 785408
  %s1049 = scalar_lea.vmem %s1, 2347
  %1050 = vst.msk [vmem:[%s1049] sm:$0x1f] %vm1048, %v1047
  %s1051 = scalar_lea.vmem %s1, 2355
  %1052 = vst.msk [vmem:[%s1051] sm:$0xe0] %vm1048, %v1047
  %s1053 = scalar_lea.vmem %s0, 2552
  %v1054 = vld [vmem:[%s1053] sm:$0x1f]
  %vm1055 = vcmask 785408
  %s1056 = scalar_lea.vmem %s1, 2363
  %1057 = vst.msk [vmem:[%s1056] sm:$0x1f] %vm1055, %v1054
  %s1058 = scalar_lea.vmem %s0, 2568
  %v1059 = vld [vmem:[%s1058] sm:$0xff]
  %vm1060 = vcmask 785408
  %s1061 = scalar_lea.vmem %s1, 2376
  %1062 = vst.msk [vmem:[%s1061] sm:$0xff] %vm1060, %v1059
  %s1063 = scalar_lea.vmem %s0, 2584
  %v1064 = vld [vmem:[%s1063] sm:$0xff]
  %vm1065 = vcmask 785408
  %s1066 = scalar_lea.vmem %s1, 2392
  %1067 = vst.msk [vmem:[%s1066] sm:$0xff] %vm1065, %v1064
  %s1068 = scalar_lea.vmem %s0, 2600
  %v1069 = vld [vmem:[%s1068] sm:$0xff]
  %vm1070 = vcmask 785408
  %s1071 = scalar_lea.vmem %s1, 2408
  %1072 = vst.msk [vmem:[%s1071] sm:$0xff] %vm1070, %v1069
  %s1073 = scalar_lea.vmem %s0, 2616
  %v1074 = vld [vmem:[%s1073] sm:$0xff]
  %vm1075 = vcmask 785408
  %s1076 = scalar_lea.vmem %s1, 2424
  %1077 = vst.msk [vmem:[%s1076] sm:$0xff] %vm1075, %v1074
  %s1078 = scalar_lea.vmem %s0, 2632
  %v1079 = vld [vmem:[%s1078] sm:$0x1f]
  %vm1080 = vcmask 785408
  %s1081 = scalar_lea.vmem %s1, 2440
  %1082 = vst.msk [vmem:[%s1081] sm:$0x1f] %vm1080, %v1079
  %s1083 = scalar_lea.vmem %s0, 2648
  %v1084 = vld [vmem:[%s1083] sm:$0xff]
  %vm1085 = vcmask 785408
  %s1086 = scalar_lea.vmem %s1, 2445
  %1087 = vst.msk [vmem:[%s1086] sm:$0x7] %vm1085, %v1084
  %s1088 = scalar_lea.vmem %s1, 2453
  %1089 = vst.msk [vmem:[%s1088] sm:$0xf8] %vm1085, %v1084
  %s1090 = scalar_lea.vmem %s0, 2664
  %v1091 = vld [vmem:[%s1090] sm:$0xff]
  %vm1092 = vcmask 785408
  %s1093 = scalar_lea.vmem %s1, 2461
  %1094 = vst.msk [vmem:[%s1093] sm:$0x7] %vm1092, %v1091
  %s1095 = scalar_lea.vmem %s1, 2469
  %1096 = vst.msk [vmem:[%s1095] sm:$0xf8] %vm1092, %v1091
  %s1097 = scalar_lea.vmem %s0, 2680
  %v1098 = vld [vmem:[%s1097] sm:$0xff]
  %vm1099 = vcmask 785408
  %s1100 = scalar_lea.vmem %s1, 2477
  %1101 = vst.msk [vmem:[%s1100] sm:$0x7] %vm1099, %v1098
  %s1102 = scalar_lea.vmem %s1, 2485
  %1103 = vst.msk [vmem:[%s1102] sm:$0xf8] %vm1099, %v1098
  %s1104 = scalar_lea.vmem %s0, 2696
  %v1105 = vld [vmem:[%s1104] sm:$0xff]
  %vm1106 = vcmask 785408
  %s1107 = scalar_lea.vmem %s1, 2493
  %1108 = vst.msk [vmem:[%s1107] sm:$0x7] %vm1106, %v1105
  %s1109 = scalar_lea.vmem %s1, 2501
  %1110 = vst.msk [vmem:[%s1109] sm:$0xf8] %vm1106, %v1105
  %s1111 = scalar_lea.vmem %s0, 2712
  %v1112 = vld [vmem:[%s1111] sm:$0x1f]
  %vm1113 = vcmask 785408
  %s1114 = scalar_lea.vmem %s1, 2509
  %1115 = vst.msk [vmem:[%s1114] sm:$0x7] %vm1113, %v1112
  %s1116 = scalar_lea.vmem %s1, 2517
  %1117 = vst.msk [vmem:[%s1116] sm:$0x18] %vm1113, %v1112
  %s1118 = scalar_lea.vmem %s0, 2728
  %v1119 = vld [vmem:[%s1118] sm:$0xff]
  %vm1120 = vcmask 785408
  %s1121 = scalar_lea.vmem %s1, 2522
  %1122 = vst.msk [vmem:[%s1121] sm:$0x3f] %vm1120, %v1119
  %s1123 = scalar_lea.vmem %s1, 2530
  %1124 = vst.msk [vmem:[%s1123] sm:$0xc0] %vm1120, %v1119
  %s1125 = scalar_lea.vmem %s0, 2744
  %v1126 = vld [vmem:[%s1125] sm:$0xff]
  %vm1127 = vcmask 785408
  %s1128 = scalar_lea.vmem %s1, 2538
  %1129 = vst.msk [vmem:[%s1128] sm:$0x3f] %vm1127, %v1126
  %s1130 = scalar_lea.vmem %s1, 2546
  %1131 = vst.msk [vmem:[%s1130] sm:$0xc0] %vm1127, %v1126
  %s1132 = scalar_lea.vmem %s0, 2760
  %v1133 = vld [vmem:[%s1132] sm:$0xff]
  %vm1134 = vcmask 785408
  %s1135 = scalar_lea.vmem %s1, 2554
  %1136 = vst.msk [vmem:[%s1135] sm:$0x3f] %vm1134, %v1133
  %s1137 = scalar_lea.vmem %s1, 2562
  %1138 = vst.msk [vmem:[%s1137] sm:$0xc0] %vm1134, %v1133
  %s1139 = scalar_lea.vmem %s0, 2776
  %v1140 = vld [vmem:[%s1139] sm:$0xff]
  %vm1141 = vcmask 785408
  %s1142 = scalar_lea.vmem %s1, 2570
  %1143 = vst.msk [vmem:[%s1142] sm:$0x3f] %vm1141, %v1140
  %s1144 = scalar_lea.vmem %s1, 2578
  %1145 = vst.msk [vmem:[%s1144] sm:$0xc0] %vm1141, %v1140
  %s1146 = scalar_lea.vmem %s0, 2792
  %v1147 = vld [vmem:[%s1146] sm:$0x1f]
  %vm1148 = vcmask 785408
  %s1149 = scalar_lea.vmem %s1, 2586
  %1150 = vst.msk [vmem:[%s1149] sm:$0x1f] %vm1148, %v1147
  %s1151 = scalar_lea.vmem %s0, 2808
  %v1152 = vld [vmem:[%s1151] sm:$0xff]
  %vm1153 = vcmask 785408
  %s1154 = scalar_lea.vmem %s1, 2591
  %1155 = vst.msk [vmem:[%s1154] ss:$9 sm:$0x3] %vm1153, %v1152
  %s1156 = scalar_lea.vmem %s1, 2599
  %1157 = vst.msk [vmem:[%s1156] sm:$0xfc] %vm1153, %v1152
  %s1158 = scalar_lea.vmem %s0, 2824
  %v1159 = vld [vmem:[%s1158] sm:$0xff]
  %vm1160 = vcmask 785408
  %s1161 = scalar_lea.vmem %s1, 2607
  %1162 = vst.msk [vmem:[%s1161] ss:$9 sm:$0x3] %vm1160, %v1159
  %s1163 = scalar_lea.vmem %s1, 2615
  %1164 = vst.msk [vmem:[%s1163] sm:$0xfc] %vm1160, %v1159
  %s1165 = scalar_lea.vmem %s0, 2840
  %v1166 = vld [vmem:[%s1165] sm:$0xff]
  %vm1167 = vcmask 785408
  %s1168 = scalar_lea.vmem %s1, 2623
  %1169 = vst.msk [vmem:[%s1168] ss:$9 sm:$0x3] %vm1167, %v1166
  %s1170 = scalar_lea.vmem %s1, 2631
  %1171 = vst.msk [vmem:[%s1170] sm:$0xfc] %vm1167, %v1166
  %s1172 = scalar_lea.vmem %s0, 2856
  %v1173 = vld [vmem:[%s1172] sm:$0xff]
  %vm1174 = vcmask 785408
  %s1175 = scalar_lea.vmem %s1, 2639
  %1176 = vst.msk [vmem:[%s1175] ss:$9 sm:$0x3] %vm1174, %v1173
  %s1177 = scalar_lea.vmem %s1, 2647
  %1178 = vst.msk [vmem:[%s1177] sm:$0xfc] %vm1174, %v1173
  %s1179 = scalar_lea.vmem %s0, 2872
  %v1180 = vld [vmem:[%s1179] sm:$0x1f]
  %vm1181 = vcmask 785408
  %s1182 = scalar_lea.vmem %s1, 2655
  %1183 = vst.msk [vmem:[%s1182] ss:$9 sm:$0x3] %vm1181, %v1180
  %s1184 = scalar_lea.vmem %s1, 2663
  %1185 = vst.msk [vmem:[%s1184] sm:$0x1c] %vm1181, %v1180
  %s1186 = scalar_lea.vmem %s0, 2888
  %v1187 = vld [vmem:[%s1186] sm:$0xff]
  %vm1188 = vcmask 785408
  %s1189 = scalar_lea.vmem %s1, 2668
  %1190 = vst.msk [vmem:[%s1189] sm:$0xf] %vm1188, %v1187
  %s1191 = scalar_lea.vmem %s1, 2676
  %1192 = vst.msk [vmem:[%s1191] sm:$0xf0] %vm1188, %v1187
  %s1193 = scalar_lea.vmem %s0, 2904
  %v1194 = vld [vmem:[%s1193] sm:$0xff]
  %vm1195 = vcmask 785408
  %s1196 = scalar_lea.vmem %s1, 2684
  %1197 = vst.msk [vmem:[%s1196] sm:$0xf] %vm1195, %v1194
  %s1198 = scalar_lea.vmem %s1, 2692
  %1199 = vst.msk [vmem:[%s1198] sm:$0xf0] %vm1195, %v1194
  %s1200 = scalar_lea.vmem %s0, 2920
  %v1201 = vld [vmem:[%s1200] sm:$0xff]
  %vm1202 = vcmask 785408
  %s1203 = scalar_lea.vmem %s1, 2700
  %1204 = vst.msk [vmem:[%s1203] sm:$0xf] %vm1202, %v1201
  %s1205 = scalar_lea.vmem %s1, 2708
  %1206 = vst.msk [vmem:[%s1205] sm:$0xf0] %vm1202, %v1201
  %s1207 = scalar_lea.vmem %s0, 2936
  %v1208 = vld [vmem:[%s1207] sm:$0xff]
  %vm1209 = vcmask 785408
  %s1210 = scalar_lea.vmem %s1, 2716
  %1211 = vst.msk [vmem:[%s1210] sm:$0xf] %vm1209, %v1208
  %s1212 = scalar_lea.vmem %s1, 2724
  %1213 = vst.msk [vmem:[%s1212] sm:$0xf0] %vm1209, %v1208
  %s1214 = scalar_lea.vmem %s0, 2952
  %v1215 = vld [vmem:[%s1214] sm:$0x1f]
  %vm1216 = vcmask 785408
  %s1217 = scalar_lea.vmem %s1, 2732
  %1218 = vst.msk [vmem:[%s1217] sm:$0xf] %vm1216, %v1215
  %s1219 = scalar_lea.vmem %s1, 2740
  %1220 = vst.msk [vmem:[%s1219] sm:$0x10] %vm1216, %v1215
  %s1221 = scalar_lea.vmem %s0, 2968
  %v1222 = vld [vmem:[%s1221] sm:$0xff]
  %vm1223 = vcmask 785408
  %s1224 = scalar_lea.vmem %s1, 2745
  %1225 = vst.msk [vmem:[%s1224] sm:$0x7f] %vm1223, %v1222
  %s1226 = scalar_lea.vmem %s1, 2753
  %1227 = vst.msk [vmem:[%s1226] sm:$0x80] %vm1223, %v1222
  %s1228 = scalar_lea.vmem %s0, 2984
  %v1229 = vld [vmem:[%s1228] sm:$0xff]
  %vm1230 = vcmask 785408
  %s1231 = scalar_lea.vmem %s1, 2761
  %1232 = vst.msk [vmem:[%s1231] sm:$0x7f] %vm1230, %v1229
  %s1233 = scalar_lea.vmem %s1, 2769
  %1234 = vst.msk [vmem:[%s1233] sm:$0x80] %vm1230, %v1229
  %s1235 = scalar_lea.vmem %s0, 3000
  %v1236 = vld [vmem:[%s1235] sm:$0xff]
  %vm1237 = vcmask 785408
  %s1238 = scalar_lea.vmem %s1, 2777
  %1239 = vst.msk [vmem:[%s1238] sm:$0x7f] %vm1237, %v1236
  %s1240 = scalar_lea.vmem %s1, 2785
  %1241 = vst.msk [vmem:[%s1240] sm:$0x80] %vm1237, %v1236
  %s1242 = scalar_lea.vmem %s0, 3016
  %v1243 = vld [vmem:[%s1242] sm:$0xff]
  %vm1244 = vcmask 785408
  %s1245 = scalar_lea.vmem %s1, 2793
  %1246 = vst.msk [vmem:[%s1245] sm:$0x7f] %vm1244, %v1243
  %s1247 = scalar_lea.vmem %s1, 2801
  %1248 = vst.msk [vmem:[%s1247] sm:$0x80] %vm1244, %v1243
  %s1249 = scalar_lea.vmem %s0, 3032
  %v1250 = vld [vmem:[%s1249] sm:$0x1f]
  %vm1251 = vcmask 785408
  %s1252 = scalar_lea.vmem %s1, 2809
  %1253 = vst.msk [vmem:[%s1252] sm:$0x1f] %vm1251, %v1250
  %s1254 = scalar_lea.vmem %s0, 3048
  %v1255 = vld [vmem:[%s1254] sm:$0xff]
  %vm1256 = vcmask 785408
  %s1257 = scalar_lea.vmem %s1, 2814
  %1258 = vst.msk [vmem:[%s1257] sm:$0x3] %vm1256, %v1255
  %s1259 = scalar_lea.vmem %s1, 2822
  %1260 = vst.msk [vmem:[%s1259] sm:$0xfc] %vm1256, %v1255
  %s1261 = scalar_lea.vmem %s0, 3064
  %v1262 = vld [vmem:[%s1261] sm:$0xff]
  %vm1263 = vcmask 785408
  %s1264 = scalar_lea.vmem %s1, 2830
  %1265 = vst.msk [vmem:[%s1264] sm:$0x3] %vm1263, %v1262
  %s1266 = scalar_lea.vmem %s1, 2838
  %1267 = vst.msk [vmem:[%s1266] sm:$0xfc] %vm1263, %v1262
  %s1268 = scalar_lea.vmem %s0, 3080
  %v1269 = vld [vmem:[%s1268] sm:$0xff]
  %vm1270 = vcmask 785408
  %s1271 = scalar_lea.vmem %s1, 2846
  %1272 = vst.msk [vmem:[%s1271] sm:$0x3] %vm1270, %v1269
  %s1273 = scalar_lea.vmem %s1, 2854
  %1274 = vst.msk [vmem:[%s1273] sm:$0xfc] %vm1270, %v1269
  %s1275 = scalar_lea.vmem %s0, 3096
  %v1276 = vld [vmem:[%s1275] sm:$0xff]
  %vm1277 = vcmask 785408
  %s1278 = scalar_lea.vmem %s1, 2862
  %1279 = vst.msk [vmem:[%s1278] sm:$0x3] %vm1277, %v1276
  %s1280 = scalar_lea.vmem %s1, 2870
  %1281 = vst.msk [vmem:[%s1280] sm:$0xfc] %vm1277, %v1276
  %s1282 = scalar_lea.vmem %s0, 3112
  %v1283 = vld [vmem:[%s1282] sm:$0x1f]
  %vm1284 = vcmask 785408
  %s1285 = scalar_lea.vmem %s1, 2878
  %1286 = vst.msk [vmem:[%s1285] sm:$0x3] %vm1284, %v1283
  %s1287 = scalar_lea.vmem %s1, 2886
  %1288 = vst.msk [vmem:[%s1287] sm:$0x1c] %vm1284, %v1283
  %s1289 = scalar_lea.vmem %s0, 3128
  %v1290 = vld [vmem:[%s1289] sm:$0xff]
  %vm1291 = vcmask 785408
  %s1292 = scalar_lea.vmem %s1, 2891
  %1293 = vst.msk [vmem:[%s1292] sm:$0x1f] %vm1291, %v1290
  %s1294 = scalar_lea.vmem %s1, 2899
  %1295 = vst.msk [vmem:[%s1294] sm:$0xe0] %vm1291, %v1290
  %s1296 = scalar_lea.vmem %s0, 3144
  %v1297 = vld [vmem:[%s1296] sm:$0xff]
  %vm1298 = vcmask 785408
  %s1299 = scalar_lea.vmem %s1, 2907
  %1300 = vst.msk [vmem:[%s1299] sm:$0x1f] %vm1298, %v1297
  %s1301 = scalar_lea.vmem %s1, 2915
  %1302 = vst.msk [vmem:[%s1301] sm:$0xe0] %vm1298, %v1297
  %s1303 = scalar_lea.vmem %s0, 3160
  %v1304 = vld [vmem:[%s1303] sm:$0xff]
  %vm1305 = vcmask 785408
  %s1306 = scalar_lea.vmem %s1, 2923
  %1307 = vst.msk [vmem:[%s1306] sm:$0x1f] %vm1305, %v1304
  %s1308 = scalar_lea.vmem %s1, 2931
  %1309 = vst.msk [vmem:[%s1308] sm:$0xe0] %vm1305, %v1304
  %s1310 = scalar_lea.vmem %s0, 3176
  %v1311 = vld [vmem:[%s1310] sm:$0xff]
  %vm1312 = vcmask 785408
  %s1313 = scalar_lea.vmem %s1, 2939
  %1314 = vst.msk [vmem:[%s1313] sm:$0x1f] %vm1312, %v1311
  %s1315 = scalar_lea.vmem %s1, 2947
  %1316 = vst.msk [vmem:[%s1315] sm:$0xe0] %vm1312, %v1311
  %s1317 = scalar_lea.vmem %s0, 3192
  %v1318 = vld [vmem:[%s1317] sm:$0x1f]
  %vm1319 = vcmask 785408
  %s1320 = scalar_lea.vmem %s1, 2955
  %1321 = vst.msk [vmem:[%s1320] sm:$0x1f] %vm1319, %v1318
  %s1322 = scalar_lea.vmem %s0, 3208
  %v1323 = vld [vmem:[%s1322] sm:$0xff]
  %vm1324 = vcmask 785408
  %s1325 = scalar_lea.vmem %s1, 2968
  %1326 = vst.msk [vmem:[%s1325] sm:$0xff] %vm1324, %v1323
  %s1327 = scalar_lea.vmem %s0, 3224
  %v1328 = vld [vmem:[%s1327] sm:$0xff]
  %vm1329 = vcmask 785408
  %s1330 = scalar_lea.vmem %s1, 2984
  %1331 = vst.msk [vmem:[%s1330] sm:$0xff] %vm1329, %v1328
  %s1332 = scalar_lea.vmem %s0, 3240
  %v1333 = vld [vmem:[%s1332] sm:$0xff]
  %vm1334 = vcmask 785408
  %s1335 = scalar_lea.vmem %s1, 3000
  %1336 = vst.msk [vmem:[%s1335] sm:$0xff] %vm1334, %v1333
  %s1337 = scalar_lea.vmem %s0, 3256
  %v1338 = vld [vmem:[%s1337] sm:$0xff]
  %vm1339 = vcmask 785408
  %s1340 = scalar_lea.vmem %s1, 3016
  %1341 = vst.msk [vmem:[%s1340] sm:$0xff] %vm1339, %v1338
  %s1342 = scalar_lea.vmem %s0, 3272
  %v1343 = vld [vmem:[%s1342] sm:$0x1f]
  %vm1344 = vcmask 785408
  %s1345 = scalar_lea.vmem %s1, 3032
  %1346 = vst.msk [vmem:[%s1345] sm:$0x1f] %vm1344, %v1343
  %s1347 = scalar_lea.vmem %s0, 3288
  %v1348 = vld [vmem:[%s1347] sm:$0xff]
  %vm1349 = vcmask 785408
  %s1350 = scalar_lea.vmem %s1, 3037
  %1351 = vst.msk [vmem:[%s1350] sm:$0x7] %vm1349, %v1348
  %s1352 = scalar_lea.vmem %s1, 3045
  %1353 = vst.msk [vmem:[%s1352] sm:$0xf8] %vm1349, %v1348
  %s1354 = scalar_lea.vmem %s0, 3304
  %v1355 = vld [vmem:[%s1354] sm:$0xff]
  %vm1356 = vcmask 785408
  %s1357 = scalar_lea.vmem %s1, 3053
  %1358 = vst.msk [vmem:[%s1357] sm:$0x7] %vm1356, %v1355
  %s1359 = scalar_lea.vmem %s1, 3061
  %1360 = vst.msk [vmem:[%s1359] sm:$0xf8] %vm1356, %v1355
  %s1361 = scalar_lea.vmem %s0, 3320
  %v1362 = vld [vmem:[%s1361] sm:$0xff]
  %vm1363 = vcmask 785408
  %s1364 = scalar_lea.vmem %s1, 3069
  %1365 = vst.msk [vmem:[%s1364] sm:$0x7] %vm1363, %v1362
  %s1366 = scalar_lea.vmem %s1, 3077
  %1367 = vst.msk [vmem:[%s1366] sm:$0xf8] %vm1363, %v1362
  %s1368 = scalar_lea.vmem %s0, 3336
  %v1369 = vld [vmem:[%s1368] sm:$0xff]
  %vm1370 = vcmask 785408
  %s1371 = scalar_lea.vmem %s1, 3085
  %1372 = vst.msk [vmem:[%s1371] sm:$0x7] %vm1370, %v1369
  %s1373 = scalar_lea.vmem %s1, 3093
  %1374 = vst.msk [vmem:[%s1373] sm:$0xf8] %vm1370, %v1369
  %s1375 = scalar_lea.vmem %s0, 3352
  %v1376 = vld [vmem:[%s1375] sm:$0x1f]
  %vm1377 = vcmask 785408
  %s1378 = scalar_lea.vmem %s1, 3101
  %1379 = vst.msk [vmem:[%s1378] sm:$0x7] %vm1377, %v1376
  %s1380 = scalar_lea.vmem %s1, 3109
  %1381 = vst.msk [vmem:[%s1380] sm:$0x18] %vm1377, %v1376
  %s1382 = scalar_lea.vmem %s0, 3368
  %v1383 = vld [vmem:[%s1382] sm:$0xff]
  %vm1384 = vcmask 785408
  %s1385 = scalar_lea.vmem %s1, 3114
  %1386 = vst.msk [vmem:[%s1385] sm:$0x3f] %vm1384, %v1383
  %s1387 = scalar_lea.vmem %s1, 3122
  %1388 = vst.msk [vmem:[%s1387] sm:$0xc0] %vm1384, %v1383
  %s1389 = scalar_lea.vmem %s0, 3384
  %v1390 = vld [vmem:[%s1389] sm:$0xff]
  %vm1391 = vcmask 785408
  %s1392 = scalar_lea.vmem %s1, 3130
  %1393 = vst.msk [vmem:[%s1392] sm:$0x3f] %vm1391, %v1390
  %s1394 = scalar_lea.vmem %s1, 3138
  %1395 = vst.msk [vmem:[%s1394] sm:$0xc0] %vm1391, %v1390
  %s1396 = scalar_lea.vmem %s0, 3400
  %v1397 = vld [vmem:[%s1396] sm:$0xff]
  %vm1398 = vcmask 785408
  %s1399 = scalar_lea.vmem %s1, 3146
  %1400 = vst.msk [vmem:[%s1399] sm:$0x3f] %vm1398, %v1397
  %s1401 = scalar_lea.vmem %s1, 3154
  %1402 = vst.msk [vmem:[%s1401] sm:$0xc0] %vm1398, %v1397
  %s1403 = scalar_lea.vmem %s0, 3416
  %v1404 = vld [vmem:[%s1403] sm:$0xff]
  %vm1405 = vcmask 785408
  %s1406 = scalar_lea.vmem %s1, 3162
  %1407 = vst.msk [vmem:[%s1406] sm:$0x3f] %vm1405, %v1404
  %s1408 = scalar_lea.vmem %s1, 3170
  %1409 = vst.msk [vmem:[%s1408] sm:$0xc0] %vm1405, %v1404
  %s1410 = scalar_lea.vmem %s0, 3432
  %v1411 = vld [vmem:[%s1410] sm:$0x1f]
  %vm1412 = vcmask 785408
  %s1413 = scalar_lea.vmem %s1, 3178
  %1414 = vst.msk [vmem:[%s1413] sm:$0x1f] %vm1412, %v1411
  %s1415 = scalar_lea.vmem %s0, 3448
  %v1416 = vld [vmem:[%s1415] sm:$0xff]
  %vm1417 = vcmask 785408
  %s1418 = scalar_lea.vmem %s1, 3183
  %1419 = vst.msk [vmem:[%s1418] ss:$9 sm:$0x3] %vm1417, %v1416
  %s1420 = scalar_lea.vmem %s1, 3191
  %1421 = vst.msk [vmem:[%s1420] sm:$0xfc] %vm1417, %v1416
  %s1422 = scalar_lea.vmem %s0, 3464
  %v1423 = vld [vmem:[%s1422] sm:$0xff]
  %vm1424 = vcmask 785408
  %s1425 = scalar_lea.vmem %s1, 3199
  %1426 = vst.msk [vmem:[%s1425] ss:$9 sm:$0x3] %vm1424, %v1423
  %s1427 = scalar_lea.vmem %s1, 3207
  %1428 = vst.msk [vmem:[%s1427] sm:$0xfc] %vm1424, %v1423
  %s1429 = scalar_lea.vmem %s0, 3480
  %v1430 = vld [vmem:[%s1429] sm:$0xff]
  %vm1431 = vcmask 785408
  %s1432 = scalar_lea.vmem %s1, 3215
  %1433 = vst.msk [vmem:[%s1432] ss:$9 sm:$0x3] %vm1431, %v1430
  %s1434 = scalar_lea.vmem %s1, 3223
  %1435 = vst.msk [vmem:[%s1434] sm:$0xfc] %vm1431, %v1430
  %s1436 = scalar_lea.vmem %s0, 3496
  %v1437 = vld [vmem:[%s1436] sm:$0xff]
  %vm1438 = vcmask 785408
  %s1439 = scalar_lea.vmem %s1, 3231
  %1440 = vst.msk [vmem:[%s1439] ss:$9 sm:$0x3] %vm1438, %v1437
  %s1441 = scalar_lea.vmem %s1, 3239
  %1442 = vst.msk [vmem:[%s1441] sm:$0xfc] %vm1438, %v1437
  %s1443 = scalar_lea.vmem %s0, 3512
  %v1444 = vld [vmem:[%s1443] sm:$0x1f]
  %vm1445 = vcmask 785408
  %s1446 = scalar_lea.vmem %s1, 3247
  %1447 = vst.msk [vmem:[%s1446] ss:$9 sm:$0x3] %vm1445, %v1444
  %s1448 = scalar_lea.vmem %s1, 3255
  %1449 = vst.msk [vmem:[%s1448] sm:$0x1c] %vm1445, %v1444
  %s1450 = scalar_lea.vmem %s0, 3528
  %v1451 = vld [vmem:[%s1450] sm:$0xff]
  %vm1452 = vcmask 785408
  %s1453 = scalar_lea.vmem %s1, 3260
  %1454 = vst.msk [vmem:[%s1453] sm:$0xf] %vm1452, %v1451
  %s1455 = scalar_lea.vmem %s1, 3268
  %1456 = vst.msk [vmem:[%s1455] sm:$0xf0] %vm1452, %v1451
  %s1457 = scalar_lea.vmem %s0, 3544
  %v1458 = vld [vmem:[%s1457] sm:$0xff]
  %vm1459 = vcmask 785408
  %s1460 = scalar_lea.vmem %s1, 3276
  %1461 = vst.msk [vmem:[%s1460] sm:$0xf] %vm1459, %v1458
  %s1462 = scalar_lea.vmem %s1, 3284
  %1463 = vst.msk [vmem:[%s1462] sm:$0xf0] %vm1459, %v1458
  %s1464 = scalar_lea.vmem %s0, 3560
  %v1465 = vld [vmem:[%s1464] sm:$0xff]
  %vm1466 = vcmask 785408
  %s1467 = scalar_lea.vmem %s1, 3292
  %1468 = vst.msk [vmem:[%s1467] sm:$0xf] %vm1466, %v1465
  %s1469 = scalar_lea.vmem %s1, 3300
  %1470 = vst.msk [vmem:[%s1469] sm:$0xf0] %vm1466, %v1465
  %s1471 = scalar_lea.vmem %s0, 3576
  %v1472 = vld [vmem:[%s1471] sm:$0xff]
  %vm1473 = vcmask 785408
  %s1474 = scalar_lea.vmem %s1, 3308
  %1475 = vst.msk [vmem:[%s1474] sm:$0xf] %vm1473, %v1472
  %s1476 = scalar_lea.vmem %s1, 3316
  %1477 = vst.msk [vmem:[%s1476] sm:$0xf0] %vm1473, %v1472
  %s1478 = scalar_lea.vmem %s0, 3592
  %v1479 = vld [vmem:[%s1478] sm:$0x1f]
  %vm1480 = vcmask 785408
  %s1481 = scalar_lea.vmem %s1, 3324
  %1482 = vst.msk [vmem:[%s1481] sm:$0xf] %vm1480, %v1479
  %s1483 = scalar_lea.vmem %s1, 3332
  %1484 = vst.msk [vmem:[%s1483] sm:$0x10] %vm1480, %v1479
  %s1485 = scalar_lea.vmem %s0, 3608
  %v1486 = vld [vmem:[%s1485] sm:$0xff]
  %vm1487 = vcmask 785408
  %s1488 = scalar_lea.vmem %s1, 3337
  %1489 = vst.msk [vmem:[%s1488] sm:$0x7f] %vm1487, %v1486
  %s1490 = scalar_lea.vmem %s1, 3345
  %1491 = vst.msk [vmem:[%s1490] sm:$0x80] %vm1487, %v1486
  %s1492 = scalar_lea.vmem %s0, 3624
  %v1493 = vld [vmem:[%s1492] sm:$0xff]
  %vm1494 = vcmask 785408
  %s1495 = scalar_lea.vmem %s1, 3353
  %1496 = vst.msk [vmem:[%s1495] sm:$0x7f] %vm1494, %v1493
  %s1497 = scalar_lea.vmem %s1, 3361
  %1498 = vst.msk [vmem:[%s1497] sm:$0x80] %vm1494, %v1493
  %s1499 = scalar_lea.vmem %s0, 3640
  %v1500 = vld [vmem:[%s1499] sm:$0xff]
  %vm1501 = vcmask 785408
  %s1502 = scalar_lea.vmem %s1, 3369
  %1503 = vst.msk [vmem:[%s1502] sm:$0x7f] %vm1501, %v1500
  %s1504 = scalar_lea.vmem %s1, 3377
  %1505 = vst.msk [vmem:[%s1504] sm:$0x80] %vm1501, %v1500
  %s1506 = scalar_lea.vmem %s0, 3656
  %v1507 = vld [vmem:[%s1506] sm:$0xff]
  %vm1508 = vcmask 785408
  %s1509 = scalar_lea.vmem %s1, 3385
  %1510 = vst.msk [vmem:[%s1509] sm:$0x7f] %vm1508, %v1507
  %s1511 = scalar_lea.vmem %s1, 3393
  %1512 = vst.msk [vmem:[%s1511] sm:$0x80] %vm1508, %v1507
  %s1513 = scalar_lea.vmem %s0, 3672
  %v1514 = vld [vmem:[%s1513] sm:$0x1f]
  %vm1515 = vcmask 785408
  %s1516 = scalar_lea.vmem %s1, 3401
  %1517 = vst.msk [vmem:[%s1516] sm:$0x1f] %vm1515, %v1514
  %s1518 = scalar_lea.vmem %s0, 3688
  %v1519 = vld [vmem:[%s1518] sm:$0xff]
  %vm1520 = vcmask 785408
  %s1521 = scalar_lea.vmem %s1, 3406
  %1522 = vst.msk [vmem:[%s1521] sm:$0x3] %vm1520, %v1519
  %s1523 = scalar_lea.vmem %s1, 3414
  %1524 = vst.msk [vmem:[%s1523] sm:$0xfc] %vm1520, %v1519
  %s1525 = scalar_lea.vmem %s0, 3704
  %v1526 = vld [vmem:[%s1525] sm:$0xff]
  %vm1527 = vcmask 785408
  %s1528 = scalar_lea.vmem %s1, 3422
  %1529 = vst.msk [vmem:[%s1528] sm:$0x3] %vm1527, %v1526
  %s1530 = scalar_lea.vmem %s1, 3430
  %1531 = vst.msk [vmem:[%s1530] sm:$0xfc] %vm1527, %v1526
  %s1532 = scalar_lea.vmem %s0, 3720
  %v1533 = vld [vmem:[%s1532] sm:$0xff]
  %vm1534 = vcmask 785408
  %s1535 = scalar_lea.vmem %s1, 3438
  %1536 = vst.msk [vmem:[%s1535] sm:$0x3] %vm1534, %v1533
  %s1537 = scalar_lea.vmem %s1, 3446
  %1538 = vst.msk [vmem:[%s1537] sm:$0xfc] %vm1534, %v1533
  %s1539 = scalar_lea.vmem %s0, 3736
  %v1540 = vld [vmem:[%s1539] sm:$0xff]
  %vm1541 = vcmask 785408
  %s1542 = scalar_lea.vmem %s1, 3454
  %1543 = vst.msk [vmem:[%s1542] sm:$0x3] %vm1541, %v1540
  %s1544 = scalar_lea.vmem %s1, 3462
  %1545 = vst.msk [vmem:[%s1544] sm:$0xfc] %vm1541, %v1540
  %s1546 = scalar_lea.vmem %s0, 3752
  %v1547 = vld [vmem:[%s1546] sm:$0x1f]
  %vm1548 = vcmask 785408
  %s1549 = scalar_lea.vmem %s1, 3470
  %1550 = vst.msk [vmem:[%s1549] sm:$0x3] %vm1548, %v1547
  %s1551 = scalar_lea.vmem %s1, 3478
  %1552 = vst.msk [vmem:[%s1551] sm:$0x1c] %vm1548, %v1547
  %s1553 = scalar_lea.vmem %s0, 3768
  %v1554 = vld [vmem:[%s1553] sm:$0xff]
  %vm1555 = vcmask 785408
  %s1556 = scalar_lea.vmem %s1, 3483
  %1557 = vst.msk [vmem:[%s1556] sm:$0x1f] %vm1555, %v1554
  %s1558 = scalar_lea.vmem %s1, 3491
  %1559 = vst.msk [vmem:[%s1558] sm:$0xe0] %vm1555, %v1554
  %s1560 = scalar_lea.vmem %s0, 3784
  %v1561 = vld [vmem:[%s1560] sm:$0xff]
  %vm1562 = vcmask 785408
  %s1563 = scalar_lea.vmem %s1, 3499
  %1564 = vst.msk [vmem:[%s1563] sm:$0x1f] %vm1562, %v1561
  %s1565 = scalar_lea.vmem %s1, 3507
  %1566 = vst.msk [vmem:[%s1565] sm:$0xe0] %vm1562, %v1561
  %s1567 = scalar_lea.vmem %s0, 3800
  %v1568 = vld [vmem:[%s1567] sm:$0xff]
  %vm1569 = vcmask 785408
  %s1570 = scalar_lea.vmem %s1, 3515
  %1571 = vst.msk [vmem:[%s1570] sm:$0x1f] %vm1569, %v1568
  %s1572 = scalar_lea.vmem %s1, 3523
  %1573 = vst.msk [vmem:[%s1572] sm:$0xe0] %vm1569, %v1568
  %s1574 = scalar_lea.vmem %s0, 3816
  %v1575 = vld [vmem:[%s1574] sm:$0xff]
  %vm1576 = vcmask 785408
  %s1577 = scalar_lea.vmem %s1, 3531
  %1578 = vst.msk [vmem:[%s1577] sm:$0x1f] %vm1576, %v1575
  %s1579 = scalar_lea.vmem %s1, 3539
  %1580 = vst.msk [vmem:[%s1579] sm:$0xe0] %vm1576, %v1575
  %s1581 = scalar_lea.vmem %s0, 3832
  %v1582 = vld [vmem:[%s1581] sm:$0x1f]
  %vm1583 = vcmask 785408
  %s1584 = scalar_lea.vmem %s1, 3547
  %1585 = vst.msk [vmem:[%s1584] sm:$0x1f] %vm1583, %v1582
  %s1586 = scalar_lea.vmem %s0, 3848
  %v1587 = vld [vmem:[%s1586] sm:$0xff]
  %vm1588 = vcmask 785408
  %s1589 = scalar_lea.vmem %s1, 3560
  %1590 = vst.msk [vmem:[%s1589] sm:$0xff] %vm1588, %v1587
  %s1591 = scalar_lea.vmem %s0, 3864
  %v1592 = vld [vmem:[%s1591] sm:$0xff]
  %vm1593 = vcmask 785408
  %s1594 = scalar_lea.vmem %s1, 3576
  %1595 = vst.msk [vmem:[%s1594] sm:$0xff] %vm1593, %v1592
  %s1596 = scalar_lea.vmem %s0, 3880
  %v1597 = vld [vmem:[%s1596] sm:$0xff]
  %vm1598 = vcmask 785408
  %s1599 = scalar_lea.vmem %s1, 3592
  %1600 = vst.msk [vmem:[%s1599] sm:$0xff] %vm1598, %v1597
  %s1601 = scalar_lea.vmem %s0, 3896
  %v1602 = vld [vmem:[%s1601] sm:$0xff]
  %vm1603 = vcmask 785408
  %s1604 = scalar_lea.vmem %s1, 3608
  %1605 = vst.msk [vmem:[%s1604] sm:$0xff] %vm1603, %v1602
  %s1606 = scalar_lea.vmem %s0, 3912
  %v1607 = vld [vmem:[%s1606] sm:$0x1f]
  %vm1608 = vcmask 785408
  %s1609 = scalar_lea.vmem %s1, 3624
  %1610 = vst.msk [vmem:[%s1609] sm:$0x1f] %vm1608, %v1607
  %s1611 = scalar_lea.vmem %s0, 3928
  %v1612 = vld [vmem:[%s1611] sm:$0xff]
  %vm1613 = vcmask 785408
  %s1614 = scalar_lea.vmem %s1, 3629
  %1615 = vst.msk [vmem:[%s1614] sm:$0x7] %vm1613, %v1612
  %s1616 = scalar_lea.vmem %s1, 3637
  %1617 = vst.msk [vmem:[%s1616] sm:$0xf8] %vm1613, %v1612
  %s1618 = scalar_lea.vmem %s0, 3944
  %v1619 = vld [vmem:[%s1618] sm:$0xff]
  %vm1620 = vcmask 785408
  %s1621 = scalar_lea.vmem %s1, 3645
  %1622 = vst.msk [vmem:[%s1621] sm:$0x7] %vm1620, %v1619
  %s1623 = scalar_lea.vmem %s1, 3653
  %1624 = vst.msk [vmem:[%s1623] sm:$0xf8] %vm1620, %v1619
  %s1625 = scalar_lea.vmem %s0, 3960
  %v1626 = vld [vmem:[%s1625] sm:$0xff]
  %vm1627 = vcmask 785408
  %s1628 = scalar_lea.vmem %s1, 3661
  %1629 = vst.msk [vmem:[%s1628] sm:$0x7] %vm1627, %v1626
  %s1630 = scalar_lea.vmem %s1, 3669
  %1631 = vst.msk [vmem:[%s1630] sm:$0xf8] %vm1627, %v1626
  %s1632 = scalar_lea.vmem %s0, 3976
  %v1633 = vld [vmem:[%s1632] sm:$0xff]
  %vm1634 = vcmask 785408
  %s1635 = scalar_lea.vmem %s1, 3677
  %1636 = vst.msk [vmem:[%s1635] sm:$0x7] %vm1634, %v1633
  %s1637 = scalar_lea.vmem %s1, 3685
  %1638 = vst.msk [vmem:[%s1637] sm:$0xf8] %vm1634, %v1633
  %s1639 = scalar_lea.vmem %s0, 3992
  %v1640 = vld [vmem:[%s1639] sm:$0x1f]
  %vm1641 = vcmask 785408
  %s1642 = scalar_lea.vmem %s1, 3693
  %1643 = vst.msk [vmem:[%s1642] sm:$0x7] %vm1641, %v1640
  %s1644 = scalar_lea.vmem %s1, 3701
  %1645 = vst.msk [vmem:[%s1644] sm:$0x18] %vm1641, %v1640
  %s1646 = scalar_lea.vmem %s0, 4008
  %v1647 = vld [vmem:[%s1646] sm:$0xff]
  %vm1648 = vcmask 785408
  %s1649 = scalar_lea.vmem %s1, 3706
  %1650 = vst.msk [vmem:[%s1649] sm:$0x3f] %vm1648, %v1647
  %s1651 = scalar_lea.vmem %s1, 3714
  %1652 = vst.msk [vmem:[%s1651] sm:$0xc0] %vm1648, %v1647
  %s1653 = scalar_lea.vmem %s0, 4024
  %v1654 = vld [vmem:[%s1653] sm:$0xff]
  %vm1655 = vcmask 785408
  %s1656 = scalar_lea.vmem %s1, 3722
  %1657 = vst.msk [vmem:[%s1656] sm:$0x3f] %vm1655, %v1654
  %s1658 = scalar_lea.vmem %s1, 3730
  %1659 = vst.msk [vmem:[%s1658] sm:$0xc0] %vm1655, %v1654
  %s1660 = scalar_lea.vmem %s0, 4040
  %v1661 = vld [vmem:[%s1660] sm:$0xff]
  %vm1662 = vcmask 785408
  %s1663 = scalar_lea.vmem %s1, 3738
  %1664 = vst.msk [vmem:[%s1663] sm:$0x3f] %vm1662, %v1661
  %s1665 = scalar_lea.vmem %s1, 3746
  %1666 = vst.msk [vmem:[%s1665] sm:$0xc0] %vm1662, %v1661
  %s1667 = scalar_lea.vmem %s0, 4056
  %v1668 = vld [vmem:[%s1667] sm:$0xff]
  %vm1669 = vcmask 785408
  %s1670 = scalar_lea.vmem %s1, 3754
  %1671 = vst.msk [vmem:[%s1670] sm:$0x3f] %vm1669, %v1668
  %s1672 = scalar_lea.vmem %s1, 3762
  %1673 = vst.msk [vmem:[%s1672] sm:$0xc0] %vm1669, %v1668
  %s1674 = scalar_lea.vmem %s0, 4072
  %v1675 = vld [vmem:[%s1674] sm:$0x1f]
  %vm1676 = vcmask 785408
  %s1677 = scalar_lea.vmem %s1, 3770
  %1678 = vst.msk [vmem:[%s1677] sm:$0x1f] %vm1676, %v1675
  %s1679 = scalar_lea.vmem %s0, 4088
  %v1680 = vld [vmem:[%s1679] sm:$0xff]
  %vm1681 = vcmask 785408
  %s1682 = scalar_lea.vmem %s1, 3775
  %1683 = vst.msk [vmem:[%s1682] ss:$9 sm:$0x3] %vm1681, %v1680
  %s1684 = scalar_lea.vmem %s1, 3783
  %1685 = vst.msk [vmem:[%s1684] sm:$0xfc] %vm1681, %v1680
  %s1686 = scalar_lea.vmem %s0, 4104
  %v1687 = vld [vmem:[%s1686] sm:$0xff]
  %vm1688 = vcmask 785408
  %s1689 = scalar_lea.vmem %s1, 3791
  %1690 = vst.msk [vmem:[%s1689] ss:$9 sm:$0x3] %vm1688, %v1687
  %s1691 = scalar_lea.vmem %s1, 3799
  %1692 = vst.msk [vmem:[%s1691] sm:$0xfc] %vm1688, %v1687
  %s1693 = scalar_lea.vmem %s0, 4120
  %v1694 = vld [vmem:[%s1693] sm:$0xff]
  %vm1695 = vcmask 785408
  %s1696 = scalar_lea.vmem %s1, 3807
  %1697 = vst.msk [vmem:[%s1696] ss:$9 sm:$0x3] %vm1695, %v1694
  %s1698 = scalar_lea.vmem %s1, 3815
  %1699 = vst.msk [vmem:[%s1698] sm:$0xfc] %vm1695, %v1694
  %s1700 = scalar_lea.vmem %s0, 4136
  %v1701 = vld [vmem:[%s1700] sm:$0xff]
  %vm1702 = vcmask 785408
  %s1703 = scalar_lea.vmem %s1, 3823
  %1704 = vst.msk [vmem:[%s1703] ss:$9 sm:$0x3] %vm1702, %v1701
  %s1705 = scalar_lea.vmem %s1, 3831
  %1706 = vst.msk [vmem:[%s1705] sm:$0xfc] %vm1702, %v1701
  %s1707 = scalar_lea.vmem %s0, 4152
  %v1708 = vld [vmem:[%s1707] sm:$0x1f]
  %vm1709 = vcmask 785408
  %s1710 = scalar_lea.vmem %s1, 3839
  %1711 = vst.msk [vmem:[%s1710] ss:$9 sm:$0x3] %vm1709, %v1708
  %s1712 = scalar_lea.vmem %s1, 3847
  %1713 = vst.msk [vmem:[%s1712] sm:$0x1c] %vm1709, %v1708
  %s1714 = scalar_lea.vmem %s0, 4168
  %v1715 = vld [vmem:[%s1714] sm:$0xff]
  %vm1716 = vcmask 785408
  %s1717 = scalar_lea.vmem %s1, 3852
  %1718 = vst.msk [vmem:[%s1717] sm:$0xf] %vm1716, %v1715
  %s1719 = scalar_lea.vmem %s1, 3860
  %1720 = vst.msk [vmem:[%s1719] sm:$0xf0] %vm1716, %v1715
  %s1721 = scalar_lea.vmem %s0, 4184
  %v1722 = vld [vmem:[%s1721] sm:$0xff]
  %vm1723 = vcmask 785408
  %s1724 = scalar_lea.vmem %s1, 3868
  %1725 = vst.msk [vmem:[%s1724] sm:$0xf] %vm1723, %v1722
  %s1726 = scalar_lea.vmem %s1, 3876
  %1727 = vst.msk [vmem:[%s1726] sm:$0xf0] %vm1723, %v1722
  %s1728 = scalar_lea.vmem %s0, 4200
  %v1729 = vld [vmem:[%s1728] sm:$0xff]
  %vm1730 = vcmask 785408
  %s1731 = scalar_lea.vmem %s1, 3884
  %1732 = vst.msk [vmem:[%s1731] sm:$0xf] %vm1730, %v1729
  %s1733 = scalar_lea.vmem %s1, 3892
  %1734 = vst.msk [vmem:[%s1733] sm:$0xf0] %vm1730, %v1729
  %s1735 = scalar_lea.vmem %s0, 4216
  %v1736 = vld [vmem:[%s1735] sm:$0xff]
  %vm1737 = vcmask 785408
  %s1738 = scalar_lea.vmem %s1, 3900
  %1739 = vst.msk [vmem:[%s1738] sm:$0xf] %vm1737, %v1736
  %s1740 = scalar_lea.vmem %s1, 3908
  %1741 = vst.msk [vmem:[%s1740] sm:$0xf0] %vm1737, %v1736
  %s1742 = scalar_lea.vmem %s0, 4232
  %v1743 = vld [vmem:[%s1742] sm:$0x1f]
  %vm1744 = vcmask 785408
  %s1745 = scalar_lea.vmem %s1, 3916
  %1746 = vst.msk [vmem:[%s1745] sm:$0xf] %vm1744, %v1743
  %s1747 = scalar_lea.vmem %s1, 3924
  %1748 = vst.msk [vmem:[%s1747] sm:$0x10] %vm1744, %v1743
  %s1749 = scalar_lea.vmem %s0, 4248
  %v1750 = vld [vmem:[%s1749] sm:$0xff]
  %vm1751 = vcmask 785408
  %s1752 = scalar_lea.vmem %s1, 3929
  %1753 = vst.msk [vmem:[%s1752] sm:$0x7f] %vm1751, %v1750
  %s1754 = scalar_lea.vmem %s1, 3937
  %1755 = vst.msk [vmem:[%s1754] sm:$0x80] %vm1751, %v1750
  %s1756 = scalar_lea.vmem %s0, 4264
  %v1757 = vld [vmem:[%s1756] sm:$0xff]
  %vm1758 = vcmask 785408
  %s1759 = scalar_lea.vmem %s1, 3945
  %1760 = vst.msk [vmem:[%s1759] sm:$0x7f] %vm1758, %v1757
  %s1761 = scalar_lea.vmem %s1, 3953
  %1762 = vst.msk [vmem:[%s1761] sm:$0x80] %vm1758, %v1757
  %s1763 = scalar_lea.vmem %s0, 4280
  %v1764 = vld [vmem:[%s1763] sm:$0xff]
  %vm1765 = vcmask 785408
  %s1766 = scalar_lea.vmem %s1, 3961
  %1767 = vst.msk [vmem:[%s1766] sm:$0x7f] %vm1765, %v1764
  %s1768 = scalar_lea.vmem %s1, 3969
  %1769 = vst.msk [vmem:[%s1768] sm:$0x80] %vm1765, %v1764
  %s1770 = scalar_lea.vmem %s0, 4296
  %v1771 = vld [vmem:[%s1770] sm:$0xff]
  %vm1772 = vcmask 785408
  %s1773 = scalar_lea.vmem %s1, 3977
  %1774 = vst.msk [vmem:[%s1773] sm:$0x7f] %vm1772, %v1771
  %s1775 = scalar_lea.vmem %s1, 3985
  %1776 = vst.msk [vmem:[%s1775] sm:$0x80] %vm1772, %v1771
  %s1777 = scalar_lea.vmem %s0, 4312
  %v1778 = vld [vmem:[%s1777] sm:$0x1f]
  %vm1779 = vcmask 785408
  %s1780 = scalar_lea.vmem %s1, 3993
  %1781 = vst.msk [vmem:[%s1780] sm:$0x1f] %vm1779, %v1778
  %s1782 = scalar_lea.vmem %s0, 4328
  %v1783 = vld [vmem:[%s1782] sm:$0xff]
  %vm1784 = vcmask 785408
  %s1785 = scalar_lea.vmem %s1, 3998
  %1786 = vst.msk [vmem:[%s1785] sm:$0x3] %vm1784, %v1783
  %s1787 = scalar_lea.vmem %s1, 4006
  %1788 = vst.msk [vmem:[%s1787] sm:$0xfc] %vm1784, %v1783
  %s1789 = scalar_lea.vmem %s0, 4344
  %v1790 = vld [vmem:[%s1789] sm:$0xff]
  %vm1791 = vcmask 785408
  %s1792 = scalar_lea.vmem %s1, 4014
  %1793 = vst.msk [vmem:[%s1792] sm:$0x3] %vm1791, %v1790
  %s1794 = scalar_lea.vmem %s1, 4022
  %1795 = vst.msk [vmem:[%s1794] sm:$0xfc] %vm1791, %v1790
  %s1796 = scalar_lea.vmem %s0, 4360
  %v1797 = vld [vmem:[%s1796] sm:$0xff]
  %vm1798 = vcmask 785408
  %s1799 = scalar_lea.vmem %s1, 4030
  %1800 = vst.msk [vmem:[%s1799] sm:$0x3] %vm1798, %v1797
  %s1801 = scalar_lea.vmem %s1, 4038
  %1802 = vst.msk [vmem:[%s1801] sm:$0xfc] %vm1798, %v1797
  %s1803 = scalar_lea.vmem %s0, 4376
  %v1804 = vld [vmem:[%s1803] sm:$0xff]
  %vm1805 = vcmask 785408
  %s1806 = scalar_lea.vmem %s1, 4046
  %1807 = vst.msk [vmem:[%s1806] sm:$0x3] %vm1805, %v1804
  %s1808 = scalar_lea.vmem %s1, 4054
  %1809 = vst.msk [vmem:[%s1808] sm:$0xfc] %vm1805, %v1804
  %s1810 = scalar_lea.vmem %s0, 4392
  %v1811 = vld [vmem:[%s1810] sm:$0x1f]
  %vm1812 = vcmask 785408
  %s1813 = scalar_lea.vmem %s1, 4062
  %1814 = vst.msk [vmem:[%s1813] sm:$0x3] %vm1812, %v1811
  %s1815 = scalar_lea.vmem %s1, 4070
  %1816 = vst.msk [vmem:[%s1815] sm:$0x1c] %vm1812, %v1811
  %s1817 = scalar_lea.vmem %s0, 4408
  %v1818 = vld [vmem:[%s1817] sm:$0xff]
  %vm1819 = vcmask 785408
  %s1820 = scalar_lea.vmem %s1, 4075
  %1821 = vst.msk [vmem:[%s1820] sm:$0x1f] %vm1819, %v1818
  %s1822 = scalar_lea.vmem %s1, 4083
  %1823 = vst.msk [vmem:[%s1822] sm:$0xe0] %vm1819, %v1818
  %s1824 = scalar_lea.vmem %s0, 4424
  %v1825 = vld [vmem:[%s1824] sm:$0xff]
  %vm1826 = vcmask 785408
  %s1827 = scalar_lea.vmem %s1, 4091
  %1828 = vst.msk [vmem:[%s1827] sm:$0x1f] %vm1826, %v1825
  %s1829 = scalar_lea.vmem %s1, 4099
  %1830 = vst.msk [vmem:[%s1829] sm:$0xe0] %vm1826, %v1825
  %s1831 = scalar_lea.vmem %s0, 4440
  %v1832 = vld [vmem:[%s1831] sm:$0xff]
  %vm1833 = vcmask 785408
  %s1834 = scalar_lea.vmem %s1, 4107
  %1835 = vst.msk [vmem:[%s1834] sm:$0x1f] %vm1833, %v1832
  %s1836 = scalar_lea.vmem %s1, 4115
  %1837 = vst.msk [vmem:[%s1836] sm:$0xe0] %vm1833, %v1832
  %s1838 = scalar_lea.vmem %s0, 4456
  %v1839 = vld [vmem:[%s1838] sm:$0xff]
  %vm1840 = vcmask 785408
  %s1841 = scalar_lea.vmem %s1, 4123
  %1842 = vst.msk [vmem:[%s1841] sm:$0x1f] %vm1840, %v1839
  %s1843 = scalar_lea.vmem %s1, 4131
  %1844 = vst.msk [vmem:[%s1843] sm:$0xe0] %vm1840, %v1839
  %s1845 = scalar_lea.vmem %s0, 4472
  %v1846 = vld [vmem:[%s1845] sm:$0x1f]
  %vm1847 = vcmask 785408
  %s1848 = scalar_lea.vmem %s1, 4139
  %1849 = vst.msk [vmem:[%s1848] sm:$0x1f] %vm1847, %v1846
  %s1850 = scalar_lea.vmem %s0, 4488
  %v1851 = vld [vmem:[%s1850] sm:$0xff]
  %vm1852 = vcmask 785408
  %s1853 = scalar_lea.vmem %s1, 4152
  %1854 = vst.msk [vmem:[%s1853] sm:$0xff] %vm1852, %v1851
  %s1855 = scalar_lea.vmem %s0, 4504
  %v1856 = vld [vmem:[%s1855] sm:$0xff]
  %vm1857 = vcmask 785408
  %s1858 = scalar_lea.vmem %s1, 4168
  %1859 = vst.msk [vmem:[%s1858] sm:$0xff] %vm1857, %v1856
  %s1860 = scalar_lea.vmem %s0, 4520
  %v1861 = vld [vmem:[%s1860] sm:$0xff]
  %vm1862 = vcmask 785408
  %s1863 = scalar_lea.vmem %s1, 4184
  %1864 = vst.msk [vmem:[%s1863] sm:$0xff] %vm1862, %v1861
  %s1865 = scalar_lea.vmem %s0, 4536
  %v1866 = vld [vmem:[%s1865] sm:$0xff]
  %vm1867 = vcmask 785408
  %s1868 = scalar_lea.vmem %s1, 4200
  %1869 = vst.msk [vmem:[%s1868] sm:$0xff] %vm1867, %v1866
  %s1870 = scalar_lea.vmem %s0, 4552
  %v1871 = vld [vmem:[%s1870] sm:$0x1f]
  %vm1872 = vcmask 785408
  %s1873 = scalar_lea.vmem %s1, 4216
  %1874 = vst.msk [vmem:[%s1873] sm:$0x1f] %vm1872, %v1871
  %s1875 = scalar_lea.vmem %s0, 4568
  %v1876 = vld [vmem:[%s1875] sm:$0xff]
  %vm1877 = vcmask 785408
  %s1878 = scalar_lea.vmem %s1, 4221
  %1879 = vst.msk [vmem:[%s1878] sm:$0x7] %vm1877, %v1876
  %s1880 = scalar_lea.vmem %s1, 4229
  %1881 = vst.msk [vmem:[%s1880] sm:$0xf8] %vm1877, %v1876
  %s1882 = scalar_lea.vmem %s0, 4584
  %v1883 = vld [vmem:[%s1882] sm:$0xff]
  %vm1884 = vcmask 785408
  %s1885 = scalar_lea.vmem %s1, 4237
  %1886 = vst.msk [vmem:[%s1885] sm:$0x7] %vm1884, %v1883
  %s1887 = scalar_lea.vmem %s1, 4245
  %1888 = vst.msk [vmem:[%s1887] sm:$0xf8] %vm1884, %v1883
  %s1889 = scalar_lea.vmem %s0, 4600
  %v1890 = vld [vmem:[%s1889] sm:$0xff]
  %vm1891 = vcmask 785408
  %s1892 = scalar_lea.vmem %s1, 4253
  %1893 = vst.msk [vmem:[%s1892] sm:$0x7] %vm1891, %v1890
  %s1894 = scalar_lea.vmem %s1, 4261
  %1895 = vst.msk [vmem:[%s1894] sm:$0xf8] %vm1891, %v1890
  %s1896 = scalar_lea.vmem %s0, 4616
  %v1897 = vld [vmem:[%s1896] sm:$0xff]
  %vm1898 = vcmask 785408
  %s1899 = scalar_lea.vmem %s1, 4269
  %1900 = vst.msk [vmem:[%s1899] sm:$0x7] %vm1898, %v1897
  %s1901 = scalar_lea.vmem %s1, 4277
  %1902 = vst.msk [vmem:[%s1901] sm:$0xf8] %vm1898, %v1897
  %s1903 = scalar_lea.vmem %s0, 4632
  %v1904 = vld [vmem:[%s1903] sm:$0x1f]
  %vm1905 = vcmask 785408
  %s1906 = scalar_lea.vmem %s1, 4285
  %1907 = vst.msk [vmem:[%s1906] sm:$0x7] %vm1905, %v1904
  %s1908 = scalar_lea.vmem %s1, 4293
  %1909 = vst.msk [vmem:[%s1908] sm:$0x18] %vm1905, %v1904
  %s1910 = scalar_lea.vmem %s0, 4648
  %v1911 = vld [vmem:[%s1910] sm:$0xff]
  %vm1912 = vcmask 785408
  %s1913 = scalar_lea.vmem %s1, 4298
  %1914 = vst.msk [vmem:[%s1913] sm:$0x3f] %vm1912, %v1911
  %s1915 = scalar_lea.vmem %s1, 4306
  %1916 = vst.msk [vmem:[%s1915] sm:$0xc0] %vm1912, %v1911
  %s1917 = scalar_lea.vmem %s0, 4664
  %v1918 = vld [vmem:[%s1917] sm:$0xff]
  %vm1919 = vcmask 785408
  %s1920 = scalar_lea.vmem %s1, 4314
  %1921 = vst.msk [vmem:[%s1920] sm:$0x3f] %vm1919, %v1918
  %s1922 = scalar_lea.vmem %s1, 4322
  %1923 = vst.msk [vmem:[%s1922] sm:$0xc0] %vm1919, %v1918
  %s1924 = scalar_lea.vmem %s0, 4680
  %v1925 = vld [vmem:[%s1924] sm:$0xff]
  %vm1926 = vcmask 785408
  %s1927 = scalar_lea.vmem %s1, 4330
  %1928 = vst.msk [vmem:[%s1927] sm:$0x3f] %vm1926, %v1925
  %s1929 = scalar_lea.vmem %s1, 4338
  %1930 = vst.msk [vmem:[%s1929] sm:$0xc0] %vm1926, %v1925
  %s1931 = scalar_lea.vmem %s0, 4696
  %v1932 = vld [vmem:[%s1931] sm:$0xff]
  %vm1933 = vcmask 785408
  %s1934 = scalar_lea.vmem %s1, 4346
  %1935 = vst.msk [vmem:[%s1934] sm:$0x3f] %vm1933, %v1932
  %s1936 = scalar_lea.vmem %s1, 4354
  %1937 = vst.msk [vmem:[%s1936] sm:$0xc0] %vm1933, %v1932
  %s1938 = scalar_lea.vmem %s0, 4712
  %v1939 = vld [vmem:[%s1938] sm:$0x1f]
  %vm1940 = vcmask 785408
  %s1941 = scalar_lea.vmem %s1, 4362
  %1942 = vst.msk [vmem:[%s1941] sm:$0x1f] %vm1940, %v1939
  %s1943 = scalar_lea.vmem %s0, 4728
  %v1944 = vld [vmem:[%s1943] sm:$0xff]
  %vm1945 = vcmask 785408
  %s1946 = scalar_lea.vmem %s1, 4367
  %1947 = vst.msk [vmem:[%s1946] ss:$9 sm:$0x3] %vm1945, %v1944
  %s1948 = scalar_lea.vmem %s1, 4375
  %1949 = vst.msk [vmem:[%s1948] sm:$0xfc] %vm1945, %v1944
  %s1950 = scalar_lea.vmem %s0, 4744
  %v1951 = vld [vmem:[%s1950] sm:$0xff]
  %vm1952 = vcmask 785408
  %s1953 = scalar_lea.vmem %s1, 4383
  %1954 = vst.msk [vmem:[%s1953] ss:$9 sm:$0x3] %vm1952, %v1951
  %s1955 = scalar_lea.vmem %s1, 4391
  %1956 = vst.msk [vmem:[%s1955] sm:$0xfc] %vm1952, %v1951
  %s1957 = scalar_lea.vmem %s0, 4760
  %v1958 = vld [vmem:[%s1957] sm:$0xff]
  %vm1959 = vcmask 785408
  %s1960 = scalar_lea.vmem %s1, 4399
  %1961 = vst.msk [vmem:[%s1960] ss:$9 sm:$0x3] %vm1959, %v1958
  %s1962 = scalar_lea.vmem %s1, 4407
  %1963 = vst.msk [vmem:[%s1962] sm:$0xfc] %vm1959, %v1958
  %s1964 = scalar_lea.vmem %s0, 4776
  %v1965 = vld [vmem:[%s1964] sm:$0xff]
  %vm1966 = vcmask 785408
  %s1967 = scalar_lea.vmem %s1, 4415
  %1968 = vst.msk [vmem:[%s1967] ss:$9 sm:$0x3] %vm1966, %v1965
  %s1969 = scalar_lea.vmem %s1, 4423
  %1970 = vst.msk [vmem:[%s1969] sm:$0xfc] %vm1966, %v1965
  %s1971 = scalar_lea.vmem %s0, 4792
  %v1972 = vld [vmem:[%s1971] sm:$0x1f]
  %vm1973 = vcmask 785408
  %s1974 = scalar_lea.vmem %s1, 4431
  %1975 = vst.msk [vmem:[%s1974] ss:$9 sm:$0x3] %vm1973, %v1972
  %s1976 = scalar_lea.vmem %s1, 4439
  %1977 = vst.msk [vmem:[%s1976] sm:$0x1c] %vm1973, %v1972
  %s1978 = scalar_lea.vmem %s0, 4808
  %v1979 = vld [vmem:[%s1978] sm:$0xff]
  %vm1980 = vcmask 785408
  %s1981 = scalar_lea.vmem %s1, 4444
  %1982 = vst.msk [vmem:[%s1981] sm:$0xf] %vm1980, %v1979
  %s1983 = scalar_lea.vmem %s1, 4452
  %1984 = vst.msk [vmem:[%s1983] sm:$0xf0] %vm1980, %v1979
  %s1985 = scalar_lea.vmem %s0, 4824
  %v1986 = vld [vmem:[%s1985] sm:$0xff]
  %vm1987 = vcmask 785408
  %s1988 = scalar_lea.vmem %s1, 4460
  %1989 = vst.msk [vmem:[%s1988] sm:$0xf] %vm1987, %v1986
  %s1990 = scalar_lea.vmem %s1, 4468
  %1991 = vst.msk [vmem:[%s1990] sm:$0xf0] %vm1987, %v1986
  %s1992 = scalar_lea.vmem %s0, 4840
  %v1993 = vld [vmem:[%s1992] sm:$0xff]
  %vm1994 = vcmask 785408
  %s1995 = scalar_lea.vmem %s1, 4476
  %1996 = vst.msk [vmem:[%s1995] sm:$0xf] %vm1994, %v1993
  %s1997 = scalar_lea.vmem %s1, 4484
  %1998 = vst.msk [vmem:[%s1997] sm:$0xf0] %vm1994, %v1993
  %s1999 = scalar_lea.vmem %s0, 4856
  %v2000 = vld [vmem:[%s1999] sm:$0xff]
  %vm2001 = vcmask 785408
  %s2002 = scalar_lea.vmem %s1, 4492
  %2003 = vst.msk [vmem:[%s2002] sm:$0xf] %vm2001, %v2000
  %s2004 = scalar_lea.vmem %s1, 4500
  %2005 = vst.msk [vmem:[%s2004] sm:$0xf0] %vm2001, %v2000
  %s2006 = scalar_lea.vmem %s0, 4872
  %v2007 = vld [vmem:[%s2006] sm:$0x1f]
  %vm2008 = vcmask 785408
  %s2009 = scalar_lea.vmem %s1, 4508
  %2010 = vst.msk [vmem:[%s2009] sm:$0xf] %vm2008, %v2007
  %s2011 = scalar_lea.vmem %s1, 4516
  %2012 = vst.msk [vmem:[%s2011] sm:$0x10] %vm2008, %v2007
  %s2013 = scalar_lea.vmem %s0, 4888
  %v2014 = vld [vmem:[%s2013] sm:$0xff]
  %vm2015 = vcmask 785408
  %s2016 = scalar_lea.vmem %s1, 4521
  %2017 = vst.msk [vmem:[%s2016] sm:$0x7f] %vm2015, %v2014
  %s2018 = scalar_lea.vmem %s1, 4529
  %2019 = vst.msk [vmem:[%s2018] sm:$0x80] %vm2015, %v2014
  %s2020 = scalar_lea.vmem %s0, 4904
  %v2021 = vld [vmem:[%s2020] sm:$0xff]
  %vm2022 = vcmask 785408
  %s2023 = scalar_lea.vmem %s1, 4537
  %2024 = vst.msk [vmem:[%s2023] sm:$0x7f] %vm2022, %v2021
  %s2025 = scalar_lea.vmem %s1, 4545
  %2026 = vst.msk [vmem:[%s2025] sm:$0x80] %vm2022, %v2021
  %s2027 = scalar_lea.vmem %s0, 4920
  %v2028 = vld [vmem:[%s2027] sm:$0xff]
  %vm2029 = vcmask 785408
  %s2030 = scalar_lea.vmem %s1, 4553
  %2031 = vst.msk [vmem:[%s2030] sm:$0x7f] %vm2029, %v2028
  %s2032 = scalar_lea.vmem %s1, 4561
  %2033 = vst.msk [vmem:[%s2032] sm:$0x80] %vm2029, %v2028
  %s2034 = scalar_lea.vmem %s0, 4936
  %v2035 = vld [vmem:[%s2034] sm:$0xff]
  %vm2036 = vcmask 785408
  %s2037 = scalar_lea.vmem %s1, 4569
  %2038 = vst.msk [vmem:[%s2037] sm:$0x7f] %vm2036, %v2035
  %s2039 = scalar_lea.vmem %s1, 4577
  %2040 = vst.msk [vmem:[%s2039] sm:$0x80] %vm2036, %v2035
  %s2041 = scalar_lea.vmem %s0, 4952
  %v2042 = vld [vmem:[%s2041] sm:$0x1f]
  %vm2043 = vcmask 785408
  %s2044 = scalar_lea.vmem %s1, 4585
  %2045 = vst.msk [vmem:[%s2044] sm:$0x1f] %vm2043, %v2042
  %s2046 = scalar_lea.vmem %s0, 4968
  %v2047 = vld [vmem:[%s2046] sm:$0xff]
  %vm2048 = vcmask 785408
  %s2049 = scalar_lea.vmem %s1, 4590
  %2050 = vst.msk [vmem:[%s2049] sm:$0x3] %vm2048, %v2047
  %s2051 = scalar_lea.vmem %s1, 4598
  %2052 = vst.msk [vmem:[%s2051] sm:$0xfc] %vm2048, %v2047
  %s2053 = scalar_lea.vmem %s0, 4984
  %v2054 = vld [vmem:[%s2053] sm:$0xff]
  %vm2055 = vcmask 785408
  %s2056 = scalar_lea.vmem %s1, 4606
  %2057 = vst.msk [vmem:[%s2056] sm:$0x3] %vm2055, %v2054
  %s2058 = scalar_lea.vmem %s1, 4614
  %2059 = vst.msk [vmem:[%s2058] sm:$0xfc] %vm2055, %v2054
  %s2060 = scalar_lea.vmem %s0, 5000
  %v2061 = vld [vmem:[%s2060] sm:$0xff]
  %vm2062 = vcmask 785408
  %s2063 = scalar_lea.vmem %s1, 4622
  %2064 = vst.msk [vmem:[%s2063] sm:$0x3] %vm2062, %v2061
  %s2065 = scalar_lea.vmem %s1, 4630
  %2066 = vst.msk [vmem:[%s2065] sm:$0xfc] %vm2062, %v2061
  %s2067 = scalar_lea.vmem %s0, 5016
  %v2068 = vld [vmem:[%s2067] sm:$0xff]
  %vm2069 = vcmask 785408
  %s2070 = scalar_lea.vmem %s1, 4638
  %2071 = vst.msk [vmem:[%s2070] sm:$0x3] %vm2069, %v2068
  %s2072 = scalar_lea.vmem %s1, 4646
  %2073 = vst.msk [vmem:[%s2072] sm:$0xfc] %vm2069, %v2068
  %s2074 = scalar_lea.vmem %s0, 5032
  %v2075 = vld [vmem:[%s2074] sm:$0x1f]
  %vm2076 = vcmask 785408
  %s2077 = scalar_lea.vmem %s1, 4654
  %2078 = vst.msk [vmem:[%s2077] sm:$0x3] %vm2076, %v2075
  %s2079 = scalar_lea.vmem %s1, 4662
  %2080 = vst.msk [vmem:[%s2079] sm:$0x1c] %vm2076, %v2075
  %s2081 = scalar_lea.vmem %s0, 5048
  %v2082 = vld [vmem:[%s2081] sm:$0xff]
  %vm2083 = vcmask 785408
  %s2084 = scalar_lea.vmem %s1, 4667
  %2085 = vst.msk [vmem:[%s2084] sm:$0x1f] %vm2083, %v2082
  %s2086 = scalar_lea.vmem %s1, 4675
  %2087 = vst.msk [vmem:[%s2086] sm:$0xe0] %vm2083, %v2082
  %s2088 = scalar_lea.vmem %s0, 5064
  %v2089 = vld [vmem:[%s2088] sm:$0xff]
  %vm2090 = vcmask 785408
  %s2091 = scalar_lea.vmem %s1, 4683
  %2092 = vst.msk [vmem:[%s2091] sm:$0x1f] %vm2090, %v2089
  %s2093 = scalar_lea.vmem %s1, 4691
  %2094 = vst.msk [vmem:[%s2093] sm:$0xe0] %vm2090, %v2089
  %s2095 = scalar_lea.vmem %s0, 5080
  %v2096 = vld [vmem:[%s2095] sm:$0xff]
  %vm2097 = vcmask 785408
  %s2098 = scalar_lea.vmem %s1, 4699
  %2099 = vst.msk [vmem:[%s2098] sm:$0x1f] %vm2097, %v2096
  %s2100 = scalar_lea.vmem %s1, 4707
  %2101 = vst.msk [vmem:[%s2100] sm:$0xe0] %vm2097, %v2096
  %s2102 = scalar_lea.vmem %s0, 5096
  %v2103 = vld [vmem:[%s2102] sm:$0xff]
  %vm2104 = vcmask 785408
  %s2105 = scalar_lea.vmem %s1, 4715
  %2106 = vst.msk [vmem:[%s2105] sm:$0x1f] %vm2104, %v2103
  %s2107 = scalar_lea.vmem %s1, 4723
  %2108 = vst.msk [vmem:[%s2107] sm:$0xe0] %vm2104, %v2103
  %s2109 = scalar_lea.vmem %s0, 5112
  %v2110 = vld [vmem:[%s2109] sm:$0x1f]
  %vm2111 = vcmask 785408
  %s2112 = scalar_lea.vmem %s1, 4731
  %2113 = vst.msk [vmem:[%s2112] sm:$0x1f] %vm2111, %v2110
  %s2114 = scalar_lea.vmem %s0, 5128
  %v2115 = vld [vmem:[%s2114] sm:$0xff]
  %vm2116 = vcmask 785408
  %s2117 = scalar_lea.vmem %s1, 4744
  %2118 = vst.msk [vmem:[%s2117] sm:$0xff] %vm2116, %v2115
  %s2119 = scalar_lea.vmem %s0, 5144
  %v2120 = vld [vmem:[%s2119] sm:$0xff]
  %vm2121 = vcmask 785408
  %s2122 = scalar_lea.vmem %s1, 4760
  %2123 = vst.msk [vmem:[%s2122] sm:$0xff] %vm2121, %v2120
  %s2124 = scalar_lea.vmem %s0, 5160
  %v2125 = vld [vmem:[%s2124] sm:$0xff]
  %vm2126 = vcmask 785408
  %s2127 = scalar_lea.vmem %s1, 4776
  %2128 = vst.msk [vmem:[%s2127] sm:$0xff] %vm2126, %v2125
  %s2129 = scalar_lea.vmem %s0, 5176
  %v2130 = vld [vmem:[%s2129] sm:$0xff]
  %vm2131 = vcmask 785408
  %s2132 = scalar_lea.vmem %s1, 4792
  %2133 = vst.msk [vmem:[%s2132] sm:$0xff] %vm2131, %v2130
  %s2134 = scalar_lea.vmem %s0, 5192
  %v2135 = vld [vmem:[%s2134] sm:$0x1f]
  %vm2136 = vcmask 785408
  %s2137 = scalar_lea.vmem %s1, 4808
  %2138 = vst.msk [vmem:[%s2137] sm:$0x1f] %vm2136, %v2135
  %s2139 = scalar_lea.vmem %s0, 5208
  %v2140 = vld [vmem:[%s2139] sm:$0xff]
  %vm2141 = vcmask 785408
  %s2142 = scalar_lea.vmem %s1, 4813
  %2143 = vst.msk [vmem:[%s2142] sm:$0x7] %vm2141, %v2140
  %s2144 = scalar_lea.vmem %s1, 4821
  %2145 = vst.msk [vmem:[%s2144] sm:$0xf8] %vm2141, %v2140
  %s2146 = scalar_lea.vmem %s0, 5224
  %v2147 = vld [vmem:[%s2146] sm:$0xff]
  %vm2148 = vcmask 785408
  %s2149 = scalar_lea.vmem %s1, 4829
  %2150 = vst.msk [vmem:[%s2149] sm:$0x7] %vm2148, %v2147
  %s2151 = scalar_lea.vmem %s1, 4837
  %2152 = vst.msk [vmem:[%s2151] sm:$0xf8] %vm2148, %v2147
  %s2153 = scalar_lea.vmem %s0, 5240
  %v2154 = vld [vmem:[%s2153] sm:$0xff]
  %vm2155 = vcmask 785408
  %s2156 = scalar_lea.vmem %s1, 4845
  %2157 = vst.msk [vmem:[%s2156] sm:$0x7] %vm2155, %v2154
  %s2158 = scalar_lea.vmem %s1, 4853
  %2159 = vst.msk [vmem:[%s2158] sm:$0xf8] %vm2155, %v2154
  %s2160 = scalar_lea.vmem %s0, 5256
  %v2161 = vld [vmem:[%s2160] sm:$0xff]
  %vm2162 = vcmask 785408
  %s2163 = scalar_lea.vmem %s1, 4861
  %2164 = vst.msk [vmem:[%s2163] sm:$0x7] %vm2162, %v2161
  %s2165 = scalar_lea.vmem %s1, 4869
  %2166 = vst.msk [vmem:[%s2165] sm:$0xf8] %vm2162, %v2161
  %s2167 = scalar_lea.vmem %s0, 5272
  %v2168 = vld [vmem:[%s2167] sm:$0x1f]
  %vm2169 = vcmask 785408
  %s2170 = scalar_lea.vmem %s1, 4877
  %2171 = vst.msk [vmem:[%s2170] sm:$0x7] %vm2169, %v2168
  %s2172 = scalar_lea.vmem %s1, 4885
  %2173 = vst.msk [vmem:[%s2172] sm:$0x18] %vm2169, %v2168
  %s2174 = scalar_lea.vmem %s0, 5288
  %v2175 = vld [vmem:[%s2174] sm:$0xff]
  %vm2176 = vcmask 785408
  %s2177 = scalar_lea.vmem %s1, 4890
  %2178 = vst.msk [vmem:[%s2177] sm:$0x3f] %vm2176, %v2175
  %s2179 = scalar_lea.vmem %s1, 4898
  %2180 = vst.msk [vmem:[%s2179] sm:$0xc0] %vm2176, %v2175
  %s2181 = scalar_lea.vmem %s0, 5304
  %v2182 = vld [vmem:[%s2181] sm:$0xff]
  %vm2183 = vcmask 785408
  %s2184 = scalar_lea.vmem %s1, 4906
  %2185 = vst.msk [vmem:[%s2184] sm:$0x3f] %vm2183, %v2182
  %s2186 = scalar_lea.vmem %s1, 4914
  %2187 = vst.msk [vmem:[%s2186] sm:$0xc0] %vm2183, %v2182
  %s2188 = scalar_lea.vmem %s0, 5320
  %v2189 = vld [vmem:[%s2188] sm:$0xff]
  %vm2190 = vcmask 785408
  %s2191 = scalar_lea.vmem %s1, 4922
  %2192 = vst.msk [vmem:[%s2191] sm:$0x3f] %vm2190, %v2189
  %s2193 = scalar_lea.vmem %s1, 4930
  %2194 = vst.msk [vmem:[%s2193] sm:$0xc0] %vm2190, %v2189
  %s2195 = scalar_lea.vmem %s0, 5336
  %v2196 = vld [vmem:[%s2195] sm:$0xff]
  %vm2197 = vcmask 785408
  %s2198 = scalar_lea.vmem %s1, 4938
  %2199 = vst.msk [vmem:[%s2198] sm:$0x3f] %vm2197, %v2196
  %s2200 = scalar_lea.vmem %s1, 4946
  %2201 = vst.msk [vmem:[%s2200] sm:$0xc0] %vm2197, %v2196
  %s2202 = scalar_lea.vmem %s0, 5352
  %v2203 = vld [vmem:[%s2202] sm:$0x1f]
  %vm2204 = vcmask 785408
  %s2205 = scalar_lea.vmem %s1, 4954
  %2206 = vst.msk [vmem:[%s2205] sm:$0x1f] %vm2204, %v2203
  %s2207 = scalar_lea.vmem %s0, 5368
  %v2208 = vld [vmem:[%s2207] sm:$0xff]
  %vm2209 = vcmask 785408
  %s2210 = scalar_lea.vmem %s1, 4959
  %2211 = vst.msk [vmem:[%s2210] ss:$9 sm:$0x3] %vm2209, %v2208
  %s2212 = scalar_lea.vmem %s1, 4967
  %2213 = vst.msk [vmem:[%s2212] sm:$0xfc] %vm2209, %v2208
  %s2214 = scalar_lea.vmem %s0, 5384
  %v2215 = vld [vmem:[%s2214] sm:$0xff]
  %vm2216 = vcmask 785408
  %s2217 = scalar_lea.vmem %s1, 4975
  %2218 = vst.msk [vmem:[%s2217] ss:$9 sm:$0x3] %vm2216, %v2215
  %s2219 = scalar_lea.vmem %s1, 4983
  %2220 = vst.msk [vmem:[%s2219] sm:$0xfc] %vm2216, %v2215
  %s2221 = scalar_lea.vmem %s0, 5400
  %v2222 = vld [vmem:[%s2221] sm:$0xff]
  %vm2223 = vcmask 785408
  %s2224 = scalar_lea.vmem %s1, 4991
  %2225 = vst.msk [vmem:[%s2224] ss:$9 sm:$0x3] %vm2223, %v2222
  %s2226 = scalar_lea.vmem %s1, 4999
  %2227 = vst.msk [vmem:[%s2226] sm:$0xfc] %vm2223, %v2222
  %s2228 = scalar_lea.vmem %s0, 5416
  %v2229 = vld [vmem:[%s2228] sm:$0xff]
  %vm2230 = vcmask 785408
  %s2231 = scalar_lea.vmem %s1, 5007
  %2232 = vst.msk [vmem:[%s2231] ss:$9 sm:$0x3] %vm2230, %v2229
  %s2233 = scalar_lea.vmem %s1, 5015
  %2234 = vst.msk [vmem:[%s2233] sm:$0xfc] %vm2230, %v2229
  %s2235 = scalar_lea.vmem %s0, 5432
  %v2236 = vld [vmem:[%s2235] sm:$0x1f]
  %vm2237 = vcmask 785408
  %s2238 = scalar_lea.vmem %s1, 5023
  %2239 = vst.msk [vmem:[%s2238] ss:$9 sm:$0x3] %vm2237, %v2236
  %s2240 = scalar_lea.vmem %s1, 5031
  %2241 = vst.msk [vmem:[%s2240] sm:$0x1c] %vm2237, %v2236
  %s2242 = scalar_lea.vmem %s0, 5448
  %v2243 = vld [vmem:[%s2242] sm:$0xff]
  %vm2244 = vcmask 785408
  %s2245 = scalar_lea.vmem %s1, 5036
  %2246 = vst.msk [vmem:[%s2245] sm:$0xf] %vm2244, %v2243
  %s2247 = scalar_lea.vmem %s1, 5044
  %2248 = vst.msk [vmem:[%s2247] sm:$0xf0] %vm2244, %v2243
  %s2249 = scalar_lea.vmem %s0, 5464
  %v2250 = vld [vmem:[%s2249] sm:$0xff]
  %vm2251 = vcmask 785408
  %s2252 = scalar_lea.vmem %s1, 5052
  %2253 = vst.msk [vmem:[%s2252] sm:$0xf] %vm2251, %v2250
  %s2254 = scalar_lea.vmem %s1, 5060
  %2255 = vst.msk [vmem:[%s2254] sm:$0xf0] %vm2251, %v2250
  %s2256 = scalar_lea.vmem %s0, 5480
  %v2257 = vld [vmem:[%s2256] sm:$0xff]
  %vm2258 = vcmask 785408
  %s2259 = scalar_lea.vmem %s1, 5068
  %2260 = vst.msk [vmem:[%s2259] sm:$0xf] %vm2258, %v2257
  %s2261 = scalar_lea.vmem %s1, 5076
  %2262 = vst.msk [vmem:[%s2261] sm:$0xf0] %vm2258, %v2257
  %s2263 = scalar_lea.vmem %s0, 5496
  %v2264 = vld [vmem:[%s2263] sm:$0xff]
  %vm2265 = vcmask 785408
  %s2266 = scalar_lea.vmem %s1, 5084
  %2267 = vst.msk [vmem:[%s2266] sm:$0xf] %vm2265, %v2264
  %s2268 = scalar_lea.vmem %s1, 5092
  %2269 = vst.msk [vmem:[%s2268] sm:$0xf0] %vm2265, %v2264
  %s2270 = scalar_lea.vmem %s0, 5512
  %v2271 = vld [vmem:[%s2270] sm:$0x1f]
  %vm2272 = vcmask 785408
  %s2273 = scalar_lea.vmem %s1, 5100
  %2274 = vst.msk [vmem:[%s2273] sm:$0xf] %vm2272, %v2271
  %s2275 = scalar_lea.vmem %s1, 5108
  %2276 = vst.msk [vmem:[%s2275] sm:$0x10] %vm2272, %v2271
  %s2277 = scalar_lea.vmem %s0, 5528
  %v2278 = vld [vmem:[%s2277] sm:$0xff]
  %vm2279 = vcmask 785408
  %s2280 = scalar_lea.vmem %s1, 5113
  %2281 = vst.msk [vmem:[%s2280] sm:$0x7f] %vm2279, %v2278
  %s2282 = scalar_lea.vmem %s1, 5121
  %2283 = vst.msk [vmem:[%s2282] sm:$0x80] %vm2279, %v2278
  %s2284 = scalar_lea.vmem %s0, 5544
  %v2285 = vld [vmem:[%s2284] sm:$0xff]
  %vm2286 = vcmask 785408
  %s2287 = scalar_lea.vmem %s1, 5129
  %2288 = vst.msk [vmem:[%s2287] sm:$0x7f] %vm2286, %v2285
  %s2289 = scalar_lea.vmem %s1, 5137
  %2290 = vst.msk [vmem:[%s2289] sm:$0x80] %vm2286, %v2285
  %s2291 = scalar_lea.vmem %s0, 5560
  %v2292 = vld [vmem:[%s2291] sm:$0xff]
  %vm2293 = vcmask 785408
  %s2294 = scalar_lea.vmem %s1, 5145
  %2295 = vst.msk [vmem:[%s2294] sm:$0x7f] %vm2293, %v2292
  %s2296 = scalar_lea.vmem %s1, 5153
  %2297 = vst.msk [vmem:[%s2296] sm:$0x80] %vm2293, %v2292
  %s2298 = scalar_lea.vmem %s0, 5576
  %v2299 = vld [vmem:[%s2298] sm:$0xff]
  %vm2300 = vcmask 785408
  %s2301 = scalar_lea.vmem %s1, 5161
  %2302 = vst.msk [vmem:[%s2301] sm:$0x7f] %vm2300, %v2299
  %s2303 = scalar_lea.vmem %s1, 5169
  %2304 = vst.msk [vmem:[%s2303] sm:$0x80] %vm2300, %v2299
  %s2305 = scalar_lea.vmem %s0, 5592
  %v2306 = vld [vmem:[%s2305] sm:$0x1f]
  %vm2307 = vcmask 785408
  %s2308 = scalar_lea.vmem %s1, 5177
  %2309 = vst.msk [vmem:[%s2308] sm:$0x1f] %vm2307, %v2306
  %s2310 = scalar_lea.vmem %s0, 5608
  %v2311 = vld [vmem:[%s2310] sm:$0xff]
  %vm2312 = vcmask 785408
  %s2313 = scalar_lea.vmem %s1, 5182
  %2314 = vst.msk [vmem:[%s2313] sm:$0x3] %vm2312, %v2311
  %s2315 = scalar_lea.vmem %s1, 5190
  %2316 = vst.msk [vmem:[%s2315] sm:$0xfc] %vm2312, %v2311
  %s2317 = scalar_lea.vmem %s0, 5624
  %v2318 = vld [vmem:[%s2317] sm:$0xff]
  %vm2319 = vcmask 785408
  %s2320 = scalar_lea.vmem %s1, 5198
  %2321 = vst.msk [vmem:[%s2320] sm:$0x3] %vm2319, %v2318
  %s2322 = scalar_lea.vmem %s1, 5206
  %2323 = vst.msk [vmem:[%s2322] sm:$0xfc] %vm2319, %v2318
  %s2324 = scalar_lea.vmem %s0, 5640
  %v2325 = vld [vmem:[%s2324] sm:$0xff]
  %vm2326 = vcmask 785408
  %s2327 = scalar_lea.vmem %s1, 5214
  %2328 = vst.msk [vmem:[%s2327] sm:$0x3] %vm2326, %v2325
  %s2329 = scalar_lea.vmem %s1, 5222
  %2330 = vst.msk [vmem:[%s2329] sm:$0xfc] %vm2326, %v2325
  %s2331 = scalar_lea.vmem %s0, 5656
  %v2332 = vld [vmem:[%s2331] sm:$0xff]
  %vm2333 = vcmask 785408
  %s2334 = scalar_lea.vmem %s1, 5230
  %2335 = vst.msk [vmem:[%s2334] sm:$0x3] %vm2333, %v2332
  %s2336 = scalar_lea.vmem %s1, 5238
  %2337 = vst.msk [vmem:[%s2336] sm:$0xfc] %vm2333, %v2332
  %s2338 = scalar_lea.vmem %s0, 5672
  %v2339 = vld [vmem:[%s2338] sm:$0x1f]
  %vm2340 = vcmask 785408
  %s2341 = scalar_lea.vmem %s1, 5246
  %2342 = vst.msk [vmem:[%s2341] sm:$0x3] %vm2340, %v2339
  %s2343 = scalar_lea.vmem %s1, 5254
  %2344 = vst.msk [vmem:[%s2343] sm:$0x1c] %vm2340, %v2339
  %s2345 = scalar_lea.vmem %s0, 5688
  %v2346 = vld [vmem:[%s2345] sm:$0xff]
  %vm2347 = vcmask 785408
  %s2348 = scalar_lea.vmem %s1, 5259
  %2349 = vst.msk [vmem:[%s2348] sm:$0x1f] %vm2347, %v2346
  %s2350 = scalar_lea.vmem %s1, 5267
  %2351 = vst.msk [vmem:[%s2350] sm:$0xe0] %vm2347, %v2346
  %s2352 = scalar_lea.vmem %s0, 5704
  %v2353 = vld [vmem:[%s2352] sm:$0xff]
  %vm2354 = vcmask 785408
  %s2355 = scalar_lea.vmem %s1, 5275
  %2356 = vst.msk [vmem:[%s2355] sm:$0x1f] %vm2354, %v2353
  %s2357 = scalar_lea.vmem %s1, 5283
  %2358 = vst.msk [vmem:[%s2357] sm:$0xe0] %vm2354, %v2353
  %s2359 = scalar_lea.vmem %s0, 5720
  %v2360 = vld [vmem:[%s2359] sm:$0xff]
  %vm2361 = vcmask 785408
  %s2362 = scalar_lea.vmem %s1, 5291
  %2363 = vst.msk [vmem:[%s2362] sm:$0x1f] %vm2361, %v2360
  %s2364 = scalar_lea.vmem %s1, 5299
  %2365 = vst.msk [vmem:[%s2364] sm:$0xe0] %vm2361, %v2360
  %s2366 = scalar_lea.vmem %s0, 5736
  %v2367 = vld [vmem:[%s2366] sm:$0xff]
  %vm2368 = vcmask 785408
  %s2369 = scalar_lea.vmem %s1, 5307
  %2370 = vst.msk [vmem:[%s2369] sm:$0x1f] %vm2368, %v2367
  %s2371 = scalar_lea.vmem %s1, 5315
  %2372 = vst.msk [vmem:[%s2371] sm:$0xe0] %vm2368, %v2367
  %s2373 = scalar_lea.vmem %s0, 5752
  %v2374 = vld [vmem:[%s2373] sm:$0x1f]
  %vm2375 = vcmask 785408
  %s2376 = scalar_lea.vmem %s1, 5323
  %2377 = vst.msk [vmem:[%s2376] sm:$0x1f] %vm2375, %v2374
  %s2378 = scalar_lea.vmem %s0, 5768
  %v2379 = vld [vmem:[%s2378] sm:$0xff]
  %vm2380 = vcmask 785408
  %s2381 = scalar_lea.vmem %s1, 5336
  %2382 = vst.msk [vmem:[%s2381] sm:$0xff] %vm2380, %v2379
  %s2383 = scalar_lea.vmem %s0, 5784
  %v2384 = vld [vmem:[%s2383] sm:$0xff]
  %vm2385 = vcmask 785408
  %s2386 = scalar_lea.vmem %s1, 5352
  %2387 = vst.msk [vmem:[%s2386] sm:$0xff] %vm2385, %v2384
  %s2388 = scalar_lea.vmem %s0, 5800
  %v2389 = vld [vmem:[%s2388] sm:$0xff]
  %vm2390 = vcmask 785408
  %s2391 = scalar_lea.vmem %s1, 5368
  %2392 = vst.msk [vmem:[%s2391] sm:$0xff] %vm2390, %v2389
  %s2393 = scalar_lea.vmem %s0, 5816
  %v2394 = vld [vmem:[%s2393] sm:$0xff]
  %vm2395 = vcmask 785408
  %s2396 = scalar_lea.vmem %s1, 5384
  %2397 = vst.msk [vmem:[%s2396] sm:$0xff] %vm2395, %v2394
  %s2398 = scalar_lea.vmem %s0, 5832
  %v2399 = vld [vmem:[%s2398] sm:$0x1f]
  %vm2400 = vcmask 785408
  %s2401 = scalar_lea.vmem %s1, 5400
  %2402 = vst.msk [vmem:[%s2401] sm:$0x1f] %vm2400, %v2399
  %s2403 = scalar_lea.vmem %s0, 5848
  %v2404 = vld [vmem:[%s2403] sm:$0xff]
  %vm2405 = vcmask 785408
  %s2406 = scalar_lea.vmem %s1, 5405
  %2407 = vst.msk [vmem:[%s2406] sm:$0x7] %vm2405, %v2404
  %s2408 = scalar_lea.vmem %s1, 5413
  %2409 = vst.msk [vmem:[%s2408] sm:$0xf8] %vm2405, %v2404
  %s2410 = scalar_lea.vmem %s0, 5864
  %v2411 = vld [vmem:[%s2410] sm:$0xff]
  %vm2412 = vcmask 785408
  %s2413 = scalar_lea.vmem %s1, 5421
  %2414 = vst.msk [vmem:[%s2413] sm:$0x7] %vm2412, %v2411
  %s2415 = scalar_lea.vmem %s1, 5429
  %2416 = vst.msk [vmem:[%s2415] sm:$0xf8] %vm2412, %v2411
  %s2417 = scalar_lea.vmem %s0, 5880
  %v2418 = vld [vmem:[%s2417] sm:$0xff]
  %vm2419 = vcmask 785408
  %s2420 = scalar_lea.vmem %s1, 5437
  %2421 = vst.msk [vmem:[%s2420] sm:$0x7] %vm2419, %v2418
  %s2422 = scalar_lea.vmem %s1, 5445
  %2423 = vst.msk [vmem:[%s2422] sm:$0xf8] %vm2419, %v2418
  %s2424 = scalar_lea.vmem %s0, 5896
  %v2425 = vld [vmem:[%s2424] sm:$0xff]
  %vm2426 = vcmask 785408
  %s2427 = scalar_lea.vmem %s1, 5453
  %2428 = vst.msk [vmem:[%s2427] sm:$0x7] %vm2426, %v2425
  %s2429 = scalar_lea.vmem %s1, 5461
  %2430 = vst.msk [vmem:[%s2429] sm:$0xf8] %vm2426, %v2425
  %s2431 = scalar_lea.vmem %s0, 5912
  %v2432 = vld [vmem:[%s2431] sm:$0x1f]
  %vm2433 = vcmask 785408
  %s2434 = scalar_lea.vmem %s1, 5469
  %2435 = vst.msk [vmem:[%s2434] sm:$0x7] %vm2433, %v2432
  %s2436 = scalar_lea.vmem %s1, 5477
  %2437 = vst.msk [vmem:[%s2436] sm:$0x18] %vm2433, %v2432
  %s2438 = scalar_lea.vmem %s0, 5928
  %v2439 = vld [vmem:[%s2438] sm:$0xff]
  %vm2440 = vcmask 785408
  %s2441 = scalar_lea.vmem %s1, 5482
  %2442 = vst.msk [vmem:[%s2441] sm:$0x3f] %vm2440, %v2439
  %s2443 = scalar_lea.vmem %s1, 5490
  %2444 = vst.msk [vmem:[%s2443] sm:$0xc0] %vm2440, %v2439
  %s2445 = scalar_lea.vmem %s0, 5944
  %v2446 = vld [vmem:[%s2445] sm:$0xff]
  %vm2447 = vcmask 785408
  %s2448 = scalar_lea.vmem %s1, 5498
  %2449 = vst.msk [vmem:[%s2448] sm:$0x3f] %vm2447, %v2446
  %s2450 = scalar_lea.vmem %s1, 5506
  %2451 = vst.msk [vmem:[%s2450] sm:$0xc0] %vm2447, %v2446
  %s2452 = scalar_lea.vmem %s0, 5960
  %v2453 = vld [vmem:[%s2452] sm:$0xff]
  %vm2454 = vcmask 785408
  %s2455 = scalar_lea.vmem %s1, 5514
  %2456 = vst.msk [vmem:[%s2455] sm:$0x3f] %vm2454, %v2453
  %s2457 = scalar_lea.vmem %s1, 5522
  %2458 = vst.msk [vmem:[%s2457] sm:$0xc0] %vm2454, %v2453
  %s2459 = scalar_lea.vmem %s0, 5976
  %v2460 = vld [vmem:[%s2459] sm:$0xff]
  %vm2461 = vcmask 785408
  %s2462 = scalar_lea.vmem %s1, 5530
  %2463 = vst.msk [vmem:[%s2462] sm:$0x3f] %vm2461, %v2460
  %s2464 = scalar_lea.vmem %s1, 5538
  %2465 = vst.msk [vmem:[%s2464] sm:$0xc0] %vm2461, %v2460
  %s2466 = scalar_lea.vmem %s0, 5992
  %v2467 = vld [vmem:[%s2466] sm:$0x1f]
  %vm2468 = vcmask 785408
  %s2469 = scalar_lea.vmem %s1, 5546
  %2470 = vst.msk [vmem:[%s2469] sm:$0x1f] %vm2468, %v2467
  %s2471 = scalar_lea.vmem %s0, 6008
  %v2472 = vld [vmem:[%s2471] sm:$0xff]
  %vm2473 = vcmask 785408
  %s2474 = scalar_lea.vmem %s1, 5551
  %2475 = vst.msk [vmem:[%s2474] ss:$9 sm:$0x3] %vm2473, %v2472
  %s2476 = scalar_lea.vmem %s1, 5559
  %2477 = vst.msk [vmem:[%s2476] sm:$0xfc] %vm2473, %v2472
  %s2478 = scalar_lea.vmem %s0, 6024
  %v2479 = vld [vmem:[%s2478] sm:$0xff]
  %vm2480 = vcmask 785408
  %s2481 = scalar_lea.vmem %s1, 5567
  %2482 = vst.msk [vmem:[%s2481] ss:$9 sm:$0x3] %vm2480, %v2479
  %s2483 = scalar_lea.vmem %s1, 5575
  %2484 = vst.msk [vmem:[%s2483] sm:$0xfc] %vm2480, %v2479
  %s2485 = scalar_lea.vmem %s0, 6040
  %v2486 = vld [vmem:[%s2485] sm:$0xff]
  %vm2487 = vcmask 785408
  %s2488 = scalar_lea.vmem %s1, 5583
  %2489 = vst.msk [vmem:[%s2488] ss:$9 sm:$0x3] %vm2487, %v2486
  %s2490 = scalar_lea.vmem %s1, 5591
  %2491 = vst.msk [vmem:[%s2490] sm:$0xfc] %vm2487, %v2486
  %s2492 = scalar_lea.vmem %s0, 6056
  %v2493 = vld [vmem:[%s2492] sm:$0xff]
  %vm2494 = vcmask 785408
  %s2495 = scalar_lea.vmem %s1, 5599
  %2496 = vst.msk [vmem:[%s2495] ss:$9 sm:$0x3] %vm2494, %v2493
  %s2497 = scalar_lea.vmem %s1, 5607
  %2498 = vst.msk [vmem:[%s2497] sm:$0xfc] %vm2494, %v2493
  %s2499 = scalar_lea.vmem %s0, 6072
  %v2500 = vld [vmem:[%s2499] sm:$0x1f]
  %vm2501 = vcmask 785408
  %s2502 = scalar_lea.vmem %s1, 5615
  %2503 = vst.msk [vmem:[%s2502] ss:$9 sm:$0x3] %vm2501, %v2500
  %s2504 = scalar_lea.vmem %s1, 5623
  %2505 = vst.msk [vmem:[%s2504] sm:$0x1c] %vm2501, %v2500
  %s2506 = scalar_lea.vmem %s0, 6088
  %v2507 = vld [vmem:[%s2506] sm:$0xff]
  %vm2508 = vcmask 785408
  %s2509 = scalar_lea.vmem %s1, 5628
  %2510 = vst.msk [vmem:[%s2509] sm:$0xf] %vm2508, %v2507
  %s2511 = scalar_lea.vmem %s1, 5636
  %2512 = vst.msk [vmem:[%s2511] sm:$0xf0] %vm2508, %v2507
  %s2513 = scalar_lea.vmem %s0, 6104
  %v2514 = vld [vmem:[%s2513] sm:$0xff]
  %vm2515 = vcmask 785408
  %s2516 = scalar_lea.vmem %s1, 5644
  %2517 = vst.msk [vmem:[%s2516] sm:$0xf] %vm2515, %v2514
  %s2518 = scalar_lea.vmem %s1, 5652
  %2519 = vst.msk [vmem:[%s2518] sm:$0xf0] %vm2515, %v2514
  %s2520 = scalar_lea.vmem %s0, 6120
  %v2521 = vld [vmem:[%s2520] sm:$0xff]
  %vm2522 = vcmask 785408
  %s2523 = scalar_lea.vmem %s1, 5660
  %2524 = vst.msk [vmem:[%s2523] sm:$0xf] %vm2522, %v2521
  %s2525 = scalar_lea.vmem %s1, 5668
  %2526 = vst.msk [vmem:[%s2525] sm:$0xf0] %vm2522, %v2521
  %s2527 = scalar_lea.vmem %s0, 6136
  %v2528 = vld [vmem:[%s2527] sm:$0xff]
  %vm2529 = vcmask 785408
  %s2530 = scalar_lea.vmem %s1, 5676
  %2531 = vst.msk [vmem:[%s2530] sm:$0xf] %vm2529, %v2528
  %s2532 = scalar_lea.vmem %s1, 5684
  %2533 = vst.msk [vmem:[%s2532] sm:$0xf0] %vm2529, %v2528
  %s2534 = scalar_lea.vmem %s0, 6152
  %v2535 = vld [vmem:[%s2534] sm:$0x1f]
  %vm2536 = vcmask 785408
  %s2537 = scalar_lea.vmem %s1, 5692
  %2538 = vst.msk [vmem:[%s2537] sm:$0xf] %vm2536, %v2535
  %s2539 = scalar_lea.vmem %s1, 5700
  %2540 = vst.msk [vmem:[%s2539] sm:$0x10] %vm2536, %v2535
  %s2541 = scalar_lea.vmem %s0, 6168
  %v2542 = vld [vmem:[%s2541] sm:$0xff]
  %vm2543 = vcmask 785408
  %s2544 = scalar_lea.vmem %s1, 5705
  %2545 = vst.msk [vmem:[%s2544] sm:$0x7f] %vm2543, %v2542
  %s2546 = scalar_lea.vmem %s1, 5713
  %2547 = vst.msk [vmem:[%s2546] sm:$0x80] %vm2543, %v2542
  %s2548 = scalar_lea.vmem %s0, 6184
  %v2549 = vld [vmem:[%s2548] sm:$0xff]
  %vm2550 = vcmask 785408
  %s2551 = scalar_lea.vmem %s1, 5721
  %2552 = vst.msk [vmem:[%s2551] sm:$0x7f] %vm2550, %v2549
  %s2553 = scalar_lea.vmem %s1, 5729
  %2554 = vst.msk [vmem:[%s2553] sm:$0x80] %vm2550, %v2549
  %s2555 = scalar_lea.vmem %s0, 6200
  %v2556 = vld [vmem:[%s2555] sm:$0xff]
  %vm2557 = vcmask 785408
  %s2558 = scalar_lea.vmem %s1, 5737
  %2559 = vst.msk [vmem:[%s2558] sm:$0x7f] %vm2557, %v2556
  %s2560 = scalar_lea.vmem %s1, 5745
  %2561 = vst.msk [vmem:[%s2560] sm:$0x80] %vm2557, %v2556
  %s2562 = scalar_lea.vmem %s0, 6216
  %v2563 = vld [vmem:[%s2562] sm:$0xff]
  %vm2564 = vcmask 785408
  %s2565 = scalar_lea.vmem %s1, 5753
  %2566 = vst.msk [vmem:[%s2565] sm:$0x7f] %vm2564, %v2563
  %s2567 = scalar_lea.vmem %s1, 5761
  %2568 = vst.msk [vmem:[%s2567] sm:$0x80] %vm2564, %v2563
  %s2569 = scalar_lea.vmem %s0, 6232
  %v2570 = vld [vmem:[%s2569] sm:$0x1f]
  %vm2571 = vcmask 785408
  %s2572 = scalar_lea.vmem %s1, 5769
  %2573 = vst.msk [vmem:[%s2572] sm:$0x1f] %vm2571, %v2570
  %s2574 = scalar_lea.vmem %s0, 6248
  %v2575 = vld [vmem:[%s2574] sm:$0xff]
  %vm2576 = vcmask 785408
  %s2577 = scalar_lea.vmem %s1, 5774
  %2578 = vst.msk [vmem:[%s2577] sm:$0x3] %vm2576, %v2575
  %s2579 = scalar_lea.vmem %s1, 5782
  %2580 = vst.msk [vmem:[%s2579] sm:$0xfc] %vm2576, %v2575
  %s2581 = scalar_lea.vmem %s0, 6264
  %v2582 = vld [vmem:[%s2581] sm:$0xff]
  %vm2583 = vcmask 785408
  %s2584 = scalar_lea.vmem %s1, 5790
  %2585 = vst.msk [vmem:[%s2584] sm:$0x3] %vm2583, %v2582
  %s2586 = scalar_lea.vmem %s1, 5798
  %2587 = vst.msk [vmem:[%s2586] sm:$0xfc] %vm2583, %v2582
  %s2588 = scalar_lea.vmem %s0, 6280
  %v2589 = vld [vmem:[%s2588] sm:$0xff]
  %vm2590 = vcmask 785408
  %s2591 = scalar_lea.vmem %s1, 5806
  %2592 = vst.msk [vmem:[%s2591] sm:$0x3] %vm2590, %v2589
  %s2593 = scalar_lea.vmem %s1, 5814
  %2594 = vst.msk [vmem:[%s2593] sm:$0xfc] %vm2590, %v2589
  %s2595 = scalar_lea.vmem %s0, 6296
  %v2596 = vld [vmem:[%s2595] sm:$0xff]
  %vm2597 = vcmask 785408
  %s2598 = scalar_lea.vmem %s1, 5822
  %2599 = vst.msk [vmem:[%s2598] sm:$0x3] %vm2597, %v2596
  %s2600 = scalar_lea.vmem %s1, 5830
  %2601 = vst.msk [vmem:[%s2600] sm:$0xfc] %vm2597, %v2596
  %s2602 = scalar_lea.vmem %s0, 6312
  %v2603 = vld [vmem:[%s2602] sm:$0x1f]
  %vm2604 = vcmask 785408
  %s2605 = scalar_lea.vmem %s1, 5838
  %2606 = vst.msk [vmem:[%s2605] sm:$0x3] %vm2604, %v2603
  %s2607 = scalar_lea.vmem %s1, 5846
  %2608 = vst.msk [vmem:[%s2607] sm:$0x1c] %vm2604, %v2603
  %s2609 = scalar_lea.vmem %s0, 6328
  %v2610 = vld [vmem:[%s2609] sm:$0xff]
  %vm2611 = vcmask 785408
  %s2612 = scalar_lea.vmem %s1, 5851
  %2613 = vst.msk [vmem:[%s2612] sm:$0x1f] %vm2611, %v2610
  %s2614 = scalar_lea.vmem %s1, 5859
  %2615 = vst.msk [vmem:[%s2614] sm:$0xe0] %vm2611, %v2610
  %s2616 = scalar_lea.vmem %s0, 6344
  %v2617 = vld [vmem:[%s2616] sm:$0xff]
  %vm2618 = vcmask 785408
  %s2619 = scalar_lea.vmem %s1, 5867
  %2620 = vst.msk [vmem:[%s2619] sm:$0x1f] %vm2618, %v2617
  %s2621 = scalar_lea.vmem %s1, 5875
  %2622 = vst.msk [vmem:[%s2621] sm:$0xe0] %vm2618, %v2617
  %s2623 = scalar_lea.vmem %s0, 6360
  %v2624 = vld [vmem:[%s2623] sm:$0xff]
  %vm2625 = vcmask 785408
  %s2626 = scalar_lea.vmem %s1, 5883
  %2627 = vst.msk [vmem:[%s2626] sm:$0x1f] %vm2625, %v2624
  %s2628 = scalar_lea.vmem %s1, 5891
  %2629 = vst.msk [vmem:[%s2628] sm:$0xe0] %vm2625, %v2624
  %s2630 = scalar_lea.vmem %s0, 6376
  %v2631 = vld [vmem:[%s2630] sm:$0xff]
  %vm2632 = vcmask 785408
  %s2633 = scalar_lea.vmem %s1, 5899
  %2634 = vst.msk [vmem:[%s2633] sm:$0x1f] %vm2632, %v2631
  %s2635 = scalar_lea.vmem %s1, 5907
  %2636 = vst.msk [vmem:[%s2635] sm:$0xe0] %vm2632, %v2631
  %s2637 = scalar_lea.vmem %s0, 6392
  %v2638 = vld [vmem:[%s2637] sm:$0x1f]
  %vm2639 = vcmask 785408
  %s2640 = scalar_lea.vmem %s1, 5915
  %2641 = vst.msk [vmem:[%s2640] sm:$0x1f] %vm2639, %v2638
  %s2642 = scalar_lea.vmem %s0, 6408
  %v2643 = vld [vmem:[%s2642] sm:$0xff]
  %vm2644 = vcmask 785408
  %s2645 = scalar_lea.vmem %s1, 5928
  %2646 = vst.msk [vmem:[%s2645] sm:$0xff] %vm2644, %v2643
  %s2647 = scalar_lea.vmem %s0, 6424
  %v2648 = vld [vmem:[%s2647] sm:$0xff]
  %vm2649 = vcmask 785408
  %s2650 = scalar_lea.vmem %s1, 5944
  %2651 = vst.msk [vmem:[%s2650] sm:$0xff] %vm2649, %v2648
  %s2652 = scalar_lea.vmem %s0, 6440
  %v2653 = vld [vmem:[%s2652] sm:$0xff]
  %vm2654 = vcmask 785408
  %s2655 = scalar_lea.vmem %s1, 5960
  %2656 = vst.msk [vmem:[%s2655] sm:$0xff] %vm2654, %v2653
  %s2657 = scalar_lea.vmem %s0, 6456
  %v2658 = vld [vmem:[%s2657] sm:$0xff]
  %vm2659 = vcmask 785408
  %s2660 = scalar_lea.vmem %s1, 5976
  %2661 = vst.msk [vmem:[%s2660] sm:$0xff] %vm2659, %v2658
  %s2662 = scalar_lea.vmem %s0, 6472
  %v2663 = vld [vmem:[%s2662] sm:$0x1f]
  %vm2664 = vcmask 785408
  %s2665 = scalar_lea.vmem %s1, 5992
  %2666 = vst.msk [vmem:[%s2665] sm:$0x1f] %vm2664, %v2663
  %s2667 = scalar_lea.vmem %s0, 6488
  %v2668 = vld [vmem:[%s2667] sm:$0xff]
  %vm2669 = vcmask 785408
  %s2670 = scalar_lea.vmem %s1, 5997
  %2671 = vst.msk [vmem:[%s2670] sm:$0x7] %vm2669, %v2668
  %s2672 = scalar_lea.vmem %s1, 6005
  %2673 = vst.msk [vmem:[%s2672] sm:$0xf8] %vm2669, %v2668
  %s2674 = scalar_lea.vmem %s0, 6504
  %v2675 = vld [vmem:[%s2674] sm:$0xff]
  %vm2676 = vcmask 785408
  %s2677 = scalar_lea.vmem %s1, 6013
  %2678 = vst.msk [vmem:[%s2677] sm:$0x7] %vm2676, %v2675
  %s2679 = scalar_lea.vmem %s1, 6021
  %2680 = vst.msk [vmem:[%s2679] sm:$0xf8] %vm2676, %v2675
  %s2681 = scalar_lea.vmem %s0, 6520
  %v2682 = vld [vmem:[%s2681] sm:$0xff]
  %vm2683 = vcmask 785408
  %s2684 = scalar_lea.vmem %s1, 6029
  %2685 = vst.msk [vmem:[%s2684] sm:$0x7] %vm2683, %v2682
  %s2686 = scalar_lea.vmem %s1, 6037
  %2687 = vst.msk [vmem:[%s2686] sm:$0xf8] %vm2683, %v2682
  %s2688 = scalar_lea.vmem %s0, 6536
  %v2689 = vld [vmem:[%s2688] sm:$0xff]
  %vm2690 = vcmask 785408
  %s2691 = scalar_lea.vmem %s1, 6045
  %2692 = vst.msk [vmem:[%s2691] sm:$0x7] %vm2690, %v2689
  %s2693 = scalar_lea.vmem %s1, 6053
  %2694 = vst.msk [vmem:[%s2693] sm:$0xf8] %vm2690, %v2689
  %s2695 = scalar_lea.vmem %s0, 6552
  %v2696 = vld [vmem:[%s2695] sm:$0x1f]
  %vm2697 = vcmask 785408
  %s2698 = scalar_lea.vmem %s1, 6061
  %2699 = vst.msk [vmem:[%s2698] sm:$0x7] %vm2697, %v2696
  %s2700 = scalar_lea.vmem %s1, 6069
  %2701 = vst.msk [vmem:[%s2700] sm:$0x18] %vm2697, %v2696
  %s2702 = scalar_lea.vmem %s0, 6568
  %v2703 = vld [vmem:[%s2702] sm:$0xff]
  %vm2704 = vcmask 785408
  %s2705 = scalar_lea.vmem %s1, 6074
  %2706 = vst.msk [vmem:[%s2705] sm:$0x3f] %vm2704, %v2703
  %s2707 = scalar_lea.vmem %s1, 6082
  %2708 = vst.msk [vmem:[%s2707] sm:$0xc0] %vm2704, %v2703
  %s2709 = scalar_lea.vmem %s0, 6584
  %v2710 = vld [vmem:[%s2709] sm:$0xff]
  %vm2711 = vcmask 785408
  %s2712 = scalar_lea.vmem %s1, 6090
  %2713 = vst.msk [vmem:[%s2712] sm:$0x3f] %vm2711, %v2710
  %s2714 = scalar_lea.vmem %s1, 6098
  %2715 = vst.msk [vmem:[%s2714] sm:$0xc0] %vm2711, %v2710
  %s2716 = scalar_lea.vmem %s0, 6600
  %v2717 = vld [vmem:[%s2716] sm:$0xff]
  %vm2718 = vcmask 785408
  %s2719 = scalar_lea.vmem %s1, 6106
  %2720 = vst.msk [vmem:[%s2719] sm:$0x3f] %vm2718, %v2717
  %s2721 = scalar_lea.vmem %s1, 6114
  %2722 = vst.msk [vmem:[%s2721] sm:$0xc0] %vm2718, %v2717
  %s2723 = scalar_lea.vmem %s0, 6616
  %v2724 = vld [vmem:[%s2723] sm:$0xff]
  %vm2725 = vcmask 785408
  %s2726 = scalar_lea.vmem %s1, 6122
  %2727 = vst.msk [vmem:[%s2726] sm:$0x3f] %vm2725, %v2724
  %s2728 = scalar_lea.vmem %s1, 6130
  %2729 = vst.msk [vmem:[%s2728] sm:$0xc0] %vm2725, %v2724
  %s2730 = scalar_lea.vmem %s0, 6632
  %v2731 = vld [vmem:[%s2730] sm:$0x1f]
  %vm2732 = vcmask 785408
  %s2733 = scalar_lea.vmem %s1, 6138
  %2734 = vst.msk [vmem:[%s2733] sm:$0x1f] %vm2732, %v2731
  %s2735 = scalar_lea.vmem %s0, 6648
  %v2736 = vld [vmem:[%s2735] sm:$0xff]
  %vm2737 = vcmask 785408
  %s2738 = scalar_lea.vmem %s1, 6143
  %2739 = vst.msk [vmem:[%s2738] ss:$9 sm:$0x3] %vm2737, %v2736
  %s2740 = scalar_lea.vmem %s1, 6151
  %2741 = vst.msk [vmem:[%s2740] sm:$0xfc] %vm2737, %v2736
  %s2742 = scalar_lea.vmem %s0, 6664
  %v2743 = vld [vmem:[%s2742] sm:$0xff]
  %vm2744 = vcmask 785408
  %s2745 = scalar_lea.vmem %s1, 6159
  %2746 = vst.msk [vmem:[%s2745] ss:$9 sm:$0x3] %vm2744, %v2743
  %s2747 = scalar_lea.vmem %s1, 6167
  %2748 = vst.msk [vmem:[%s2747] sm:$0xfc] %vm2744, %v2743
  %s2749 = scalar_lea.vmem %s0, 6680
  %v2750 = vld [vmem:[%s2749] sm:$0xff]
  %vm2751 = vcmask 785408
  %s2752 = scalar_lea.vmem %s1, 6175
  %2753 = vst.msk [vmem:[%s2752] ss:$9 sm:$0x3] %vm2751, %v2750
  %s2754 = scalar_lea.vmem %s1, 6183
  %2755 = vst.msk [vmem:[%s2754] sm:$0xfc] %vm2751, %v2750
  %s2756 = scalar_lea.vmem %s0, 6696
  %v2757 = vld [vmem:[%s2756] sm:$0xff]
  %vm2758 = vcmask 785408
  %s2759 = scalar_lea.vmem %s1, 6191
  %2760 = vst.msk [vmem:[%s2759] ss:$9 sm:$0x3] %vm2758, %v2757
  %s2761 = scalar_lea.vmem %s1, 6199
  %2762 = vst.msk [vmem:[%s2761] sm:$0xfc] %vm2758, %v2757
  %s2763 = scalar_lea.vmem %s0, 6712
  %v2764 = vld [vmem:[%s2763] sm:$0x1f]
  %vm2765 = vcmask 785408
  %s2766 = scalar_lea.vmem %s1, 6207
  %2767 = vst.msk [vmem:[%s2766] ss:$9 sm:$0x3] %vm2765, %v2764
  %s2768 = scalar_lea.vmem %s1, 6215
  %2769 = vst.msk [vmem:[%s2768] sm:$0x1c] %vm2765, %v2764
  %s2770 = scalar_lea.vmem %s0, 6728
  %v2771 = vld [vmem:[%s2770] sm:$0xff]
  %vm2772 = vcmask 785408
  %s2773 = scalar_lea.vmem %s1, 6220
  %2774 = vst.msk [vmem:[%s2773] sm:$0xf] %vm2772, %v2771
  %s2775 = scalar_lea.vmem %s1, 6228
  %2776 = vst.msk [vmem:[%s2775] sm:$0xf0] %vm2772, %v2771
  %s2777 = scalar_lea.vmem %s0, 6744
  %v2778 = vld [vmem:[%s2777] sm:$0xff]
  %vm2779 = vcmask 785408
  %s2780 = scalar_lea.vmem %s1, 6236
  %2781 = vst.msk [vmem:[%s2780] sm:$0xf] %vm2779, %v2778
  %s2782 = scalar_lea.vmem %s1, 6244
  %2783 = vst.msk [vmem:[%s2782] sm:$0xf0] %vm2779, %v2778
  %s2784 = scalar_lea.vmem %s0, 6760
  %v2785 = vld [vmem:[%s2784] sm:$0xff]
  %vm2786 = vcmask 785408
  %s2787 = scalar_lea.vmem %s1, 6252
  %2788 = vst.msk [vmem:[%s2787] sm:$0xf] %vm2786, %v2785
  %s2789 = scalar_lea.vmem %s1, 6260
  %2790 = vst.msk [vmem:[%s2789] sm:$0xf0] %vm2786, %v2785
  %s2791 = scalar_lea.vmem %s0, 6776
  %v2792 = vld [vmem:[%s2791] sm:$0xff]
  %vm2793 = vcmask 785408
  %s2794 = scalar_lea.vmem %s1, 6268
  %2795 = vst.msk [vmem:[%s2794] sm:$0xf] %vm2793, %v2792
  %s2796 = scalar_lea.vmem %s1, 6276
  %2797 = vst.msk [vmem:[%s2796] sm:$0xf0] %vm2793, %v2792
  %s2798 = scalar_lea.vmem %s0, 6792
  %v2799 = vld [vmem:[%s2798] sm:$0x1f]
  %vm2800 = vcmask 785408
  %s2801 = scalar_lea.vmem %s1, 6284
  %2802 = vst.msk [vmem:[%s2801] sm:$0xf] %vm2800, %v2799
  %s2803 = scalar_lea.vmem %s1, 6292
  %2804 = vst.msk [vmem:[%s2803] sm:$0x10] %vm2800, %v2799
  %s2805 = scalar_lea.vmem %s0, 6808
  %v2806 = vld [vmem:[%s2805] sm:$0xff]
  %vm2807 = vcmask 785408
  %s2808 = scalar_lea.vmem %s1, 6297
  %2809 = vst.msk [vmem:[%s2808] sm:$0x7f] %vm2807, %v2806
  %s2810 = scalar_lea.vmem %s1, 6305
  %2811 = vst.msk [vmem:[%s2810] sm:$0x80] %vm2807, %v2806
  %s2812 = scalar_lea.vmem %s0, 6824
  %v2813 = vld [vmem:[%s2812] sm:$0xff]
  %vm2814 = vcmask 785408
  %s2815 = scalar_lea.vmem %s1, 6313
  %2816 = vst.msk [vmem:[%s2815] sm:$0x7f] %vm2814, %v2813
  %s2817 = scalar_lea.vmem %s1, 6321
  %2818 = vst.msk [vmem:[%s2817] sm:$0x80] %vm2814, %v2813
  %s2819 = scalar_lea.vmem %s0, 6840
  %v2820 = vld [vmem:[%s2819] sm:$0xff]
  %vm2821 = vcmask 785408
  %s2822 = scalar_lea.vmem %s1, 6329
  %2823 = vst.msk [vmem:[%s2822] sm:$0x7f] %vm2821, %v2820
  %s2824 = scalar_lea.vmem %s1, 6337
  %2825 = vst.msk [vmem:[%s2824] sm:$0x80] %vm2821, %v2820
  %s2826 = scalar_lea.vmem %s0, 6856
  %v2827 = vld [vmem:[%s2826] sm:$0xff]
  %vm2828 = vcmask 785408
  %s2829 = scalar_lea.vmem %s1, 6345
  %2830 = vst.msk [vmem:[%s2829] sm:$0x7f] %vm2828, %v2827
  %s2831 = scalar_lea.vmem %s1, 6353
  %2832 = vst.msk [vmem:[%s2831] sm:$0x80] %vm2828, %v2827
  %s2833 = scalar_lea.vmem %s0, 6872
  %v2834 = vld [vmem:[%s2833] sm:$0x1f]
  %vm2835 = vcmask 785408
  %s2836 = scalar_lea.vmem %s1, 6361
  %2837 = vst.msk [vmem:[%s2836] sm:$0x1f] %vm2835, %v2834
  %s2838 = scalar_lea.vmem %s0, 6888
  %v2839 = vld [vmem:[%s2838] sm:$0xff]
  %vm2840 = vcmask 785408
  %s2841 = scalar_lea.vmem %s1, 6366
  %2842 = vst.msk [vmem:[%s2841] sm:$0x3] %vm2840, %v2839
  %s2843 = scalar_lea.vmem %s1, 6374
  %2844 = vst.msk [vmem:[%s2843] sm:$0xfc] %vm2840, %v2839
  %s2845 = scalar_lea.vmem %s0, 6904
  %v2846 = vld [vmem:[%s2845] sm:$0xff]
  %vm2847 = vcmask 785408
  %s2848 = scalar_lea.vmem %s1, 6382
  %2849 = vst.msk [vmem:[%s2848] sm:$0x3] %vm2847, %v2846
  %s2850 = scalar_lea.vmem %s1, 6390
  %2851 = vst.msk [vmem:[%s2850] sm:$0xfc] %vm2847, %v2846
  %s2852 = scalar_lea.vmem %s0, 6920
  %v2853 = vld [vmem:[%s2852] sm:$0xff]
  %vm2854 = vcmask 785408
  %s2855 = scalar_lea.vmem %s1, 6398
  %2856 = vst.msk [vmem:[%s2855] sm:$0x3] %vm2854, %v2853
  %s2857 = scalar_lea.vmem %s1, 6406
  %2858 = vst.msk [vmem:[%s2857] sm:$0xfc] %vm2854, %v2853
  %s2859 = scalar_lea.vmem %s0, 6936
  %v2860 = vld [vmem:[%s2859] sm:$0xff]
  %vm2861 = vcmask 785408
  %s2862 = scalar_lea.vmem %s1, 6414
  %2863 = vst.msk [vmem:[%s2862] sm:$0x3] %vm2861, %v2860
  %s2864 = scalar_lea.vmem %s1, 6422
  %2865 = vst.msk [vmem:[%s2864] sm:$0xfc] %vm2861, %v2860
  %s2866 = scalar_lea.vmem %s0, 6952
  %v2867 = vld [vmem:[%s2866] sm:$0x1f]
  %vm2868 = vcmask 785408
  %s2869 = scalar_lea.vmem %s1, 6430
  %2870 = vst.msk [vmem:[%s2869] sm:$0x3] %vm2868, %v2867
  %s2871 = scalar_lea.vmem %s1, 6438
  %2872 = vst.msk [vmem:[%s2871] sm:$0x1c] %vm2868, %v2867
  %s2873 = scalar_lea.vmem %s0, 6968
  %v2874 = vld [vmem:[%s2873] sm:$0xff]
  %vm2875 = vcmask 785408
  %s2876 = scalar_lea.vmem %s1, 6443
  %2877 = vst.msk [vmem:[%s2876] sm:$0x1f] %vm2875, %v2874
  %s2878 = scalar_lea.vmem %s1, 6451
  %2879 = vst.msk [vmem:[%s2878] sm:$0xe0] %vm2875, %v2874
  %s2880 = scalar_lea.vmem %s0, 6984
  %v2881 = vld [vmem:[%s2880] sm:$0xff]
  %vm2882 = vcmask 785408
  %s2883 = scalar_lea.vmem %s1, 6459
  %2884 = vst.msk [vmem:[%s2883] sm:$0x1f] %vm2882, %v2881
  %s2885 = scalar_lea.vmem %s1, 6467
  %2886 = vst.msk [vmem:[%s2885] sm:$0xe0] %vm2882, %v2881
  %s2887 = scalar_lea.vmem %s0, 7000
  %v2888 = vld [vmem:[%s2887] sm:$0xff]
  %vm2889 = vcmask 785408
  %s2890 = scalar_lea.vmem %s1, 6475
  %2891 = vst.msk [vmem:[%s2890] sm:$0x1f] %vm2889, %v2888
  %s2892 = scalar_lea.vmem %s1, 6483
  %2893 = vst.msk [vmem:[%s2892] sm:$0xe0] %vm2889, %v2888
  %s2894 = scalar_lea.vmem %s0, 7016
  %v2895 = vld [vmem:[%s2894] sm:$0xff]
  %vm2896 = vcmask 785408
  %s2897 = scalar_lea.vmem %s1, 6491
  %2898 = vst.msk [vmem:[%s2897] sm:$0x1f] %vm2896, %v2895
  %s2899 = scalar_lea.vmem %s1, 6499
  %2900 = vst.msk [vmem:[%s2899] sm:$0xe0] %vm2896, %v2895
  %s2901 = scalar_lea.vmem %s0, 7032
  %v2902 = vld [vmem:[%s2901] sm:$0x1f]
  %vm2903 = vcmask 785408
  %s2904 = scalar_lea.vmem %s1, 6507
  %2905 = vst.msk [vmem:[%s2904] sm:$0x1f] %vm2903, %v2902
  %v2906 = vld [vmem:[%s0] sm:$0xff]
  %2907 = vst [vmem:[%s1] sm:$0xff] %v2906
  %s2908 = scalar_lea.vmem %s0, 16
  %v2909 = vld [vmem:[%s2908] sm:$0xff]
  %s2910 = scalar_lea.vmem %s1, 16
  %2911 = vst [vmem:[%s2910] sm:$0xff] %v2909
  %s2912 = scalar_lea.vmem %s0, 32
  %v2913 = vld [vmem:[%s2912] sm:$0xff]
  %s2914 = scalar_lea.vmem %s1, 32
  %2915 = vst [vmem:[%s2914] sm:$0xff] %v2913
  %s2916 = scalar_lea.vmem %s0, 48
  %v2917 = vld [vmem:[%s2916] sm:$0xff]
  %s2918 = scalar_lea.vmem %s1, 48
  %2919 = vst [vmem:[%s2918] sm:$0xff] %v2917
  %s2920 = scalar_lea.vmem %s0, 64
  %v2921 = vld [vmem:[%s2920] sm:$0x1f]
  %s2922 = scalar_lea.vmem %s1, 64
  %2923 = vst [vmem:[%s2922] sm:$0x1f] %v2921
  %s2924 = scalar_lea.vmem %s0, 80
  %v2925 = vld [vmem:[%s2924] sm:$0xff]
  %s2926 = scalar_lea.vmem %s1, 69
  %2927 = vst [vmem:[%s2926] sm:$0x7] %v2925
  %s2928 = scalar_lea.vmem %s1, 77
  %2929 = vst [vmem:[%s2928] sm:$0xf8] %v2925
  %s2930 = scalar_lea.vmem %s0, 96
  %v2931 = vld [vmem:[%s2930] sm:$0xff]
  %s2932 = scalar_lea.vmem %s1, 85
  %2933 = vst [vmem:[%s2932] sm:$0x7] %v2931
  %s2934 = scalar_lea.vmem %s1, 93
  %2935 = vst [vmem:[%s2934] sm:$0xf8] %v2931
  %s2936 = scalar_lea.vmem %s0, 112
  %v2937 = vld [vmem:[%s2936] sm:$0xff]
  %s2938 = scalar_lea.vmem %s1, 101
  %2939 = vst [vmem:[%s2938] sm:$0x7] %v2937
  %s2940 = scalar_lea.vmem %s1, 109
  %2941 = vst [vmem:[%s2940] sm:$0xf8] %v2937
  %s2942 = scalar_lea.vmem %s0, 128
  %v2943 = vld [vmem:[%s2942] sm:$0xff]
  %s2944 = scalar_lea.vmem %s1, 117
  %2945 = vst [vmem:[%s2944] sm:$0x7] %v2943
  %s2946 = scalar_lea.vmem %s1, 125
  %2947 = vst [vmem:[%s2946] sm:$0xf8] %v2943
  %s2948 = scalar_lea.vmem %s0, 144
  %v2949 = vld [vmem:[%s2948] sm:$0x1f]
  %s2950 = scalar_lea.vmem %s1, 133
  %2951 = vst [vmem:[%s2950] sm:$0x7] %v2949
  %s2952 = scalar_lea.vmem %s1, 141
  %2953 = vst [vmem:[%s2952] sm:$0x18] %v2949
  %s2954 = scalar_lea.vmem %s0, 160
  %v2955 = vld [vmem:[%s2954] sm:$0xff]
  %s2956 = scalar_lea.vmem %s1, 146
  %2957 = vst [vmem:[%s2956] sm:$0x3f] %v2955
  %s2958 = scalar_lea.vmem %s1, 154
  %2959 = vst [vmem:[%s2958] sm:$0xc0] %v2955
  %s2960 = scalar_lea.vmem %s0, 176
  %v2961 = vld [vmem:[%s2960] sm:$0xff]
  %s2962 = scalar_lea.vmem %s1, 162
  %2963 = vst [vmem:[%s2962] sm:$0x3f] %v2961
  %s2964 = scalar_lea.vmem %s1, 170
  %2965 = vst [vmem:[%s2964] sm:$0xc0] %v2961
  %s2966 = scalar_lea.vmem %s0, 192
  %v2967 = vld [vmem:[%s2966] sm:$0xff]
  %s2968 = scalar_lea.vmem %s1, 178
  %2969 = vst [vmem:[%s2968] sm:$0x3f] %v2967
  %s2970 = scalar_lea.vmem %s1, 186
  %2971 = vst [vmem:[%s2970] sm:$0xc0] %v2967
  %s2972 = scalar_lea.vmem %s0, 208
  %v2973 = vld [vmem:[%s2972] sm:$0xff]
  %s2974 = scalar_lea.vmem %s1, 194
  %2975 = vst [vmem:[%s2974] sm:$0x3f] %v2973
  %s2976 = scalar_lea.vmem %s1, 202
  %2977 = vst [vmem:[%s2976] sm:$0xc0] %v2973
  %s2978 = scalar_lea.vmem %s0, 224
  %v2979 = vld [vmem:[%s2978] sm:$0x1f]
  %s2980 = scalar_lea.vmem %s1, 210
  %2981 = vst [vmem:[%s2980] sm:$0x1f] %v2979
  %s2982 = scalar_lea.vmem %s0, 240
  %v2983 = vld [vmem:[%s2982] sm:$0xff]
  %s2984 = scalar_lea.vmem %s1, 215
  %2985 = vst [vmem:[%s2984] ss:$9 sm:$0x3] %v2983
  %s2986 = scalar_lea.vmem %s1, 223
  %2987 = vst [vmem:[%s2986] sm:$0xfc] %v2983
  %s2988 = scalar_lea.vmem %s0, 256
  %v2989 = vld [vmem:[%s2988] sm:$0xff]
  %s2990 = scalar_lea.vmem %s1, 231
  %2991 = vst [vmem:[%s2990] ss:$9 sm:$0x3] %v2989
  %s2992 = scalar_lea.vmem %s1, 239
  %2993 = vst [vmem:[%s2992] sm:$0xfc] %v2989
  %s2994 = scalar_lea.vmem %s0, 272
  %v2995 = vld [vmem:[%s2994] sm:$0xff]
  %s2996 = scalar_lea.vmem %s1, 247
  %2997 = vst [vmem:[%s2996] ss:$9 sm:$0x3] %v2995
  %s2998 = scalar_lea.vmem %s1, 255
  %2999 = vst [vmem:[%s2998] sm:$0xfc] %v2995
  %s3000 = scalar_lea.vmem %s0, 288
  %v3001 = vld [vmem:[%s3000] sm:$0xff]
  %s3002 = scalar_lea.vmem %s1, 263
  %3003 = vst [vmem:[%s3002] ss:$9 sm:$0x3] %v3001
  %s3004 = scalar_lea.vmem %s1, 271
  %3005 = vst [vmem:[%s3004] sm:$0xfc] %v3001
  %s3006 = scalar_lea.vmem %s0, 304
  %v3007 = vld [vmem:[%s3006] sm:$0x1f]
  %s3008 = scalar_lea.vmem %s1, 279
  %3009 = vst [vmem:[%s3008] ss:$9 sm:$0x3] %v3007
  %s3010 = scalar_lea.vmem %s1, 287
  %3011 = vst [vmem:[%s3010] sm:$0x1c] %v3007
  %s3012 = scalar_lea.vmem %s0, 320
  %v3013 = vld [vmem:[%s3012] sm:$0xff]
  %s3014 = scalar_lea.vmem %s1, 292
  %3015 = vst [vmem:[%s3014] sm:$0xf] %v3013
  %s3016 = scalar_lea.vmem %s1, 300
  %3017 = vst [vmem:[%s3016] sm:$0xf0] %v3013
  %s3018 = scalar_lea.vmem %s0, 336
  %v3019 = vld [vmem:[%s3018] sm:$0xff]
  %s3020 = scalar_lea.vmem %s1, 308
  %3021 = vst [vmem:[%s3020] sm:$0xf] %v3019
  %s3022 = scalar_lea.vmem %s1, 316
  %3023 = vst [vmem:[%s3022] sm:$0xf0] %v3019
  %s3024 = scalar_lea.vmem %s0, 352
  %v3025 = vld [vmem:[%s3024] sm:$0xff]
  %s3026 = scalar_lea.vmem %s1, 324
  %3027 = vst [vmem:[%s3026] sm:$0xf] %v3025
  %s3028 = scalar_lea.vmem %s1, 332
  %3029 = vst [vmem:[%s3028] sm:$0xf0] %v3025
  %s3030 = scalar_lea.vmem %s0, 368
  %v3031 = vld [vmem:[%s3030] sm:$0xff]
  %s3032 = scalar_lea.vmem %s1, 340
  %3033 = vst [vmem:[%s3032] sm:$0xf] %v3031
  %s3034 = scalar_lea.vmem %s1, 348
  %3035 = vst [vmem:[%s3034] sm:$0xf0] %v3031
  %s3036 = scalar_lea.vmem %s0, 384
  %v3037 = vld [vmem:[%s3036] sm:$0x1f]
  %s3038 = scalar_lea.vmem %s1, 356
  %3039 = vst [vmem:[%s3038] sm:$0xf] %v3037
  %s3040 = scalar_lea.vmem %s1, 364
  %3041 = vst [vmem:[%s3040] sm:$0x10] %v3037
  %s3042 = scalar_lea.vmem %s0, 400
  %v3043 = vld [vmem:[%s3042] sm:$0xff]
  %s3044 = scalar_lea.vmem %s1, 369
  %3045 = vst [vmem:[%s3044] sm:$0x7f] %v3043
  %s3046 = scalar_lea.vmem %s1, 377
  %3047 = vst [vmem:[%s3046] sm:$0x80] %v3043
  %s3048 = scalar_lea.vmem %s0, 416
  %v3049 = vld [vmem:[%s3048] sm:$0xff]
  %s3050 = scalar_lea.vmem %s1, 385
  %3051 = vst [vmem:[%s3050] sm:$0x7f] %v3049
  %s3052 = scalar_lea.vmem %s1, 393
  %3053 = vst [vmem:[%s3052] sm:$0x80] %v3049
  %s3054 = scalar_lea.vmem %s0, 432
  %v3055 = vld [vmem:[%s3054] sm:$0xff]
  %s3056 = scalar_lea.vmem %s1, 401
  %3057 = vst [vmem:[%s3056] sm:$0x7f] %v3055
  %s3058 = scalar_lea.vmem %s1, 409
  %3059 = vst [vmem:[%s3058] sm:$0x80] %v3055
  %s3060 = scalar_lea.vmem %s0, 448
  %v3061 = vld [vmem:[%s3060] sm:$0xff]
  %s3062 = scalar_lea.vmem %s1, 417
  %3063 = vst [vmem:[%s3062] sm:$0x7f] %v3061
  %s3064 = scalar_lea.vmem %s1, 425
  %3065 = vst [vmem:[%s3064] sm:$0x80] %v3061
  %s3066 = scalar_lea.vmem %s0, 464
  %v3067 = vld [vmem:[%s3066] sm:$0x1f]
  %s3068 = scalar_lea.vmem %s1, 433
  %3069 = vst [vmem:[%s3068] sm:$0x1f] %v3067
  %s3070 = scalar_lea.vmem %s0, 480
  %v3071 = vld [vmem:[%s3070] sm:$0xff]
  %s3072 = scalar_lea.vmem %s1, 438
  %3073 = vst [vmem:[%s3072] sm:$0x3] %v3071
  %s3074 = scalar_lea.vmem %s1, 446
  %3075 = vst [vmem:[%s3074] sm:$0xfc] %v3071
  %s3076 = scalar_lea.vmem %s0, 496
  %v3077 = vld [vmem:[%s3076] sm:$0xff]
  %s3078 = scalar_lea.vmem %s1, 454
  %3079 = vst [vmem:[%s3078] sm:$0x3] %v3077
  %s3080 = scalar_lea.vmem %s1, 462
  %3081 = vst [vmem:[%s3080] sm:$0xfc] %v3077
  %s3082 = scalar_lea.vmem %s0, 512
  %v3083 = vld [vmem:[%s3082] sm:$0xff]
  %s3084 = scalar_lea.vmem %s1, 470
  %3085 = vst [vmem:[%s3084] sm:$0x3] %v3083
  %s3086 = scalar_lea.vmem %s1, 478
  %3087 = vst [vmem:[%s3086] sm:$0xfc] %v3083
  %s3088 = scalar_lea.vmem %s0, 528
  %v3089 = vld [vmem:[%s3088] sm:$0xff]
  %s3090 = scalar_lea.vmem %s1, 486
  %3091 = vst [vmem:[%s3090] sm:$0x3] %v3089
  %s3092 = scalar_lea.vmem %s1, 494
  %3093 = vst [vmem:[%s3092] sm:$0xfc] %v3089
  %s3094 = scalar_lea.vmem %s0, 544
  %v3095 = vld [vmem:[%s3094] sm:$0x1f]
  %s3096 = scalar_lea.vmem %s1, 502
  %3097 = vst [vmem:[%s3096] sm:$0x3] %v3095
  %s3098 = scalar_lea.vmem %s1, 510
  %3099 = vst [vmem:[%s3098] sm:$0x1c] %v3095
  %s3100 = scalar_lea.vmem %s0, 560
  %v3101 = vld [vmem:[%s3100] sm:$0xff]
  %s3102 = scalar_lea.vmem %s1, 515
  %3103 = vst [vmem:[%s3102] sm:$0x1f] %v3101
  %s3104 = scalar_lea.vmem %s1, 523
  %3105 = vst [vmem:[%s3104] sm:$0xe0] %v3101
  %s3106 = scalar_lea.vmem %s0, 576
  %v3107 = vld [vmem:[%s3106] sm:$0xff]
  %s3108 = scalar_lea.vmem %s1, 531
  %3109 = vst [vmem:[%s3108] sm:$0x1f] %v3107
  %s3110 = scalar_lea.vmem %s1, 539
  %3111 = vst [vmem:[%s3110] sm:$0xe0] %v3107
  %s3112 = scalar_lea.vmem %s0, 592
  %v3113 = vld [vmem:[%s3112] sm:$0xff]
  %s3114 = scalar_lea.vmem %s1, 547
  %3115 = vst [vmem:[%s3114] sm:$0x1f] %v3113
  %s3116 = scalar_lea.vmem %s1, 555
  %3117 = vst [vmem:[%s3116] sm:$0xe0] %v3113
  %s3118 = scalar_lea.vmem %s0, 608
  %v3119 = vld [vmem:[%s3118] sm:$0xff]
  %s3120 = scalar_lea.vmem %s1, 563
  %3121 = vst [vmem:[%s3120] sm:$0x1f] %v3119
  %s3122 = scalar_lea.vmem %s1, 571
  %3123 = vst [vmem:[%s3122] sm:$0xe0] %v3119
  %s3124 = scalar_lea.vmem %s0, 624
  %v3125 = vld [vmem:[%s3124] sm:$0x1f]
  %s3126 = scalar_lea.vmem %s1, 579
  %3127 = vst [vmem:[%s3126] sm:$0x1f] %v3125
  %s3128 = scalar_lea.vmem %s0, 640
  %v3129 = vld [vmem:[%s3128] sm:$0xff]
  %s3130 = scalar_lea.vmem %s1, 592
  %3131 = vst [vmem:[%s3130] sm:$0xff] %v3129
  %s3132 = scalar_lea.vmem %s0, 656
  %v3133 = vld [vmem:[%s3132] sm:$0xff]
  %s3134 = scalar_lea.vmem %s1, 608
  %3135 = vst [vmem:[%s3134] sm:$0xff] %v3133
  %s3136 = scalar_lea.vmem %s0, 672
  %v3137 = vld [vmem:[%s3136] sm:$0xff]
  %s3138 = scalar_lea.vmem %s1, 624
  %3139 = vst [vmem:[%s3138] sm:$0xff] %v3137
  %s3140 = scalar_lea.vmem %s0, 688
  %v3141 = vld [vmem:[%s3140] sm:$0xff]
  %s3142 = scalar_lea.vmem %s1, 640
  %3143 = vst [vmem:[%s3142] sm:$0xff] %v3141
  %s3144 = scalar_lea.vmem %s0, 704
  %v3145 = vld [vmem:[%s3144] sm:$0x1f]
  %s3146 = scalar_lea.vmem %s1, 656
  %3147 = vst [vmem:[%s3146] sm:$0x1f] %v3145
  %s3148 = scalar_lea.vmem %s0, 720
  %v3149 = vld [vmem:[%s3148] sm:$0xff]
  %s3150 = scalar_lea.vmem %s1, 661
  %3151 = vst [vmem:[%s3150] sm:$0x7] %v3149
  %s3152 = scalar_lea.vmem %s1, 669
  %3153 = vst [vmem:[%s3152] sm:$0xf8] %v3149
  %s3154 = scalar_lea.vmem %s0, 736
  %v3155 = vld [vmem:[%s3154] sm:$0xff]
  %s3156 = scalar_lea.vmem %s1, 677
  %3157 = vst [vmem:[%s3156] sm:$0x7] %v3155
  %s3158 = scalar_lea.vmem %s1, 685
  %3159 = vst [vmem:[%s3158] sm:$0xf8] %v3155
  %s3160 = scalar_lea.vmem %s0, 752
  %v3161 = vld [vmem:[%s3160] sm:$0xff]
  %s3162 = scalar_lea.vmem %s1, 693
  %3163 = vst [vmem:[%s3162] sm:$0x7] %v3161
  %s3164 = scalar_lea.vmem %s1, 701
  %3165 = vst [vmem:[%s3164] sm:$0xf8] %v3161
  %s3166 = scalar_lea.vmem %s0, 768
  %v3167 = vld [vmem:[%s3166] sm:$0xff]
  %s3168 = scalar_lea.vmem %s1, 709
  %3169 = vst [vmem:[%s3168] sm:$0x7] %v3167
  %s3170 = scalar_lea.vmem %s1, 717
  %3171 = vst [vmem:[%s3170] sm:$0xf8] %v3167
  %s3172 = scalar_lea.vmem %s0, 784
  %v3173 = vld [vmem:[%s3172] sm:$0x1f]
  %s3174 = scalar_lea.vmem %s1, 725
  %3175 = vst [vmem:[%s3174] sm:$0x7] %v3173
  %s3176 = scalar_lea.vmem %s1, 733
  %3177 = vst [vmem:[%s3176] sm:$0x18] %v3173
  %s3178 = scalar_lea.vmem %s0, 800
  %v3179 = vld [vmem:[%s3178] sm:$0xff]
  %s3180 = scalar_lea.vmem %s1, 738
  %3181 = vst [vmem:[%s3180] sm:$0x3f] %v3179
  %s3182 = scalar_lea.vmem %s1, 746
  %3183 = vst [vmem:[%s3182] sm:$0xc0] %v3179
  %s3184 = scalar_lea.vmem %s0, 816
  %v3185 = vld [vmem:[%s3184] sm:$0xff]
  %s3186 = scalar_lea.vmem %s1, 754
  %3187 = vst [vmem:[%s3186] sm:$0x3f] %v3185
  %s3188 = scalar_lea.vmem %s1, 762
  %3189 = vst [vmem:[%s3188] sm:$0xc0] %v3185
  %s3190 = scalar_lea.vmem %s0, 832
  %v3191 = vld [vmem:[%s3190] sm:$0xff]
  %s3192 = scalar_lea.vmem %s1, 770
  %3193 = vst [vmem:[%s3192] sm:$0x3f] %v3191
  %s3194 = scalar_lea.vmem %s1, 778
  %3195 = vst [vmem:[%s3194] sm:$0xc0] %v3191
  %s3196 = scalar_lea.vmem %s0, 848
  %v3197 = vld [vmem:[%s3196] sm:$0xff]
  %s3198 = scalar_lea.vmem %s1, 786
  %3199 = vst [vmem:[%s3198] sm:$0x3f] %v3197
  %s3200 = scalar_lea.vmem %s1, 794
  %3201 = vst [vmem:[%s3200] sm:$0xc0] %v3197
  %s3202 = scalar_lea.vmem %s0, 864
  %v3203 = vld [vmem:[%s3202] sm:$0x1f]
  %s3204 = scalar_lea.vmem %s1, 802
  %3205 = vst [vmem:[%s3204] sm:$0x1f] %v3203
  %s3206 = scalar_lea.vmem %s0, 880
  %v3207 = vld [vmem:[%s3206] sm:$0xff]
  %s3208 = scalar_lea.vmem %s1, 807
  %3209 = vst [vmem:[%s3208] ss:$9 sm:$0x3] %v3207
  %s3210 = scalar_lea.vmem %s1, 815
  %3211 = vst [vmem:[%s3210] sm:$0xfc] %v3207
  %s3212 = scalar_lea.vmem %s0, 896
  %v3213 = vld [vmem:[%s3212] sm:$0xff]
  %s3214 = scalar_lea.vmem %s1, 823
  %3215 = vst [vmem:[%s3214] ss:$9 sm:$0x3] %v3213
  %s3216 = scalar_lea.vmem %s1, 831
  %3217 = vst [vmem:[%s3216] sm:$0xfc] %v3213
  %s3218 = scalar_lea.vmem %s0, 912
  %v3219 = vld [vmem:[%s3218] sm:$0xff]
  %s3220 = scalar_lea.vmem %s1, 839
  %3221 = vst [vmem:[%s3220] ss:$9 sm:$0x3] %v3219
  %s3222 = scalar_lea.vmem %s1, 847
  %3223 = vst [vmem:[%s3222] sm:$0xfc] %v3219
  %s3224 = scalar_lea.vmem %s0, 928
  %v3225 = vld [vmem:[%s3224] sm:$0xff]
  %s3226 = scalar_lea.vmem %s1, 855
  %3227 = vst [vmem:[%s3226] ss:$9 sm:$0x3] %v3225
  %s3228 = scalar_lea.vmem %s1, 863
  %3229 = vst [vmem:[%s3228] sm:$0xfc] %v3225
  %s3230 = scalar_lea.vmem %s0, 944
  %v3231 = vld [vmem:[%s3230] sm:$0x1f]
  %s3232 = scalar_lea.vmem %s1, 871
  %3233 = vst [vmem:[%s3232] ss:$9 sm:$0x3] %v3231
  %s3234 = scalar_lea.vmem %s1, 879
  %3235 = vst [vmem:[%s3234] sm:$0x1c] %v3231
  %s3236 = scalar_lea.vmem %s0, 960
  %v3237 = vld [vmem:[%s3236] sm:$0xff]
  %s3238 = scalar_lea.vmem %s1, 884
  %3239 = vst [vmem:[%s3238] sm:$0xf] %v3237
  %s3240 = scalar_lea.vmem %s1, 892
  %3241 = vst [vmem:[%s3240] sm:$0xf0] %v3237
  %s3242 = scalar_lea.vmem %s0, 976
  %v3243 = vld [vmem:[%s3242] sm:$0xff]
  %s3244 = scalar_lea.vmem %s1, 900
  %3245 = vst [vmem:[%s3244] sm:$0xf] %v3243
  %s3246 = scalar_lea.vmem %s1, 908
  %3247 = vst [vmem:[%s3246] sm:$0xf0] %v3243
  %s3248 = scalar_lea.vmem %s0, 992
  %v3249 = vld [vmem:[%s3248] sm:$0xff]
  %s3250 = scalar_lea.vmem %s1, 916
  %3251 = vst [vmem:[%s3250] sm:$0xf] %v3249
  %s3252 = scalar_lea.vmem %s1, 924
  %3253 = vst [vmem:[%s3252] sm:$0xf0] %v3249
  %s3254 = scalar_lea.vmem %s0, 1008
  %v3255 = vld [vmem:[%s3254] sm:$0xff]
  %s3256 = scalar_lea.vmem %s1, 932
  %3257 = vst [vmem:[%s3256] sm:$0xf] %v3255
  %s3258 = scalar_lea.vmem %s1, 940
  %3259 = vst [vmem:[%s3258] sm:$0xf0] %v3255
  %s3260 = scalar_lea.vmem %s0, 1024
  %v3261 = vld [vmem:[%s3260] sm:$0x1f]
  %s3262 = scalar_lea.vmem %s1, 948
  %3263 = vst [vmem:[%s3262] sm:$0xf] %v3261
  %s3264 = scalar_lea.vmem %s1, 956
  %3265 = vst [vmem:[%s3264] sm:$0x10] %v3261
  %s3266 = scalar_lea.vmem %s0, 1040
  %v3267 = vld [vmem:[%s3266] sm:$0xff]
  %s3268 = scalar_lea.vmem %s1, 961
  %3269 = vst [vmem:[%s3268] sm:$0x7f] %v3267
  %s3270 = scalar_lea.vmem %s1, 969
  %3271 = vst [vmem:[%s3270] sm:$0x80] %v3267
  %s3272 = scalar_lea.vmem %s0, 1056
  %v3273 = vld [vmem:[%s3272] sm:$0xff]
  %s3274 = scalar_lea.vmem %s1, 977
  %3275 = vst [vmem:[%s3274] sm:$0x7f] %v3273
  %s3276 = scalar_lea.vmem %s1, 985
  %3277 = vst [vmem:[%s3276] sm:$0x80] %v3273
  %s3278 = scalar_lea.vmem %s0, 1072
  %v3279 = vld [vmem:[%s3278] sm:$0xff]
  %s3280 = scalar_lea.vmem %s1, 993
  %3281 = vst [vmem:[%s3280] sm:$0x7f] %v3279
  %s3282 = scalar_lea.vmem %s1, 1001
  %3283 = vst [vmem:[%s3282] sm:$0x80] %v3279
  %s3284 = scalar_lea.vmem %s0, 1088
  %v3285 = vld [vmem:[%s3284] sm:$0xff]
  %s3286 = scalar_lea.vmem %s1, 1009
  %3287 = vst [vmem:[%s3286] sm:$0x7f] %v3285
  %s3288 = scalar_lea.vmem %s1, 1017
  %3289 = vst [vmem:[%s3288] sm:$0x80] %v3285
  %s3290 = scalar_lea.vmem %s0, 1104
  %v3291 = vld [vmem:[%s3290] sm:$0x1f]
  %s3292 = scalar_lea.vmem %s1, 1025
  %3293 = vst [vmem:[%s3292] sm:$0x1f] %v3291
  %s3294 = scalar_lea.vmem %s0, 1120
  %v3295 = vld [vmem:[%s3294] sm:$0xff]
  %s3296 = scalar_lea.vmem %s1, 1030
  %3297 = vst [vmem:[%s3296] sm:$0x3] %v3295
  %s3298 = scalar_lea.vmem %s1, 1038
  %3299 = vst [vmem:[%s3298] sm:$0xfc] %v3295
  %s3300 = scalar_lea.vmem %s0, 1136
  %v3301 = vld [vmem:[%s3300] sm:$0xff]
  %s3302 = scalar_lea.vmem %s1, 1046
  %3303 = vst [vmem:[%s3302] sm:$0x3] %v3301
  %s3304 = scalar_lea.vmem %s1, 1054
  %3305 = vst [vmem:[%s3304] sm:$0xfc] %v3301
  %s3306 = scalar_lea.vmem %s0, 1152
  %v3307 = vld [vmem:[%s3306] sm:$0xff]
  %s3308 = scalar_lea.vmem %s1, 1062
  %3309 = vst [vmem:[%s3308] sm:$0x3] %v3307
  %s3310 = scalar_lea.vmem %s1, 1070
  %3311 = vst [vmem:[%s3310] sm:$0xfc] %v3307
  %s3312 = scalar_lea.vmem %s0, 1168
  %v3313 = vld [vmem:[%s3312] sm:$0xff]
  %s3314 = scalar_lea.vmem %s1, 1078
  %3315 = vst [vmem:[%s3314] sm:$0x3] %v3313
  %s3316 = scalar_lea.vmem %s1, 1086
  %3317 = vst [vmem:[%s3316] sm:$0xfc] %v3313
  %s3318 = scalar_lea.vmem %s0, 1184
  %v3319 = vld [vmem:[%s3318] sm:$0x1f]
  %s3320 = scalar_lea.vmem %s1, 1094
  %3321 = vst [vmem:[%s3320] sm:$0x3] %v3319
  %s3322 = scalar_lea.vmem %s1, 1102
  %3323 = vst [vmem:[%s3322] sm:$0x1c] %v3319
  %s3324 = scalar_lea.vmem %s0, 1200
  %v3325 = vld [vmem:[%s3324] sm:$0xff]
  %s3326 = scalar_lea.vmem %s1, 1107
  %3327 = vst [vmem:[%s3326] sm:$0x1f] %v3325
  %s3328 = scalar_lea.vmem %s1, 1115
  %3329 = vst [vmem:[%s3328] sm:$0xe0] %v3325
  %s3330 = scalar_lea.vmem %s0, 1216
  %v3331 = vld [vmem:[%s3330] sm:$0xff]
  %s3332 = scalar_lea.vmem %s1, 1123
  %3333 = vst [vmem:[%s3332] sm:$0x1f] %v3331
  %s3334 = scalar_lea.vmem %s1, 1131
  %3335 = vst [vmem:[%s3334] sm:$0xe0] %v3331
  %s3336 = scalar_lea.vmem %s0, 1232
  %v3337 = vld [vmem:[%s3336] sm:$0xff]
  %s3338 = scalar_lea.vmem %s1, 1139
  %3339 = vst [vmem:[%s3338] sm:$0x1f] %v3337
  %s3340 = scalar_lea.vmem %s1, 1147
  %3341 = vst [vmem:[%s3340] sm:$0xe0] %v3337
  %s3342 = scalar_lea.vmem %s0, 1248
  %v3343 = vld [vmem:[%s3342] sm:$0xff]
  %s3344 = scalar_lea.vmem %s1, 1155
  %3345 = vst [vmem:[%s3344] sm:$0x1f] %v3343
  %s3346 = scalar_lea.vmem %s1, 1163
  %3347 = vst [vmem:[%s3346] sm:$0xe0] %v3343
  %s3348 = scalar_lea.vmem %s0, 1264
  %v3349 = vld [vmem:[%s3348] sm:$0x1f]
  %s3350 = scalar_lea.vmem %s1, 1171
  %3351 = vst [vmem:[%s3350] sm:$0x1f] %v3349
  %s3352 = scalar_lea.vmem %s0, 1280
  %v3353 = vld [vmem:[%s3352] sm:$0xff]
  %s3354 = scalar_lea.vmem %s1, 1184
  %3355 = vst [vmem:[%s3354] sm:$0xff] %v3353
  %s3356 = scalar_lea.vmem %s0, 1296
  %v3357 = vld [vmem:[%s3356] sm:$0xff]
  %s3358 = scalar_lea.vmem %s1, 1200
  %3359 = vst [vmem:[%s3358] sm:$0xff] %v3357
  %s3360 = scalar_lea.vmem %s0, 1312
  %v3361 = vld [vmem:[%s3360] sm:$0xff]
  %s3362 = scalar_lea.vmem %s1, 1216
  %3363 = vst [vmem:[%s3362] sm:$0xff] %v3361
  %s3364 = scalar_lea.vmem %s0, 1328
  %v3365 = vld [vmem:[%s3364] sm:$0xff]
  %s3366 = scalar_lea.vmem %s1, 1232
  %3367 = vst [vmem:[%s3366] sm:$0xff] %v3365
  %s3368 = scalar_lea.vmem %s0, 1344
  %v3369 = vld [vmem:[%s3368] sm:$0x1f]
  %s3370 = scalar_lea.vmem %s1, 1248
  %3371 = vst [vmem:[%s3370] sm:$0x1f] %v3369
  %s3372 = scalar_lea.vmem %s0, 1360
  %v3373 = vld [vmem:[%s3372] sm:$0xff]
  %s3374 = scalar_lea.vmem %s1, 1253
  %3375 = vst [vmem:[%s3374] sm:$0x7] %v3373
  %s3376 = scalar_lea.vmem %s1, 1261
  %3377 = vst [vmem:[%s3376] sm:$0xf8] %v3373
  %s3378 = scalar_lea.vmem %s0, 1376
  %v3379 = vld [vmem:[%s3378] sm:$0xff]
  %s3380 = scalar_lea.vmem %s1, 1269
  %3381 = vst [vmem:[%s3380] sm:$0x7] %v3379
  %s3382 = scalar_lea.vmem %s1, 1277
  %3383 = vst [vmem:[%s3382] sm:$0xf8] %v3379
  %s3384 = scalar_lea.vmem %s0, 1392
  %v3385 = vld [vmem:[%s3384] sm:$0xff]
  %s3386 = scalar_lea.vmem %s1, 1285
  %3387 = vst [vmem:[%s3386] sm:$0x7] %v3385
  %s3388 = scalar_lea.vmem %s1, 1293
  %3389 = vst [vmem:[%s3388] sm:$0xf8] %v3385
  %s3390 = scalar_lea.vmem %s0, 1408
  %v3391 = vld [vmem:[%s3390] sm:$0xff]
  %s3392 = scalar_lea.vmem %s1, 1301
  %3393 = vst [vmem:[%s3392] sm:$0x7] %v3391
  %s3394 = scalar_lea.vmem %s1, 1309
  %3395 = vst [vmem:[%s3394] sm:$0xf8] %v3391
  %s3396 = scalar_lea.vmem %s0, 1424
  %v3397 = vld [vmem:[%s3396] sm:$0x1f]
  %s3398 = scalar_lea.vmem %s1, 1317
  %3399 = vst [vmem:[%s3398] sm:$0x7] %v3397
  %s3400 = scalar_lea.vmem %s1, 1325
  %3401 = vst [vmem:[%s3400] sm:$0x18] %v3397
  %s3402 = scalar_lea.vmem %s0, 1440
  %v3403 = vld [vmem:[%s3402] sm:$0xff]
  %s3404 = scalar_lea.vmem %s1, 1330
  %3405 = vst [vmem:[%s3404] sm:$0x3f] %v3403
  %s3406 = scalar_lea.vmem %s1, 1338
  %3407 = vst [vmem:[%s3406] sm:$0xc0] %v3403
  %s3408 = scalar_lea.vmem %s0, 1456
  %v3409 = vld [vmem:[%s3408] sm:$0xff]
  %s3410 = scalar_lea.vmem %s1, 1346
  %3411 = vst [vmem:[%s3410] sm:$0x3f] %v3409
  %s3412 = scalar_lea.vmem %s1, 1354
  %3413 = vst [vmem:[%s3412] sm:$0xc0] %v3409
  %s3414 = scalar_lea.vmem %s0, 1472
  %v3415 = vld [vmem:[%s3414] sm:$0xff]
  %s3416 = scalar_lea.vmem %s1, 1362
  %3417 = vst [vmem:[%s3416] sm:$0x3f] %v3415
  %s3418 = scalar_lea.vmem %s1, 1370
  %3419 = vst [vmem:[%s3418] sm:$0xc0] %v3415
  %s3420 = scalar_lea.vmem %s0, 1488
  %v3421 = vld [vmem:[%s3420] sm:$0xff]
  %s3422 = scalar_lea.vmem %s1, 1378
  %3423 = vst [vmem:[%s3422] sm:$0x3f] %v3421
  %s3424 = scalar_lea.vmem %s1, 1386
  %3425 = vst [vmem:[%s3424] sm:$0xc0] %v3421
  %s3426 = scalar_lea.vmem %s0, 1504
  %v3427 = vld [vmem:[%s3426] sm:$0x1f]
  %s3428 = scalar_lea.vmem %s1, 1394
  %3429 = vst [vmem:[%s3428] sm:$0x1f] %v3427
  %s3430 = scalar_lea.vmem %s0, 1520
  %v3431 = vld [vmem:[%s3430] sm:$0xff]
  %s3432 = scalar_lea.vmem %s1, 1399
  %3433 = vst [vmem:[%s3432] ss:$9 sm:$0x3] %v3431
  %s3434 = scalar_lea.vmem %s1, 1407
  %3435 = vst [vmem:[%s3434] sm:$0xfc] %v3431
  %s3436 = scalar_lea.vmem %s0, 1536
  %v3437 = vld [vmem:[%s3436] sm:$0xff]
  %s3438 = scalar_lea.vmem %s1, 1415
  %3439 = vst [vmem:[%s3438] ss:$9 sm:$0x3] %v3437
  %s3440 = scalar_lea.vmem %s1, 1423
  %3441 = vst [vmem:[%s3440] sm:$0xfc] %v3437
  %s3442 = scalar_lea.vmem %s0, 1552
  %v3443 = vld [vmem:[%s3442] sm:$0xff]
  %s3444 = scalar_lea.vmem %s1, 1431
  %3445 = vst [vmem:[%s3444] ss:$9 sm:$0x3] %v3443
  %s3446 = scalar_lea.vmem %s1, 1439
  %3447 = vst [vmem:[%s3446] sm:$0xfc] %v3443
  %s3448 = scalar_lea.vmem %s0, 1568
  %v3449 = vld [vmem:[%s3448] sm:$0xff]
  %s3450 = scalar_lea.vmem %s1, 1447
  %3451 = vst [vmem:[%s3450] ss:$9 sm:$0x3] %v3449
  %s3452 = scalar_lea.vmem %s1, 1455
  %3453 = vst [vmem:[%s3452] sm:$0xfc] %v3449
  %s3454 = scalar_lea.vmem %s0, 1584
  %v3455 = vld [vmem:[%s3454] sm:$0x1f]
  %s3456 = scalar_lea.vmem %s1, 1463
  %3457 = vst [vmem:[%s3456] ss:$9 sm:$0x3] %v3455
  %s3458 = scalar_lea.vmem %s1, 1471
  %3459 = vst [vmem:[%s3458] sm:$0x1c] %v3455
  %s3460 = scalar_lea.vmem %s0, 1600
  %v3461 = vld [vmem:[%s3460] sm:$0xff]
  %s3462 = scalar_lea.vmem %s1, 1476
  %3463 = vst [vmem:[%s3462] sm:$0xf] %v3461
  %s3464 = scalar_lea.vmem %s1, 1484
  %3465 = vst [vmem:[%s3464] sm:$0xf0] %v3461
  %s3466 = scalar_lea.vmem %s0, 1616
  %v3467 = vld [vmem:[%s3466] sm:$0xff]
  %s3468 = scalar_lea.vmem %s1, 1492
  %3469 = vst [vmem:[%s3468] sm:$0xf] %v3467
  %s3470 = scalar_lea.vmem %s1, 1500
  %3471 = vst [vmem:[%s3470] sm:$0xf0] %v3467
  %s3472 = scalar_lea.vmem %s0, 1632
  %v3473 = vld [vmem:[%s3472] sm:$0xff]
  %s3474 = scalar_lea.vmem %s1, 1508
  %3475 = vst [vmem:[%s3474] sm:$0xf] %v3473
  %s3476 = scalar_lea.vmem %s1, 1516
  %3477 = vst [vmem:[%s3476] sm:$0xf0] %v3473
  %s3478 = scalar_lea.vmem %s0, 1648
  %v3479 = vld [vmem:[%s3478] sm:$0xff]
  %s3480 = scalar_lea.vmem %s1, 1524
  %3481 = vst [vmem:[%s3480] sm:$0xf] %v3479
  %s3482 = scalar_lea.vmem %s1, 1532
  %3483 = vst [vmem:[%s3482] sm:$0xf0] %v3479
  %s3484 = scalar_lea.vmem %s0, 1664
  %v3485 = vld [vmem:[%s3484] sm:$0x1f]
  %s3486 = scalar_lea.vmem %s1, 1540
  %3487 = vst [vmem:[%s3486] sm:$0xf] %v3485
  %s3488 = scalar_lea.vmem %s1, 1548
  %3489 = vst [vmem:[%s3488] sm:$0x10] %v3485
  %s3490 = scalar_lea.vmem %s0, 1680
  %v3491 = vld [vmem:[%s3490] sm:$0xff]
  %s3492 = scalar_lea.vmem %s1, 1553
  %3493 = vst [vmem:[%s3492] sm:$0x7f] %v3491
  %s3494 = scalar_lea.vmem %s1, 1561
  %3495 = vst [vmem:[%s3494] sm:$0x80] %v3491
  %s3496 = scalar_lea.vmem %s0, 1696
  %v3497 = vld [vmem:[%s3496] sm:$0xff]
  %s3498 = scalar_lea.vmem %s1, 1569
  %3499 = vst [vmem:[%s3498] sm:$0x7f] %v3497
  %s3500 = scalar_lea.vmem %s1, 1577
  %3501 = vst [vmem:[%s3500] sm:$0x80] %v3497
  %s3502 = scalar_lea.vmem %s0, 1712
  %v3503 = vld [vmem:[%s3502] sm:$0xff]
  %s3504 = scalar_lea.vmem %s1, 1585
  %3505 = vst [vmem:[%s3504] sm:$0x7f] %v3503
  %s3506 = scalar_lea.vmem %s1, 1593
  %3507 = vst [vmem:[%s3506] sm:$0x80] %v3503
  %s3508 = scalar_lea.vmem %s0, 1728
  %v3509 = vld [vmem:[%s3508] sm:$0xff]
  %s3510 = scalar_lea.vmem %s1, 1601
  %3511 = vst [vmem:[%s3510] sm:$0x7f] %v3509
  %s3512 = scalar_lea.vmem %s1, 1609
  %3513 = vst [vmem:[%s3512] sm:$0x80] %v3509
  %s3514 = scalar_lea.vmem %s0, 1744
  %v3515 = vld [vmem:[%s3514] sm:$0x1f]
  %s3516 = scalar_lea.vmem %s1, 1617
  %3517 = vst [vmem:[%s3516] sm:$0x1f] %v3515
  %s3518 = scalar_lea.vmem %s0, 1760
  %v3519 = vld [vmem:[%s3518] sm:$0xff]
  %s3520 = scalar_lea.vmem %s1, 1622
  %3521 = vst [vmem:[%s3520] sm:$0x3] %v3519
  %s3522 = scalar_lea.vmem %s1, 1630
  %3523 = vst [vmem:[%s3522] sm:$0xfc] %v3519
  %s3524 = scalar_lea.vmem %s0, 1776
  %v3525 = vld [vmem:[%s3524] sm:$0xff]
  %s3526 = scalar_lea.vmem %s1, 1638
  %3527 = vst [vmem:[%s3526] sm:$0x3] %v3525
  %s3528 = scalar_lea.vmem %s1, 1646
  %3529 = vst [vmem:[%s3528] sm:$0xfc] %v3525
  %s3530 = scalar_lea.vmem %s0, 1792
  %v3531 = vld [vmem:[%s3530] sm:$0xff]
  %s3532 = scalar_lea.vmem %s1, 1654
  %3533 = vst [vmem:[%s3532] sm:$0x3] %v3531
  %s3534 = scalar_lea.vmem %s1, 1662
  %3535 = vst [vmem:[%s3534] sm:$0xfc] %v3531
  %s3536 = scalar_lea.vmem %s0, 1808
  %v3537 = vld [vmem:[%s3536] sm:$0xff]
  %s3538 = scalar_lea.vmem %s1, 1670
  %3539 = vst [vmem:[%s3538] sm:$0x3] %v3537
  %s3540 = scalar_lea.vmem %s1, 1678
  %3541 = vst [vmem:[%s3540] sm:$0xfc] %v3537
  %s3542 = scalar_lea.vmem %s0, 1824
  %v3543 = vld [vmem:[%s3542] sm:$0x1f]
  %s3544 = scalar_lea.vmem %s1, 1686
  %3545 = vst [vmem:[%s3544] sm:$0x3] %v3543
  %s3546 = scalar_lea.vmem %s1, 1694
  %3547 = vst [vmem:[%s3546] sm:$0x1c] %v3543
  %s3548 = scalar_lea.vmem %s0, 1840
  %v3549 = vld [vmem:[%s3548] sm:$0xff]
  %s3550 = scalar_lea.vmem %s1, 1699
  %3551 = vst [vmem:[%s3550] sm:$0x1f] %v3549
  %s3552 = scalar_lea.vmem %s1, 1707
  %3553 = vst [vmem:[%s3552] sm:$0xe0] %v3549
  %s3554 = scalar_lea.vmem %s0, 1856
  %v3555 = vld [vmem:[%s3554] sm:$0xff]
  %s3556 = scalar_lea.vmem %s1, 1715
  %3557 = vst [vmem:[%s3556] sm:$0x1f] %v3555
  %s3558 = scalar_lea.vmem %s1, 1723
  %3559 = vst [vmem:[%s3558] sm:$0xe0] %v3555
  %s3560 = scalar_lea.vmem %s0, 1872
  %v3561 = vld [vmem:[%s3560] sm:$0xff]
  %s3562 = scalar_lea.vmem %s1, 1731
  %3563 = vst [vmem:[%s3562] sm:$0x1f] %v3561
  %s3564 = scalar_lea.vmem %s1, 1739
  %3565 = vst [vmem:[%s3564] sm:$0xe0] %v3561
  %s3566 = scalar_lea.vmem %s0, 1888
  %v3567 = vld [vmem:[%s3566] sm:$0xff]
  %s3568 = scalar_lea.vmem %s1, 1747
  %3569 = vst [vmem:[%s3568] sm:$0x1f] %v3567
  %s3570 = scalar_lea.vmem %s1, 1755
  %3571 = vst [vmem:[%s3570] sm:$0xe0] %v3567
  %s3572 = scalar_lea.vmem %s0, 1904
  %v3573 = vld [vmem:[%s3572] sm:$0x1f]
  %s3574 = scalar_lea.vmem %s1, 1763
  %3575 = vst [vmem:[%s3574] sm:$0x1f] %v3573
  %s3576 = scalar_lea.vmem %s0, 1920
  %v3577 = vld [vmem:[%s3576] sm:$0xff]
  %s3578 = scalar_lea.vmem %s1, 1776
  %3579 = vst [vmem:[%s3578] sm:$0xff] %v3577
  %s3580 = scalar_lea.vmem %s0, 1936
  %v3581 = vld [vmem:[%s3580] sm:$0xff]
  %s3582 = scalar_lea.vmem %s1, 1792
  %3583 = vst [vmem:[%s3582] sm:$0xff] %v3581
  %s3584 = scalar_lea.vmem %s0, 1952
  %v3585 = vld [vmem:[%s3584] sm:$0xff]
  %s3586 = scalar_lea.vmem %s1, 1808
  %3587 = vst [vmem:[%s3586] sm:$0xff] %v3585
  %s3588 = scalar_lea.vmem %s0, 1968
  %v3589 = vld [vmem:[%s3588] sm:$0xff]
  %s3590 = scalar_lea.vmem %s1, 1824
  %3591 = vst [vmem:[%s3590] sm:$0xff] %v3589
  %s3592 = scalar_lea.vmem %s0, 1984
  %v3593 = vld [vmem:[%s3592] sm:$0x1f]
  %s3594 = scalar_lea.vmem %s1, 1840
  %3595 = vst [vmem:[%s3594] sm:$0x1f] %v3593
  %s3596 = scalar_lea.vmem %s0, 2000
  %v3597 = vld [vmem:[%s3596] sm:$0xff]
  %s3598 = scalar_lea.vmem %s1, 1845
  %3599 = vst [vmem:[%s3598] sm:$0x7] %v3597
  %s3600 = scalar_lea.vmem %s1, 1853
  %3601 = vst [vmem:[%s3600] sm:$0xf8] %v3597
  %s3602 = scalar_lea.vmem %s0, 2016
  %v3603 = vld [vmem:[%s3602] sm:$0xff]
  %s3604 = scalar_lea.vmem %s1, 1861
  %3605 = vst [vmem:[%s3604] sm:$0x7] %v3603
  %s3606 = scalar_lea.vmem %s1, 1869
  %3607 = vst [vmem:[%s3606] sm:$0xf8] %v3603
  %s3608 = scalar_lea.vmem %s0, 2032
  %v3609 = vld [vmem:[%s3608] sm:$0xff]
  %s3610 = scalar_lea.vmem %s1, 1877
  %3611 = vst [vmem:[%s3610] sm:$0x7] %v3609
  %s3612 = scalar_lea.vmem %s1, 1885
  %3613 = vst [vmem:[%s3612] sm:$0xf8] %v3609
  %s3614 = scalar_lea.vmem %s0, 2048
  %v3615 = vld [vmem:[%s3614] sm:$0xff]
  %s3616 = scalar_lea.vmem %s1, 1893
  %3617 = vst [vmem:[%s3616] sm:$0x7] %v3615
  %s3618 = scalar_lea.vmem %s1, 1901
  %3619 = vst [vmem:[%s3618] sm:$0xf8] %v3615
  %s3620 = scalar_lea.vmem %s0, 2064
  %v3621 = vld [vmem:[%s3620] sm:$0x1f]
  %s3622 = scalar_lea.vmem %s1, 1909
  %3623 = vst [vmem:[%s3622] sm:$0x7] %v3621
  %s3624 = scalar_lea.vmem %s1, 1917
  %3625 = vst [vmem:[%s3624] sm:$0x18] %v3621
  %s3626 = scalar_lea.vmem %s0, 2080
  %v3627 = vld [vmem:[%s3626] sm:$0xff]
  %s3628 = scalar_lea.vmem %s1, 1922
  %3629 = vst [vmem:[%s3628] sm:$0x3f] %v3627
  %s3630 = scalar_lea.vmem %s1, 1930
  %3631 = vst [vmem:[%s3630] sm:$0xc0] %v3627
  %s3632 = scalar_lea.vmem %s0, 2096
  %v3633 = vld [vmem:[%s3632] sm:$0xff]
  %s3634 = scalar_lea.vmem %s1, 1938
  %3635 = vst [vmem:[%s3634] sm:$0x3f] %v3633
  %s3636 = scalar_lea.vmem %s1, 1946
  %3637 = vst [vmem:[%s3636] sm:$0xc0] %v3633
  %s3638 = scalar_lea.vmem %s0, 2112
  %v3639 = vld [vmem:[%s3638] sm:$0xff]
  %s3640 = scalar_lea.vmem %s1, 1954
  %3641 = vst [vmem:[%s3640] sm:$0x3f] %v3639
  %s3642 = scalar_lea.vmem %s1, 1962
  %3643 = vst [vmem:[%s3642] sm:$0xc0] %v3639
  %s3644 = scalar_lea.vmem %s0, 2128
  %v3645 = vld [vmem:[%s3644] sm:$0xff]
  %s3646 = scalar_lea.vmem %s1, 1970
  %3647 = vst [vmem:[%s3646] sm:$0x3f] %v3645
  %s3648 = scalar_lea.vmem %s1, 1978
  %3649 = vst [vmem:[%s3648] sm:$0xc0] %v3645
  %s3650 = scalar_lea.vmem %s0, 2144
  %v3651 = vld [vmem:[%s3650] sm:$0x1f]
  %s3652 = scalar_lea.vmem %s1, 1986
  %3653 = vst [vmem:[%s3652] sm:$0x1f] %v3651
  %s3654 = scalar_lea.vmem %s0, 2160
  %v3655 = vld [vmem:[%s3654] sm:$0xff]
  %s3656 = scalar_lea.vmem %s1, 1991
  %3657 = vst [vmem:[%s3656] ss:$9 sm:$0x3] %v3655
  %s3658 = scalar_lea.vmem %s1, 1999
  %3659 = vst [vmem:[%s3658] sm:$0xfc] %v3655
  %s3660 = scalar_lea.vmem %s0, 2176
  %v3661 = vld [vmem:[%s3660] sm:$0xff]
  %s3662 = scalar_lea.vmem %s1, 2007
  %3663 = vst [vmem:[%s3662] ss:$9 sm:$0x3] %v3661
  %s3664 = scalar_lea.vmem %s1, 2015
  %3665 = vst [vmem:[%s3664] sm:$0xfc] %v3661
  %s3666 = scalar_lea.vmem %s0, 2192
  %v3667 = vld [vmem:[%s3666] sm:$0xff]
  %s3668 = scalar_lea.vmem %s1, 2023
  %3669 = vst [vmem:[%s3668] ss:$9 sm:$0x3] %v3667
  %s3670 = scalar_lea.vmem %s1, 2031
  %3671 = vst [vmem:[%s3670] sm:$0xfc] %v3667
  %s3672 = scalar_lea.vmem %s0, 2208
  %v3673 = vld [vmem:[%s3672] sm:$0xff]
  %s3674 = scalar_lea.vmem %s1, 2039
  %3675 = vst [vmem:[%s3674] ss:$9 sm:$0x3] %v3673
  %s3676 = scalar_lea.vmem %s1, 2047
  %3677 = vst [vmem:[%s3676] sm:$0xfc] %v3673
  %s3678 = scalar_lea.vmem %s0, 2224
  %v3679 = vld [vmem:[%s3678] sm:$0x1f]
  %s3680 = scalar_lea.vmem %s1, 2055
  %3681 = vst [vmem:[%s3680] ss:$9 sm:$0x3] %v3679
  %s3682 = scalar_lea.vmem %s1, 2063
  %3683 = vst [vmem:[%s3682] sm:$0x1c] %v3679
  %s3684 = scalar_lea.vmem %s0, 2240
  %v3685 = vld [vmem:[%s3684] sm:$0xff]
  %s3686 = scalar_lea.vmem %s1, 2068
  %3687 = vst [vmem:[%s3686] sm:$0xf] %v3685
  %s3688 = scalar_lea.vmem %s1, 2076
  %3689 = vst [vmem:[%s3688] sm:$0xf0] %v3685
  %s3690 = scalar_lea.vmem %s0, 2256
  %v3691 = vld [vmem:[%s3690] sm:$0xff]
  %s3692 = scalar_lea.vmem %s1, 2084
  %3693 = vst [vmem:[%s3692] sm:$0xf] %v3691
  %s3694 = scalar_lea.vmem %s1, 2092
  %3695 = vst [vmem:[%s3694] sm:$0xf0] %v3691
  %s3696 = scalar_lea.vmem %s0, 2272
  %v3697 = vld [vmem:[%s3696] sm:$0xff]
  %s3698 = scalar_lea.vmem %s1, 2100
  %3699 = vst [vmem:[%s3698] sm:$0xf] %v3697
  %s3700 = scalar_lea.vmem %s1, 2108
  %3701 = vst [vmem:[%s3700] sm:$0xf0] %v3697
  %s3702 = scalar_lea.vmem %s0, 2288
  %v3703 = vld [vmem:[%s3702] sm:$0xff]
  %s3704 = scalar_lea.vmem %s1, 2116
  %3705 = vst [vmem:[%s3704] sm:$0xf] %v3703
  %s3706 = scalar_lea.vmem %s1, 2124
  %3707 = vst [vmem:[%s3706] sm:$0xf0] %v3703
  %s3708 = scalar_lea.vmem %s0, 2304
  %v3709 = vld [vmem:[%s3708] sm:$0x1f]
  %s3710 = scalar_lea.vmem %s1, 2132
  %3711 = vst [vmem:[%s3710] sm:$0xf] %v3709
  %s3712 = scalar_lea.vmem %s1, 2140
  %3713 = vst [vmem:[%s3712] sm:$0x10] %v3709
  %s3714 = scalar_lea.vmem %s0, 2320
  %v3715 = vld [vmem:[%s3714] sm:$0xff]
  %s3716 = scalar_lea.vmem %s1, 2145
  %3717 = vst [vmem:[%s3716] sm:$0x7f] %v3715
  %s3718 = scalar_lea.vmem %s1, 2153
  %3719 = vst [vmem:[%s3718] sm:$0x80] %v3715
  %s3720 = scalar_lea.vmem %s0, 2336
  %v3721 = vld [vmem:[%s3720] sm:$0xff]
  %s3722 = scalar_lea.vmem %s1, 2161
  %3723 = vst [vmem:[%s3722] sm:$0x7f] %v3721
  %s3724 = scalar_lea.vmem %s1, 2169
  %3725 = vst [vmem:[%s3724] sm:$0x80] %v3721
  %s3726 = scalar_lea.vmem %s0, 2352
  %v3727 = vld [vmem:[%s3726] sm:$0xff]
  %s3728 = scalar_lea.vmem %s1, 2177
  %3729 = vst [vmem:[%s3728] sm:$0x7f] %v3727
  %s3730 = scalar_lea.vmem %s1, 2185
  %3731 = vst [vmem:[%s3730] sm:$0x80] %v3727
  %s3732 = scalar_lea.vmem %s0, 2368
  %v3733 = vld [vmem:[%s3732] sm:$0xff]
  %s3734 = scalar_lea.vmem %s1, 2193
  %3735 = vst [vmem:[%s3734] sm:$0x7f] %v3733
  %s3736 = scalar_lea.vmem %s1, 2201
  %3737 = vst [vmem:[%s3736] sm:$0x80] %v3733
  %s3738 = scalar_lea.vmem %s0, 2384
  %v3739 = vld [vmem:[%s3738] sm:$0x1f]
  %s3740 = scalar_lea.vmem %s1, 2209
  %3741 = vst [vmem:[%s3740] sm:$0x1f] %v3739
  %s3742 = scalar_lea.vmem %s0, 2400
  %v3743 = vld [vmem:[%s3742] sm:$0xff]
  %s3744 = scalar_lea.vmem %s1, 2214
  %3745 = vst [vmem:[%s3744] sm:$0x3] %v3743
  %s3746 = scalar_lea.vmem %s1, 2222
  %3747 = vst [vmem:[%s3746] sm:$0xfc] %v3743
  %s3748 = scalar_lea.vmem %s0, 2416
  %v3749 = vld [vmem:[%s3748] sm:$0xff]
  %s3750 = scalar_lea.vmem %s1, 2230
  %3751 = vst [vmem:[%s3750] sm:$0x3] %v3749
  %s3752 = scalar_lea.vmem %s1, 2238
  %3753 = vst [vmem:[%s3752] sm:$0xfc] %v3749
  %s3754 = scalar_lea.vmem %s0, 2432
  %v3755 = vld [vmem:[%s3754] sm:$0xff]
  %s3756 = scalar_lea.vmem %s1, 2246
  %3757 = vst [vmem:[%s3756] sm:$0x3] %v3755
  %s3758 = scalar_lea.vmem %s1, 2254
  %3759 = vst [vmem:[%s3758] sm:$0xfc] %v3755
  %s3760 = scalar_lea.vmem %s0, 2448
  %v3761 = vld [vmem:[%s3760] sm:$0xff]
  %s3762 = scalar_lea.vmem %s1, 2262
  %3763 = vst [vmem:[%s3762] sm:$0x3] %v3761
  %s3764 = scalar_lea.vmem %s1, 2270
  %3765 = vst [vmem:[%s3764] sm:$0xfc] %v3761
  %s3766 = scalar_lea.vmem %s0, 2464
  %v3767 = vld [vmem:[%s3766] sm:$0x1f]
  %s3768 = scalar_lea.vmem %s1, 2278
  %3769 = vst [vmem:[%s3768] sm:$0x3] %v3767
  %s3770 = scalar_lea.vmem %s1, 2286
  %3771 = vst [vmem:[%s3770] sm:$0x1c] %v3767
  %s3772 = scalar_lea.vmem %s0, 2480
  %v3773 = vld [vmem:[%s3772] sm:$0xff]
  %s3774 = scalar_lea.vmem %s1, 2291
  %3775 = vst [vmem:[%s3774] sm:$0x1f] %v3773
  %s3776 = scalar_lea.vmem %s1, 2299
  %3777 = vst [vmem:[%s3776] sm:$0xe0] %v3773
  %s3778 = scalar_lea.vmem %s0, 2496
  %v3779 = vld [vmem:[%s3778] sm:$0xff]
  %s3780 = scalar_lea.vmem %s1, 2307
  %3781 = vst [vmem:[%s3780] sm:$0x1f] %v3779
  %s3782 = scalar_lea.vmem %s1, 2315
  %3783 = vst [vmem:[%s3782] sm:$0xe0] %v3779
  %s3784 = scalar_lea.vmem %s0, 2512
  %v3785 = vld [vmem:[%s3784] sm:$0xff]
  %s3786 = scalar_lea.vmem %s1, 2323
  %3787 = vst [vmem:[%s3786] sm:$0x1f] %v3785
  %s3788 = scalar_lea.vmem %s1, 2331
  %3789 = vst [vmem:[%s3788] sm:$0xe0] %v3785
  %s3790 = scalar_lea.vmem %s0, 2528
  %v3791 = vld [vmem:[%s3790] sm:$0xff]
  %s3792 = scalar_lea.vmem %s1, 2339
  %3793 = vst [vmem:[%s3792] sm:$0x1f] %v3791
  %s3794 = scalar_lea.vmem %s1, 2347
  %3795 = vst [vmem:[%s3794] sm:$0xe0] %v3791
  %s3796 = scalar_lea.vmem %s0, 2544
  %v3797 = vld [vmem:[%s3796] sm:$0x1f]
  %s3798 = scalar_lea.vmem %s1, 2355
  %3799 = vst [vmem:[%s3798] sm:$0x1f] %v3797
  %s3800 = scalar_lea.vmem %s0, 2560
  %v3801 = vld [vmem:[%s3800] sm:$0xff]
  %s3802 = scalar_lea.vmem %s1, 2368
  %3803 = vst [vmem:[%s3802] sm:$0xff] %v3801
  %s3804 = scalar_lea.vmem %s0, 2576
  %v3805 = vld [vmem:[%s3804] sm:$0xff]
  %s3806 = scalar_lea.vmem %s1, 2384
  %3807 = vst [vmem:[%s3806] sm:$0xff] %v3805
  %s3808 = scalar_lea.vmem %s0, 2592
  %v3809 = vld [vmem:[%s3808] sm:$0xff]
  %s3810 = scalar_lea.vmem %s1, 2400
  %3811 = vst [vmem:[%s3810] sm:$0xff] %v3809
  %s3812 = scalar_lea.vmem %s0, 2608
  %v3813 = vld [vmem:[%s3812] sm:$0xff]
  %s3814 = scalar_lea.vmem %s1, 2416
  %3815 = vst [vmem:[%s3814] sm:$0xff] %v3813
  %s3816 = scalar_lea.vmem %s0, 2624
  %v3817 = vld [vmem:[%s3816] sm:$0x1f]
  %s3818 = scalar_lea.vmem %s1, 2432
  %3819 = vst [vmem:[%s3818] sm:$0x1f] %v3817
  %s3820 = scalar_lea.vmem %s0, 2640
  %v3821 = vld [vmem:[%s3820] sm:$0xff]
  %s3822 = scalar_lea.vmem %s1, 2437
  %3823 = vst [vmem:[%s3822] sm:$0x7] %v3821
  %s3824 = scalar_lea.vmem %s1, 2445
  %3825 = vst [vmem:[%s3824] sm:$0xf8] %v3821
  %s3826 = scalar_lea.vmem %s0, 2656
  %v3827 = vld [vmem:[%s3826] sm:$0xff]
  %s3828 = scalar_lea.vmem %s1, 2453
  %3829 = vst [vmem:[%s3828] sm:$0x7] %v3827
  %s3830 = scalar_lea.vmem %s1, 2461
  %3831 = vst [vmem:[%s3830] sm:$0xf8] %v3827
  %s3832 = scalar_lea.vmem %s0, 2672
  %v3833 = vld [vmem:[%s3832] sm:$0xff]
  %s3834 = scalar_lea.vmem %s1, 2469
  %3835 = vst [vmem:[%s3834] sm:$0x7] %v3833
  %s3836 = scalar_lea.vmem %s1, 2477
  %3837 = vst [vmem:[%s3836] sm:$0xf8] %v3833
  %s3838 = scalar_lea.vmem %s0, 2688
  %v3839 = vld [vmem:[%s3838] sm:$0xff]
  %s3840 = scalar_lea.vmem %s1, 2485
  %3841 = vst [vmem:[%s3840] sm:$0x7] %v3839
  %s3842 = scalar_lea.vmem %s1, 2493
  %3843 = vst [vmem:[%s3842] sm:$0xf8] %v3839
  %s3844 = scalar_lea.vmem %s0, 2704
  %v3845 = vld [vmem:[%s3844] sm:$0x1f]
  %s3846 = scalar_lea.vmem %s1, 2501
  %3847 = vst [vmem:[%s3846] sm:$0x7] %v3845
  %s3848 = scalar_lea.vmem %s1, 2509
  %3849 = vst [vmem:[%s3848] sm:$0x18] %v3845
  %s3850 = scalar_lea.vmem %s0, 2720
  %v3851 = vld [vmem:[%s3850] sm:$0xff]
  %s3852 = scalar_lea.vmem %s1, 2514
  %3853 = vst [vmem:[%s3852] sm:$0x3f] %v3851
  %s3854 = scalar_lea.vmem %s1, 2522
  %3855 = vst [vmem:[%s3854] sm:$0xc0] %v3851
  %s3856 = scalar_lea.vmem %s0, 2736
  %v3857 = vld [vmem:[%s3856] sm:$0xff]
  %s3858 = scalar_lea.vmem %s1, 2530
  %3859 = vst [vmem:[%s3858] sm:$0x3f] %v3857
  %s3860 = scalar_lea.vmem %s1, 2538
  %3861 = vst [vmem:[%s3860] sm:$0xc0] %v3857
  %s3862 = scalar_lea.vmem %s0, 2752
  %v3863 = vld [vmem:[%s3862] sm:$0xff]
  %s3864 = scalar_lea.vmem %s1, 2546
  %3865 = vst [vmem:[%s3864] sm:$0x3f] %v3863
  %s3866 = scalar_lea.vmem %s1, 2554
  %3867 = vst [vmem:[%s3866] sm:$0xc0] %v3863
  %s3868 = scalar_lea.vmem %s0, 2768
  %v3869 = vld [vmem:[%s3868] sm:$0xff]
  %s3870 = scalar_lea.vmem %s1, 2562
  %3871 = vst [vmem:[%s3870] sm:$0x3f] %v3869
  %s3872 = scalar_lea.vmem %s1, 2570
  %3873 = vst [vmem:[%s3872] sm:$0xc0] %v3869
  %s3874 = scalar_lea.vmem %s0, 2784
  %v3875 = vld [vmem:[%s3874] sm:$0x1f]
  %s3876 = scalar_lea.vmem %s1, 2578
  %3877 = vst [vmem:[%s3876] sm:$0x1f] %v3875
  %s3878 = scalar_lea.vmem %s0, 2800
  %v3879 = vld [vmem:[%s3878] sm:$0xff]
  %s3880 = scalar_lea.vmem %s1, 2583
  %3881 = vst [vmem:[%s3880] ss:$9 sm:$0x3] %v3879
  %s3882 = scalar_lea.vmem %s1, 2591
  %3883 = vst [vmem:[%s3882] sm:$0xfc] %v3879
  %s3884 = scalar_lea.vmem %s0, 2816
  %v3885 = vld [vmem:[%s3884] sm:$0xff]
  %s3886 = scalar_lea.vmem %s1, 2599
  %3887 = vst [vmem:[%s3886] ss:$9 sm:$0x3] %v3885
  %s3888 = scalar_lea.vmem %s1, 2607
  %3889 = vst [vmem:[%s3888] sm:$0xfc] %v3885
  %s3890 = scalar_lea.vmem %s0, 2832
  %v3891 = vld [vmem:[%s3890] sm:$0xff]
  %s3892 = scalar_lea.vmem %s1, 2615
  %3893 = vst [vmem:[%s3892] ss:$9 sm:$0x3] %v3891
  %s3894 = scalar_lea.vmem %s1, 2623
  %3895 = vst [vmem:[%s3894] sm:$0xfc] %v3891
  %s3896 = scalar_lea.vmem %s0, 2848
  %v3897 = vld [vmem:[%s3896] sm:$0xff]
  %s3898 = scalar_lea.vmem %s1, 2631
  %3899 = vst [vmem:[%s3898] ss:$9 sm:$0x3] %v3897
  %s3900 = scalar_lea.vmem %s1, 2639
  %3901 = vst [vmem:[%s3900] sm:$0xfc] %v3897
  %s3902 = scalar_lea.vmem %s0, 2864
  %v3903 = vld [vmem:[%s3902] sm:$0x1f]
  %s3904 = scalar_lea.vmem %s1, 2647
  %3905 = vst [vmem:[%s3904] ss:$9 sm:$0x3] %v3903
  %s3906 = scalar_lea.vmem %s1, 2655
  %3907 = vst [vmem:[%s3906] sm:$0x1c] %v3903
  %s3908 = scalar_lea.vmem %s0, 2880
  %v3909 = vld [vmem:[%s3908] sm:$0xff]
  %s3910 = scalar_lea.vmem %s1, 2660
  %3911 = vst [vmem:[%s3910] sm:$0xf] %v3909
  %s3912 = scalar_lea.vmem %s1, 2668
  %3913 = vst [vmem:[%s3912] sm:$0xf0] %v3909
  %s3914 = scalar_lea.vmem %s0, 2896
  %v3915 = vld [vmem:[%s3914] sm:$0xff]
  %s3916 = scalar_lea.vmem %s1, 2676
  %3917 = vst [vmem:[%s3916] sm:$0xf] %v3915
  %s3918 = scalar_lea.vmem %s1, 2684
  %3919 = vst [vmem:[%s3918] sm:$0xf0] %v3915
  %s3920 = scalar_lea.vmem %s0, 2912
  %v3921 = vld [vmem:[%s3920] sm:$0xff]
  %s3922 = scalar_lea.vmem %s1, 2692
  %3923 = vst [vmem:[%s3922] sm:$0xf] %v3921
  %s3924 = scalar_lea.vmem %s1, 2700
  %3925 = vst [vmem:[%s3924] sm:$0xf0] %v3921
  %s3926 = scalar_lea.vmem %s0, 2928
  %v3927 = vld [vmem:[%s3926] sm:$0xff]
  %s3928 = scalar_lea.vmem %s1, 2708
  %3929 = vst [vmem:[%s3928] sm:$0xf] %v3927
  %s3930 = scalar_lea.vmem %s1, 2716
  %3931 = vst [vmem:[%s3930] sm:$0xf0] %v3927
  %s3932 = scalar_lea.vmem %s0, 2944
  %v3933 = vld [vmem:[%s3932] sm:$0x1f]
  %s3934 = scalar_lea.vmem %s1, 2724
  %3935 = vst [vmem:[%s3934] sm:$0xf] %v3933
  %s3936 = scalar_lea.vmem %s1, 2732
  %3937 = vst [vmem:[%s3936] sm:$0x10] %v3933
  %s3938 = scalar_lea.vmem %s0, 2960
  %v3939 = vld [vmem:[%s3938] sm:$0xff]
  %s3940 = scalar_lea.vmem %s1, 2737
  %3941 = vst [vmem:[%s3940] sm:$0x7f] %v3939
  %s3942 = scalar_lea.vmem %s1, 2745
  %3943 = vst [vmem:[%s3942] sm:$0x80] %v3939
  %s3944 = scalar_lea.vmem %s0, 2976
  %v3945 = vld [vmem:[%s3944] sm:$0xff]
  %s3946 = scalar_lea.vmem %s1, 2753
  %3947 = vst [vmem:[%s3946] sm:$0x7f] %v3945
  %s3948 = scalar_lea.vmem %s1, 2761
  %3949 = vst [vmem:[%s3948] sm:$0x80] %v3945
  %s3950 = scalar_lea.vmem %s0, 2992
  %v3951 = vld [vmem:[%s3950] sm:$0xff]
  %s3952 = scalar_lea.vmem %s1, 2769
  %3953 = vst [vmem:[%s3952] sm:$0x7f] %v3951
  %s3954 = scalar_lea.vmem %s1, 2777
  %3955 = vst [vmem:[%s3954] sm:$0x80] %v3951
  %s3956 = scalar_lea.vmem %s0, 3008
  %v3957 = vld [vmem:[%s3956] sm:$0xff]
  %s3958 = scalar_lea.vmem %s1, 2785
  %3959 = vst [vmem:[%s3958] sm:$0x7f] %v3957
  %s3960 = scalar_lea.vmem %s1, 2793
  %3961 = vst [vmem:[%s3960] sm:$0x80] %v3957
  %s3962 = scalar_lea.vmem %s0, 3024
  %v3963 = vld [vmem:[%s3962] sm:$0x1f]
  %s3964 = scalar_lea.vmem %s1, 2801
  %3965 = vst [vmem:[%s3964] sm:$0x1f] %v3963
  %s3966 = scalar_lea.vmem %s0, 3040
  %v3967 = vld [vmem:[%s3966] sm:$0xff]
  %s3968 = scalar_lea.vmem %s1, 2806
  %3969 = vst [vmem:[%s3968] sm:$0x3] %v3967
  %s3970 = scalar_lea.vmem %s1, 2814
  %3971 = vst [vmem:[%s3970] sm:$0xfc] %v3967
  %s3972 = scalar_lea.vmem %s0, 3056
  %v3973 = vld [vmem:[%s3972] sm:$0xff]
  %s3974 = scalar_lea.vmem %s1, 2822
  %3975 = vst [vmem:[%s3974] sm:$0x3] %v3973
  %s3976 = scalar_lea.vmem %s1, 2830
  %3977 = vst [vmem:[%s3976] sm:$0xfc] %v3973
  %s3978 = scalar_lea.vmem %s0, 3072
  %v3979 = vld [vmem:[%s3978] sm:$0xff]
  %s3980 = scalar_lea.vmem %s1, 2838
  %3981 = vst [vmem:[%s3980] sm:$0x3] %v3979
  %s3982 = scalar_lea.vmem %s1, 2846
  %3983 = vst [vmem:[%s3982] sm:$0xfc] %v3979
  %s3984 = scalar_lea.vmem %s0, 3088
  %v3985 = vld [vmem:[%s3984] sm:$0xff]
  %s3986 = scalar_lea.vmem %s1, 2854
  %3987 = vst [vmem:[%s3986] sm:$0x3] %v3985
  %s3988 = scalar_lea.vmem %s1, 2862
  %3989 = vst [vmem:[%s3988] sm:$0xfc] %v3985
  %s3990 = scalar_lea.vmem %s0, 3104
  %v3991 = vld [vmem:[%s3990] sm:$0x1f]
  %s3992 = scalar_lea.vmem %s1, 2870
  %3993 = vst [vmem:[%s3992] sm:$0x3] %v3991
  %s3994 = scalar_lea.vmem %s1, 2878
  %3995 = vst [vmem:[%s3994] sm:$0x1c] %v3991
  %s3996 = scalar_lea.vmem %s0, 3120
  %v3997 = vld [vmem:[%s3996] sm:$0xff]
  %s3998 = scalar_lea.vmem %s1, 2883
  %3999 = vst [vmem:[%s3998] sm:$0x1f] %v3997
  %s4000 = scalar_lea.vmem %s1, 2891
  %4001 = vst [vmem:[%s4000] sm:$0xe0] %v3997
  %s4002 = scalar_lea.vmem %s0, 3136
  %v4003 = vld [vmem:[%s4002] sm:$0xff]
  %s4004 = scalar_lea.vmem %s1, 2899
  %4005 = vst [vmem:[%s4004] sm:$0x1f] %v4003
  %s4006 = scalar_lea.vmem %s1, 2907
  %4007 = vst [vmem:[%s4006] sm:$0xe0] %v4003
  %s4008 = scalar_lea.vmem %s0, 3152
  %v4009 = vld [vmem:[%s4008] sm:$0xff]
  %s4010 = scalar_lea.vmem %s1, 2915
  %4011 = vst [vmem:[%s4010] sm:$0x1f] %v4009
  %s4012 = scalar_lea.vmem %s1, 2923
  %4013 = vst [vmem:[%s4012] sm:$0xe0] %v4009
  %s4014 = scalar_lea.vmem %s0, 3168
  %v4015 = vld [vmem:[%s4014] sm:$0xff]
  %s4016 = scalar_lea.vmem %s1, 2931
  %4017 = vst [vmem:[%s4016] sm:$0x1f] %v4015
  %s4018 = scalar_lea.vmem %s1, 2939
  %4019 = vst [vmem:[%s4018] sm:$0xe0] %v4015
  %s4020 = scalar_lea.vmem %s0, 3184
  %v4021 = vld [vmem:[%s4020] sm:$0x1f]
  %s4022 = scalar_lea.vmem %s1, 2947
  %4023 = vst [vmem:[%s4022] sm:$0x1f] %v4021
  %s4024 = scalar_lea.vmem %s0, 3200
  %v4025 = vld [vmem:[%s4024] sm:$0xff]
  %s4026 = scalar_lea.vmem %s1, 2960
  %4027 = vst [vmem:[%s4026] sm:$0xff] %v4025
  %s4028 = scalar_lea.vmem %s0, 3216
  %v4029 = vld [vmem:[%s4028] sm:$0xff]
  %s4030 = scalar_lea.vmem %s1, 2976
  %4031 = vst [vmem:[%s4030] sm:$0xff] %v4029
  %s4032 = scalar_lea.vmem %s0, 3232
  %v4033 = vld [vmem:[%s4032] sm:$0xff]
  %s4034 = scalar_lea.vmem %s1, 2992
  %4035 = vst [vmem:[%s4034] sm:$0xff] %v4033
  %s4036 = scalar_lea.vmem %s0, 3248
  %v4037 = vld [vmem:[%s4036] sm:$0xff]
  %s4038 = scalar_lea.vmem %s1, 3008
  %4039 = vst [vmem:[%s4038] sm:$0xff] %v4037
  %s4040 = scalar_lea.vmem %s0, 3264
  %v4041 = vld [vmem:[%s4040] sm:$0x1f]
  %s4042 = scalar_lea.vmem %s1, 3024
  %4043 = vst [vmem:[%s4042] sm:$0x1f] %v4041
  %s4044 = scalar_lea.vmem %s0, 3280
  %v4045 = vld [vmem:[%s4044] sm:$0xff]
  %s4046 = scalar_lea.vmem %s1, 3029
  %4047 = vst [vmem:[%s4046] sm:$0x7] %v4045
  %s4048 = scalar_lea.vmem %s1, 3037
  %4049 = vst [vmem:[%s4048] sm:$0xf8] %v4045
  %s4050 = scalar_lea.vmem %s0, 3296
  %v4051 = vld [vmem:[%s4050] sm:$0xff]
  %s4052 = scalar_lea.vmem %s1, 3045
  %4053 = vst [vmem:[%s4052] sm:$0x7] %v4051
  %s4054 = scalar_lea.vmem %s1, 3053
  %4055 = vst [vmem:[%s4054] sm:$0xf8] %v4051
  %s4056 = scalar_lea.vmem %s0, 3312
  %v4057 = vld [vmem:[%s4056] sm:$0xff]
  %s4058 = scalar_lea.vmem %s1, 3061
  %4059 = vst [vmem:[%s4058] sm:$0x7] %v4057
  %s4060 = scalar_lea.vmem %s1, 3069
  %4061 = vst [vmem:[%s4060] sm:$0xf8] %v4057
  %s4062 = scalar_lea.vmem %s0, 3328
  %v4063 = vld [vmem:[%s4062] sm:$0xff]
  %s4064 = scalar_lea.vmem %s1, 3077
  %4065 = vst [vmem:[%s4064] sm:$0x7] %v4063
  %s4066 = scalar_lea.vmem %s1, 3085
  %4067 = vst [vmem:[%s4066] sm:$0xf8] %v4063
  %s4068 = scalar_lea.vmem %s0, 3344
  %v4069 = vld [vmem:[%s4068] sm:$0x1f]
  %s4070 = scalar_lea.vmem %s1, 3093
  %4071 = vst [vmem:[%s4070] sm:$0x7] %v4069
  %s4072 = scalar_lea.vmem %s1, 3101
  %4073 = vst [vmem:[%s4072] sm:$0x18] %v4069
  %s4074 = scalar_lea.vmem %s0, 3360
  %v4075 = vld [vmem:[%s4074] sm:$0xff]
  %s4076 = scalar_lea.vmem %s1, 3106
  %4077 = vst [vmem:[%s4076] sm:$0x3f] %v4075
  %s4078 = scalar_lea.vmem %s1, 3114
  %4079 = vst [vmem:[%s4078] sm:$0xc0] %v4075
  %s4080 = scalar_lea.vmem %s0, 3376
  %v4081 = vld [vmem:[%s4080] sm:$0xff]
  %s4082 = scalar_lea.vmem %s1, 3122
  %4083 = vst [vmem:[%s4082] sm:$0x3f] %v4081
  %s4084 = scalar_lea.vmem %s1, 3130
  %4085 = vst [vmem:[%s4084] sm:$0xc0] %v4081
  %s4086 = scalar_lea.vmem %s0, 3392
  %v4087 = vld [vmem:[%s4086] sm:$0xff]
  %s4088 = scalar_lea.vmem %s1, 3138
  %4089 = vst [vmem:[%s4088] sm:$0x3f] %v4087
  %s4090 = scalar_lea.vmem %s1, 3146
  %4091 = vst [vmem:[%s4090] sm:$0xc0] %v4087
  %s4092 = scalar_lea.vmem %s0, 3408
  %v4093 = vld [vmem:[%s4092] sm:$0xff]
  %s4094 = scalar_lea.vmem %s1, 3154
  %4095 = vst [vmem:[%s4094] sm:$0x3f] %v4093
  %s4096 = scalar_lea.vmem %s1, 3162
  %4097 = vst [vmem:[%s4096] sm:$0xc0] %v4093
  %s4098 = scalar_lea.vmem %s0, 3424
  %v4099 = vld [vmem:[%s4098] sm:$0x1f]
  %s4100 = scalar_lea.vmem %s1, 3170
  %4101 = vst [vmem:[%s4100] sm:$0x1f] %v4099
  %s4102 = scalar_lea.vmem %s0, 3440
  %v4103 = vld [vmem:[%s4102] sm:$0xff]
  %s4104 = scalar_lea.vmem %s1, 3175
  %4105 = vst [vmem:[%s4104] ss:$9 sm:$0x3] %v4103
  %s4106 = scalar_lea.vmem %s1, 3183
  %4107 = vst [vmem:[%s4106] sm:$0xfc] %v4103
  %s4108 = scalar_lea.vmem %s0, 3456
  %v4109 = vld [vmem:[%s4108] sm:$0xff]
  %s4110 = scalar_lea.vmem %s1, 3191
  %4111 = vst [vmem:[%s4110] ss:$9 sm:$0x3] %v4109
  %s4112 = scalar_lea.vmem %s1, 3199
  %4113 = vst [vmem:[%s4112] sm:$0xfc] %v4109
  %s4114 = scalar_lea.vmem %s0, 3472
  %v4115 = vld [vmem:[%s4114] sm:$0xff]
  %s4116 = scalar_lea.vmem %s1, 3207
  %4117 = vst [vmem:[%s4116] ss:$9 sm:$0x3] %v4115
  %s4118 = scalar_lea.vmem %s1, 3215
  %4119 = vst [vmem:[%s4118] sm:$0xfc] %v4115
  %s4120 = scalar_lea.vmem %s0, 3488
  %v4121 = vld [vmem:[%s4120] sm:$0xff]
  %s4122 = scalar_lea.vmem %s1, 3223
  %4123 = vst [vmem:[%s4122] ss:$9 sm:$0x3] %v4121
  %s4124 = scalar_lea.vmem %s1, 3231
  %4125 = vst [vmem:[%s4124] sm:$0xfc] %v4121
  %s4126 = scalar_lea.vmem %s0, 3504
  %v4127 = vld [vmem:[%s4126] sm:$0x1f]
  %s4128 = scalar_lea.vmem %s1, 3239
  %4129 = vst [vmem:[%s4128] ss:$9 sm:$0x3] %v4127
  %s4130 = scalar_lea.vmem %s1, 3247
  %4131 = vst [vmem:[%s4130] sm:$0x1c] %v4127
  %s4132 = scalar_lea.vmem %s0, 3520
  %v4133 = vld [vmem:[%s4132] sm:$0xff]
  %s4134 = scalar_lea.vmem %s1, 3252
  %4135 = vst [vmem:[%s4134] sm:$0xf] %v4133
  %s4136 = scalar_lea.vmem %s1, 3260
  %4137 = vst [vmem:[%s4136] sm:$0xf0] %v4133
  %s4138 = scalar_lea.vmem %s0, 3536
  %v4139 = vld [vmem:[%s4138] sm:$0xff]
  %s4140 = scalar_lea.vmem %s1, 3268
  %4141 = vst [vmem:[%s4140] sm:$0xf] %v4139
  %s4142 = scalar_lea.vmem %s1, 3276
  %4143 = vst [vmem:[%s4142] sm:$0xf0] %v4139
  %s4144 = scalar_lea.vmem %s0, 3552
  %v4145 = vld [vmem:[%s4144] sm:$0xff]
  %s4146 = scalar_lea.vmem %s1, 3284
  %4147 = vst [vmem:[%s4146] sm:$0xf] %v4145
  %s4148 = scalar_lea.vmem %s1, 3292
  %4149 = vst [vmem:[%s4148] sm:$0xf0] %v4145
  %s4150 = scalar_lea.vmem %s0, 3568
  %v4151 = vld [vmem:[%s4150] sm:$0xff]
  %s4152 = scalar_lea.vmem %s1, 3300
  %4153 = vst [vmem:[%s4152] sm:$0xf] %v4151
  %s4154 = scalar_lea.vmem %s1, 3308
  %4155 = vst [vmem:[%s4154] sm:$0xf0] %v4151
  %s4156 = scalar_lea.vmem %s0, 3584
  %v4157 = vld [vmem:[%s4156] sm:$0x1f]
  %s4158 = scalar_lea.vmem %s1, 3316
  %4159 = vst [vmem:[%s4158] sm:$0xf] %v4157
  %s4160 = scalar_lea.vmem %s1, 3324
  %4161 = vst [vmem:[%s4160] sm:$0x10] %v4157
  %s4162 = scalar_lea.vmem %s0, 3600
  %v4163 = vld [vmem:[%s4162] sm:$0xff]
  %s4164 = scalar_lea.vmem %s1, 3329
  %4165 = vst [vmem:[%s4164] sm:$0x7f] %v4163
  %s4166 = scalar_lea.vmem %s1, 3337
  %4167 = vst [vmem:[%s4166] sm:$0x80] %v4163
  %s4168 = scalar_lea.vmem %s0, 3616
  %v4169 = vld [vmem:[%s4168] sm:$0xff]
  %s4170 = scalar_lea.vmem %s1, 3345
  %4171 = vst [vmem:[%s4170] sm:$0x7f] %v4169
  %s4172 = scalar_lea.vmem %s1, 3353
  %4173 = vst [vmem:[%s4172] sm:$0x80] %v4169
  %s4174 = scalar_lea.vmem %s0, 3632
  %v4175 = vld [vmem:[%s4174] sm:$0xff]
  %s4176 = scalar_lea.vmem %s1, 3361
  %4177 = vst [vmem:[%s4176] sm:$0x7f] %v4175
  %s4178 = scalar_lea.vmem %s1, 3369
  %4179 = vst [vmem:[%s4178] sm:$0x80] %v4175
  %s4180 = scalar_lea.vmem %s0, 3648
  %v4181 = vld [vmem:[%s4180] sm:$0xff]
  %s4182 = scalar_lea.vmem %s1, 3377
  %4183 = vst [vmem:[%s4182] sm:$0x7f] %v4181
  %s4184 = scalar_lea.vmem %s1, 3385
  %4185 = vst [vmem:[%s4184] sm:$0x80] %v4181
  %s4186 = scalar_lea.vmem %s0, 3664
  %v4187 = vld [vmem:[%s4186] sm:$0x1f]
  %s4188 = scalar_lea.vmem %s1, 3393
  %4189 = vst [vmem:[%s4188] sm:$0x1f] %v4187
  %s4190 = scalar_lea.vmem %s0, 3680
  %v4191 = vld [vmem:[%s4190] sm:$0xff]
  %s4192 = scalar_lea.vmem %s1, 3398
  %4193 = vst [vmem:[%s4192] sm:$0x3] %v4191
  %s4194 = scalar_lea.vmem %s1, 3406
  %4195 = vst [vmem:[%s4194] sm:$0xfc] %v4191
  %s4196 = scalar_lea.vmem %s0, 3696
  %v4197 = vld [vmem:[%s4196] sm:$0xff]
  %s4198 = scalar_lea.vmem %s1, 3414
  %4199 = vst [vmem:[%s4198] sm:$0x3] %v4197
  %s4200 = scalar_lea.vmem %s1, 3422
  %4201 = vst [vmem:[%s4200] sm:$0xfc] %v4197
  %s4202 = scalar_lea.vmem %s0, 3712
  %v4203 = vld [vmem:[%s4202] sm:$0xff]
  %s4204 = scalar_lea.vmem %s1, 3430
  %4205 = vst [vmem:[%s4204] sm:$0x3] %v4203
  %s4206 = scalar_lea.vmem %s1, 3438
  %4207 = vst [vmem:[%s4206] sm:$0xfc] %v4203
  %s4208 = scalar_lea.vmem %s0, 3728
  %v4209 = vld [vmem:[%s4208] sm:$0xff]
  %s4210 = scalar_lea.vmem %s1, 3446
  %4211 = vst [vmem:[%s4210] sm:$0x3] %v4209
  %s4212 = scalar_lea.vmem %s1, 3454
  %4213 = vst [vmem:[%s4212] sm:$0xfc] %v4209
  %s4214 = scalar_lea.vmem %s0, 3744
  %v4215 = vld [vmem:[%s4214] sm:$0x1f]
  %s4216 = scalar_lea.vmem %s1, 3462
  %4217 = vst [vmem:[%s4216] sm:$0x3] %v4215
  %s4218 = scalar_lea.vmem %s1, 3470
  %4219 = vst [vmem:[%s4218] sm:$0x1c] %v4215
  %s4220 = scalar_lea.vmem %s0, 3760
  %v4221 = vld [vmem:[%s4220] sm:$0xff]
  %s4222 = scalar_lea.vmem %s1, 3475
  %4223 = vst [vmem:[%s4222] sm:$0x1f] %v4221
  %s4224 = scalar_lea.vmem %s1, 3483
  %4225 = vst [vmem:[%s4224] sm:$0xe0] %v4221
  %s4226 = scalar_lea.vmem %s0, 3776
  %v4227 = vld [vmem:[%s4226] sm:$0xff]
  %s4228 = scalar_lea.vmem %s1, 3491
  %4229 = vst [vmem:[%s4228] sm:$0x1f] %v4227
  %s4230 = scalar_lea.vmem %s1, 3499
  %4231 = vst [vmem:[%s4230] sm:$0xe0] %v4227
  %s4232 = scalar_lea.vmem %s0, 3792
  %v4233 = vld [vmem:[%s4232] sm:$0xff]
  %s4234 = scalar_lea.vmem %s1, 3507
  %4235 = vst [vmem:[%s4234] sm:$0x1f] %v4233
  %s4236 = scalar_lea.vmem %s1, 3515
  %4237 = vst [vmem:[%s4236] sm:$0xe0] %v4233
  %s4238 = scalar_lea.vmem %s0, 3808
  %v4239 = vld [vmem:[%s4238] sm:$0xff]
  %s4240 = scalar_lea.vmem %s1, 3523
  %4241 = vst [vmem:[%s4240] sm:$0x1f] %v4239
  %s4242 = scalar_lea.vmem %s1, 3531
  %4243 = vst [vmem:[%s4242] sm:$0xe0] %v4239
  %s4244 = scalar_lea.vmem %s0, 3824
  %v4245 = vld [vmem:[%s4244] sm:$0x1f]
  %s4246 = scalar_lea.vmem %s1, 3539
  %4247 = vst [vmem:[%s4246] sm:$0x1f] %v4245
  %s4248 = scalar_lea.vmem %s0, 3840
  %v4249 = vld [vmem:[%s4248] sm:$0xff]
  %s4250 = scalar_lea.vmem %s1, 3552
  %4251 = vst [vmem:[%s4250] sm:$0xff] %v4249
  %s4252 = scalar_lea.vmem %s0, 3856
  %v4253 = vld [vmem:[%s4252] sm:$0xff]
  %s4254 = scalar_lea.vmem %s1, 3568
  %4255 = vst [vmem:[%s4254] sm:$0xff] %v4253
  %s4256 = scalar_lea.vmem %s0, 3872
  %v4257 = vld [vmem:[%s4256] sm:$0xff]
  %s4258 = scalar_lea.vmem %s1, 3584
  %4259 = vst [vmem:[%s4258] sm:$0xff] %v4257
  %s4260 = scalar_lea.vmem %s0, 3888
  %v4261 = vld [vmem:[%s4260] sm:$0xff]
  %s4262 = scalar_lea.vmem %s1, 3600
  %4263 = vst [vmem:[%s4262] sm:$0xff] %v4261
  %s4264 = scalar_lea.vmem %s0, 3904
  %v4265 = vld [vmem:[%s4264] sm:$0x1f]
  %s4266 = scalar_lea.vmem %s1, 3616
  %4267 = vst [vmem:[%s4266] sm:$0x1f] %v4265
  %s4268 = scalar_lea.vmem %s0, 3920
  %v4269 = vld [vmem:[%s4268] sm:$0xff]
  %s4270 = scalar_lea.vmem %s1, 3621
  %4271 = vst [vmem:[%s4270] sm:$0x7] %v4269
  %s4272 = scalar_lea.vmem %s1, 3629
  %4273 = vst [vmem:[%s4272] sm:$0xf8] %v4269
  %s4274 = scalar_lea.vmem %s0, 3936
  %v4275 = vld [vmem:[%s4274] sm:$0xff]
  %s4276 = scalar_lea.vmem %s1, 3637
  %4277 = vst [vmem:[%s4276] sm:$0x7] %v4275
  %s4278 = scalar_lea.vmem %s1, 3645
  %4279 = vst [vmem:[%s4278] sm:$0xf8] %v4275
  %s4280 = scalar_lea.vmem %s0, 3952
  %v4281 = vld [vmem:[%s4280] sm:$0xff]
  %s4282 = scalar_lea.vmem %s1, 3653
  %4283 = vst [vmem:[%s4282] sm:$0x7] %v4281
  %s4284 = scalar_lea.vmem %s1, 3661
  %4285 = vst [vmem:[%s4284] sm:$0xf8] %v4281
  %s4286 = scalar_lea.vmem %s0, 3968
  %v4287 = vld [vmem:[%s4286] sm:$0xff]
  %s4288 = scalar_lea.vmem %s1, 3669
  %4289 = vst [vmem:[%s4288] sm:$0x7] %v4287
  %s4290 = scalar_lea.vmem %s1, 3677
  %4291 = vst [vmem:[%s4290] sm:$0xf8] %v4287
  %s4292 = scalar_lea.vmem %s0, 3984
  %v4293 = vld [vmem:[%s4292] sm:$0x1f]
  %s4294 = scalar_lea.vmem %s1, 3685
  %4295 = vst [vmem:[%s4294] sm:$0x7] %v4293
  %s4296 = scalar_lea.vmem %s1, 3693
  %4297 = vst [vmem:[%s4296] sm:$0x18] %v4293
  %s4298 = scalar_lea.vmem %s0, 4000
  %v4299 = vld [vmem:[%s4298] sm:$0xff]
  %s4300 = scalar_lea.vmem %s1, 3698
  %4301 = vst [vmem:[%s4300] sm:$0x3f] %v4299
  %s4302 = scalar_lea.vmem %s1, 3706
  %4303 = vst [vmem:[%s4302] sm:$0xc0] %v4299
  %s4304 = scalar_lea.vmem %s0, 4016
  %v4305 = vld [vmem:[%s4304] sm:$0xff]
  %s4306 = scalar_lea.vmem %s1, 3714
  %4307 = vst [vmem:[%s4306] sm:$0x3f] %v4305
  %s4308 = scalar_lea.vmem %s1, 3722
  %4309 = vst [vmem:[%s4308] sm:$0xc0] %v4305
  %s4310 = scalar_lea.vmem %s0, 4032
  %v4311 = vld [vmem:[%s4310] sm:$0xff]
  %s4312 = scalar_lea.vmem %s1, 3730
  %4313 = vst [vmem:[%s4312] sm:$0x3f] %v4311
  %s4314 = scalar_lea.vmem %s1, 3738
  %4315 = vst [vmem:[%s4314] sm:$0xc0] %v4311
  %s4316 = scalar_lea.vmem %s0, 4048
  %v4317 = vld [vmem:[%s4316] sm:$0xff]
  %s4318 = scalar_lea.vmem %s1, 3746
  %4319 = vst [vmem:[%s4318] sm:$0x3f] %v4317
  %s4320 = scalar_lea.vmem %s1, 3754
  %4321 = vst [vmem:[%s4320] sm:$0xc0] %v4317
  %s4322 = scalar_lea.vmem %s0, 4064
  %v4323 = vld [vmem:[%s4322] sm:$0x1f]
  %s4324 = scalar_lea.vmem %s1, 3762
  %4325 = vst [vmem:[%s4324] sm:$0x1f] %v4323
  %s4326 = scalar_lea.vmem %s0, 4080
  %v4327 = vld [vmem:[%s4326] sm:$0xff]
  %s4328 = scalar_lea.vmem %s1, 3767
  %4329 = vst [vmem:[%s4328] ss:$9 sm:$0x3] %v4327
  %s4330 = scalar_lea.vmem %s1, 3775
  %4331 = vst [vmem:[%s4330] sm:$0xfc] %v4327
  %s4332 = scalar_lea.vmem %s0, 4096
  %v4333 = vld [vmem:[%s4332] sm:$0xff]
  %s4334 = scalar_lea.vmem %s1, 3783
  %4335 = vst [vmem:[%s4334] ss:$9 sm:$0x3] %v4333
  %s4336 = scalar_lea.vmem %s1, 3791
  %4337 = vst [vmem:[%s4336] sm:$0xfc] %v4333
  %s4338 = scalar_lea.vmem %s0, 4112
  %v4339 = vld [vmem:[%s4338] sm:$0xff]
  %s4340 = scalar_lea.vmem %s1, 3799
  %4341 = vst [vmem:[%s4340] ss:$9 sm:$0x3] %v4339
  %s4342 = scalar_lea.vmem %s1, 3807
  %4343 = vst [vmem:[%s4342] sm:$0xfc] %v4339
  %s4344 = scalar_lea.vmem %s0, 4128
  %v4345 = vld [vmem:[%s4344] sm:$0xff]
  %s4346 = scalar_lea.vmem %s1, 3815
  %4347 = vst [vmem:[%s4346] ss:$9 sm:$0x3] %v4345
  %s4348 = scalar_lea.vmem %s1, 3823
  %4349 = vst [vmem:[%s4348] sm:$0xfc] %v4345
  %s4350 = scalar_lea.vmem %s0, 4144
  %v4351 = vld [vmem:[%s4350] sm:$0x1f]
  %s4352 = scalar_lea.vmem %s1, 3831
  %4353 = vst [vmem:[%s4352] ss:$9 sm:$0x3] %v4351
  %s4354 = scalar_lea.vmem %s1, 3839
  %4355 = vst [vmem:[%s4354] sm:$0x1c] %v4351
  %s4356 = scalar_lea.vmem %s0, 4160
  %v4357 = vld [vmem:[%s4356] sm:$0xff]
  %s4358 = scalar_lea.vmem %s1, 3844
  %4359 = vst [vmem:[%s4358] sm:$0xf] %v4357
  %s4360 = scalar_lea.vmem %s1, 3852
  %4361 = vst [vmem:[%s4360] sm:$0xf0] %v4357
  %s4362 = scalar_lea.vmem %s0, 4176
  %v4363 = vld [vmem:[%s4362] sm:$0xff]
  %s4364 = scalar_lea.vmem %s1, 3860
  %4365 = vst [vmem:[%s4364] sm:$0xf] %v4363
  %s4366 = scalar_lea.vmem %s1, 3868
  %4367 = vst [vmem:[%s4366] sm:$0xf0] %v4363
  %s4368 = scalar_lea.vmem %s0, 4192
  %v4369 = vld [vmem:[%s4368] sm:$0xff]
  %s4370 = scalar_lea.vmem %s1, 3876
  %4371 = vst [vmem:[%s4370] sm:$0xf] %v4369
  %s4372 = scalar_lea.vmem %s1, 3884
  %4373 = vst [vmem:[%s4372] sm:$0xf0] %v4369
  %s4374 = scalar_lea.vmem %s0, 4208
  %v4375 = vld [vmem:[%s4374] sm:$0xff]
  %s4376 = scalar_lea.vmem %s1, 3892
  %4377 = vst [vmem:[%s4376] sm:$0xf] %v4375
  %s4378 = scalar_lea.vmem %s1, 3900
  %4379 = vst [vmem:[%s4378] sm:$0xf0] %v4375
  %s4380 = scalar_lea.vmem %s0, 4224
  %v4381 = vld [vmem:[%s4380] sm:$0x1f]
  %s4382 = scalar_lea.vmem %s1, 3908
  %4383 = vst [vmem:[%s4382] sm:$0xf] %v4381
  %s4384 = scalar_lea.vmem %s1, 3916
  %4385 = vst [vmem:[%s4384] sm:$0x10] %v4381
  %s4386 = scalar_lea.vmem %s0, 4240
  %v4387 = vld [vmem:[%s4386] sm:$0xff]
  %s4388 = scalar_lea.vmem %s1, 3921
  %4389 = vst [vmem:[%s4388] sm:$0x7f] %v4387
  %s4390 = scalar_lea.vmem %s1, 3929
  %4391 = vst [vmem:[%s4390] sm:$0x80] %v4387
  %s4392 = scalar_lea.vmem %s0, 4256
  %v4393 = vld [vmem:[%s4392] sm:$0xff]
  %s4394 = scalar_lea.vmem %s1, 3937
  %4395 = vst [vmem:[%s4394] sm:$0x7f] %v4393
  %s4396 = scalar_lea.vmem %s1, 3945
  %4397 = vst [vmem:[%s4396] sm:$0x80] %v4393
  %s4398 = scalar_lea.vmem %s0, 4272
  %v4399 = vld [vmem:[%s4398] sm:$0xff]
  %s4400 = scalar_lea.vmem %s1, 3953
  %4401 = vst [vmem:[%s4400] sm:$0x7f] %v4399
  %s4402 = scalar_lea.vmem %s1, 3961
  %4403 = vst [vmem:[%s4402] sm:$0x80] %v4399
  %s4404 = scalar_lea.vmem %s0, 4288
  %v4405 = vld [vmem:[%s4404] sm:$0xff]
  %s4406 = scalar_lea.vmem %s1, 3969
  %4407 = vst [vmem:[%s4406] sm:$0x7f] %v4405
  %s4408 = scalar_lea.vmem %s1, 3977
  %4409 = vst [vmem:[%s4408] sm:$0x80] %v4405
  %s4410 = scalar_lea.vmem %s0, 4304
  %v4411 = vld [vmem:[%s4410] sm:$0x1f]
  %s4412 = scalar_lea.vmem %s1, 3985
  %4413 = vst [vmem:[%s4412] sm:$0x1f] %v4411
  %s4414 = scalar_lea.vmem %s0, 4320
  %v4415 = vld [vmem:[%s4414] sm:$0xff]
  %s4416 = scalar_lea.vmem %s1, 3990
  %4417 = vst [vmem:[%s4416] sm:$0x3] %v4415
  %s4418 = scalar_lea.vmem %s1, 3998
  %4419 = vst [vmem:[%s4418] sm:$0xfc] %v4415
  %s4420 = scalar_lea.vmem %s0, 4336
  %v4421 = vld [vmem:[%s4420] sm:$0xff]
  %s4422 = scalar_lea.vmem %s1, 4006
  %4423 = vst [vmem:[%s4422] sm:$0x3] %v4421
  %s4424 = scalar_lea.vmem %s1, 4014
  %4425 = vst [vmem:[%s4424] sm:$0xfc] %v4421
  %s4426 = scalar_lea.vmem %s0, 4352
  %v4427 = vld [vmem:[%s4426] sm:$0xff]
  %s4428 = scalar_lea.vmem %s1, 4022
  %4429 = vst [vmem:[%s4428] sm:$0x3] %v4427
  %s4430 = scalar_lea.vmem %s1, 4030
  %4431 = vst [vmem:[%s4430] sm:$0xfc] %v4427
  %s4432 = scalar_lea.vmem %s0, 4368
  %v4433 = vld [vmem:[%s4432] sm:$0xff]
  %s4434 = scalar_lea.vmem %s1, 4038
  %4435 = vst [vmem:[%s4434] sm:$0x3] %v4433
  %s4436 = scalar_lea.vmem %s1, 4046
  %4437 = vst [vmem:[%s4436] sm:$0xfc] %v4433
  %s4438 = scalar_lea.vmem %s0, 4384
  %v4439 = vld [vmem:[%s4438] sm:$0x1f]
  %s4440 = scalar_lea.vmem %s1, 4054
  %4441 = vst [vmem:[%s4440] sm:$0x3] %v4439
  %s4442 = scalar_lea.vmem %s1, 4062
  %4443 = vst [vmem:[%s4442] sm:$0x1c] %v4439
  %s4444 = scalar_lea.vmem %s0, 4400
  %v4445 = vld [vmem:[%s4444] sm:$0xff]
  %s4446 = scalar_lea.vmem %s1, 4067
  %4447 = vst [vmem:[%s4446] sm:$0x1f] %v4445
  %s4448 = scalar_lea.vmem %s1, 4075
  %4449 = vst [vmem:[%s4448] sm:$0xe0] %v4445
  %s4450 = scalar_lea.vmem %s0, 4416
  %v4451 = vld [vmem:[%s4450] sm:$0xff]
  %s4452 = scalar_lea.vmem %s1, 4083
  %4453 = vst [vmem:[%s4452] sm:$0x1f] %v4451
  %s4454 = scalar_lea.vmem %s1, 4091
  %4455 = vst [vmem:[%s4454] sm:$0xe0] %v4451
  %s4456 = scalar_lea.vmem %s0, 4432
  %v4457 = vld [vmem:[%s4456] sm:$0xff]
  %s4458 = scalar_lea.vmem %s1, 4099
  %4459 = vst [vmem:[%s4458] sm:$0x1f] %v4457
  %s4460 = scalar_lea.vmem %s1, 4107
  %4461 = vst [vmem:[%s4460] sm:$0xe0] %v4457
  %s4462 = scalar_lea.vmem %s0, 4448
  %v4463 = vld [vmem:[%s4462] sm:$0xff]
  %s4464 = scalar_lea.vmem %s1, 4115
  %4465 = vst [vmem:[%s4464] sm:$0x1f] %v4463
  %s4466 = scalar_lea.vmem %s1, 4123
  %4467 = vst [vmem:[%s4466] sm:$0xe0] %v4463
  %s4468 = scalar_lea.vmem %s0, 4464
  %v4469 = vld [vmem:[%s4468] sm:$0x1f]
  %s4470 = scalar_lea.vmem %s1, 4131
  %4471 = vst [vmem:[%s4470] sm:$0x1f] %v4469
  %s4472 = scalar_lea.vmem %s0, 4480
  %v4473 = vld [vmem:[%s4472] sm:$0xff]
  %s4474 = scalar_lea.vmem %s1, 4144
  %4475 = vst [vmem:[%s4474] sm:$0xff] %v4473
  %s4476 = scalar_lea.vmem %s0, 4496
  %v4477 = vld [vmem:[%s4476] sm:$0xff]
  %s4478 = scalar_lea.vmem %s1, 4160
  %4479 = vst [vmem:[%s4478] sm:$0xff] %v4477
  %s4480 = scalar_lea.vmem %s0, 4512
  %v4481 = vld [vmem:[%s4480] sm:$0xff]
  %s4482 = scalar_lea.vmem %s1, 4176
  %4483 = vst [vmem:[%s4482] sm:$0xff] %v4481
  %s4484 = scalar_lea.vmem %s0, 4528
  %v4485 = vld [vmem:[%s4484] sm:$0xff]
  %s4486 = scalar_lea.vmem %s1, 4192
  %4487 = vst [vmem:[%s4486] sm:$0xff] %v4485
  %s4488 = scalar_lea.vmem %s0, 4544
  %v4489 = vld [vmem:[%s4488] sm:$0x1f]
  %s4490 = scalar_lea.vmem %s1, 4208
  %4491 = vst [vmem:[%s4490] sm:$0x1f] %v4489
  %s4492 = scalar_lea.vmem %s0, 4560
  %v4493 = vld [vmem:[%s4492] sm:$0xff]
  %s4494 = scalar_lea.vmem %s1, 4213
  %4495 = vst [vmem:[%s4494] sm:$0x7] %v4493
  %s4496 = scalar_lea.vmem %s1, 4221
  %4497 = vst [vmem:[%s4496] sm:$0xf8] %v4493
  %s4498 = scalar_lea.vmem %s0, 4576
  %v4499 = vld [vmem:[%s4498] sm:$0xff]
  %s4500 = scalar_lea.vmem %s1, 4229
  %4501 = vst [vmem:[%s4500] sm:$0x7] %v4499
  %s4502 = scalar_lea.vmem %s1, 4237
  %4503 = vst [vmem:[%s4502] sm:$0xf8] %v4499
  %s4504 = scalar_lea.vmem %s0, 4592
  %v4505 = vld [vmem:[%s4504] sm:$0xff]
  %s4506 = scalar_lea.vmem %s1, 4245
  %4507 = vst [vmem:[%s4506] sm:$0x7] %v4505
  %s4508 = scalar_lea.vmem %s1, 4253
  %4509 = vst [vmem:[%s4508] sm:$0xf8] %v4505
  %s4510 = scalar_lea.vmem %s0, 4608
  %v4511 = vld [vmem:[%s4510] sm:$0xff]
  %s4512 = scalar_lea.vmem %s1, 4261
  %4513 = vst [vmem:[%s4512] sm:$0x7] %v4511
  %s4514 = scalar_lea.vmem %s1, 4269
  %4515 = vst [vmem:[%s4514] sm:$0xf8] %v4511
  %s4516 = scalar_lea.vmem %s0, 4624
  %v4517 = vld [vmem:[%s4516] sm:$0x1f]
  %s4518 = scalar_lea.vmem %s1, 4277
  %4519 = vst [vmem:[%s4518] sm:$0x7] %v4517
  %s4520 = scalar_lea.vmem %s1, 4285
  %4521 = vst [vmem:[%s4520] sm:$0x18] %v4517
  %s4522 = scalar_lea.vmem %s0, 4640
  %v4523 = vld [vmem:[%s4522] sm:$0xff]
  %s4524 = scalar_lea.vmem %s1, 4290
  %4525 = vst [vmem:[%s4524] sm:$0x3f] %v4523
  %s4526 = scalar_lea.vmem %s1, 4298
  %4527 = vst [vmem:[%s4526] sm:$0xc0] %v4523
  %s4528 = scalar_lea.vmem %s0, 4656
  %v4529 = vld [vmem:[%s4528] sm:$0xff]
  %s4530 = scalar_lea.vmem %s1, 4306
  %4531 = vst [vmem:[%s4530] sm:$0x3f] %v4529
  %s4532 = scalar_lea.vmem %s1, 4314
  %4533 = vst [vmem:[%s4532] sm:$0xc0] %v4529
  %s4534 = scalar_lea.vmem %s0, 4672
  %v4535 = vld [vmem:[%s4534] sm:$0xff]
  %s4536 = scalar_lea.vmem %s1, 4322
  %4537 = vst [vmem:[%s4536] sm:$0x3f] %v4535
  %s4538 = scalar_lea.vmem %s1, 4330
  %4539 = vst [vmem:[%s4538] sm:$0xc0] %v4535
  %s4540 = scalar_lea.vmem %s0, 4688
  %v4541 = vld [vmem:[%s4540] sm:$0xff]
  %s4542 = scalar_lea.vmem %s1, 4338
  %4543 = vst [vmem:[%s4542] sm:$0x3f] %v4541
  %s4544 = scalar_lea.vmem %s1, 4346
  %4545 = vst [vmem:[%s4544] sm:$0xc0] %v4541
  %s4546 = scalar_lea.vmem %s0, 4704
  %v4547 = vld [vmem:[%s4546] sm:$0x1f]
  %s4548 = scalar_lea.vmem %s1, 4354
  %4549 = vst [vmem:[%s4548] sm:$0x1f] %v4547
  %s4550 = scalar_lea.vmem %s0, 4720
  %v4551 = vld [vmem:[%s4550] sm:$0xff]
  %s4552 = scalar_lea.vmem %s1, 4359
  %4553 = vst [vmem:[%s4552] ss:$9 sm:$0x3] %v4551
  %s4554 = scalar_lea.vmem %s1, 4367
  %4555 = vst [vmem:[%s4554] sm:$0xfc] %v4551
  %s4556 = scalar_lea.vmem %s0, 4736
  %v4557 = vld [vmem:[%s4556] sm:$0xff]
  %s4558 = scalar_lea.vmem %s1, 4375
  %4559 = vst [vmem:[%s4558] ss:$9 sm:$0x3] %v4557
  %s4560 = scalar_lea.vmem %s1, 4383
  %4561 = vst [vmem:[%s4560] sm:$0xfc] %v4557
  %s4562 = scalar_lea.vmem %s0, 4752
  %v4563 = vld [vmem:[%s4562] sm:$0xff]
  %s4564 = scalar_lea.vmem %s1, 4391
  %4565 = vst [vmem:[%s4564] ss:$9 sm:$0x3] %v4563
  %s4566 = scalar_lea.vmem %s1, 4399
  %4567 = vst [vmem:[%s4566] sm:$0xfc] %v4563
  %s4568 = scalar_lea.vmem %s0, 4768
  %v4569 = vld [vmem:[%s4568] sm:$0xff]
  %s4570 = scalar_lea.vmem %s1, 4407
  %4571 = vst [vmem:[%s4570] ss:$9 sm:$0x3] %v4569
  %s4572 = scalar_lea.vmem %s1, 4415
  %4573 = vst [vmem:[%s4572] sm:$0xfc] %v4569
  %s4574 = scalar_lea.vmem %s0, 4784
  %v4575 = vld [vmem:[%s4574] sm:$0x1f]
  %s4576 = scalar_lea.vmem %s1, 4423
  %4577 = vst [vmem:[%s4576] ss:$9 sm:$0x3] %v4575
  %s4578 = scalar_lea.vmem %s1, 4431
  %4579 = vst [vmem:[%s4578] sm:$0x1c] %v4575
  %s4580 = scalar_lea.vmem %s0, 4800
  %v4581 = vld [vmem:[%s4580] sm:$0xff]
  %s4582 = scalar_lea.vmem %s1, 4436
  %4583 = vst [vmem:[%s4582] sm:$0xf] %v4581
  %s4584 = scalar_lea.vmem %s1, 4444
  %4585 = vst [vmem:[%s4584] sm:$0xf0] %v4581
  %s4586 = scalar_lea.vmem %s0, 4816
  %v4587 = vld [vmem:[%s4586] sm:$0xff]
  %s4588 = scalar_lea.vmem %s1, 4452
  %4589 = vst [vmem:[%s4588] sm:$0xf] %v4587
  %s4590 = scalar_lea.vmem %s1, 4460
  %4591 = vst [vmem:[%s4590] sm:$0xf0] %v4587
  %s4592 = scalar_lea.vmem %s0, 4832
  %v4593 = vld [vmem:[%s4592] sm:$0xff]
  %s4594 = scalar_lea.vmem %s1, 4468
  %4595 = vst [vmem:[%s4594] sm:$0xf] %v4593
  %s4596 = scalar_lea.vmem %s1, 4476
  %4597 = vst [vmem:[%s4596] sm:$0xf0] %v4593
  %s4598 = scalar_lea.vmem %s0, 4848
  %v4599 = vld [vmem:[%s4598] sm:$0xff]
  %s4600 = scalar_lea.vmem %s1, 4484
  %4601 = vst [vmem:[%s4600] sm:$0xf] %v4599
  %s4602 = scalar_lea.vmem %s1, 4492
  %4603 = vst [vmem:[%s4602] sm:$0xf0] %v4599
  %s4604 = scalar_lea.vmem %s0, 4864
  %v4605 = vld [vmem:[%s4604] sm:$0x1f]
  %s4606 = scalar_lea.vmem %s1, 4500
  %4607 = vst [vmem:[%s4606] sm:$0xf] %v4605
  %s4608 = scalar_lea.vmem %s1, 4508
  %4609 = vst [vmem:[%s4608] sm:$0x10] %v4605
  %s4610 = scalar_lea.vmem %s0, 4880
  %v4611 = vld [vmem:[%s4610] sm:$0xff]
  %s4612 = scalar_lea.vmem %s1, 4513
  %4613 = vst [vmem:[%s4612] sm:$0x7f] %v4611
  %s4614 = scalar_lea.vmem %s1, 4521
  %4615 = vst [vmem:[%s4614] sm:$0x80] %v4611
  %s4616 = scalar_lea.vmem %s0, 4896
  %v4617 = vld [vmem:[%s4616] sm:$0xff]
  %s4618 = scalar_lea.vmem %s1, 4529
  %4619 = vst [vmem:[%s4618] sm:$0x7f] %v4617
  %s4620 = scalar_lea.vmem %s1, 4537
  %4621 = vst [vmem:[%s4620] sm:$0x80] %v4617
  %s4622 = scalar_lea.vmem %s0, 4912
  %v4623 = vld [vmem:[%s4622] sm:$0xff]
  %s4624 = scalar_lea.vmem %s1, 4545
  %4625 = vst [vmem:[%s4624] sm:$0x7f] %v4623
  %s4626 = scalar_lea.vmem %s1, 4553
  %4627 = vst [vmem:[%s4626] sm:$0x80] %v4623
  %s4628 = scalar_lea.vmem %s0, 4928
  %v4629 = vld [vmem:[%s4628] sm:$0xff]
  %s4630 = scalar_lea.vmem %s1, 4561
  %4631 = vst [vmem:[%s4630] sm:$0x7f] %v4629
  %s4632 = scalar_lea.vmem %s1, 4569
  %4633 = vst [vmem:[%s4632] sm:$0x80] %v4629
  %s4634 = scalar_lea.vmem %s0, 4944
  %v4635 = vld [vmem:[%s4634] sm:$0x1f]
  %s4636 = scalar_lea.vmem %s1, 4577
  %4637 = vst [vmem:[%s4636] sm:$0x1f] %v4635
  %s4638 = scalar_lea.vmem %s0, 4960
  %v4639 = vld [vmem:[%s4638] sm:$0xff]
  %s4640 = scalar_lea.vmem %s1, 4582
  %4641 = vst [vmem:[%s4640] sm:$0x3] %v4639
  %s4642 = scalar_lea.vmem %s1, 4590
  %4643 = vst [vmem:[%s4642] sm:$0xfc] %v4639
  %s4644 = scalar_lea.vmem %s0, 4976
  %v4645 = vld [vmem:[%s4644] sm:$0xff]
  %s4646 = scalar_lea.vmem %s1, 4598
  %4647 = vst [vmem:[%s4646] sm:$0x3] %v4645
  %s4648 = scalar_lea.vmem %s1, 4606
  %4649 = vst [vmem:[%s4648] sm:$0xfc] %v4645
  %s4650 = scalar_lea.vmem %s0, 4992
  %v4651 = vld [vmem:[%s4650] sm:$0xff]
  %s4652 = scalar_lea.vmem %s1, 4614
  %4653 = vst [vmem:[%s4652] sm:$0x3] %v4651
  %s4654 = scalar_lea.vmem %s1, 4622
  %4655 = vst [vmem:[%s4654] sm:$0xfc] %v4651
  %s4656 = scalar_lea.vmem %s0, 5008
  %v4657 = vld [vmem:[%s4656] sm:$0xff]
  %s4658 = scalar_lea.vmem %s1, 4630
  %4659 = vst [vmem:[%s4658] sm:$0x3] %v4657
  %s4660 = scalar_lea.vmem %s1, 4638
  %4661 = vst [vmem:[%s4660] sm:$0xfc] %v4657
  %s4662 = scalar_lea.vmem %s0, 5024
  %v4663 = vld [vmem:[%s4662] sm:$0x1f]
  %s4664 = scalar_lea.vmem %s1, 4646
  %4665 = vst [vmem:[%s4664] sm:$0x3] %v4663
  %s4666 = scalar_lea.vmem %s1, 4654
  %4667 = vst [vmem:[%s4666] sm:$0x1c] %v4663
  %s4668 = scalar_lea.vmem %s0, 5040
  %v4669 = vld [vmem:[%s4668] sm:$0xff]
  %s4670 = scalar_lea.vmem %s1, 4659
  %4671 = vst [vmem:[%s4670] sm:$0x1f] %v4669
  %s4672 = scalar_lea.vmem %s1, 4667
  %4673 = vst [vmem:[%s4672] sm:$0xe0] %v4669
  %s4674 = scalar_lea.vmem %s0, 5056
  %v4675 = vld [vmem:[%s4674] sm:$0xff]
  %s4676 = scalar_lea.vmem %s1, 4675
  %4677 = vst [vmem:[%s4676] sm:$0x1f] %v4675
  %s4678 = scalar_lea.vmem %s1, 4683
  %4679 = vst [vmem:[%s4678] sm:$0xe0] %v4675
  %s4680 = scalar_lea.vmem %s0, 5072
  %v4681 = vld [vmem:[%s4680] sm:$0xff]
  %s4682 = scalar_lea.vmem %s1, 4691
  %4683 = vst [vmem:[%s4682] sm:$0x1f] %v4681
  %s4684 = scalar_lea.vmem %s1, 4699
  %4685 = vst [vmem:[%s4684] sm:$0xe0] %v4681
  %s4686 = scalar_lea.vmem %s0, 5088
  %v4687 = vld [vmem:[%s4686] sm:$0xff]
  %s4688 = scalar_lea.vmem %s1, 4707
  %4689 = vst [vmem:[%s4688] sm:$0x1f] %v4687
  %s4690 = scalar_lea.vmem %s1, 4715
  %4691 = vst [vmem:[%s4690] sm:$0xe0] %v4687
  %s4692 = scalar_lea.vmem %s0, 5104
  %v4693 = vld [vmem:[%s4692] sm:$0x1f]
  %s4694 = scalar_lea.vmem %s1, 4723
  %4695 = vst [vmem:[%s4694] sm:$0x1f] %v4693
  %s4696 = scalar_lea.vmem %s0, 5120
  %v4697 = vld [vmem:[%s4696] sm:$0xff]
  %s4698 = scalar_lea.vmem %s1, 4736
  %4699 = vst [vmem:[%s4698] sm:$0xff] %v4697
  %s4700 = scalar_lea.vmem %s0, 5136
  %v4701 = vld [vmem:[%s4700] sm:$0xff]
  %s4702 = scalar_lea.vmem %s1, 4752
  %4703 = vst [vmem:[%s4702] sm:$0xff] %v4701
  %s4704 = scalar_lea.vmem %s0, 5152
  %v4705 = vld [vmem:[%s4704] sm:$0xff]
  %s4706 = scalar_lea.vmem %s1, 4768
  %4707 = vst [vmem:[%s4706] sm:$0xff] %v4705
  %s4708 = scalar_lea.vmem %s0, 5168
  %v4709 = vld [vmem:[%s4708] sm:$0xff]
  %s4710 = scalar_lea.vmem %s1, 4784
  %4711 = vst [vmem:[%s4710] sm:$0xff] %v4709
  %s4712 = scalar_lea.vmem %s0, 5184
  %v4713 = vld [vmem:[%s4712] sm:$0x1f]
  %s4714 = scalar_lea.vmem %s1, 4800
  %4715 = vst [vmem:[%s4714] sm:$0x1f] %v4713
  %s4716 = scalar_lea.vmem %s0, 5200
  %v4717 = vld [vmem:[%s4716] sm:$0xff]
  %s4718 = scalar_lea.vmem %s1, 4805
  %4719 = vst [vmem:[%s4718] sm:$0x7] %v4717
  %s4720 = scalar_lea.vmem %s1, 4813
  %4721 = vst [vmem:[%s4720] sm:$0xf8] %v4717
  %s4722 = scalar_lea.vmem %s0, 5216
  %v4723 = vld [vmem:[%s4722] sm:$0xff]
  %s4724 = scalar_lea.vmem %s1, 4821
  %4725 = vst [vmem:[%s4724] sm:$0x7] %v4723
  %s4726 = scalar_lea.vmem %s1, 4829
  %4727 = vst [vmem:[%s4726] sm:$0xf8] %v4723
  %s4728 = scalar_lea.vmem %s0, 5232
  %v4729 = vld [vmem:[%s4728] sm:$0xff]
  %s4730 = scalar_lea.vmem %s1, 4837
  %4731 = vst [vmem:[%s4730] sm:$0x7] %v4729
  %s4732 = scalar_lea.vmem %s1, 4845
  %4733 = vst [vmem:[%s4732] sm:$0xf8] %v4729
  %s4734 = scalar_lea.vmem %s0, 5248
  %v4735 = vld [vmem:[%s4734] sm:$0xff]
  %s4736 = scalar_lea.vmem %s1, 4853
  %4737 = vst [vmem:[%s4736] sm:$0x7] %v4735
  %s4738 = scalar_lea.vmem %s1, 4861
  %4739 = vst [vmem:[%s4738] sm:$0xf8] %v4735
  %s4740 = scalar_lea.vmem %s0, 5264
  %v4741 = vld [vmem:[%s4740] sm:$0x1f]
  %s4742 = scalar_lea.vmem %s1, 4869
  %4743 = vst [vmem:[%s4742] sm:$0x7] %v4741
  %s4744 = scalar_lea.vmem %s1, 4877
  %4745 = vst [vmem:[%s4744] sm:$0x18] %v4741
  %s4746 = scalar_lea.vmem %s0, 5280
  %v4747 = vld [vmem:[%s4746] sm:$0xff]
  %s4748 = scalar_lea.vmem %s1, 4882
  %4749 = vst [vmem:[%s4748] sm:$0x3f] %v4747
  %s4750 = scalar_lea.vmem %s1, 4890
  %4751 = vst [vmem:[%s4750] sm:$0xc0] %v4747
  %s4752 = scalar_lea.vmem %s0, 5296
  %v4753 = vld [vmem:[%s4752] sm:$0xff]
  %s4754 = scalar_lea.vmem %s1, 4898
  %4755 = vst [vmem:[%s4754] sm:$0x3f] %v4753
  %s4756 = scalar_lea.vmem %s1, 4906
  %4757 = vst [vmem:[%s4756] sm:$0xc0] %v4753
  %s4758 = scalar_lea.vmem %s0, 5312
  %v4759 = vld [vmem:[%s4758] sm:$0xff]
  %s4760 = scalar_lea.vmem %s1, 4914
  %4761 = vst [vmem:[%s4760] sm:$0x3f] %v4759
  %s4762 = scalar_lea.vmem %s1, 4922
  %4763 = vst [vmem:[%s4762] sm:$0xc0] %v4759
  %s4764 = scalar_lea.vmem %s0, 5328
  %v4765 = vld [vmem:[%s4764] sm:$0xff]
  %s4766 = scalar_lea.vmem %s1, 4930
  %4767 = vst [vmem:[%s4766] sm:$0x3f] %v4765
  %s4768 = scalar_lea.vmem %s1, 4938
  %4769 = vst [vmem:[%s4768] sm:$0xc0] %v4765
  %s4770 = scalar_lea.vmem %s0, 5344
  %v4771 = vld [vmem:[%s4770] sm:$0x1f]
  %s4772 = scalar_lea.vmem %s1, 4946
  %4773 = vst [vmem:[%s4772] sm:$0x1f] %v4771
  %s4774 = scalar_lea.vmem %s0, 5360
  %v4775 = vld [vmem:[%s4774] sm:$0xff]
  %s4776 = scalar_lea.vmem %s1, 4951
  %4777 = vst [vmem:[%s4776] ss:$9 sm:$0x3] %v4775
  %s4778 = scalar_lea.vmem %s1, 4959
  %4779 = vst [vmem:[%s4778] sm:$0xfc] %v4775
  %s4780 = scalar_lea.vmem %s0, 5376
  %v4781 = vld [vmem:[%s4780] sm:$0xff]
  %s4782 = scalar_lea.vmem %s1, 4967
  %4783 = vst [vmem:[%s4782] ss:$9 sm:$0x3] %v4781
  %s4784 = scalar_lea.vmem %s1, 4975
  %4785 = vst [vmem:[%s4784] sm:$0xfc] %v4781
  %s4786 = scalar_lea.vmem %s0, 5392
  %v4787 = vld [vmem:[%s4786] sm:$0xff]
  %s4788 = scalar_lea.vmem %s1, 4983
  %4789 = vst [vmem:[%s4788] ss:$9 sm:$0x3] %v4787
  %s4790 = scalar_lea.vmem %s1, 4991
  %4791 = vst [vmem:[%s4790] sm:$0xfc] %v4787
  %s4792 = scalar_lea.vmem %s0, 5408
  %v4793 = vld [vmem:[%s4792] sm:$0xff]
  %s4794 = scalar_lea.vmem %s1, 4999
  %4795 = vst [vmem:[%s4794] ss:$9 sm:$0x3] %v4793
  %s4796 = scalar_lea.vmem %s1, 5007
  %4797 = vst [vmem:[%s4796] sm:$0xfc] %v4793
  %s4798 = scalar_lea.vmem %s0, 5424
  %v4799 = vld [vmem:[%s4798] sm:$0x1f]
  %s4800 = scalar_lea.vmem %s1, 5015
  %4801 = vst [vmem:[%s4800] ss:$9 sm:$0x3] %v4799
  %s4802 = scalar_lea.vmem %s1, 5023
  %4803 = vst [vmem:[%s4802] sm:$0x1c] %v4799
  %s4804 = scalar_lea.vmem %s0, 5440
  %v4805 = vld [vmem:[%s4804] sm:$0xff]
  %s4806 = scalar_lea.vmem %s1, 5028
  %4807 = vst [vmem:[%s4806] sm:$0xf] %v4805
  %s4808 = scalar_lea.vmem %s1, 5036
  %4809 = vst [vmem:[%s4808] sm:$0xf0] %v4805
  %s4810 = scalar_lea.vmem %s0, 5456
  %v4811 = vld [vmem:[%s4810] sm:$0xff]
  %s4812 = scalar_lea.vmem %s1, 5044
  %4813 = vst [vmem:[%s4812] sm:$0xf] %v4811
  %s4814 = scalar_lea.vmem %s1, 5052
  %4815 = vst [vmem:[%s4814] sm:$0xf0] %v4811
  %s4816 = scalar_lea.vmem %s0, 5472
  %v4817 = vld [vmem:[%s4816] sm:$0xff]
  %s4818 = scalar_lea.vmem %s1, 5060
  %4819 = vst [vmem:[%s4818] sm:$0xf] %v4817
  %s4820 = scalar_lea.vmem %s1, 5068
  %4821 = vst [vmem:[%s4820] sm:$0xf0] %v4817
  %s4822 = scalar_lea.vmem %s0, 5488
  %v4823 = vld [vmem:[%s4822] sm:$0xff]
  %s4824 = scalar_lea.vmem %s1, 5076
  %4825 = vst [vmem:[%s4824] sm:$0xf] %v4823
  %s4826 = scalar_lea.vmem %s1, 5084
  %4827 = vst [vmem:[%s4826] sm:$0xf0] %v4823
  %s4828 = scalar_lea.vmem %s0, 5504
  %v4829 = vld [vmem:[%s4828] sm:$0x1f]
  %s4830 = scalar_lea.vmem %s1, 5092
  %4831 = vst [vmem:[%s4830] sm:$0xf] %v4829
  %s4832 = scalar_lea.vmem %s1, 5100
  %4833 = vst [vmem:[%s4832] sm:$0x10] %v4829
  %s4834 = scalar_lea.vmem %s0, 5520
  %v4835 = vld [vmem:[%s4834] sm:$0xff]
  %s4836 = scalar_lea.vmem %s1, 5105
  %4837 = vst [vmem:[%s4836] sm:$0x7f] %v4835
  %s4838 = scalar_lea.vmem %s1, 5113
  %4839 = vst [vmem:[%s4838] sm:$0x80] %v4835
  %s4840 = scalar_lea.vmem %s0, 5536
  %v4841 = vld [vmem:[%s4840] sm:$0xff]
  %s4842 = scalar_lea.vmem %s1, 5121
  %4843 = vst [vmem:[%s4842] sm:$0x7f] %v4841
  %s4844 = scalar_lea.vmem %s1, 5129
  %4845 = vst [vmem:[%s4844] sm:$0x80] %v4841
  %s4846 = scalar_lea.vmem %s0, 5552
  %v4847 = vld [vmem:[%s4846] sm:$0xff]
  %s4848 = scalar_lea.vmem %s1, 5137
  %4849 = vst [vmem:[%s4848] sm:$0x7f] %v4847
  %s4850 = scalar_lea.vmem %s1, 5145
  %4851 = vst [vmem:[%s4850] sm:$0x80] %v4847
  %s4852 = scalar_lea.vmem %s0, 5568
  %v4853 = vld [vmem:[%s4852] sm:$0xff]
  %s4854 = scalar_lea.vmem %s1, 5153
  %4855 = vst [vmem:[%s4854] sm:$0x7f] %v4853
  %s4856 = scalar_lea.vmem %s1, 5161
  %4857 = vst [vmem:[%s4856] sm:$0x80] %v4853
  %s4858 = scalar_lea.vmem %s0, 5584
  %v4859 = vld [vmem:[%s4858] sm:$0x1f]
  %s4860 = scalar_lea.vmem %s1, 5169
  %4861 = vst [vmem:[%s4860] sm:$0x1f] %v4859
  %s4862 = scalar_lea.vmem %s0, 5600
  %v4863 = vld [vmem:[%s4862] sm:$0xff]
  %s4864 = scalar_lea.vmem %s1, 5174
  %4865 = vst [vmem:[%s4864] sm:$0x3] %v4863
  %s4866 = scalar_lea.vmem %s1, 5182
  %4867 = vst [vmem:[%s4866] sm:$0xfc] %v4863
  %s4868 = scalar_lea.vmem %s0, 5616
  %v4869 = vld [vmem:[%s4868] sm:$0xff]
  %s4870 = scalar_lea.vmem %s1, 5190
  %4871 = vst [vmem:[%s4870] sm:$0x3] %v4869
  %s4872 = scalar_lea.vmem %s1, 5198
  %4873 = vst [vmem:[%s4872] sm:$0xfc] %v4869
  %s4874 = scalar_lea.vmem %s0, 5632
  %v4875 = vld [vmem:[%s4874] sm:$0xff]
  %s4876 = scalar_lea.vmem %s1, 5206
  %4877 = vst [vmem:[%s4876] sm:$0x3] %v4875
  %s4878 = scalar_lea.vmem %s1, 5214
  %4879 = vst [vmem:[%s4878] sm:$0xfc] %v4875
  %s4880 = scalar_lea.vmem %s0, 5648
  %v4881 = vld [vmem:[%s4880] sm:$0xff]
  %s4882 = scalar_lea.vmem %s1, 5222
  %4883 = vst [vmem:[%s4882] sm:$0x3] %v4881
  %s4884 = scalar_lea.vmem %s1, 5230
  %4885 = vst [vmem:[%s4884] sm:$0xfc] %v4881
  %s4886 = scalar_lea.vmem %s0, 5664
  %v4887 = vld [vmem:[%s4886] sm:$0x1f]
  %s4888 = scalar_lea.vmem %s1, 5238
  %4889 = vst [vmem:[%s4888] sm:$0x3] %v4887
  %s4890 = scalar_lea.vmem %s1, 5246
  %4891 = vst [vmem:[%s4890] sm:$0x1c] %v4887
  %s4892 = scalar_lea.vmem %s0, 5680
  %v4893 = vld [vmem:[%s4892] sm:$0xff]
  %s4894 = scalar_lea.vmem %s1, 5251
  %4895 = vst [vmem:[%s4894] sm:$0x1f] %v4893
  %s4896 = scalar_lea.vmem %s1, 5259
  %4897 = vst [vmem:[%s4896] sm:$0xe0] %v4893
  %s4898 = scalar_lea.vmem %s0, 5696
  %v4899 = vld [vmem:[%s4898] sm:$0xff]
  %s4900 = scalar_lea.vmem %s1, 5267
  %4901 = vst [vmem:[%s4900] sm:$0x1f] %v4899
  %s4902 = scalar_lea.vmem %s1, 5275
  %4903 = vst [vmem:[%s4902] sm:$0xe0] %v4899
  %s4904 = scalar_lea.vmem %s0, 5712
  %v4905 = vld [vmem:[%s4904] sm:$0xff]
  %s4906 = scalar_lea.vmem %s1, 5283
  %4907 = vst [vmem:[%s4906] sm:$0x1f] %v4905
  %s4908 = scalar_lea.vmem %s1, 5291
  %4909 = vst [vmem:[%s4908] sm:$0xe0] %v4905
  %s4910 = scalar_lea.vmem %s0, 5728
  %v4911 = vld [vmem:[%s4910] sm:$0xff]
  %s4912 = scalar_lea.vmem %s1, 5299
  %4913 = vst [vmem:[%s4912] sm:$0x1f] %v4911
  %s4914 = scalar_lea.vmem %s1, 5307
  %4915 = vst [vmem:[%s4914] sm:$0xe0] %v4911
  %s4916 = scalar_lea.vmem %s0, 5744
  %v4917 = vld [vmem:[%s4916] sm:$0x1f]
  %s4918 = scalar_lea.vmem %s1, 5315
  %4919 = vst [vmem:[%s4918] sm:$0x1f] %v4917
  %s4920 = scalar_lea.vmem %s0, 5760
  %v4921 = vld [vmem:[%s4920] sm:$0xff]
  %s4922 = scalar_lea.vmem %s1, 5328
  %4923 = vst [vmem:[%s4922] sm:$0xff] %v4921
  %s4924 = scalar_lea.vmem %s0, 5776
  %v4925 = vld [vmem:[%s4924] sm:$0xff]
  %s4926 = scalar_lea.vmem %s1, 5344
  %4927 = vst [vmem:[%s4926] sm:$0xff] %v4925
  %s4928 = scalar_lea.vmem %s0, 5792
  %v4929 = vld [vmem:[%s4928] sm:$0xff]
  %s4930 = scalar_lea.vmem %s1, 5360
  %4931 = vst [vmem:[%s4930] sm:$0xff] %v4929
  %s4932 = scalar_lea.vmem %s0, 5808
  %v4933 = vld [vmem:[%s4932] sm:$0xff]
  %s4934 = scalar_lea.vmem %s1, 5376
  %4935 = vst [vmem:[%s4934] sm:$0xff] %v4933
  %s4936 = scalar_lea.vmem %s0, 5824
  %v4937 = vld [vmem:[%s4936] sm:$0x1f]
  %s4938 = scalar_lea.vmem %s1, 5392
  %4939 = vst [vmem:[%s4938] sm:$0x1f] %v4937
  %s4940 = scalar_lea.vmem %s0, 5840
  %v4941 = vld [vmem:[%s4940] sm:$0xff]
  %s4942 = scalar_lea.vmem %s1, 5397
  %4943 = vst [vmem:[%s4942] sm:$0x7] %v4941
  %s4944 = scalar_lea.vmem %s1, 5405
  %4945 = vst [vmem:[%s4944] sm:$0xf8] %v4941
  %s4946 = scalar_lea.vmem %s0, 5856
  %v4947 = vld [vmem:[%s4946] sm:$0xff]
  %s4948 = scalar_lea.vmem %s1, 5413
  %4949 = vst [vmem:[%s4948] sm:$0x7] %v4947
  %s4950 = scalar_lea.vmem %s1, 5421
  %4951 = vst [vmem:[%s4950] sm:$0xf8] %v4947
  %s4952 = scalar_lea.vmem %s0, 5872
  %v4953 = vld [vmem:[%s4952] sm:$0xff]
  %s4954 = scalar_lea.vmem %s1, 5429
  %4955 = vst [vmem:[%s4954] sm:$0x7] %v4953
  %s4956 = scalar_lea.vmem %s1, 5437
  %4957 = vst [vmem:[%s4956] sm:$0xf8] %v4953
  %s4958 = scalar_lea.vmem %s0, 5888
  %v4959 = vld [vmem:[%s4958] sm:$0xff]
  %s4960 = scalar_lea.vmem %s1, 5445
  %4961 = vst [vmem:[%s4960] sm:$0x7] %v4959
  %s4962 = scalar_lea.vmem %s1, 5453
  %4963 = vst [vmem:[%s4962] sm:$0xf8] %v4959
  %s4964 = scalar_lea.vmem %s0, 5904
  %v4965 = vld [vmem:[%s4964] sm:$0x1f]
  %s4966 = scalar_lea.vmem %s1, 5461
  %4967 = vst [vmem:[%s4966] sm:$0x7] %v4965
  %s4968 = scalar_lea.vmem %s1, 5469
  %4969 = vst [vmem:[%s4968] sm:$0x18] %v4965
  %s4970 = scalar_lea.vmem %s0, 5920
  %v4971 = vld [vmem:[%s4970] sm:$0xff]
  %s4972 = scalar_lea.vmem %s1, 5474
  %4973 = vst [vmem:[%s4972] sm:$0x3f] %v4971
  %s4974 = scalar_lea.vmem %s1, 5482
  %4975 = vst [vmem:[%s4974] sm:$0xc0] %v4971
  %s4976 = scalar_lea.vmem %s0, 5936
  %v4977 = vld [vmem:[%s4976] sm:$0xff]
  %s4978 = scalar_lea.vmem %s1, 5490
  %4979 = vst [vmem:[%s4978] sm:$0x3f] %v4977
  %s4980 = scalar_lea.vmem %s1, 5498
  %4981 = vst [vmem:[%s4980] sm:$0xc0] %v4977
  %s4982 = scalar_lea.vmem %s0, 5952
  %v4983 = vld [vmem:[%s4982] sm:$0xff]
  %s4984 = scalar_lea.vmem %s1, 5506
  %4985 = vst [vmem:[%s4984] sm:$0x3f] %v4983
  %s4986 = scalar_lea.vmem %s1, 5514
  %4987 = vst [vmem:[%s4986] sm:$0xc0] %v4983
  %s4988 = scalar_lea.vmem %s0, 5968
  %v4989 = vld [vmem:[%s4988] sm:$0xff]
  %s4990 = scalar_lea.vmem %s1, 5522
  %4991 = vst [vmem:[%s4990] sm:$0x3f] %v4989
  %s4992 = scalar_lea.vmem %s1, 5530
  %4993 = vst [vmem:[%s4992] sm:$0xc0] %v4989
  %s4994 = scalar_lea.vmem %s0, 5984
  %v4995 = vld [vmem:[%s4994] sm:$0x1f]
  %s4996 = scalar_lea.vmem %s1, 5538
  %4997 = vst [vmem:[%s4996] sm:$0x1f] %v4995
  %s4998 = scalar_lea.vmem %s0, 6000
  %v4999 = vld [vmem:[%s4998] sm:$0xff]
  %s5000 = scalar_lea.vmem %s1, 5543
  %5001 = vst [vmem:[%s5000] ss:$9 sm:$0x3] %v4999
  %s5002 = scalar_lea.vmem %s1, 5551
  %5003 = vst [vmem:[%s5002] sm:$0xfc] %v4999
  %s5004 = scalar_lea.vmem %s0, 6016
  %v5005 = vld [vmem:[%s5004] sm:$0xff]
  %s5006 = scalar_lea.vmem %s1, 5559
  %5007 = vst [vmem:[%s5006] ss:$9 sm:$0x3] %v5005
  %s5008 = scalar_lea.vmem %s1, 5567
  %5009 = vst [vmem:[%s5008] sm:$0xfc] %v5005
  %s5010 = scalar_lea.vmem %s0, 6032
  %v5011 = vld [vmem:[%s5010] sm:$0xff]
  %s5012 = scalar_lea.vmem %s1, 5575
  %5013 = vst [vmem:[%s5012] ss:$9 sm:$0x3] %v5011
  %s5014 = scalar_lea.vmem %s1, 5583
  %5015 = vst [vmem:[%s5014] sm:$0xfc] %v5011
  %s5016 = scalar_lea.vmem %s0, 6048
  %v5017 = vld [vmem:[%s5016] sm:$0xff]
  %s5018 = scalar_lea.vmem %s1, 5591
  %5019 = vst [vmem:[%s5018] ss:$9 sm:$0x3] %v5017
  %s5020 = scalar_lea.vmem %s1, 5599
  %5021 = vst [vmem:[%s5020] sm:$0xfc] %v5017
  %s5022 = scalar_lea.vmem %s0, 6064
  %v5023 = vld [vmem:[%s5022] sm:$0x1f]
  %s5024 = scalar_lea.vmem %s1, 5607
  %5025 = vst [vmem:[%s5024] ss:$9 sm:$0x3] %v5023
  %s5026 = scalar_lea.vmem %s1, 5615
  %5027 = vst [vmem:[%s5026] sm:$0x1c] %v5023
  %s5028 = scalar_lea.vmem %s0, 6080
  %v5029 = vld [vmem:[%s5028] sm:$0xff]
  %s5030 = scalar_lea.vmem %s1, 5620
  %5031 = vst [vmem:[%s5030] sm:$0xf] %v5029
  %s5032 = scalar_lea.vmem %s1, 5628
  %5033 = vst [vmem:[%s5032] sm:$0xf0] %v5029
  %s5034 = scalar_lea.vmem %s0, 6096
  %v5035 = vld [vmem:[%s5034] sm:$0xff]
  %s5036 = scalar_lea.vmem %s1, 5636
  %5037 = vst [vmem:[%s5036] sm:$0xf] %v5035
  %s5038 = scalar_lea.vmem %s1, 5644
  %5039 = vst [vmem:[%s5038] sm:$0xf0] %v5035
  %s5040 = scalar_lea.vmem %s0, 6112
  %v5041 = vld [vmem:[%s5040] sm:$0xff]
  %s5042 = scalar_lea.vmem %s1, 5652
  %5043 = vst [vmem:[%s5042] sm:$0xf] %v5041
  %s5044 = scalar_lea.vmem %s1, 5660
  %5045 = vst [vmem:[%s5044] sm:$0xf0] %v5041
  %s5046 = scalar_lea.vmem %s0, 6128
  %v5047 = vld [vmem:[%s5046] sm:$0xff]
  %s5048 = scalar_lea.vmem %s1, 5668
  %5049 = vst [vmem:[%s5048] sm:$0xf] %v5047
  %s5050 = scalar_lea.vmem %s1, 5676
  %5051 = vst [vmem:[%s5050] sm:$0xf0] %v5047
  %s5052 = scalar_lea.vmem %s0, 6144
  %v5053 = vld [vmem:[%s5052] sm:$0x1f]
  %s5054 = scalar_lea.vmem %s1, 5684
  %5055 = vst [vmem:[%s5054] sm:$0xf] %v5053
  %s5056 = scalar_lea.vmem %s1, 5692
  %5057 = vst [vmem:[%s5056] sm:$0x10] %v5053
  %s5058 = scalar_lea.vmem %s0, 6160
  %v5059 = vld [vmem:[%s5058] sm:$0xff]
  %s5060 = scalar_lea.vmem %s1, 5697
  %5061 = vst [vmem:[%s5060] sm:$0x7f] %v5059
  %s5062 = scalar_lea.vmem %s1, 5705
  %5063 = vst [vmem:[%s5062] sm:$0x80] %v5059
  %s5064 = scalar_lea.vmem %s0, 6176
  %v5065 = vld [vmem:[%s5064] sm:$0xff]
  %s5066 = scalar_lea.vmem %s1, 5713
  %5067 = vst [vmem:[%s5066] sm:$0x7f] %v5065
  %s5068 = scalar_lea.vmem %s1, 5721
  %5069 = vst [vmem:[%s5068] sm:$0x80] %v5065
  %s5070 = scalar_lea.vmem %s0, 6192
  %v5071 = vld [vmem:[%s5070] sm:$0xff]
  %s5072 = scalar_lea.vmem %s1, 5729
  %5073 = vst [vmem:[%s5072] sm:$0x7f] %v5071
  %s5074 = scalar_lea.vmem %s1, 5737
  %5075 = vst [vmem:[%s5074] sm:$0x80] %v5071
  %s5076 = scalar_lea.vmem %s0, 6208
  %v5077 = vld [vmem:[%s5076] sm:$0xff]
  %s5078 = scalar_lea.vmem %s1, 5745
  %5079 = vst [vmem:[%s5078] sm:$0x7f] %v5077
  %s5080 = scalar_lea.vmem %s1, 5753
  %5081 = vst [vmem:[%s5080] sm:$0x80] %v5077
  %s5082 = scalar_lea.vmem %s0, 6224
  %v5083 = vld [vmem:[%s5082] sm:$0x1f]
  %s5084 = scalar_lea.vmem %s1, 5761
  %5085 = vst [vmem:[%s5084] sm:$0x1f] %v5083
  %s5086 = scalar_lea.vmem %s0, 6240
  %v5087 = vld [vmem:[%s5086] sm:$0xff]
  %s5088 = scalar_lea.vmem %s1, 5766
  %5089 = vst [vmem:[%s5088] sm:$0x3] %v5087
  %s5090 = scalar_lea.vmem %s1, 5774
  %5091 = vst [vmem:[%s5090] sm:$0xfc] %v5087
  %s5092 = scalar_lea.vmem %s0, 6256
  %v5093 = vld [vmem:[%s5092] sm:$0xff]
  %s5094 = scalar_lea.vmem %s1, 5782
  %5095 = vst [vmem:[%s5094] sm:$0x3] %v5093
  %s5096 = scalar_lea.vmem %s1, 5790
  %5097 = vst [vmem:[%s5096] sm:$0xfc] %v5093
  %s5098 = scalar_lea.vmem %s0, 6272
  %v5099 = vld [vmem:[%s5098] sm:$0xff]
  %s5100 = scalar_lea.vmem %s1, 5798
  %5101 = vst [vmem:[%s5100] sm:$0x3] %v5099
  %s5102 = scalar_lea.vmem %s1, 5806
  %5103 = vst [vmem:[%s5102] sm:$0xfc] %v5099
  %s5104 = scalar_lea.vmem %s0, 6288
  %v5105 = vld [vmem:[%s5104] sm:$0xff]
  %s5106 = scalar_lea.vmem %s1, 5814
  %5107 = vst [vmem:[%s5106] sm:$0x3] %v5105
  %s5108 = scalar_lea.vmem %s1, 5822
  %5109 = vst [vmem:[%s5108] sm:$0xfc] %v5105
  %s5110 = scalar_lea.vmem %s0, 6304
  %v5111 = vld [vmem:[%s5110] sm:$0x1f]
  %s5112 = scalar_lea.vmem %s1, 5830
  %5113 = vst [vmem:[%s5112] sm:$0x3] %v5111
  %s5114 = scalar_lea.vmem %s1, 5838
  %5115 = vst [vmem:[%s5114] sm:$0x1c] %v5111
  %s5116 = scalar_lea.vmem %s0, 6320
  %v5117 = vld [vmem:[%s5116] sm:$0xff]
  %s5118 = scalar_lea.vmem %s1, 5843
  %5119 = vst [vmem:[%s5118] sm:$0x1f] %v5117
  %s5120 = scalar_lea.vmem %s1, 5851
  %5121 = vst [vmem:[%s5120] sm:$0xe0] %v5117
  %s5122 = scalar_lea.vmem %s0, 6336
  %v5123 = vld [vmem:[%s5122] sm:$0xff]
  %s5124 = scalar_lea.vmem %s1, 5859
  %5125 = vst [vmem:[%s5124] sm:$0x1f] %v5123
  %s5126 = scalar_lea.vmem %s1, 5867
  %5127 = vst [vmem:[%s5126] sm:$0xe0] %v5123
  %s5128 = scalar_lea.vmem %s0, 6352
  %v5129 = vld [vmem:[%s5128] sm:$0xff]
  %s5130 = scalar_lea.vmem %s1, 5875
  %5131 = vst [vmem:[%s5130] sm:$0x1f] %v5129
  %s5132 = scalar_lea.vmem %s1, 5883
  %5133 = vst [vmem:[%s5132] sm:$0xe0] %v5129
  %s5134 = scalar_lea.vmem %s0, 6368
  %v5135 = vld [vmem:[%s5134] sm:$0xff]
  %s5136 = scalar_lea.vmem %s1, 5891
  %5137 = vst [vmem:[%s5136] sm:$0x1f] %v5135
  %s5138 = scalar_lea.vmem %s1, 5899
  %5139 = vst [vmem:[%s5138] sm:$0xe0] %v5135
  %s5140 = scalar_lea.vmem %s0, 6384
  %v5141 = vld [vmem:[%s5140] sm:$0x1f]
  %s5142 = scalar_lea.vmem %s1, 5907
  %5143 = vst [vmem:[%s5142] sm:$0x1f] %v5141
  %s5144 = scalar_lea.vmem %s0, 6400
  %v5145 = vld [vmem:[%s5144] sm:$0xff]
  %s5146 = scalar_lea.vmem %s1, 5920
  %5147 = vst [vmem:[%s5146] sm:$0xff] %v5145
  %s5148 = scalar_lea.vmem %s0, 6416
  %v5149 = vld [vmem:[%s5148] sm:$0xff]
  %s5150 = scalar_lea.vmem %s1, 5936
  %5151 = vst [vmem:[%s5150] sm:$0xff] %v5149
  %s5152 = scalar_lea.vmem %s0, 6432
  %v5153 = vld [vmem:[%s5152] sm:$0xff]
  %s5154 = scalar_lea.vmem %s1, 5952
  %5155 = vst [vmem:[%s5154] sm:$0xff] %v5153
  %s5156 = scalar_lea.vmem %s0, 6448
  %v5157 = vld [vmem:[%s5156] sm:$0xff]
  %s5158 = scalar_lea.vmem %s1, 5968
  %5159 = vst [vmem:[%s5158] sm:$0xff] %v5157
  %s5160 = scalar_lea.vmem %s0, 6464
  %v5161 = vld [vmem:[%s5160] sm:$0x1f]
  %s5162 = scalar_lea.vmem %s1, 5984
  %5163 = vst [vmem:[%s5162] sm:$0x1f] %v5161
  %s5164 = scalar_lea.vmem %s0, 6480
  %v5165 = vld [vmem:[%s5164] sm:$0xff]
  %s5166 = scalar_lea.vmem %s1, 5989
  %5167 = vst [vmem:[%s5166] sm:$0x7] %v5165
  %s5168 = scalar_lea.vmem %s1, 5997
  %5169 = vst [vmem:[%s5168] sm:$0xf8] %v5165
  %s5170 = scalar_lea.vmem %s0, 6496
  %v5171 = vld [vmem:[%s5170] sm:$0xff]
  %s5172 = scalar_lea.vmem %s1, 6005
  %5173 = vst [vmem:[%s5172] sm:$0x7] %v5171
  %s5174 = scalar_lea.vmem %s1, 6013
  %5175 = vst [vmem:[%s5174] sm:$0xf8] %v5171
  %s5176 = scalar_lea.vmem %s0, 6512
  %v5177 = vld [vmem:[%s5176] sm:$0xff]
  %s5178 = scalar_lea.vmem %s1, 6021
  %5179 = vst [vmem:[%s5178] sm:$0x7] %v5177
  %s5180 = scalar_lea.vmem %s1, 6029
  %5181 = vst [vmem:[%s5180] sm:$0xf8] %v5177
  %s5182 = scalar_lea.vmem %s0, 6528
  %v5183 = vld [vmem:[%s5182] sm:$0xff]
  %s5184 = scalar_lea.vmem %s1, 6037
  %5185 = vst [vmem:[%s5184] sm:$0x7] %v5183
  %s5186 = scalar_lea.vmem %s1, 6045
  %5187 = vst [vmem:[%s5186] sm:$0xf8] %v5183
  %s5188 = scalar_lea.vmem %s0, 6544
  %v5189 = vld [vmem:[%s5188] sm:$0x1f]
  %s5190 = scalar_lea.vmem %s1, 6053
  %5191 = vst [vmem:[%s5190] sm:$0x7] %v5189
  %s5192 = scalar_lea.vmem %s1, 6061
  %5193 = vst [vmem:[%s5192] sm:$0x18] %v5189
  %s5194 = scalar_lea.vmem %s0, 6560
  %v5195 = vld [vmem:[%s5194] sm:$0xff]
  %s5196 = scalar_lea.vmem %s1, 6066
  %5197 = vst [vmem:[%s5196] sm:$0x3f] %v5195
  %s5198 = scalar_lea.vmem %s1, 6074
  %5199 = vst [vmem:[%s5198] sm:$0xc0] %v5195
  %s5200 = scalar_lea.vmem %s0, 6576
  %v5201 = vld [vmem:[%s5200] sm:$0xff]
  %s5202 = scalar_lea.vmem %s1, 6082
  %5203 = vst [vmem:[%s5202] sm:$0x3f] %v5201
  %s5204 = scalar_lea.vmem %s1, 6090
  %5205 = vst [vmem:[%s5204] sm:$0xc0] %v5201
  %s5206 = scalar_lea.vmem %s0, 6592
  %v5207 = vld [vmem:[%s5206] sm:$0xff]
  %s5208 = scalar_lea.vmem %s1, 6098
  %5209 = vst [vmem:[%s5208] sm:$0x3f] %v5207
  %s5210 = scalar_lea.vmem %s1, 6106
  %5211 = vst [vmem:[%s5210] sm:$0xc0] %v5207
  %s5212 = scalar_lea.vmem %s0, 6608
  %v5213 = vld [vmem:[%s5212] sm:$0xff]
  %s5214 = scalar_lea.vmem %s1, 6114
  %5215 = vst [vmem:[%s5214] sm:$0x3f] %v5213
  %s5216 = scalar_lea.vmem %s1, 6122
  %5217 = vst [vmem:[%s5216] sm:$0xc0] %v5213
  %s5218 = scalar_lea.vmem %s0, 6624
  %v5219 = vld [vmem:[%s5218] sm:$0x1f]
  %s5220 = scalar_lea.vmem %s1, 6130
  %5221 = vst [vmem:[%s5220] sm:$0x1f] %v5219
  %s5222 = scalar_lea.vmem %s0, 6640
  %v5223 = vld [vmem:[%s5222] sm:$0xff]
  %s5224 = scalar_lea.vmem %s1, 6135
  %5225 = vst [vmem:[%s5224] ss:$9 sm:$0x3] %v5223
  %s5226 = scalar_lea.vmem %s1, 6143
  %5227 = vst [vmem:[%s5226] sm:$0xfc] %v5223
  %s5228 = scalar_lea.vmem %s0, 6656
  %v5229 = vld [vmem:[%s5228] sm:$0xff]
  %s5230 = scalar_lea.vmem %s1, 6151
  %5231 = vst [vmem:[%s5230] ss:$9 sm:$0x3] %v5229
  %s5232 = scalar_lea.vmem %s1, 6159
  %5233 = vst [vmem:[%s5232] sm:$0xfc] %v5229
  %s5234 = scalar_lea.vmem %s0, 6672
  %v5235 = vld [vmem:[%s5234] sm:$0xff]
  %s5236 = scalar_lea.vmem %s1, 6167
  %5237 = vst [vmem:[%s5236] ss:$9 sm:$0x3] %v5235
  %s5238 = scalar_lea.vmem %s1, 6175
  %5239 = vst [vmem:[%s5238] sm:$0xfc] %v5235
  %s5240 = scalar_lea.vmem %s0, 6688
  %v5241 = vld [vmem:[%s5240] sm:$0xff]
  %s5242 = scalar_lea.vmem %s1, 6183
  %5243 = vst [vmem:[%s5242] ss:$9 sm:$0x3] %v5241
  %s5244 = scalar_lea.vmem %s1, 6191
  %5245 = vst [vmem:[%s5244] sm:$0xfc] %v5241
  %s5246 = scalar_lea.vmem %s0, 6704
  %v5247 = vld [vmem:[%s5246] sm:$0x1f]
  %s5248 = scalar_lea.vmem %s1, 6199
  %5249 = vst [vmem:[%s5248] ss:$9 sm:$0x3] %v5247
  %s5250 = scalar_lea.vmem %s1, 6207
  %5251 = vst [vmem:[%s5250] sm:$0x1c] %v5247
  %s5252 = scalar_lea.vmem %s0, 6720
  %v5253 = vld [vmem:[%s5252] sm:$0xff]
  %s5254 = scalar_lea.vmem %s1, 6212
  %5255 = vst [vmem:[%s5254] sm:$0xf] %v5253
  %s5256 = scalar_lea.vmem %s1, 6220
  %5257 = vst [vmem:[%s5256] sm:$0xf0] %v5253
  %s5258 = scalar_lea.vmem %s0, 6736
  %v5259 = vld [vmem:[%s5258] sm:$0xff]
  %s5260 = scalar_lea.vmem %s1, 6228
  %5261 = vst [vmem:[%s5260] sm:$0xf] %v5259
  %s5262 = scalar_lea.vmem %s1, 6236
  %5263 = vst [vmem:[%s5262] sm:$0xf0] %v5259
  %s5264 = scalar_lea.vmem %s0, 6752
  %v5265 = vld [vmem:[%s5264] sm:$0xff]
  %s5266 = scalar_lea.vmem %s1, 6244
  %5267 = vst [vmem:[%s5266] sm:$0xf] %v5265
  %s5268 = scalar_lea.vmem %s1, 6252
  %5269 = vst [vmem:[%s5268] sm:$0xf0] %v5265
  %s5270 = scalar_lea.vmem %s0, 6768
  %v5271 = vld [vmem:[%s5270] sm:$0xff]
  %s5272 = scalar_lea.vmem %s1, 6260
  %5273 = vst [vmem:[%s5272] sm:$0xf] %v5271
  %s5274 = scalar_lea.vmem %s1, 6268
  %5275 = vst [vmem:[%s5274] sm:$0xf0] %v5271
  %s5276 = scalar_lea.vmem %s0, 6784
  %v5277 = vld [vmem:[%s5276] sm:$0x1f]
  %s5278 = scalar_lea.vmem %s1, 6276
  %5279 = vst [vmem:[%s5278] sm:$0xf] %v5277
  %s5280 = scalar_lea.vmem %s1, 6284
  %5281 = vst [vmem:[%s5280] sm:$0x10] %v5277
  %s5282 = scalar_lea.vmem %s0, 6800
  %v5283 = vld [vmem:[%s5282] sm:$0xff]
  %s5284 = scalar_lea.vmem %s1, 6289
  %5285 = vst [vmem:[%s5284] sm:$0x7f] %v5283
  %s5286 = scalar_lea.vmem %s1, 6297
  %5287 = vst [vmem:[%s5286] sm:$0x80] %v5283
  %s5288 = scalar_lea.vmem %s0, 6816
  %v5289 = vld [vmem:[%s5288] sm:$0xff]
  %s5290 = scalar_lea.vmem %s1, 6305
  %5291 = vst [vmem:[%s5290] sm:$0x7f] %v5289
  %s5292 = scalar_lea.vmem %s1, 6313
  %5293 = vst [vmem:[%s5292] sm:$0x80] %v5289
  %s5294 = scalar_lea.vmem %s0, 6832
  %v5295 = vld [vmem:[%s5294] sm:$0xff]
  %s5296 = scalar_lea.vmem %s1, 6321
  %5297 = vst [vmem:[%s5296] sm:$0x7f] %v5295
  %s5298 = scalar_lea.vmem %s1, 6329
  %5299 = vst [vmem:[%s5298] sm:$0x80] %v5295
  %s5300 = scalar_lea.vmem %s0, 6848
  %v5301 = vld [vmem:[%s5300] sm:$0xff]
  %s5302 = scalar_lea.vmem %s1, 6337
  %5303 = vst [vmem:[%s5302] sm:$0x7f] %v5301
  %s5304 = scalar_lea.vmem %s1, 6345
  %5305 = vst [vmem:[%s5304] sm:$0x80] %v5301
  %s5306 = scalar_lea.vmem %s0, 6864
  %v5307 = vld [vmem:[%s5306] sm:$0x1f]
  %s5308 = scalar_lea.vmem %s1, 6353
  %5309 = vst [vmem:[%s5308] sm:$0x1f] %v5307
  %s5310 = scalar_lea.vmem %s0, 6880
  %v5311 = vld [vmem:[%s5310] sm:$0xff]
  %s5312 = scalar_lea.vmem %s1, 6358
  %5313 = vst [vmem:[%s5312] sm:$0x3] %v5311
  %s5314 = scalar_lea.vmem %s1, 6366
  %5315 = vst [vmem:[%s5314] sm:$0xfc] %v5311
  %s5316 = scalar_lea.vmem %s0, 6896
  %v5317 = vld [vmem:[%s5316] sm:$0xff]
  %s5318 = scalar_lea.vmem %s1, 6374
  %5319 = vst [vmem:[%s5318] sm:$0x3] %v5317
  %s5320 = scalar_lea.vmem %s1, 6382
  %5321 = vst [vmem:[%s5320] sm:$0xfc] %v5317
  %s5322 = scalar_lea.vmem %s0, 6912
  %v5323 = vld [vmem:[%s5322] sm:$0xff]
  %s5324 = scalar_lea.vmem %s1, 6390
  %5325 = vst [vmem:[%s5324] sm:$0x3] %v5323
  %s5326 = scalar_lea.vmem %s1, 6398
  %5327 = vst [vmem:[%s5326] sm:$0xfc] %v5323
  %s5328 = scalar_lea.vmem %s0, 6928
  %v5329 = vld [vmem:[%s5328] sm:$0xff]
  %s5330 = scalar_lea.vmem %s1, 6406
  %5331 = vst [vmem:[%s5330] sm:$0x3] %v5329
  %s5332 = scalar_lea.vmem %s1, 6414
  %5333 = vst [vmem:[%s5332] sm:$0xfc] %v5329
  %s5334 = scalar_lea.vmem %s0, 6944
  %v5335 = vld [vmem:[%s5334] sm:$0x1f]
  %s5336 = scalar_lea.vmem %s1, 6422
  %5337 = vst [vmem:[%s5336] sm:$0x3] %v5335
  %s5338 = scalar_lea.vmem %s1, 6430
  %5339 = vst [vmem:[%s5338] sm:$0x1c] %v5335
  %s5340 = scalar_lea.vmem %s0, 6960
  %v5341 = vld [vmem:[%s5340] sm:$0xff]
  %s5342 = scalar_lea.vmem %s1, 6435
  %5343 = vst [vmem:[%s5342] sm:$0x1f] %v5341
  %s5344 = scalar_lea.vmem %s1, 6443
  %5345 = vst [vmem:[%s5344] sm:$0xe0] %v5341
  %s5346 = scalar_lea.vmem %s0, 6976
  %v5347 = vld [vmem:[%s5346] sm:$0xff]
  %s5348 = scalar_lea.vmem %s1, 6451
  %5349 = vst [vmem:[%s5348] sm:$0x1f] %v5347
  %s5350 = scalar_lea.vmem %s1, 6459
  %5351 = vst [vmem:[%s5350] sm:$0xe0] %v5347
  %s5352 = scalar_lea.vmem %s0, 6992
  %v5353 = vld [vmem:[%s5352] sm:$0xff]
  %s5354 = scalar_lea.vmem %s1, 6467
  %5355 = vst [vmem:[%s5354] sm:$0x1f] %v5353
  %s5356 = scalar_lea.vmem %s1, 6475
  %5357 = vst [vmem:[%s5356] sm:$0xe0] %v5353
  %s5358 = scalar_lea.vmem %s0, 7008
  %v5359 = vld [vmem:[%s5358] sm:$0xff]
  %s5360 = scalar_lea.vmem %s1, 6483
  %5361 = vst [vmem:[%s5360] sm:$0x1f] %v5359
  %s5362 = scalar_lea.vmem %s1, 6491
  %5363 = vst [vmem:[%s5362] sm:$0xe0] %v5359
  %s5364 = scalar_lea.vmem %s0, 7024
  %v5365 = vld [vmem:[%s5364] sm:$0x1f]
  %s5366 = scalar_lea.vmem %s1, 6499
  %5367 = vst [vmem:[%s5366] sm:$0x1f] %v5365

// kernel: tile.19
$region0: #{tile.19}
  %s0 = inlined_call_operand.vmem [shape: f32[8,37,224], index: 0, kind: input, shape index: {}]
  %s1 = inlined_call_operand.vmem [shape: f32[296,224], index: 1, kind: output, shape index: {}]
  %s2 = scalar_lea.vmem %s0, 8
  %v3 = vld [vmem:[%s2] sm:$0xff]
  %vm4 = vcmask 785408
  %s5 = scalar_lea.vmem %s1, 8
  %6 = vst.msk [vmem:[%s5] sm:$0xff] %vm4, %v3
  %s7 = scalar_lea.vmem %s0, 24
  %v8 = vld [vmem:[%s7] sm:$0xff]
  %vm9 = vcmask 785408
  %s10 = scalar_lea.vmem %s1, 24
  %11 = vst.msk [vmem:[%s10] sm:$0xff] %vm9, %v8
  %s12 = scalar_lea.vmem %s0, 40
  %v13 = vld [vmem:[%s12] sm:$0xff]
  %vm14 = vcmask 785408
  %s15 = scalar_lea.vmem %s1, 40
  %16 = vst.msk [vmem:[%s15] sm:$0xff] %vm14, %v13
  %s17 = scalar_lea.vmem %s0, 56
  %v18 = vld [vmem:[%s17] sm:$0xff]
  %vm19 = vcmask 785408
  %s20 = scalar_lea.vmem %s1, 56
  %21 = vst.msk [vmem:[%s20] sm:$0xff] %vm19, %v18
  %s22 = scalar_lea.vmem %s0, 72
  %v23 = vld [vmem:[%s22] sm:$0x1f]
  %vm24 = vcmask 785408
  %s25 = scalar_lea.vmem %s1, 72
  %26 = vst.msk [vmem:[%s25] sm:$0x1f] %vm24, %v23
  %s27 = scalar_lea.vmem %s0, 88
  %v28 = vld [vmem:[%s27] sm:$0xff]
  %vm29 = vcmask 785408
  %s30 = scalar_lea.vmem %s1, 77
  %31 = vst.msk [vmem:[%s30] sm:$0x7] %vm29, %v28
  %s32 = scalar_lea.vmem %s1, 85
  %33 = vst.msk [vmem:[%s32] sm:$0xf8] %vm29, %v28
  %s34 = scalar_lea.vmem %s0, 104
  %v35 = vld [vmem:[%s34] sm:$0xff]
  %vm36 = vcmask 785408
  %s37 = scalar_lea.vmem %s1, 93
  %38 = vst.msk [vmem:[%s37] sm:$0x7] %vm36, %v35
  %s39 = scalar_lea.vmem %s1, 101
  %40 = vst.msk [vmem:[%s39] sm:$0xf8] %vm36, %v35
  %s41 = scalar_lea.vmem %s0, 120
  %v42 = vld [vmem:[%s41] sm:$0xff]
  %vm43 = vcmask 785408
  %s44 = scalar_lea.vmem %s1, 109
  %45 = vst.msk [vmem:[%s44] sm:$0x7] %vm43, %v42
  %s46 = scalar_lea.vmem %s1, 117
  %47 = vst.msk [vmem:[%s46] sm:$0xf8] %vm43, %v42
  %s48 = scalar_lea.vmem %s0, 136
  %v49 = vld [vmem:[%s48] sm:$0xff]
  %vm50 = vcmask 785408
  %s51 = scalar_lea.vmem %s1, 125
  %52 = vst.msk [vmem:[%s51] sm:$0x7] %vm50, %v49
  %s53 = scalar_lea.vmem %s1, 133
  %54 = vst.msk [vmem:[%s53] sm:$0xf8] %vm50, %v49
  %s55 = scalar_lea.vmem %s0, 152
  %v56 = vld [vmem:[%s55] sm:$0x1f]
  %vm57 = vcmask 785408
  %s58 = scalar_lea.vmem %s1, 141
  %59 = vst.msk [vmem:[%s58] sm:$0x7] %vm57, %v56
  %s60 = scalar_lea.vmem %s1, 149
  %61 = vst.msk [vmem:[%s60] sm:$0x18] %vm57, %v56
  %s62 = scalar_lea.vmem %s0, 168
  %v63 = vld [vmem:[%s62] sm:$0xff]
  %vm64 = vcmask 785408
  %s65 = scalar_lea.vmem %s1, 154
  %66 = vst.msk [vmem:[%s65] sm:$0x3f] %vm64, %v63
  %s67 = scalar_lea.vmem %s1, 162
  %68 = vst.msk [vmem:[%s67] sm:$0xc0] %vm64, %v63
  %s69 = scalar_lea.vmem %s0, 184
  %v70 = vld [vmem:[%s69] sm:$0xff]
  %vm71 = vcmask 785408
  %s72 = scalar_lea.vmem %s1, 170
  %73 = vst.msk [vmem:[%s72] sm:$0x3f] %vm71, %v70
  %s74 = scalar_lea.vmem %s1, 178
  %75 = vst.msk [vmem:[%s74] sm:$0xc0] %vm71, %v70
  %s76 = scalar_lea.vmem %s0, 200
  %v77 = vld [vmem:[%s76] sm:$0xff]
  %vm78 = vcmask 785408
  %s79 = scalar_lea.vmem %s1, 186
  %80 = vst.msk [vmem:[%s79] sm:$0x3f] %vm78, %v77
  %s81 = scalar_lea.vmem %s1, 194
  %82 = vst.msk [vmem:[%s81] sm:$0xc0] %vm78, %v77
  %s83 = scalar_lea.vmem %s0, 216
  %v84 = vld [vmem:[%s83] sm:$0xff]
  %vm85 = vcmask 785408
  %s86 = scalar_lea.vmem %s1, 202
  %87 = vst.msk [vmem:[%s86] sm:$0x3f] %vm85, %v84
  %s88 = scalar_lea.vmem %s1, 210
  %89 = vst.msk [vmem:[%s88] sm:$0xc0] %vm85, %v84
  %s90 = scalar_lea.vmem %s0, 232
  %v91 = vld [vmem:[%s90] sm:$0x1f]
  %vm92 = vcmask 785408
  %s93 = scalar_lea.vmem %s1, 218
  %94 = vst.msk [vmem:[%s93] sm:$0x1f] %vm92, %v91
  %s95 = scalar_lea.vmem %s0, 248
  %v96 = vld [vmem:[%s95] sm:$0xff]
  %vm97 = vcmask 785408
  %s98 = scalar_lea.vmem %s1, 223
  %99 = vst.msk [vmem:[%s98] ss:$9 sm:$0x3] %vm97, %v96
  %s100 = scalar_lea.vmem %s1, 231
  %101 = vst.msk [vmem:[%s100] sm:$0xfc] %vm97, %v96
  %s102 = scalar_lea.vmem %s0, 264
  %v103 = vld [vmem:[%s102] sm:$0xff]
  %vm104 = vcmask 785408
  %s105 = scalar_lea.vmem %s1, 239
  %106 = vst.msk [vmem:[%s105] ss:$9 sm:$0x3] %vm104, %v103
  %s107 = scalar_lea.vmem %s1, 247
  %108 = vst.msk [vmem:[%s107] sm:$0xfc] %vm104, %v103
  %s109 = scalar_lea.vmem %s0, 280
  %v110 = vld [vmem:[%s109] sm:$0xff]
  %vm111 = vcmask 785408
  %s112 = scalar_lea.vmem %s1, 255
  %113 = vst.msk [vmem:[%s112] ss:$9 sm:$0x3] %vm111, %v110
  %s114 = scalar_lea.vmem %s1, 263
  %115 = vst.msk [vmem:[%s114] sm:$0xfc] %vm111, %v110
  %s116 = scalar_lea.vmem %s0, 296
  %v117 = vld [vmem:[%s116] sm:$0xff]
  %vm118 = vcmask 785408
  %s119 = scalar_lea.vmem %s1, 271
  %120 = vst.msk [vmem:[%s119] ss:$9 sm:$0x3] %vm118, %v117
  %s121 = scalar_lea.vmem %s1, 279
  %122 = vst.msk [vmem:[%s121] sm:$0xfc] %vm118, %v117
  %s123 = scalar_lea.vmem %s0, 312
  %v124 = vld [vmem:[%s123] sm:$0x1f]
  %vm125 = vcmask 785408
  %s126 = scalar_lea.vmem %s1, 287
  %127 = vst.msk [vmem:[%s126] ss:$9 sm:$0x3] %vm125, %v124
  %s128 = scalar_lea.vmem %s1, 295
  %129 = vst.msk [vmem:[%s128] sm:$0x1c] %vm125, %v124
  %s130 = scalar_lea.vmem %s0, 328
  %v131 = vld [vmem:[%s130] sm:$0xff]
  %vm132 = vcmask 785408
  %s133 = scalar_lea.vmem %s1, 300
  %134 = vst.msk [vmem:[%s133] sm:$0xf] %vm132, %v131
  %s135 = scalar_lea.vmem %s1, 308
  %136 = vst.msk [vmem:[%s135] sm:$0xf0] %vm132, %v131
  %s137 = scalar_lea.vmem %s0, 344
  %v138 = vld [vmem:[%s137] sm:$0xff]
  %vm139 = vcmask 785408
  %s140 = scalar_lea.vmem %s1, 316
  %141 = vst.msk [vmem:[%s140] sm:$0xf] %vm139, %v138
  %s142 = scalar_lea.vmem %s1, 324
  %143 = vst.msk [vmem:[%s142] sm:$0xf0] %vm139, %v138
  %s144 = scalar_lea.vmem %s0, 360
  %v145 = vld [vmem:[%s144] sm:$0xff]
  %vm146 = vcmask 785408
  %s147 = scalar_lea.vmem %s1, 332
  %148 = vst.msk [vmem:[%s147] sm:$0xf] %vm146, %v145
  %s149 = scalar_lea.vmem %s1, 340
  %150 = vst.msk [vmem:[%s149] sm:$0xf0] %vm146, %v145
  %s151 = scalar_lea.vmem %s0, 376
  %v152 = vld [vmem:[%s151] sm:$0xff]
  %vm153 = vcmask 785408
  %s154 = scalar_lea.vmem %s1, 348
  %155 = vst.msk [vmem:[%s154] sm:$0xf] %vm153, %v152
  %s156 = scalar_lea.vmem %s1, 356
  %157 = vst.msk [vmem:[%s156] sm:$0xf0] %vm153, %v152
  %s158 = scalar_lea.vmem %s0, 392
  %v159 = vld [vmem:[%s158] sm:$0x1f]
  %vm160 = vcmask 785408
  %s161 = scalar_lea.vmem %s1, 364
  %162 = vst.msk [vmem:[%s161] sm:$0xf] %vm160, %v159
  %s163 = scalar_lea.vmem %s1, 372
  %164 = vst.msk [vmem:[%s163] sm:$0x10] %vm160, %v159
  %s165 = scalar_lea.vmem %s0, 408
  %v166 = vld [vmem:[%s165] sm:$0xff]
  %vm167 = vcmask 785408
  %s168 = scalar_lea.vmem %s1, 377
  %169 = vst.msk [vmem:[%s168] sm:$0x7f] %vm167, %v166
  %s170 = scalar_lea.vmem %s1, 385
  %171 = vst.msk [vmem:[%s170] sm:$0x80] %vm167, %v166
  %s172 = scalar_lea.vmem %s0, 424
  %v173 = vld [vmem:[%s172] sm:$0xff]
  %vm174 = vcmask 785408
  %s175 = scalar_lea.vmem %s1, 393
  %176 = vst.msk [vmem:[%s175] sm:$0x7f] %vm174, %v173
  %s177 = scalar_lea.vmem %s1, 401
  %178 = vst.msk [vmem:[%s177] sm:$0x80] %vm174, %v173
  %s179 = scalar_lea.vmem %s0, 440
  %v180 = vld [vmem:[%s179] sm:$0xff]
  %vm181 = vcmask 785408
  %s182 = scalar_lea.vmem %s1, 409
  %183 = vst.msk [vmem:[%s182] sm:$0x7f] %vm181, %v180
  %s184 = scalar_lea.vmem %s1, 417
  %185 = vst.msk [vmem:[%s184] sm:$0x80] %vm181, %v180
  %s186 = scalar_lea.vmem %s0, 456
  %v187 = vld [vmem:[%s186] sm:$0xff]
  %vm188 = vcmask 785408
  %s189 = scalar_lea.vmem %s1, 425
  %190 = vst.msk [vmem:[%s189] sm:$0x7f] %vm188, %v187
  %s191 = scalar_lea.vmem %s1, 433
  %192 = vst.msk [vmem:[%s191] sm:$0x80] %vm188, %v187
  %s193 = scalar_lea.vmem %s0, 472
  %v194 = vld [vmem:[%s193] sm:$0x1f]
  %vm195 = vcmask 785408
  %s196 = scalar_lea.vmem %s1, 441
  %197 = vst.msk [vmem:[%s196] sm:$0x1f] %vm195, %v194
  %s198 = scalar_lea.vmem %s0, 488
  %v199 = vld [vmem:[%s198] sm:$0xff]
  %vm200 = vcmask 785408
  %s201 = scalar_lea.vmem %s1, 446
  %202 = vst.msk [vmem:[%s201] sm:$0x3] %vm200, %v199
  %s203 = scalar_lea.vmem %s1, 454
  %204 = vst.msk [vmem:[%s203] sm:$0xfc] %vm200, %v199
  %s205 = scalar_lea.vmem %s0, 504
  %v206 = vld [vmem:[%s205] sm:$0xff]
  %vm207 = vcmask 785408
  %s208 = scalar_lea.vmem %s1, 462
  %209 = vst.msk [vmem:[%s208] sm:$0x3] %vm207, %v206
  %s210 = scalar_lea.vmem %s1, 470
  %211 = vst.msk [vmem:[%s210] sm:$0xfc] %vm207, %v206
  %s212 = scalar_lea.vmem %s0, 520
  %v213 = vld [vmem:[%s212] sm:$0xff]
  %vm214 = vcmask 785408
  %s215 = scalar_lea.vmem %s1, 478
  %216 = vst.msk [vmem:[%s215] sm:$0x3] %vm214, %v213
  %s217 = scalar_lea.vmem %s1, 486
  %218 = vst.msk [vmem:[%s217] sm:$0xfc] %vm214, %v213
  %s219 = scalar_lea.vmem %s0, 536
  %v220 = vld [vmem:[%s219] sm:$0xff]
  %vm221 = vcmask 785408
  %s222 = scalar_lea.vmem %s1, 494
  %223 = vst.msk [vmem:[%s222] sm:$0x3] %vm221, %v220
  %s224 = scalar_lea.vmem %s1, 502
  %225 = vst.msk [vmem:[%s224] sm:$0xfc] %vm221, %v220
  %s226 = scalar_lea.vmem %s0, 552
  %v227 = vld [vmem:[%s226] sm:$0x1f]
  %vm228 = vcmask 785408
  %s229 = scalar_lea.vmem %s1, 510
  %230 = vst.msk [vmem:[%s229] sm:$0x3] %vm228, %v227
  %s231 = scalar_lea.vmem %s1, 518
  %232 = vst.msk [vmem:[%s231] sm:$0x1c] %vm228, %v227
  %s233 = scalar_lea.vmem %s0, 568
  %v234 = vld [vmem:[%s233] sm:$0xff]
  %vm235 = vcmask 785408
  %s236 = scalar_lea.vmem %s1, 523
  %237 = vst.msk [vmem:[%s236] sm:$0x1f] %vm235, %v234
  %s238 = scalar_lea.vmem %s1, 531
  %239 = vst.msk [vmem:[%s238] sm:$0xe0] %vm235, %v234
  %s240 = scalar_lea.vmem %s0, 584
  %v241 = vld [vmem:[%s240] sm:$0xff]
  %vm242 = vcmask 785408
  %s243 = scalar_lea.vmem %s1, 539
  %244 = vst.msk [vmem:[%s243] sm:$0x1f] %vm242, %v241
  %s245 = scalar_lea.vmem %s1, 547
  %246 = vst.msk [vmem:[%s245] sm:$0xe0] %vm242, %v241
  %s247 = scalar_lea.vmem %s0, 600
  %v248 = vld [vmem:[%s247] sm:$0xff]
  %vm249 = vcmask 785408
  %s250 = scalar_lea.vmem %s1, 555
  %251 = vst.msk [vmem:[%s250] sm:$0x1f] %vm249, %v248
  %s252 = scalar_lea.vmem %s1, 563
  %253 = vst.msk [vmem:[%s252] sm:$0xe0] %vm249, %v248
  %s254 = scalar_lea.vmem %s0, 616
  %v255 = vld [vmem:[%s254] sm:$0xff]
  %vm256 = vcmask 785408
  %s257 = scalar_lea.vmem %s1, 571
  %258 = vst.msk [vmem:[%s257] sm:$0x1f] %vm256, %v255
  %s259 = scalar_lea.vmem %s1, 579
  %260 = vst.msk [vmem:[%s259] sm:$0xe0] %vm256, %v255
  %s261 = scalar_lea.vmem %s0, 632
  %v262 = vld [vmem:[%s261] sm:$0x1f]
  %vm263 = vcmask 785408
  %s264 = scalar_lea.vmem %s1, 587
  %265 = vst.msk [vmem:[%s264] sm:$0x1f] %vm263, %v262
  %v266 = vld [vmem:[%s0] sm:$0xff]
  %267 = vst [vmem:[%s1] sm:$0xff] %v266
  %s268 = scalar_lea.vmem %s0, 16
  %v269 = vld [vmem:[%s268] sm:$0xff]
  %s270 = scalar_lea.vmem %s1, 16
  %271 = vst [vmem:[%s270] sm:$0xff] %v269
  %s272 = scalar_lea.vmem %s0, 32
  %v273 = vld [vmem:[%s272] sm:$0xff]
  %s274 = scalar_lea.vmem %s1, 32
  %275 = vst [vmem:[%s274] sm:$0xff] %v273
  %s276 = scalar_lea.vmem %s0, 48
  %v277 = vld [vmem:[%s276] sm:$0xff]
  %s278 = scalar_lea.vmem %s1, 48
  %279 = vst [vmem:[%s278] sm:$0xff] %v277
  %s280 = scalar_lea.vmem %s0, 64
  %v281 = vld [vmem:[%s280] sm:$0x1f]
  %s282 = scalar_lea.vmem %s1, 64
  %283 = vst [vmem:[%s282] sm:$0x1f] %v281
  %s284 = scalar_lea.vmem %s0, 80
  %v285 = vld [vmem:[%s284] sm:$0xff]
  %s286 = scalar_lea.vmem %s1, 69
  %287 = vst [vmem:[%s286] sm:$0x7] %v285
  %s288 = scalar_lea.vmem %s1, 77
  %289 = vst [vmem:[%s288] sm:$0xf8] %v285
  %s290 = scalar_lea.vmem %s0, 96
  %v291 = vld [vmem:[%s290] sm:$0xff]
  %s292 = scalar_lea.vmem %s1, 85
  %293 = vst [vmem:[%s292] sm:$0x7] %v291
  %s294 = scalar_lea.vmem %s1, 93
  %295 = vst [vmem:[%s294] sm:$0xf8] %v291
  %s296 = scalar_lea.vmem %s0, 112
  %v297 = vld [vmem:[%s296] sm:$0xff]
  %s298 = scalar_lea.vmem %s1, 101
  %299 = vst [vmem:[%s298] sm:$0x7] %v297
  %s300 = scalar_lea.vmem %s1, 109
  %301 = vst [vmem:[%s300] sm:$0xf8] %v297
  %s302 = scalar_lea.vmem %s0, 128
  %v303 = vld [vmem:[%s302] sm:$0xff]
  %s304 = scalar_lea.vmem %s1, 117
  %305 = vst [vmem:[%s304] sm:$0x7] %v303
  %s306 = scalar_lea.vmem %s1, 125
  %307 = vst [vmem:[%s306] sm:$0xf8] %v303
  %s308 = scalar_lea.vmem %s0, 144
  %v309 = vld [vmem:[%s308] sm:$0x1f]
  %s310 = scalar_lea.vmem %s1, 133
  %311 = vst [vmem:[%s310] sm:$0x7] %v309
  %s312 = scalar_lea.vmem %s1, 141
  %313 = vst [vmem:[%s312] sm:$0x18] %v309
  %s314 = scalar_lea.vmem %s0, 160
  %v315 = vld [vmem:[%s314] sm:$0xff]
  %s316 = scalar_lea.vmem %s1, 146
  %317 = vst [vmem:[%s316] sm:$0x3f] %v315
  %s318 = scalar_lea.vmem %s1, 154
  %319 = vst [vmem:[%s318] sm:$0xc0] %v315
  %s320 = scalar_lea.vmem %s0, 176
  %v321 = vld [vmem:[%s320] sm:$0xff]
  %s322 = scalar_lea.vmem %s1, 162
  %323 = vst [vmem:[%s322] sm:$0x3f] %v321
  %s324 = scalar_lea.vmem %s1, 170
  %325 = vst [vmem:[%s324] sm:$0xc0] %v321
  %s326 = scalar_lea.vmem %s0, 192
  %v327 = vld [vmem:[%s326] sm:$0xff]
  %s328 = scalar_lea.vmem %s1, 178
  %329 = vst [vmem:[%s328] sm:$0x3f] %v327
  %s330 = scalar_lea.vmem %s1, 186
  %331 = vst [vmem:[%s330] sm:$0xc0] %v327
  %s332 = scalar_lea.vmem %s0, 208
  %v333 = vld [vmem:[%s332] sm:$0xff]
  %s334 = scalar_lea.vmem %s1, 194
  %335 = vst [vmem:[%s334] sm:$0x3f] %v333
  %s336 = scalar_lea.vmem %s1, 202
  %337 = vst [vmem:[%s336] sm:$0xc0] %v333
  %s338 = scalar_lea.vmem %s0, 224
  %v339 = vld [vmem:[%s338] sm:$0x1f]
  %s340 = scalar_lea.vmem %s1, 210
  %341 = vst [vmem:[%s340] sm:$0x1f] %v339
  %s342 = scalar_lea.vmem %s0, 240
  %v343 = vld [vmem:[%s342] sm:$0xff]
  %s344 = scalar_lea.vmem %s1, 215
  %345 = vst [vmem:[%s344] ss:$9 sm:$0x3] %v343
  %s346 = scalar_lea.vmem %s1, 223
  %347 = vst [vmem:[%s346] sm:$0xfc] %v343
  %s348 = scalar_lea.vmem %s0, 256
  %v349 = vld [vmem:[%s348] sm:$0xff]
  %s350 = scalar_lea.vmem %s1, 231
  %351 = vst [vmem:[%s350] ss:$9 sm:$0x3] %v349
  %s352 = scalar_lea.vmem %s1, 239
  %353 = vst [vmem:[%s352] sm:$0xfc] %v349
  %s354 = scalar_lea.vmem %s0, 272
  %v355 = vld [vmem:[%s354] sm:$0xff]
  %s356 = scalar_lea.vmem %s1, 247
  %357 = vst [vmem:[%s356] ss:$9 sm:$0x3] %v355
  %s358 = scalar_lea.vmem %s1, 255
  %359 = vst [vmem:[%s358] sm:$0xfc] %v355
  %s360 = scalar_lea.vmem %s0, 288
  %v361 = vld [vmem:[%s360] sm:$0xff]
  %s362 = scalar_lea.vmem %s1, 263
  %363 = vst [vmem:[%s362] ss:$9 sm:$0x3] %v361
  %s364 = scalar_lea.vmem %s1, 271
  %365 = vst [vmem:[%s364] sm:$0xfc] %v361
  %s366 = scalar_lea.vmem %s0, 304
  %v367 = vld [vmem:[%s366] sm:$0x1f]
  %s368 = scalar_lea.vmem %s1, 279
  %369 = vst [vmem:[%s368] ss:$9 sm:$0x3] %v367
  %s370 = scalar_lea.vmem %s1, 287
  %371 = vst [vmem:[%s370] sm:$0x1c] %v367
  %s372 = scalar_lea.vmem %s0, 320
  %v373 = vld [vmem:[%s372] sm:$0xff]
  %s374 = scalar_lea.vmem %s1, 292
  %375 = vst [vmem:[%s374] sm:$0xf] %v373
  %s376 = scalar_lea.vmem %s1, 300
  %377 = vst [vmem:[%s376] sm:$0xf0] %v373
  %s378 = scalar_lea.vmem %s0, 336
  %v379 = vld [vmem:[%s378] sm:$0xff]
  %s380 = scalar_lea.vmem %s1, 308
  %381 = vst [vmem:[%s380] sm:$0xf] %v379
  %s382 = scalar_lea.vmem %s1, 316
  %383 = vst [vmem:[%s382] sm:$0xf0] %v379
  %s384 = scalar_lea.vmem %s0, 352
  %v385 = vld [vmem:[%s384] sm:$0xff]
  %s386 = scalar_lea.vmem %s1, 324
  %387 = vst [vmem:[%s386] sm:$0xf] %v385
  %s388 = scalar_lea.vmem %s1, 332
  %389 = vst [vmem:[%s388] sm:$0xf0] %v385
  %s390 = scalar_lea.vmem %s0, 368
  %v391 = vld [vmem:[%s390] sm:$0xff]
  %s392 = scalar_lea.vmem %s1, 340
  %393 = vst [vmem:[%s392] sm:$0xf] %v391
  %s394 = scalar_lea.vmem %s1, 348
  %395 = vst [vmem:[%s394] sm:$0xf0] %v391
  %s396 = scalar_lea.vmem %s0, 384
  %v397 = vld [vmem:[%s396] sm:$0x1f]
  %s398 = scalar_lea.vmem %s1, 356
  %399 = vst [vmem:[%s398] sm:$0xf] %v397
  %s400 = scalar_lea.vmem %s1, 364
  %401 = vst [vmem:[%s400] sm:$0x10] %v397
  %s402 = scalar_lea.vmem %s0, 400
  %v403 = vld [vmem:[%s402] sm:$0xff]
  %s404 = scalar_lea.vmem %s1, 369
  %405 = vst [vmem:[%s404] sm:$0x7f] %v403
  %s406 = scalar_lea.vmem %s1, 377
  %407 = vst [vmem:[%s406] sm:$0x80] %v403
  %s408 = scalar_lea.vmem %s0, 416
  %v409 = vld [vmem:[%s408] sm:$0xff]
  %s410 = scalar_lea.vmem %s1, 385
  %411 = vst [vmem:[%s410] sm:$0x7f] %v409
  %s412 = scalar_lea.vmem %s1, 393
  %413 = vst [vmem:[%s412] sm:$0x80] %v409
  %s414 = scalar_lea.vmem %s0, 432
  %v415 = vld [vmem:[%s414] sm:$0xff]
  %s416 = scalar_lea.vmem %s1, 401
  %417 = vst [vmem:[%s416] sm:$0x7f] %v415
  %s418 = scalar_lea.vmem %s1, 409
  %419 = vst [vmem:[%s418] sm:$0x80] %v415
  %s420 = scalar_lea.vmem %s0, 448
  %v421 = vld [vmem:[%s420] sm:$0xff]
  %s422 = scalar_lea.vmem %s1, 417
  %423 = vst [vmem:[%s422] sm:$0x7f] %v421
  %s424 = scalar_lea.vmem %s1, 425
  %425 = vst [vmem:[%s424] sm:$0x80] %v421
  %s426 = scalar_lea.vmem %s0, 464
  %v427 = vld [vmem:[%s426] sm:$0x1f]
  %s428 = scalar_lea.vmem %s1, 433
  %429 = vst [vmem:[%s428] sm:$0x1f] %v427
  %s430 = scalar_lea.vmem %s0, 480
  %v431 = vld [vmem:[%s430] sm:$0xff]
  %s432 = scalar_lea.vmem %s1, 438
  %433 = vst [vmem:[%s432] sm:$0x3] %v431
  %s434 = scalar_lea.vmem %s1, 446
  %435 = vst [vmem:[%s434] sm:$0xfc] %v431
  %s436 = scalar_lea.vmem %s0, 496
  %v437 = vld [vmem:[%s436] sm:$0xff]
  %s438 = scalar_lea.vmem %s1, 454
  %439 = vst [vmem:[%s438] sm:$0x3] %v437
  %s440 = scalar_lea.vmem %s1, 462
  %441 = vst [vmem:[%s440] sm:$0xfc] %v437
  %s442 = scalar_lea.vmem %s0, 512
  %v443 = vld [vmem:[%s442] sm:$0xff]
  %s444 = scalar_lea.vmem %s1, 470
  %445 = vst [vmem:[%s444] sm:$0x3] %v443
  %s446 = scalar_lea.vmem %s1, 478
  %447 = vst [vmem:[%s446] sm:$0xfc] %v443
  %s448 = scalar_lea.vmem %s0, 528
  %v449 = vld [vmem:[%s448] sm:$0xff]
  %s450 = scalar_lea.vmem %s1, 486
  %451 = vst [vmem:[%s450] sm:$0x3] %v449
  %s452 = scalar_lea.vmem %s1, 494
  %453 = vst [vmem:[%s452] sm:$0xfc] %v449
  %s454 = scalar_lea.vmem %s0, 544
  %v455 = vld [vmem:[%s454] sm:$0x1f]
  %s456 = scalar_lea.vmem %s1, 502
  %457 = vst [vmem:[%s456] sm:$0x3] %v455
  %s458 = scalar_lea.vmem %s1, 510
  %459 = vst [vmem:[%s458] sm:$0x1c] %v455
  %s460 = scalar_lea.vmem %s0, 560
  %v461 = vld [vmem:[%s460] sm:$0xff]
  %s462 = scalar_lea.vmem %s1, 515
  %463 = vst [vmem:[%s462] sm:$0x1f] %v461
  %s464 = scalar_lea.vmem %s1, 523
  %465 = vst [vmem:[%s464] sm:$0xe0] %v461
  %s466 = scalar_lea.vmem %s0, 576
  %v467 = vld [vmem:[%s466] sm:$0xff]
  %s468 = scalar_lea.vmem %s1, 531
  %469 = vst [vmem:[%s468] sm:$0x1f] %v467
  %s470 = scalar_lea.vmem %s1, 539
  %471 = vst [vmem:[%s470] sm:$0xe0] %v467
  %s472 = scalar_lea.vmem %s0, 592
  %v473 = vld [vmem:[%s472] sm:$0xff]
  %s474 = scalar_lea.vmem %s1, 547
  %475 = vst [vmem:[%s474] sm:$0x1f] %v473
  %s476 = scalar_lea.vmem %s1, 555
  %477 = vst [vmem:[%s476] sm:$0xe0] %v473
  %s478 = scalar_lea.vmem %s0, 608
  %v479 = vld [vmem:[%s478] sm:$0xff]
  %s480 = scalar_lea.vmem %s1, 563
  %481 = vst [vmem:[%s480] sm:$0x1f] %v479
  %s482 = scalar_lea.vmem %s1, 571
  %483 = vst [vmem:[%s482] sm:$0xe0] %v479
  %s484 = scalar_lea.vmem %s0, 624
  %v485 = vld [vmem:[%s484] sm:$0x1f]
  %s486 = scalar_lea.vmem %s1, 579
  %487 = vst [vmem:[%s486] sm:$0x1f] %v485

// kernel: data_embedding.1
$region0: #{data_embedding.1}
  #allocation0 [shape = 'u32[]', space=smem, size = 0x4, offset = 0x4, fixed_abs, tag = 'smem constant byte address 0x4 - core index']
  #allocation1 [shape = 'u32[144,128]{1,0:T(1,128)}', space=vmem, size = 0x12000, scoped, tag = 'internal scratch']
  %s0 = inlined_call_operand.vmem [shape: f32[296,11], index: 0, kind: input, shape index: {}]
  %s1 = inlined_call_operand.vmem [shape: f32[11,296,224], index: 1, kind: input, shape index: {}]
  %s2 = inlined_call_operand.vmem [shape: f32[296,224], index: 2, kind: input, shape index: {}]
  %s3 = inlined_call_operand.vmem [shape: s32[296,4], index: 3, kind: input, shape index: {}]
  %s4 = inlined_call_operand.vmem [shape: f32[76,224], index: 4, kind: input, shape index: {}]
  %s5 = inlined_call_operand.vmem [shape: f32[296,224], index: 5, kind: output, shape index: {}]
  %s6 = sld [smem:[#allocation0]]
  $region30: #{data_embedding.1} parent=0
    _
  %s8 = ssub.s32 1, %s6
  %s9 = scalar_select 0, %s8, %s6
  // Predicated region
  $region2: #{data_embedding.1} parent=0 // pred_check
    _
  $region3: #{data_embedding.1} parent=0 // pred_check_branch
    %11 = sbr.rel (0) target = $region5
  $region4: #{data_embedding.1} parent=0 // pred_region
    _
  $region5: #{data_embedding.1} parent=0 // pred_fallthru
    _
  // Predicated region
  $region6: #{data_embedding.1} parent=0 // pred_check
    _
  $region7: #{data_embedding.1} parent=0 // pred_check_branch
    %13 = sbr.rel (0) target = $region9
  $region8: #{data_embedding.1} parent=0 // pred_region
    _
  $region9: #{data_embedding.1} parent=0 // pred_fallthru
    _
  // Predicated region
  $region10: #{data_embedding.1} parent=0 // pred_check
    _
  $region11: #{data_embedding.1} parent=0 // pred_check_branch
    %15 = sbr.rel (0) target = $region13
  $region12: #{data_embedding.1} parent=0 // pred_region
    _
  $region13: #{data_embedding.1} parent=0 // pred_fallthru
    _
  // Predicated region
  $region14: #{data_embedding.1} parent=0 // pred_check
    _
  $region15: #{data_embedding.1} parent=0 // pred_check_branch
    %17 = sbr.rel (0) target = $region17
  $region16: #{data_embedding.1} parent=0 // pred_region
    _
  $region17: #{data_embedding.1} parent=0 // pred_fallthru
    _
  // Predicated region
  $region18: #{data_embedding.1} parent=0 // pred_check
    _
  $region19: #{data_embedding.1} parent=0 // pred_check_branch
    %19 = sbr.rel (0) target = $region21
  $region20: #{data_embedding.1} parent=0 // pred_region
    _
  $region21: #{data_embedding.1} parent=0 // pred_fallthru
    _
  %v20 = vld [vmem:[%s2] sm:$0xff]
  %v21 = vld [vmem:[%s2 + $0x8] sm:$0xff]
  %v22 = vld [vmem:[%s2 + $0x10] sm:$0xff]
  %v23 = vld [vmem:[%s2 + $0x18] sm:$0xff]
  %v24 = vld [vmem:[%s2 + $0x20] sm:$0xff]
  %v25 = vld [vmem:[%s2 + $0x28] sm:$0xff]
  %v26 = vld [vmem:[%s2 + $0x30] sm:$0xff]
  %v27 = vld [vmem:[%s2 + $0x38] sm:$0xff]
  %v28 = vld [vmem:[%s2 + $0x40] sm:$0xff]
  %v29 = vld [vmem:[%s2 + $0x48] sm:$0xff]
  %v30 = vld [vmem:[%s2 + $0x50] sm:$0xff]
  %v31 = vld [vmem:[%s2 + $0x58] sm:$0xff]
  %v32 = vld [vmem:[%s2 + $0x60] sm:$0xff]
  %v33 = vld [vmem:[%s2 + $0x68] sm:$0xff]
  %v34 = vld [vmem:[%s2 + $0x70] sm:$0xff]
  %v35 = vld [vmem:[%s2 + $0x78] sm:$0xff]
  %v36 = vld [vmem:[%s2 + $0x80] sm:$0xff]
  %v37 = vld [vmem:[%s2 + $0x88] sm:$0xff]
  %v38 = vld [vmem:[%s2 + $0x90] sm:$0xff]
  %v39 = vld [vmem:[%s2 + $0x98] sm:$0xff]
  %v40 = vld [vmem:[%s2 + $0xa0] sm:$0xff]
  %v41 = vld [vmem:[%s2 + $0xa8] sm:$0xff]
  %v42 = vld [vmem:[%s2 + $0xb0] sm:$0xff]
  %v43 = vld [vmem:[%s2 + $0xb8] sm:$0xff]
  %v44 = vld [vmem:[%s2 + $0xc0] sm:$0xff]
  %v45 = vld [vmem:[%s2 + $0xc8] sm:$0xff]
  %v46 = vld [vmem:[%s2 + $0xd0] sm:$0xff]
  %v47 = vld [vmem:[%s2 + $0xd8] sm:$0xff]
  %v48 = vld [vmem:[%s2 + $0xe0] sm:$0xff]
  %v49 = vld [vmem:[%s2 + $0xe8] sm:$0xff]
  %v50 = vld [vmem:[%s2 + $0xf0] sm:$0xff]
  %v51 = vld [vmem:[%s2 + $0xf8] sm:$0xff]
  %v52 = vld [vmem:[%s2 + $0x100] sm:$0xff]
  %v53 = vld [vmem:[%s2 + $0x108] sm:$0xff]
  %v54 = vld [vmem:[%s2 + $0x110] sm:$0xff]
  %v55 = vld [vmem:[%s2 + $0x118] sm:$0xff]
  %v56 = vld [vmem:[%s2 + $0x120] sm:$0xff]
  %v57 = vld [vmem:[%s2 + $0x128] sm:$0xff]
  %v58 = vld [vmem:[%s2 + $0x130] sm:$0xff]
  %v59 = vld [vmem:[%s2 + $0x138] sm:$0xff]
  %v60 = vld [vmem:[%s2 + $0x140] sm:$0xff]
  %v61 = vld [vmem:[%s2 + $0x148] sm:$0xff]
  %v62 = vld [vmem:[%s2 + $0x150] sm:$0xff]
  %v63 = vld [vmem:[%s2 + $0x158] sm:$0xff]
  %v64 = vld [vmem:[%s2 + $0x160] sm:$0xff]
  %v65 = vld [vmem:[%s2 + $0x168] sm:$0xff]
  %v66 = vld [vmem:[%s2 + $0x170] sm:$0xff]
  %v67 = vld [vmem:[%s2 + $0x178] sm:$0xff]
  %v68 = vld [vmem:[%s2 + $0x180] sm:$0xff]
  %v69 = vld [vmem:[%s2 + $0x188] sm:$0xff]
  %v70 = vld [vmem:[%s2 + $0x190] sm:$0xff]
  %v71 = vld [vmem:[%s2 + $0x198] sm:$0xff]
  %v72 = vld [vmem:[%s2 + $0x1a0] sm:$0xff]
  %v73 = vld [vmem:[%s2 + $0x1a8] sm:$0xff]
  %v74 = vld [vmem:[%s2 + $0x1b0] sm:$0xff]
  %v75 = vld [vmem:[%s2 + $0x1b8] sm:$0xff]
  %v76 = vld [vmem:[%s2 + $0x1c0] sm:$0xff]
  %v77 = vld [vmem:[%s2 + $0x1c8] sm:$0xff]
  %v78 = vld [vmem:[%s2 + $0x1d0] sm:$0xff]
  %v79 = vld [vmem:[%s2 + $0x1d8] sm:$0xff]
  %v80 = vld [vmem:[%s2 + $0x1e0] sm:$0xff]
  %v81 = vld [vmem:[%s2 + $0x1e8] sm:$0xff]
  %v82 = vld [vmem:[%s2 + $0x1f0] sm:$0xff]
  %v83 = vld [vmem:[%s2 + $0x1f8] sm:$0xff]
  %v84 = vld [vmem:[%s2 + $0x200] sm:$0xff]
  %v85 = vld [vmem:[%s2 + $0x208] sm:$0xff]
  %v86 = vld [vmem:[%s2 + $0x210] sm:$0xff]
  %v87 = vld [vmem:[%s2 + $0x218] sm:$0xff]
  %v88 = vld [vmem:[%s2 + $0x220] sm:$0xff]
  %v89 = vld [vmem:[%s2 + $0x228] sm:$0xff]
  %v90 = vld [vmem:[%s2 + $0x230] sm:$0xff]
  %v91 = vld [vmem:[%s2 + $0x238] sm:$0xff]
  %v92 = vld [vmem:[%s2 + $0x240] sm:$0xff]
  %v93 = vld [vmem:[%s2 + $0x248] sm:$0xff]
  %v94 = vld [vmem:[%s0] sm:$0xff]
  %v95 = vld [vmem:[%s0 + $0x8] sm:$0xff]
  %v96 = vld [vmem:[%s0 + $0x10] sm:$0xff]
  %v97 = vld [vmem:[%s0 + $0x18] sm:$0xff]
  %v98 = vld [vmem:[%s0 + $0x20] sm:$0xff]
  %v99 = vld [vmem:[%s0 + $0x28] sm:$0xff]
  %v100 = vld [vmem:[%s0 + $0x30] sm:$0xff]
  %v101 = vld [vmem:[%s0 + $0x38] sm:$0xff]
  %v102 = vld [vmem:[%s0 + $0x40] sm:$0xff]
  %v103 = vld [vmem:[%s0 + $0x48] sm:$0xff]
  %v104 = vld [vmem:[%s0 + $0x50] sm:$0xff]
  %v105 = vld [vmem:[%s0 + $0x58] sm:$0xff]
  %v106 = vld [vmem:[%s0 + $0x60] sm:$0xff]
  %v107 = vld [vmem:[%s0 + $0x68] sm:$0xff]
  %v108 = vld [vmem:[%s0 + $0x70] sm:$0xff]
  %v109 = vld [vmem:[%s0 + $0x78] sm:$0xff]
  %v110 = vld [vmem:[%s0 + $0x80] sm:$0xff]
  %v111 = vld [vmem:[%s0 + $0x88] sm:$0xff]
  %v112 = vld [vmem:[%s0 + $0x90] sm:$0xff]
  %v113 = vld [vmem:[%s0 + $0x98] sm:$0xff]
  %v114 = vld [vmem:[%s0 + $0xa0] sm:$0xff]
  %v115 = vld [vmem:[%s0 + $0xa8] sm:$0xff]
  %v116 = vld [vmem:[%s0 + $0xb0] sm:$0xff]
  %v117 = vld [vmem:[%s0 + $0xb8] sm:$0xff]
  %v118 = vld [vmem:[%s0 + $0xc0] sm:$0xff]
  %v119 = vld [vmem:[%s0 + $0xc8] sm:$0xff]
  %v120 = vld [vmem:[%s0 + $0xd0] sm:$0xff]
  %v121 = vld [vmem:[%s0 + $0xd8] sm:$0xff]
  %v122 = vld [vmem:[%s0 + $0xe0] sm:$0xff]
  %v123 = vld [vmem:[%s0 + $0xe8] sm:$0xff]
  %v124 = vld [vmem:[%s0 + $0xf0] sm:$0xff]
  %v125 = vld [vmem:[%s0 + $0xf8] sm:$0xff]
  %v126 = vld [vmem:[%s0 + $0x100] sm:$0xff]
  %v127 = vld [vmem:[%s0 + $0x108] sm:$0xff]
  %v128 = vld [vmem:[%s0 + $0x110] sm:$0xff]
  %v129 = vld [vmem:[%s0 + $0x118] sm:$0xff]
  %v130 = vld [vmem:[%s0 + $0x120] sm:$0xff]
  %v131 = vld [vmem:[%s1] sm:$0xff]
  %v132 = vld [vmem:[%s1 + $0x8] sm:$0xff]
  %v133 = vld [vmem:[%s1 + $0x10] sm:$0xff]
  %v134 = vld [vmem:[%s1 + $0x18] sm:$0xff]
  %v135 = vld [vmem:[%s1 + $0x20] sm:$0xff]
  %v136 = vld [vmem:[%s1 + $0x28] sm:$0xff]
  %v137 = vld [vmem:[%s1 + $0x30] sm:$0xff]
  %v138 = vld [vmem:[%s1 + $0x38] sm:$0xff]
  %v139 = vld [vmem:[%s1 + $0x40] sm:$0xff]
  %v140 = vld [vmem:[%s1 + $0x48] sm:$0xff]
  %v141 = vld [vmem:[%s1 + $0x50] sm:$0xff]
  %v142 = vld [vmem:[%s1 + $0x58] sm:$0xff]
  %v143 = vld [vmem:[%s1 + $0x60] sm:$0xff]
  %v144 = vld [vmem:[%s1 + $0x68] sm:$0xff]
  %v145 = vld [vmem:[%s1 + $0x70] sm:$0xff]
  %v146 = vld [vmem:[%s1 + $0x78] sm:$0xff]
  %v147 = vld [vmem:[%s1 + $0x80] sm:$0xff]
  %v148 = vld [vmem:[%s1 + $0x88] sm:$0xff]
  %v149 = vld [vmem:[%s1 + $0x90] sm:$0xff]
  %v150 = vld [vmem:[%s1 + $0x98] sm:$0xff]
  %v151 = vld [vmem:[%s1 + $0xa0] sm:$0xff]
  %v152 = vld [vmem:[%s1 + $0xa8] sm:$0xff]
  %v153 = vld [vmem:[%s1 + $0xb0] sm:$0xff]
  %v154 = vld [vmem:[%s1 + $0xb8] sm:$0xff]
  %v155 = vld [vmem:[%s1 + $0xc0] sm:$0xff]
  %v156 = vld [vmem:[%s1 + $0xc8] sm:$0xff]
  %v157 = vld [vmem:[%s1 + $0xd0] sm:$0xff]
  %v158 = vld [vmem:[%s1 + $0xd8] sm:$0xff]
  %v159 = vld [vmem:[%s1 + $0xe0] sm:$0xff]
  %v160 = vld [vmem:[%s1 + $0xe8] sm:$0xff]
  %v161 = vld [vmem:[%s1 + $0xf0] sm:$0xff]
  %v162 = vld [vmem:[%s1 + $0xf8] sm:$0xff]
  %v163 = vld [vmem:[%s1 + $0x100] sm:$0xff]
  %v164 = vld [vmem:[%s1 + $0x108] sm:$0xff]
  %v165 = vld [vmem:[%s1 + $0x110] sm:$0xff]
  %v166 = vld [vmem:[%s1 + $0x118] sm:$0xff]
  %v167 = vld [vmem:[%s1 + $0x120] sm:$0xff]
  %v168 = vld [vmem:[%s1 + $0x128] sm:$0xff]
  %v169 = vld [vmem:[%s1 + $0x130] sm:$0xff]
  %v170 = vld [vmem:[%s1 + $0x138] sm:$0xff]
  %v171 = vld [vmem:[%s1 + $0x140] sm:$0xff]
  %v172 = vld [vmem:[%s1 + $0x148] sm:$0xff]
  %v173 = vld [vmem:[%s1 + $0x150] sm:$0xff]
  %v174 = vld [vmem:[%s1 + $0x158] sm:$0xff]
  %v175 = vld [vmem:[%s1 + $0x160] sm:$0xff]
  %v176 = vld [vmem:[%s1 + $0x168] sm:$0xff]
  %v177 = vld [vmem:[%s1 + $0x170] sm:$0xff]
  %v178 = vld [vmem:[%s1 + $0x178] sm:$0xff]
  %v179 = vld [vmem:[%s1 + $0x180] sm:$0xff]
  %v180 = vld [vmem:[%s1 + $0x188] sm:$0xff]
  %v181 = vld [vmem:[%s1 + $0x190] sm:$0xff]
  %v182 = vld [vmem:[%s1 + $0x198] sm:$0xff]
  %v183 = vld [vmem:[%s1 + $0x1a0] sm:$0xff]
  %v184 = vld [vmem:[%s1 + $0x1a8] sm:$0xff]
  %v185 = vld [vmem:[%s1 + $0x1b0] sm:$0xff]
  %v186 = vld [vmem:[%s1 + $0x1b8] sm:$0xff]
  %v187 = vld [vmem:[%s1 + $0x1c0] sm:$0xff]
  %v188 = vld [vmem:[%s1 + $0x1c8] sm:$0xff]
  %v189 = vld [vmem:[%s1 + $0x1d0] sm:$0xff]
  %v190 = vld [vmem:[%s1 + $0x1d8] sm:$0xff]
  %v191 = vld [vmem:[%s1 + $0x1e0] sm:$0xff]
  %v192 = vld [vmem:[%s1 + $0x1e8] sm:$0xff]
  %v193 = vld [vmem:[%s1 + $0x1f0] sm:$0xff]
  %v194 = vld [vmem:[%s1 + $0x1f8] sm:$0xff]
  %v195 = vld [vmem:[%s1 + $0x200] sm:$0xff]
  %v196 = vld [vmem:[%s1 + $0x208] sm:$0xff]
  %v197 = vld [vmem:[%s1 + $0x210] sm:$0xff]
  %v198 = vld [vmem:[%s1 + $0x218] sm:$0xff]
  %v199 = vld [vmem:[%s1 + $0x220] sm:$0xff]
  %v200 = vld [vmem:[%s1 + $0x228] sm:$0xff]
  %v201 = vld [vmem:[%s1 + $0x230] sm:$0xff]
  %v202 = vld [vmem:[%s1 + $0x238] sm:$0xff]
  %v203 = vld [vmem:[%s1 + $0x240] sm:$0xff]
  %v204 = vld [vmem:[%s1 + $0x248] sm:$0xff]
  %206 = vset.pattern.permute.xlu0 0
  %207 = vperm.xlu0 %206, %v94
  %v208 = vpop.permute.xlu0 %207
  %211 = vset.pattern.permute.xlu0 0
  %212 = vperm.xlu0 %211, %v95
  %v213 = vpop.permute.xlu0 %212
  %216 = vset.pattern.permute.xlu0 0
  %217 = vperm.xlu0 %216, %v96
  %v218 = vpop.permute.xlu0 %217
  %221 = vset.pattern.permute.xlu0 0
  %222 = vperm.xlu0 %221, %v97
  %v223 = vpop.permute.xlu0 %222
  %226 = vset.pattern.permute.xlu0 0
  %227 = vperm.xlu0 %226, %v98
  %v228 = vpop.permute.xlu0 %227
  %231 = vset.pattern.permute.xlu0 0
  %232 = vperm.xlu0 %231, %v99
  %v233 = vpop.permute.xlu0 %232
  %236 = vset.pattern.permute.xlu0 0
  %237 = vperm.xlu0 %236, %v100
  %v238 = vpop.permute.xlu0 %237
  %241 = vset.pattern.permute.xlu0 0
  %242 = vperm.xlu0 %241, %v101
  %v243 = vpop.permute.xlu0 %242
  %246 = vset.pattern.permute.xlu0 0
  %247 = vperm.xlu0 %246, %v102
  %v248 = vpop.permute.xlu0 %247
  %251 = vset.pattern.permute.xlu0 0
  %252 = vperm.xlu0 %251, %v103
  %v253 = vpop.permute.xlu0 %252
  %256 = vset.pattern.permute.xlu0 0
  %257 = vperm.xlu0 %256, %v104
  %v258 = vpop.permute.xlu0 %257
  %261 = vset.pattern.permute.xlu0 0
  %262 = vperm.xlu0 %261, %v105
  %v263 = vpop.permute.xlu0 %262
  %266 = vset.pattern.permute.xlu0 0
  %267 = vperm.xlu0 %266, %v106
  %v268 = vpop.permute.xlu0 %267
  %271 = vset.pattern.permute.xlu0 0
  %272 = vperm.xlu0 %271, %v107
  %v273 = vpop.permute.xlu0 %272
  %276 = vset.pattern.permute.xlu0 0
  %277 = vperm.xlu0 %276, %v108
  %v278 = vpop.permute.xlu0 %277
  %281 = vset.pattern.permute.xlu0 0
  %282 = vperm.xlu0 %281, %v109
  %v283 = vpop.permute.xlu0 %282
  %286 = vset.pattern.permute.xlu0 0
  %287 = vperm.xlu0 %286, %v110
  %v288 = vpop.permute.xlu0 %287
  %291 = vset.pattern.permute.xlu0 0
  %292 = vperm.xlu0 %291, %v111
  %v293 = vpop.permute.xlu0 %292
  %296 = vset.pattern.permute.xlu0 0
  %297 = vperm.xlu0 %296, %v112
  %v298 = vpop.permute.xlu0 %297
  %301 = vset.pattern.permute.xlu0 0
  %302 = vperm.xlu0 %301, %v113
  %v303 = vpop.permute.xlu0 %302
  %306 = vset.pattern.permute.xlu0 0
  %307 = vperm.xlu0 %306, %v114
  %v308 = vpop.permute.xlu0 %307
  %311 = vset.pattern.permute.xlu0 0
  %312 = vperm.xlu0 %311, %v115
  %v313 = vpop.permute.xlu0 %312
  %316 = vset.pattern.permute.xlu0 0
  %317 = vperm.xlu0 %316, %v116
  %v318 = vpop.permute.xlu0 %317
  %321 = vset.pattern.permute.xlu0 0
  %322 = vperm.xlu0 %321, %v117
  %v323 = vpop.permute.xlu0 %322
  %326 = vset.pattern.permute.xlu0 0
  %327 = vperm.xlu0 %326, %v118
  %v328 = vpop.permute.xlu0 %327
  %331 = vset.pattern.permute.xlu0 0
  %332 = vperm.xlu0 %331, %v119
  %v333 = vpop.permute.xlu0 %332
  %336 = vset.pattern.permute.xlu0 0
  %337 = vperm.xlu0 %336, %v120
  %v338 = vpop.permute.xlu0 %337
  %341 = vset.pattern.permute.xlu0 0
  %342 = vperm.xlu0 %341, %v121
  %v343 = vpop.permute.xlu0 %342
  %346 = vset.pattern.permute.xlu0 0
  %347 = vperm.xlu0 %346, %v122
  %v348 = vpop.permute.xlu0 %347
  %351 = vset.pattern.permute.xlu0 0
  %352 = vperm.xlu0 %351, %v123
  %v353 = vpop.permute.xlu0 %352
  %356 = vset.pattern.permute.xlu0 0
  %357 = vperm.xlu0 %356, %v124
  %v358 = vpop.permute.xlu0 %357
  %361 = vset.pattern.permute.xlu0 0
  %362 = vperm.xlu0 %361, %v125
  %v363 = vpop.permute.xlu0 %362
  %366 = vset.pattern.permute.xlu0 0
  %367 = vperm.xlu0 %366, %v126
  %v368 = vpop.permute.xlu0 %367
  %371 = vset.pattern.permute.xlu0 0
  %372 = vperm.xlu0 %371, %v127
  %v373 = vpop.permute.xlu0 %372
  %376 = vset.pattern.permute.xlu0 0
  %377 = vperm.xlu0 %376, %v128
  %v378 = vpop.permute.xlu0 %377
  %381 = vset.pattern.permute.xlu0 0
  %382 = vperm.xlu0 %381, %v129
  %v383 = vpop.permute.xlu0 %382
  %386 = vset.pattern.permute.xlu0 0
  %387 = vperm.xlu0 %386, %v130
  %v388 = vpop.permute.xlu0 %387
  %v390 = vmul.f32 %v208, %v131
  %v391 = vmul.f32 %v208, %v132
  %v392 = vmul.f32 %v213, %v133
  %v393 = vmul.f32 %v213, %v134
  %v394 = vmul.f32 %v218, %v135
  %v395 = vmul.f32 %v218, %v136
  %v396 = vmul.f32 %v223, %v137
  %v397 = vmul.f32 %v223, %v138
  %v398 = vmul.f32 %v228, %v139
  %v399 = vmul.f32 %v228, %v140
  %v400 = vmul.f32 %v233, %v141
  %v401 = vmul.f32 %v233, %v142
  %v402 = vmul.f32 %v238, %v143
  %v403 = vmul.f32 %v238, %v144
  %v404 = vmul.f32 %v243, %v145
  %v405 = vmul.f32 %v243, %v146
  %v406 = vmul.f32 %v248, %v147
  %v407 = vmul.f32 %v248, %v148
  %v408 = vmul.f32 %v253, %v149
  %v409 = vmul.f32 %v253, %v150
  %v410 = vmul.f32 %v258, %v151
  %v411 = vmul.f32 %v258, %v152
  %v412 = vmul.f32 %v263, %v153
  %v413 = vmul.f32 %v263, %v154
  %v414 = vmul.f32 %v268, %v155
  %v415 = vmul.f32 %v268, %v156
  %v416 = vmul.f32 %v273, %v157
  %v417 = vmul.f32 %v273, %v158
  %v418 = vmul.f32 %v278, %v159
  %v419 = vmul.f32 %v278, %v160
  %v420 = vmul.f32 %v283, %v161
  %v421 = vmul.f32 %v283, %v162
  %v422 = vmul.f32 %v288, %v163
  %v423 = vmul.f32 %v288, %v164
  %v424 = vmul.f32 %v293, %v165
  %v425 = vmul.f32 %v293, %v166
  %v426 = vmul.f32 %v298, %v167
  %v427 = vmul.f32 %v298, %v168
  %v428 = vmul.f32 %v303, %v169
  %v429 = vmul.f32 %v303, %v170
  %v430 = vmul.f32 %v308, %v171
  %v431 = vmul.f32 %v308, %v172
  %v432 = vmul.f32 %v313, %v173
  %v433 = vmul.f32 %v313, %v174
  %v434 = vmul.f32 %v318, %v175
  %v435 = vmul.f32 %v318, %v176
  %v436 = vmul.f32 %v323, %v177
  %v437 = vmul.f32 %v323, %v178
  %v438 = vmul.f32 %v328, %v179
  %v439 = vmul.f32 %v328, %v180
  %v440 = vmul.f32 %v333, %v181
  %v441 = vmul.f32 %v333, %v182
  %v442 = vmul.f32 %v338, %v183
  %v443 = vmul.f32 %v338, %v184
  %v444 = vmul.f32 %v343, %v185
  %v445 = vmul.f32 %v343, %v186
  %v446 = vmul.f32 %v348, %v187
  %v447 = vmul.f32 %v348, %v188
  %v448 = vmul.f32 %v353, %v189
  %v449 = vmul.f32 %v353, %v190
  %v450 = vmul.f32 %v358, %v191
  %v451 = vmul.f32 %v358, %v192
  %v452 = vmul.f32 %v363, %v193
  %v453 = vmul.f32 %v363, %v194
  %v454 = vmul.f32 %v368, %v195
  %v455 = vmul.f32 %v368, %v196
  %v456 = vmul.f32 %v373, %v197
  %v457 = vmul.f32 %v373, %v198
  %v458 = vmul.f32 %v378, %v199
  %v459 = vmul.f32 %v378, %v200
  %v460 = vmul.f32 %v383, %v201
  %v461 = vmul.f32 %v383, %v202
  %v462 = vmul.f32 %v388, %v203
  %v463 = vmul.f32 %v388, %v204
  %v464 = vadd.f32 %v20, %v390
  %v465 = vadd.f32 %v21, %v391
  %v466 = vadd.f32 %v22, %v392
  %v467 = vadd.f32 %v23, %v393
  %v468 = vadd.f32 %v24, %v394
  %v469 = vadd.f32 %v25, %v395
  %v470 = vadd.f32 %v26, %v396
  %v471 = vadd.f32 %v27, %v397
  %v472 = vadd.f32 %v28, %v398
  %v473 = vadd.f32 %v29, %v399
  %v474 = vadd.f32 %v30, %v400
  %v475 = vadd.f32 %v31, %v401
  %v476 = vadd.f32 %v32, %v402
  %v477 = vadd.f32 %v33, %v403
  %v478 = vadd.f32 %v34, %v404
  %v479 = vadd.f32 %v35, %v405
  %v480 = vadd.f32 %v36, %v406
  %v481 = vadd.f32 %v37, %v407
  %v482 = vadd.f32 %v38, %v408
  %v483 = vadd.f32 %v39, %v409
  %v484 = vadd.f32 %v40, %v410
  %v485 = vadd.f32 %v41, %v411
  %v486 = vadd.f32 %v42, %v412
  %v487 = vadd.f32 %v43, %v413
  %v488 = vadd.f32 %v44, %v414
  %v489 = vadd.f32 %v45, %v415
  %v490 = vadd.f32 %v46, %v416
  %v491 = vadd.f32 %v47, %v417
  %v492 = vadd.f32 %v48, %v418
  %v493 = vadd.f32 %v49, %v419
  %v494 = vadd.f32 %v50, %v420
  %v495 = vadd.f32 %v51, %v421
  %v496 = vadd.f32 %v52, %v422
  %v497 = vadd.f32 %v53, %v423
  %v498 = vadd.f32 %v54, %v424
  %v499 = vadd.f32 %v55, %v425
  %v500 = vadd.f32 %v56, %v426
  %v501 = vadd.f32 %v57, %v427
  %v502 = vadd.f32 %v58, %v428
  %v503 = vadd.f32 %v59, %v429
  %v504 = vadd.f32 %v60, %v430
  %v505 = vadd.f32 %v61, %v431
  %v506 = vadd.f32 %v62, %v432
  %v507 = vadd.f32 %v63, %v433
  %v508 = vadd.f32 %v64, %v434
  %v509 = vadd.f32 %v65, %v435
  %v510 = vadd.f32 %v66, %v436
  %v511 = vadd.f32 %v67, %v437
  %v512 = vadd.f32 %v68, %v438
  %v513 = vadd.f32 %v69, %v439
  %v514 = vadd.f32 %v70, %v440
  %v515 = vadd.f32 %v71, %v441
  %v516 = vadd.f32 %v72, %v442
  %v517 = vadd.f32 %v73, %v443
  %v518 = vadd.f32 %v74, %v444
  %v519 = vadd.f32 %v75, %v445
  %v520 = vadd.f32 %v76, %v446
  %v521 = vadd.f32 %v77, %v447
  %v522 = vadd.f32 %v78, %v448
  %v523 = vadd.f32 %v79, %v449
  %v524 = vadd.f32 %v80, %v450
  %v525 = vadd.f32 %v81, %v451
  %v526 = vadd.f32 %v82, %v452
  %v527 = vadd.f32 %v83, %v453
  %v528 = vadd.f32 %v84, %v454
  %v529 = vadd.f32 %v85, %v455
  %v530 = vadd.f32 %v86, %v456
  %v531 = vadd.f32 %v87, %v457
  %v532 = vadd.f32 %v88, %v458
  %v533 = vadd.f32 %v89, %v459
  %v534 = vadd.f32 %v90, %v460
  %v535 = vadd.f32 %v91, %v461
  %v536 = vadd.f32 %v92, %v462
  %v537 = vadd.f32 %v93, %v463
  %s538 = scalar_lea.vmem %s1, 592
  %v539 = vld [vmem:[%s538] sm:$0xff]
  %v540 = vld [vmem:[%s538 + $0x8] sm:$0xff]
  %v541 = vld [vmem:[%s538 + $0x10] sm:$0xff]
  %v542 = vld [vmem:[%s538 + $0x18] sm:$0xff]
  %v543 = vld [vmem:[%s538 + $0x20] sm:$0xff]
  %v544 = vld [vmem:[%s538 + $0x28] sm:$0xff]
  %v545 = vld [vmem:[%s538 + $0x30] sm:$0xff]
  %v546 = vld [vmem:[%s538 + $0x38] sm:$0xff]
  %v547 = vld [vmem:[%s538 + $0x40] sm:$0xff]
  %v548 = vld [vmem:[%s538 + $0x48] sm:$0xff]
  %v549 = vld [vmem:[%s538 + $0x50] sm:$0xff]
  %v550 = vld [vmem:[%s538 + $0x58] sm:$0xff]
  %v551 = vld [vmem:[%s538 + $0x60] sm:$0xff]
  %v552 = vld [vmem:[%s538 + $0x68] sm:$0xff]
  %v553 = vld [vmem:[%s538 + $0x70] sm:$0xff]
  %v554 = vld [vmem:[%s538 + $0x78] sm:$0xff]
  %v555 = vld [vmem:[%s538 + $0x80] sm:$0xff]
  %v556 = vld [vmem:[%s538 + $0x88] sm:$0xff]
  %v557 = vld [vmem:[%s538 + $0x90] sm:$0xff]
  %v558 = vld [vmem:[%s538 + $0x98] sm:$0xff]
  %v559 = vld [vmem:[%s538 + $0xa0] sm:$0xff]
  %v560 = vld [vmem:[%s538 + $0xa8] sm:$0xff]
  %v561 = vld [vmem:[%s538 + $0xb0] sm:$0xff]
  %v562 = vld [vmem:[%s538 + $0xb8] sm:$0xff]
  %v563 = vld [vmem:[%s538 + $0xc0] sm:$0xff]
  %v564 = vld [vmem:[%s538 + $0xc8] sm:$0xff]
  %v565 = vld [vmem:[%s538 + $0xd0] sm:$0xff]
  %v566 = vld [vmem:[%s538 + $0xd8] sm:$0xff]
  %v567 = vld [vmem:[%s538 + $0xe0] sm:$0xff]
  %v568 = vld [vmem:[%s538 + $0xe8] sm:$0xff]
  %v569 = vld [vmem:[%s538 + $0xf0] sm:$0xff]
  %v570 = vld [vmem:[%s538 + $0xf8] sm:$0xff]
  %v571 = vld [vmem:[%s538 + $0x100] sm:$0xff]
  %v572 = vld [vmem:[%s538 + $0x108] sm:$0xff]
  %v573 = vld [vmem:[%s538 + $0x110] sm:$0xff]
  %v574 = vld [vmem:[%s538 + $0x118] sm:$0xff]
  %v575 = vld [vmem:[%s538 + $0x120] sm:$0xff]
  %v576 = vld [vmem:[%s538 + $0x128] sm:$0xff]
  %v577 = vld [vmem:[%s538 + $0x130] sm:$0xff]
  %v578 = vld [vmem:[%s538 + $0x138] sm:$0xff]
  %v579 = vld [vmem:[%s538 + $0x140] sm:$0xff]
  %v580 = vld [vmem:[%s538 + $0x148] sm:$0xff]
  %v581 = vld [vmem:[%s538 + $0x150] sm:$0xff]
  %v582 = vld [vmem:[%s538 + $0x158] sm:$0xff]
  %v583 = vld [vmem:[%s538 + $0x160] sm:$0xff]
  %v584 = vld [vmem:[%s538 + $0x168] sm:$0xff]
  %v585 = vld [vmem:[%s538 + $0x170] sm:$0xff]
  %v586 = vld [vmem:[%s538 + $0x178] sm:$0xff]
  %v587 = vld [vmem:[%s538 + $0x180] sm:$0xff]
  %v588 = vld [vmem:[%s538 + $0x188] sm:$0xff]
  %v589 = vld [vmem:[%s538 + $0x190] sm:$0xff]
  %v590 = vld [vmem:[%s538 + $0x198] sm:$0xff]
  %v591 = vld [vmem:[%s538 + $0x1a0] sm:$0xff]
  %v592 = vld [vmem:[%s538 + $0x1a8] sm:$0xff]
  %v593 = vld [vmem:[%s538 + $0x1b0] sm:$0xff]
  %v594 = vld [vmem:[%s538 + $0x1b8] sm:$0xff]
  %v595 = vld [vmem:[%s538 + $0x1c0] sm:$0xff]
  %v596 = vld [vmem:[%s538 + $0x1c8] sm:$0xff]
  %v597 = vld [vmem:[%s538 + $0x1d0] sm:$0xff]
  %v598 = vld [vmem:[%s538 + $0x1d8] sm:$0xff]
  %v599 = vld [vmem:[%s538 + $0x1e0] sm:$0xff]
  %v600 = vld [vmem:[%s538 + $0x1e8] sm:$0xff]
  %v601 = vld [vmem:[%s538 + $0x1f0] sm:$0xff]
  %v602 = vld [vmem:[%s538 + $0x1f8] sm:$0xff]
  %v603 = vld [vmem:[%s538 + $0x200] sm:$0xff]
  %v604 = vld [vmem:[%s538 + $0x208] sm:$0xff]
  %v605 = vld [vmem:[%s538 + $0x210] sm:$0xff]
  %v606 = vld [vmem:[%s538 + $0x218] sm:$0xff]
  %v607 = vld [vmem:[%s538 + $0x220] sm:$0xff]
  %v608 = vld [vmem:[%s538 + $0x228] sm:$0xff]
  %v609 = vld [vmem:[%s538 + $0x230] sm:$0xff]
  %v610 = vld [vmem:[%s538 + $0x238] sm:$0xff]
  %v611 = vld [vmem:[%s538 + $0x240] sm:$0xff]
  %v612 = vld [vmem:[%s538 + $0x248] sm:$0xff]
  %613 = vset.pattern.permute.xlu0 1
  %614 = vperm.xlu0 %613, %v94
  %v615 = vpop.permute.xlu0 %614
  %617 = vset.pattern.permute.xlu0 1
  %618 = vperm.xlu0 %617, %v95
  %v619 = vpop.permute.xlu0 %618
  %621 = vset.pattern.permute.xlu0 1
  %622 = vperm.xlu0 %621, %v96
  %v623 = vpop.permute.xlu0 %622
  %625 = vset.pattern.permute.xlu0 1
  %626 = vperm.xlu0 %625, %v97
  %v627 = vpop.permute.xlu0 %626
  %629 = vset.pattern.permute.xlu0 1
  %630 = vperm.xlu0 %629, %v98
  %v631 = vpop.permute.xlu0 %630
  %633 = vset.pattern.permute.xlu0 1
  %634 = vperm.xlu0 %633, %v99
  %v635 = vpop.permute.xlu0 %634
  %637 = vset.pattern.permute.xlu0 1
  %638 = vperm.xlu0 %637, %v100
  %v639 = vpop.permute.xlu0 %638
  %641 = vset.pattern.permute.xlu0 1
  %642 = vperm.xlu0 %641, %v101
  %v643 = vpop.permute.xlu0 %642
  %645 = vset.pattern.permute.xlu0 1
  %646 = vperm.xlu0 %645, %v102
  %v647 = vpop.permute.xlu0 %646
  %649 = vset.pattern.permute.xlu0 1
  %650 = vperm.xlu0 %649, %v103
  %v651 = vpop.permute.xlu0 %650
  %653 = vset.pattern.permute.xlu0 1
  %654 = vperm.xlu0 %653, %v104
  %v655 = vpop.permute.xlu0 %654
  %657 = vset.pattern.permute.xlu0 1
  %658 = vperm.xlu0 %657, %v105
  %v659 = vpop.permute.xlu0 %658
  %661 = vset.pattern.permute.xlu0 1
  %662 = vperm.xlu0 %661, %v106
  %v663 = vpop.permute.xlu0 %662
  %665 = vset.pattern.permute.xlu0 1
  %666 = vperm.xlu0 %665, %v107
  %v667 = vpop.permute.xlu0 %666
  %669 = vset.pattern.permute.xlu0 1
  %670 = vperm.xlu0 %669, %v108
  %v671 = vpop.permute.xlu0 %670
  %673 = vset.pattern.permute.xlu0 1
  %674 = vperm.xlu0 %673, %v109
  %v675 = vpop.permute.xlu0 %674
  %677 = vset.pattern.permute.xlu0 1
  %678 = vperm.xlu0 %677, %v110
  %v679 = vpop.permute.xlu0 %678
  %681 = vset.pattern.permute.xlu0 1
  %682 = vperm.xlu0 %681, %v111
  %v683 = vpop.permute.xlu0 %682
  %685 = vset.pattern.permute.xlu0 1
  %686 = vperm.xlu0 %685, %v112
  %v687 = vpop.permute.xlu0 %686
  %689 = vset.pattern.permute.xlu0 1
  %690 = vperm.xlu0 %689, %v113
  %v691 = vpop.permute.xlu0 %690
  %693 = vset.pattern.permute.xlu0 1
  %694 = vperm.xlu0 %693, %v114
  %v695 = vpop.permute.xlu0 %694
  %697 = vset.pattern.permute.xlu0 1
  %698 = vperm.xlu0 %697, %v115
  %v699 = vpop.permute.xlu0 %698
  %701 = vset.pattern.permute.xlu0 1
  %702 = vperm.xlu0 %701, %v116
  %v703 = vpop.permute.xlu0 %702
  %705 = vset.pattern.permute.xlu0 1
  %706 = vperm.xlu0 %705, %v117
  %v707 = vpop.permute.xlu0 %706
  %709 = vset.pattern.permute.xlu0 1
  %710 = vperm.xlu0 %709, %v118
  %v711 = vpop.permute.xlu0 %710
  %713 = vset.pattern.permute.xlu0 1
  %714 = vperm.xlu0 %713, %v119
  %v715 = vpop.permute.xlu0 %714
  %717 = vset.pattern.permute.xlu0 1
  %718 = vperm.xlu0 %717, %v120
  %v719 = vpop.permute.xlu0 %718
  %721 = vset.pattern.permute.xlu0 1
  %722 = vperm.xlu0 %721, %v121
  %v723 = vpop.permute.xlu0 %722
  %725 = vset.pattern.permute.xlu0 1
  %726 = vperm.xlu0 %725, %v122
  %v727 = vpop.permute.xlu0 %726
  %729 = vset.pattern.permute.xlu0 1
  %730 = vperm.xlu0 %729, %v123
  %v731 = vpop.permute.xlu0 %730
  %733 = vset.pattern.permute.xlu0 1
  %734 = vperm.xlu0 %733, %v124
  %v735 = vpop.permute.xlu0 %734
  %737 = vset.pattern.permute.xlu0 1
  %738 = vperm.xlu0 %737, %v125
  %v739 = vpop.permute.xlu0 %738
  %741 = vset.pattern.permute.xlu0 1
  %742 = vperm.xlu0 %741, %v126
  %v743 = vpop.permute.xlu0 %742
  %745 = vset.pattern.permute.xlu0 1
  %746 = vperm.xlu0 %745, %v127
  %v747 = vpop.permute.xlu0 %746
  %749 = vset.pattern.permute.xlu0 1
  %750 = vperm.xlu0 %749, %v128
  %v751 = vpop.permute.xlu0 %750
  %753 = vset.pattern.permute.xlu0 1
  %754 = vperm.xlu0 %753, %v129
  %v755 = vpop.permute.xlu0 %754
  %757 = vset.pattern.permute.xlu0 1
  %758 = vperm.xlu0 %757, %v130
  %v759 = vpop.permute.xlu0 %758
  %v761 = vmul.f32 %v615, %v539
  %v762 = vmul.f32 %v615, %v540
  %v763 = vmul.f32 %v619, %v541
  %v764 = vmul.f32 %v619, %v542
  %v765 = vmul.f32 %v623, %v543
  %v766 = vmul.f32 %v623, %v544
  %v767 = vmul.f32 %v627, %v545
  %v768 = vmul.f32 %v627, %v546
  %v769 = vmul.f32 %v631, %v547
  %v770 = vmul.f32 %v631, %v548
  %v771 = vmul.f32 %v635, %v549
  %v772 = vmul.f32 %v635, %v550
  %v773 = vmul.f32 %v639, %v551
  %v774 = vmul.f32 %v639, %v552
  %v775 = vmul.f32 %v643, %v553
  %v776 = vmul.f32 %v643, %v554
  %v777 = vmul.f32 %v647, %v555
  %v778 = vmul.f32 %v647, %v556
  %v779 = vmul.f32 %v651, %v557
  %v780 = vmul.f32 %v651, %v558
  %v781 = vmul.f32 %v655, %v559
  %v782 = vmul.f32 %v655, %v560
  %v783 = vmul.f32 %v659, %v561
  %v784 = vmul.f32 %v659, %v562
  %v785 = vmul.f32 %v663, %v563
  %v786 = vmul.f32 %v663, %v564
  %v787 = vmul.f32 %v667, %v565
  %v788 = vmul.f32 %v667, %v566
  %v789 = vmul.f32 %v671, %v567
  %v790 = vmul.f32 %v671, %v568
  %v791 = vmul.f32 %v675, %v569
  %v792 = vmul.f32 %v675, %v570
  %v793 = vmul.f32 %v679, %v571
  %v794 = vmul.f32 %v679, %v572
  %v795 = vmul.f32 %v683, %v573
  %v796 = vmul.f32 %v683, %v574
  %v797 = vmul.f32 %v687, %v575
  %v798 = vmul.f32 %v687, %v576
  %v799 = vmul.f32 %v691, %v577
  %v800 = vmul.f32 %v691, %v578
  %v801 = vmul.f32 %v695, %v579
  %v802 = vmul.f32 %v695, %v580
  %v803 = vmul.f32 %v699, %v581
  %v804 = vmul.f32 %v699, %v582
  %v805 = vmul.f32 %v703, %v583
  %v806 = vmul.f32 %v703, %v584
  %v807 = vmul.f32 %v707, %v585
  %v808 = vmul.f32 %v707, %v586
  %v809 = vmul.f32 %v711, %v587
  %v810 = vmul.f32 %v711, %v588
  %v811 = vmul.f32 %v715, %v589
  %v812 = vmul.f32 %v715, %v590
  %v813 = vmul.f32 %v719, %v591
  %v814 = vmul.f32 %v719, %v592
  %v815 = vmul.f32 %v723, %v593
  %v816 = vmul.f32 %v723, %v594
  %v817 = vmul.f32 %v727, %v595
  %v818 = vmul.f32 %v727, %v596
  %v819 = vmul.f32 %v731, %v597
  %v820 = vmul.f32 %v731, %v598
  %v821 = vmul.f32 %v735, %v599
  %v822 = vmul.f32 %v735, %v600
  %v823 = vmul.f32 %v739, %v601
  %v824 = vmul.f32 %v739, %v602
  %v825 = vmul.f32 %v743, %v603
  %v826 = vmul.f32 %v743, %v604
  %v827 = vmul.f32 %v747, %v605
  %v828 = vmul.f32 %v747, %v606
  %v829 = vmul.f32 %v751, %v607
  %v830 = vmul.f32 %v751, %v608
  %v831 = vmul.f32 %v755, %v609
  %v832 = vmul.f32 %v755, %v610
  %v833 = vmul.f32 %v759, %v611
  %v834 = vmul.f32 %v759, %v612
  %v835 = vadd.f32 %v464, %v761
  %v836 = vadd.f32 %v465, %v762
  %v837 = vadd.f32 %v466, %v763
  %v838 = vadd.f32 %v467, %v764
  %v839 = vadd.f32 %v468, %v765
  %v840 = vadd.f32 %v469, %v766
  %v841 = vadd.f32 %v470, %v767
  %v842 = vadd.f32 %v471, %v768
  %v843 = vadd.f32 %v472, %v769
  %v844 = vadd.f32 %v473, %v770
  %v845 = vadd.f32 %v474, %v771
  %v846 = vadd.f32 %v475, %v772
  %v847 = vadd.f32 %v476, %v773
  %v848 = vadd.f32 %v477, %v774
  %v849 = vadd.f32 %v478, %v775
  %v850 = vadd.f32 %v479, %v776
  %v851 = vadd.f32 %v480, %v777
  %v852 = vadd.f32 %v481, %v778
  %v853 = vadd.f32 %v482, %v779
  %v854 = vadd.f32 %v483, %v780
  %v855 = vadd.f32 %v484, %v781
  %v856 = vadd.f32 %v485, %v782
  %v857 = vadd.f32 %v486, %v783
  %v858 = vadd.f32 %v487, %v784
  %v859 = vadd.f32 %v488, %v785
  %v860 = vadd.f32 %v489, %v786
  %v861 = vadd.f32 %v490, %v787
  %v862 = vadd.f32 %v491, %v788
  %v863 = vadd.f32 %v492, %v789
  %v864 = vadd.f32 %v493, %v790
  %v865 = vadd.f32 %v494, %v791
  %v866 = vadd.f32 %v495, %v792
  %v867 = vadd.f32 %v496, %v793
  %v868 = vadd.f32 %v497, %v794
  %v869 = vadd.f32 %v498, %v795
  %v870 = vadd.f32 %v499, %v796
  %v871 = vadd.f32 %v500, %v797
  %v872 = vadd.f32 %v501, %v798
  %v873 = vadd.f32 %v502, %v799
  %v874 = vadd.f32 %v503, %v800
  %v875 = vadd.f32 %v504, %v801
  %v876 = vadd.f32 %v505, %v802
  %v877 = vadd.f32 %v506, %v803
  %v878 = vadd.f32 %v507, %v804
  %v879 = vadd.f32 %v508, %v805
  %v880 = vadd.f32 %v509, %v806
  %v881 = vadd.f32 %v510, %v807
  %v882 = vadd.f32 %v511, %v808
  %v883 = vadd.f32 %v512, %v809
  %v884 = vadd.f32 %v513, %v810
  %v885 = vadd.f32 %v514, %v811
  %v886 = vadd.f32 %v515, %v812
  %v887 = vadd.f32 %v516, %v813
  %v888 = vadd.f32 %v517, %v814
  %v889 = vadd.f32 %v518, %v815
  %v890 = vadd.f32 %v519, %v816
  %v891 = vadd.f32 %v520, %v817
  %v892 = vadd.f32 %v521, %v818
  %v893 = vadd.f32 %v522, %v819
  %v894 = vadd.f32 %v523, %v820
  %v895 = vadd.f32 %v524, %v821
  %v896 = vadd.f32 %v525, %v822
  %v897 = vadd.f32 %v526, %v823
  %v898 = vadd.f32 %v527, %v824
  %v899 = vadd.f32 %v528, %v825
  %v900 = vadd.f32 %v529, %v826
  %v901 = vadd.f32 %v530, %v827
  %v902 = vadd.f32 %v531, %v828
  %v903 = vadd.f32 %v532, %v829
  %v904 = vadd.f32 %v533, %v830
  %v905 = vadd.f32 %v534, %v831
  %v906 = vadd.f32 %v535, %v832
  %v907 = vadd.f32 %v536, %v833
  %v908 = vadd.f32 %v537, %v834
  %s909 = scalar_lea.vmem %s1, 1184
  %v910 = vld [vmem:[%s909] sm:$0xff]
  %v911 = vld [vmem:[%s909 + $0x8] sm:$0xff]
  %v912 = vld [vmem:[%s909 + $0x10] sm:$0xff]
  %v913 = vld [vmem:[%s909 + $0x18] sm:$0xff]
  %v914 = vld [vmem:[%s909 + $0x20] sm:$0xff]
  %v915 = vld [vmem:[%s909 + $0x28] sm:$0xff]
  %v916 = vld [vmem:[%s909 + $0x30] sm:$0xff]
  %v917 = vld [vmem:[%s909 + $0x38] sm:$0xff]
  %v918 = vld [vmem:[%s909 + $0x40] sm:$0xff]
  %v919 = vld [vmem:[%s909 + $0x48] sm:$0xff]
  %v920 = vld [vmem:[%s909 + $0x50] sm:$0xff]
  %v921 = vld [vmem:[%s909 + $0x58] sm:$0xff]
  %v922 = vld [vmem:[%s909 + $0x60] sm:$0xff]
  %v923 = vld [vmem:[%s909 + $0x68] sm:$0xff]
  %v924 = vld [vmem:[%s909 + $0x70] sm:$0xff]
  %v925 = vld [vmem:[%s909 + $0x78] sm:$0xff]
  %v926 = vld [vmem:[%s909 + $0x80] sm:$0xff]
  %v927 = vld [vmem:[%s909 + $0x88] sm:$0xff]
  %v928 = vld [vmem:[%s909 + $0x90] sm:$0xff]
  %v929 = vld [vmem:[%s909 + $0x98] sm:$0xff]
  %v930 = vld [vmem:[%s909 + $0xa0] sm:$0xff]
  %v931 = vld [vmem:[%s909 + $0xa8] sm:$0xff]
  %v932 = vld [vmem:[%s909 + $0xb0] sm:$0xff]
  %v933 = vld [vmem:[%s909 + $0xb8] sm:$0xff]
  %v934 = vld [vmem:[%s909 + $0xc0] sm:$0xff]
  %v935 = vld [vmem:[%s909 + $0xc8] sm:$0xff]
  %v936 = vld [vmem:[%s909 + $0xd0] sm:$0xff]
  %v937 = vld [vmem:[%s909 + $0xd8] sm:$0xff]
  %v938 = vld [vmem:[%s909 + $0xe0] sm:$0xff]
  %v939 = vld [vmem:[%s909 + $0xe8] sm:$0xff]
  %v940 = vld [vmem:[%s909 + $0xf0] sm:$0xff]
  %v941 = vld [vmem:[%s909 + $0xf8] sm:$0xff]
  %v942 = vld [vmem:[%s909 + $0x100] sm:$0xff]
  %v943 = vld [vmem:[%s909 + $0x108] sm:$0xff]
  %v944 = vld [vmem:[%s909 + $0x110] sm:$0xff]
  %v945 = vld [vmem:[%s909 + $0x118] sm:$0xff]
  %v946 = vld [vmem:[%s909 + $0x120] sm:$0xff]
  %v947 = vld [vmem:[%s909 + $0x128] sm:$0xff]
  %v948 = vld [vmem:[%s909 + $0x130] sm:$0xff]
  %v949 = vld [vmem:[%s909 + $0x138] sm:$0xff]
  %v950 = vld [vmem:[%s909 + $0x140] sm:$0xff]
  %v951 = vld [vmem:[%s909 + $0x148] sm:$0xff]
  %v952 = vld [vmem:[%s909 + $0x150] sm:$0xff]
  %v953 = vld [vmem:[%s909 + $0x158] sm:$0xff]
  %v954 = vld [vmem:[%s909 + $0x160] sm:$0xff]
  %v955 = vld [vmem:[%s909 + $0x168] sm:$0xff]
  %v956 = vld [vmem:[%s909 + $0x170] sm:$0xff]
  %v957 = vld [vmem:[%s909 + $0x178] sm:$0xff]
  %v958 = vld [vmem:[%s909 + $0x180] sm:$0xff]
  %v959 = vld [vmem:[%s909 + $0x188] sm:$0xff]
  %v960 = vld [vmem:[%s909 + $0x190] sm:$0xff]
  %v961 = vld [vmem:[%s909 + $0x198] sm:$0xff]
  %v962 = vld [vmem:[%s909 + $0x1a0] sm:$0xff]
  %v963 = vld [vmem:[%s909 + $0x1a8] sm:$0xff]
  %v964 = vld [vmem:[%s909 + $0x1b0] sm:$0xff]
  %v965 = vld [vmem:[%s909 + $0x1b8] sm:$0xff]
  %v966 = vld [vmem:[%s909 + $0x1c0] sm:$0xff]
  %v967 = vld [vmem:[%s909 + $0x1c8] sm:$0xff]
  %v968 = vld [vmem:[%s909 + $0x1d0] sm:$0xff]
  %v969 = vld [vmem:[%s909 + $0x1d8] sm:$0xff]
  %v970 = vld [vmem:[%s909 + $0x1e0] sm:$0xff]
  %v971 = vld [vmem:[%s909 + $0x1e8] sm:$0xff]
  %v972 = vld [vmem:[%s909 + $0x1f0] sm:$0xff]
  %v973 = vld [vmem:[%s909 + $0x1f8] sm:$0xff]
  %v974 = vld [vmem:[%s909 + $0x200] sm:$0xff]
  %v975 = vld [vmem:[%s909 + $0x208] sm:$0xff]
  %v976 = vld [vmem:[%s909 + $0x210] sm:$0xff]
  %v977 = vld [vmem:[%s909 + $0x218] sm:$0xff]
  %v978 = vld [vmem:[%s909 + $0x220] sm:$0xff]
  %v979 = vld [vmem:[%s909 + $0x228] sm:$0xff]
  %v980 = vld [vmem:[%s909 + $0x230] sm:$0xff]
  %v981 = vld [vmem:[%s909 + $0x238] sm:$0xff]
  %v982 = vld [vmem:[%s909 + $0x240] sm:$0xff]
  %v983 = vld [vmem:[%s909 + $0x248] sm:$0xff]
  %984 = vset.pattern.permute.xlu0 2
  %985 = vperm.xlu0 %984, %v94
  %v986 = vpop.permute.xlu0 %985
  %988 = vset.pattern.permute.xlu0 2
  %989 = vperm.xlu0 %988, %v95
  %v990 = vpop.permute.xlu0 %989
  %992 = vset.pattern.permute.xlu0 2
  %993 = vperm.xlu0 %992, %v96
  %v994 = vpop.permute.xlu0 %993
  %996 = vset.pattern.permute.xlu0 2
  %997 = vperm.xlu0 %996, %v97
  %v998 = vpop.permute.xlu0 %997
  %1000 = vset.pattern.permute.xlu0 2
  %1001 = vperm.xlu0 %1000, %v98
  %v1002 = vpop.permute.xlu0 %1001
  %1004 = vset.pattern.permute.xlu0 2
  %1005 = vperm.xlu0 %1004, %v99
  %v1006 = vpop.permute.xlu0 %1005
  %1008 = vset.pattern.permute.xlu0 2
  %1009 = vperm.xlu0 %1008, %v100
  %v1010 = vpop.permute.xlu0 %1009
  %1012 = vset.pattern.permute.xlu0 2
  %1013 = vperm.xlu0 %1012, %v101
  %v1014 = vpop.permute.xlu0 %1013
  %1016 = vset.pattern.permute.xlu0 2
  %1017 = vperm.xlu0 %1016, %v102
  %v1018 = vpop.permute.xlu0 %1017
  %1020 = vset.pattern.permute.xlu0 2
  %1021 = vperm.xlu0 %1020, %v103
  %v1022 = vpop.permute.xlu0 %1021
  %1024 = vset.pattern.permute.xlu0 2
  %1025 = vperm.xlu0 %1024, %v104
  %v1026 = vpop.permute.xlu0 %1025
  %1028 = vset.pattern.permute.xlu0 2
  %1029 = vperm.xlu0 %1028, %v105
  %v1030 = vpop.permute.xlu0 %1029
  %1032 = vset.pattern.permute.xlu0 2
  %1033 = vperm.xlu0 %1032, %v106
  %v1034 = vpop.permute.xlu0 %1033
  %1036 = vset.pattern.permute.xlu0 2
  %1037 = vperm.xlu0 %1036, %v107
  %v1038 = vpop.permute.xlu0 %1037
  %1040 = vset.pattern.permute.xlu0 2
  %1041 = vperm.xlu0 %1040, %v108
  %v1042 = vpop.permute.xlu0 %1041
  %1044 = vset.pattern.permute.xlu0 2
  %1045 = vperm.xlu0 %1044, %v109
  %v1046 = vpop.permute.xlu0 %1045
  %1048 = vset.pattern.permute.xlu0 2
  %1049 = vperm.xlu0 %1048, %v110
  %v1050 = vpop.permute.xlu0 %1049
  %1052 = vset.pattern.permute.xlu0 2
  %1053 = vperm.xlu0 %1052, %v111
  %v1054 = vpop.permute.xlu0 %1053
  %1056 = vset.pattern.permute.xlu0 2
  %1057 = vperm.xlu0 %1056, %v112
  %v1058 = vpop.permute.xlu0 %1057
  %1060 = vset.pattern.permute.xlu0 2
  %1061 = vperm.xlu0 %1060, %v113
  %v1062 = vpop.permute.xlu0 %1061
  %1064 = vset.pattern.permute.xlu0 2
  %1065 = vperm.xlu0 %1064, %v114
  %v1066 = vpop.permute.xlu0 %1065
  %1068 = vset.pattern.permute.xlu0 2
  %1069 = vperm.xlu0 %1068, %v115
  %v1070 = vpop.permute.xlu0 %1069
  %1072 = vset.pattern.permute.xlu0 2
  %1073 = vperm.xlu0 %1072, %v116
  %v1074 = vpop.permute.xlu0 %1073
  %1076 = vset.pattern.permute.xlu0 2
  %1077 = vperm.xlu0 %1076, %v117
  %v1078 = vpop.permute.xlu0 %1077
  %1080 = vset.pattern.permute.xlu0 2
  %1081 = vperm.xlu0 %1080, %v118
  %v1082 = vpop.permute.xlu0 %1081
  %1084 = vset.pattern.permute.xlu0 2
  %1085 = vperm.xlu0 %1084, %v119
  %v1086 = vpop.permute.xlu0 %1085
  %1088 = vset.pattern.permute.xlu0 2
  %1089 = vperm.xlu0 %1088, %v120
  %v1090 = vpop.permute.xlu0 %1089
  %1092 = vset.pattern.permute.xlu0 2
  %1093 = vperm.xlu0 %1092, %v121
  %v1094 = vpop.permute.xlu0 %1093
  %1096 = vset.pattern.permute.xlu0 2
  %1097 = vperm.xlu0 %1096, %v122
  %v1098 = vpop.permute.xlu0 %1097
  %1100 = vset.pattern.permute.xlu0 2
  %1101 = vperm.xlu0 %1100, %v123
  %v1102 = vpop.permute.xlu0 %1101
  %1104 = vset.pattern.permute.xlu0 2
  %1105 = vperm.xlu0 %1104, %v124
  %v1106 = vpop.permute.xlu0 %1105
  %1108 = vset.pattern.permute.xlu0 2
  %1109 = vperm.xlu0 %1108, %v125
  %v1110 = vpop.permute.xlu0 %1109
  %1112 = vset.pattern.permute.xlu0 2
  %1113 = vperm.xlu0 %1112, %v126
  %v1114 = vpop.permute.xlu0 %1113
  %1116 = vset.pattern.permute.xlu0 2
  %1117 = vperm.xlu0 %1116, %v127
  %v1118 = vpop.permute.xlu0 %1117
  %1120 = vset.pattern.permute.xlu0 2
  %1121 = vperm.xlu0 %1120, %v128
  %v1122 = vpop.permute.xlu0 %1121
  %1124 = vset.pattern.permute.xlu0 2
  %1125 = vperm.xlu0 %1124, %v129
  %v1126 = vpop.permute.xlu0 %1125
  %1128 = vset.pattern.permute.xlu0 2
  %1129 = vperm.xlu0 %1128, %v130
  %v1130 = vpop.permute.xlu0 %1129
  %v1132 = vmul.f32 %v986, %v910
  %v1133 = vmul.f32 %v986, %v911
  %v1134 = vmul.f32 %v990, %v912
  %v1135 = vmul.f32 %v990, %v913
  %v1136 = vmul.f32 %v994, %v914
  %v1137 = vmul.f32 %v994, %v915
  %v1138 = vmul.f32 %v998, %v916
  %v1139 = vmul.f32 %v998, %v917
  %v1140 = vmul.f32 %v1002, %v918
  %v1141 = vmul.f32 %v1002, %v919
  %v1142 = vmul.f32 %v1006, %v920
  %v1143 = vmul.f32 %v1006, %v921
  %v1144 = vmul.f32 %v1010, %v922
  %v1145 = vmul.f32 %v1010, %v923
  %v1146 = vmul.f32 %v1014, %v924
  %v1147 = vmul.f32 %v1014, %v925
  %v1148 = vmul.f32 %v1018, %v926
  %v1149 = vmul.f32 %v1018, %v927
  %v1150 = vmul.f32 %v1022, %v928
  %v1151 = vmul.f32 %v1022, %v929
  %v1152 = vmul.f32 %v1026, %v930
  %v1153 = vmul.f32 %v1026, %v931
  %v1154 = vmul.f32 %v1030, %v932
  %v1155 = vmul.f32 %v1030, %v933
  %v1156 = vmul.f32 %v1034, %v934
  %v1157 = vmul.f32 %v1034, %v935
  %v1158 = vmul.f32 %v1038, %v936
  %v1159 = vmul.f32 %v1038, %v937
  %v1160 = vmul.f32 %v1042, %v938
  %v1161 = vmul.f32 %v1042, %v939
  %v1162 = vmul.f32 %v1046, %v940
  %v1163 = vmul.f32 %v1046, %v941
  %v1164 = vmul.f32 %v1050, %v942
  %v1165 = vmul.f32 %v1050, %v943
  %v1166 = vmul.f32 %v1054, %v944
  %v1167 = vmul.f32 %v1054, %v945
  %v1168 = vmul.f32 %v1058, %v946
  %v1169 = vmul.f32 %v1058, %v947
  %v1170 = vmul.f32 %v1062, %v948
  %v1171 = vmul.f32 %v1062, %v949
  %v1172 = vmul.f32 %v1066, %v950
  %v1173 = vmul.f32 %v1066, %v951
  %v1174 = vmul.f32 %v1070, %v952
  %v1175 = vmul.f32 %v1070, %v953
  %v1176 = vmul.f32 %v1074, %v954
  %v1177 = vmul.f32 %v1074, %v955
  %v1178 = vmul.f32 %v1078, %v956
  %v1179 = vmul.f32 %v1078, %v957
  %v1180 = vmul.f32 %v1082, %v958
  %v1181 = vmul.f32 %v1082, %v959
  %v1182 = vmul.f32 %v1086, %v960
  %v1183 = vmul.f32 %v1086, %v961
  %v1184 = vmul.f32 %v1090, %v962
  %v1185 = vmul.f32 %v1090, %v963
  %v1186 = vmul.f32 %v1094, %v964
  %v1187 = vmul.f32 %v1094, %v965
  %v1188 = vmul.f32 %v1098, %v966
  %v1189 = vmul.f32 %v1098, %v967
  %v1190 = vmul.f32 %v1102, %v968
  %v1191 = vmul.f32 %v1102, %v969
  %v1192 = vmul.f32 %v1106, %v970
  %v1193 = vmul.f32 %v1106, %v971
  %v1194 = vmul.f32 %v1110, %v972
  %v1195 = vmul.f32 %v1110, %v973
  %v1196 = vmul.f32 %v1114, %v974
  %v1197 = vmul.f32 %v1114, %v975
  %v1198 = vmul.f32 %v1118, %v976
  %v1199 = vmul.f32 %v1118, %v977
  %v1200 = vmul.f32 %v1122, %v978
  %v1201 = vmul.f32 %v1122, %v979
  %v1202 = vmul.f32 %v1126, %v980
  %v1203 = vmul.f32 %v1126, %v981
  %v1204 = vmul.f32 %v1130, %v982
  %v1205 = vmul.f32 %v1130, %v983
  %v1206 = vadd.f32 %v835, %v1132
  %v1207 = vadd.f32 %v836, %v1133
  %v1208 = vadd.f32 %v837, %v1134
  %v1209 = vadd.f32 %v838, %v1135
  %v1210 = vadd.f32 %v839, %v1136
  %v1211 = vadd.f32 %v840, %v1137
  %v1212 = vadd.f32 %v841, %v1138
  %v1213 = vadd.f32 %v842, %v1139
  %v1214 = vadd.f32 %v843, %v1140
  %v1215 = vadd.f32 %v844, %v1141
  %v1216 = vadd.f32 %v845, %v1142
  %v1217 = vadd.f32 %v846, %v1143
  %v1218 = vadd.f32 %v847, %v1144
  %v1219 = vadd.f32 %v848, %v1145
  %v1220 = vadd.f32 %v849, %v1146
  %v1221 = vadd.f32 %v850, %v1147
  %v1222 = vadd.f32 %v851, %v1148
  %v1223 = vadd.f32 %v852, %v1149
  %v1224 = vadd.f32 %v853, %v1150
  %v1225 = vadd.f32 %v854, %v1151
  %v1226 = vadd.f32 %v855, %v1152
  %v1227 = vadd.f32 %v856, %v1153
  %v1228 = vadd.f32 %v857, %v1154
  %v1229 = vadd.f32 %v858, %v1155
  %v1230 = vadd.f32 %v859, %v1156
  %v1231 = vadd.f32 %v860, %v1157
  %v1232 = vadd.f32 %v861, %v1158
  %v1233 = vadd.f32 %v862, %v1159
  %v1234 = vadd.f32 %v863, %v1160
  %v1235 = vadd.f32 %v864, %v1161
  %v1236 = vadd.f32 %v865, %v1162
  %v1237 = vadd.f32 %v866, %v1163
  %v1238 = vadd.f32 %v867, %v1164
  %v1239 = vadd.f32 %v868, %v1165
  %v1240 = vadd.f32 %v869, %v1166
  %v1241 = vadd.f32 %v870, %v1167
  %v1242 = vadd.f32 %v871, %v1168
  %v1243 = vadd.f32 %v872, %v1169
  %v1244 = vadd.f32 %v873, %v1170
  %v1245 = vadd.f32 %v874, %v1171
  %v1246 = vadd.f32 %v875, %v1172
  %v1247 = vadd.f32 %v876, %v1173
  %v1248 = vadd.f32 %v877, %v1174
  %v1249 = vadd.f32 %v878, %v1175
  %v1250 = vadd.f32 %v879, %v1176
  %v1251 = vadd.f32 %v880, %v1177
  %v1252 = vadd.f32 %v881, %v1178
  %v1253 = vadd.f32 %v882, %v1179
  %v1254 = vadd.f32 %v883, %v1180
  %v1255 = vadd.f32 %v884, %v1181
  %v1256 = vadd.f32 %v885, %v1182
  %v1257 = vadd.f32 %v886, %v1183
  %v1258 = vadd.f32 %v887, %v1184
  %v1259 = vadd.f32 %v888, %v1185
  %v1260 = vadd.f32 %v889, %v1186
  %v1261 = vadd.f32 %v890, %v1187
  %v1262 = vadd.f32 %v891, %v1188
  %v1263 = vadd.f32 %v892, %v1189
  %v1264 = vadd.f32 %v893, %v1190
  %v1265 = vadd.f32 %v894, %v1191
  %v1266 = vadd.f32 %v895, %v1192
  %v1267 = vadd.f32 %v896, %v1193
  %v1268 = vadd.f32 %v897, %v1194
  %v1269 = vadd.f32 %v898, %v1195
  %v1270 = vadd.f32 %v899, %v1196
  %v1271 = vadd.f32 %v900, %v1197
  %v1272 = vadd.f32 %v901, %v1198
  %v1273 = vadd.f32 %v902, %v1199
  %v1274 = vadd.f32 %v903, %v1200
  %v1275 = vadd.f32 %v904, %v1201
  %v1276 = vadd.f32 %v905, %v1202
  %v1277 = vadd.f32 %v906, %v1203
  %v1278 = vadd.f32 %v907, %v1204
  %v1279 = vadd.f32 %v908, %v1205
  %s1280 = scalar_lea.vmem %s1, 1776
  %v1281 = vld [vmem:[%s1280] sm:$0xff]
  %v1282 = vld [vmem:[%s1280 + $0x8] sm:$0xff]
  %v1283 = vld [vmem:[%s1280 + $0x10] sm:$0xff]
  %v1284 = vld [vmem:[%s1280 + $0x18] sm:$0xff]
  %v1285 = vld [vmem:[%s1280 + $0x20] sm:$0xff]
  %v1286 = vld [vmem:[%s1280 + $0x28] sm:$0xff]
  %v1287 = vld [vmem:[%s1280 + $0x30] sm:$0xff]
  %v1288 = vld [vmem:[%s1280 + $0x38] sm:$0xff]
  %v1289 = vld [vmem:[%s1280 + $0x40] sm:$0xff]
  %v1290 = vld [vmem:[%s1280 + $0x48] sm:$0xff]
  %v1291 = vld [vmem:[%s1280 + $0x50] sm:$0xff]
  %v1292 = vld [vmem:[%s1280 + $0x58] sm:$0xff]
  %v1293 = vld [vmem:[%s1280 + $0x60] sm:$0xff]
  %v1294 = vld [vmem:[%s1280 + $0x68] sm:$0xff]
  %v1295 = vld [vmem:[%s1280 + $0x70] sm:$0xff]
  %v1296 = vld [vmem:[%s1280 + $0x78] sm:$0xff]
  %v1297 = vld [vmem:[%s1280 + $0x80] sm:$0xff]
  %v1298 = vld [vmem:[%s1280 + $0x88] sm:$0xff]
  %v1299 = vld [vmem:[%s1280 + $0x90] sm:$0xff]
  %v1300 = vld [vmem:[%s1280 + $0x98] sm:$0xff]
  %v1301 = vld [vmem:[%s1280 + $0xa0] sm:$0xff]
  %v1302 = vld [vmem:[%s1280 + $0xa8] sm:$0xff]
  %v1303 = vld [vmem:[%s1280 + $0xb0] sm:$0xff]
  %v1304 = vld [vmem:[%s1280 + $0xb8] sm:$0xff]
  %v1305 = vld [vmem:[%s1280 + $0xc0] sm:$0xff]
  %v1306 = vld [vmem:[%s1280 + $0xc8] sm:$0xff]
  %v1307 = vld [vmem:[%s1280 + $0xd0] sm:$0xff]
  %v1308 = vld [vmem:[%s1280 + $0xd8] sm:$0xff]
  %v1309 = vld [vmem:[%s1280 + $0xe0] sm:$0xff]
  %v1310 = vld [vmem:[%s1280 + $0xe8] sm:$0xff]
  %v1311 = vld [vmem:[%s1280 + $0xf0] sm:$0xff]
  %v1312 = vld [vmem:[%s1280 + $0xf8] sm:$0xff]
  %v1313 = vld [vmem:[%s1280 + $0x100] sm:$0xff]
  %v1314 = vld [vmem:[%s1280 + $0x108] sm:$0xff]
  %v1315 = vld [vmem:[%s1280 + $0x110] sm:$0xff]
  %v1316 = vld [vmem:[%s1280 + $0x118] sm:$0xff]
  %v1317 = vld [vmem:[%s1280 + $0x120] sm:$0xff]
  %v1318 = vld [vmem:[%s1280 + $0x128] sm:$0xff]
  %v1319 = vld [vmem:[%s1280 + $0x130] sm:$0xff]
  %v1320 = vld [vmem:[%s1280 + $0x138] sm:$0xff]
  %v1321 = vld [vmem:[%s1280 + $0x140] sm:$0xff]
  %v1322 = vld [vmem:[%s1280 + $0x148] sm:$0xff]
  %v1323 = vld [vmem:[%s1280 + $0x150] sm:$0xff]
  %v1324 = vld [vmem:[%s1280 + $0x158] sm:$0xff]
  %v1325 = vld [vmem:[%s1280 + $0x160] sm:$0xff]
  %v1326 = vld [vmem:[%s1280 + $0x168] sm:$0xff]
  %v1327 = vld [vmem:[%s1280 + $0x170] sm:$0xff]
  %v1328 = vld [vmem:[%s1280 + $0x178] sm:$0xff]
  %v1329 = vld [vmem:[%s1280 + $0x180] sm:$0xff]
  %v1330 = vld [vmem:[%s1280 + $0x188] sm:$0xff]
  %v1331 = vld [vmem:[%s1280 + $0x190] sm:$0xff]
  %v1332 = vld [vmem:[%s1280 + $0x198] sm:$0xff]
  %v1333 = vld [vmem:[%s1280 + $0x1a0] sm:$0xff]
  %v1334 = vld [vmem:[%s1280 + $0x1a8] sm:$0xff]
  %v1335 = vld [vmem:[%s1280 + $0x1b0] sm:$0xff]
  %v1336 = vld [vmem:[%s1280 + $0x1b8] sm:$0xff]
  %v1337 = vld [vmem:[%s1280 + $0x1c0] sm:$0xff]
  %v1338 = vld [vmem:[%s1280 + $0x1c8] sm:$0xff]
  %v1339 = vld [vmem:[%s1280 + $0x1d0] sm:$0xff]
  %v1340 = vld [vmem:[%s1280 + $0x1d8] sm:$0xff]
  %v1341 = vld [vmem:[%s1280 + $0x1e0] sm:$0xff]
  %v1342 = vld [vmem:[%s1280 + $0x1e8] sm:$0xff]
  %v1343 = vld [vmem:[%s1280 + $0x1f0] sm:$0xff]
  %v1344 = vld [vmem:[%s1280 + $0x1f8] sm:$0xff]
  %v1345 = vld [vmem:[%s1280 + $0x200] sm:$0xff]
  %v1346 = vld [vmem:[%s1280 + $0x208] sm:$0xff]
  %v1347 = vld [vmem:[%s1280 + $0x210] sm:$0xff]
  %v1348 = vld [vmem:[%s1280 + $0x218] sm:$0xff]
  %v1349 = vld [vmem:[%s1280 + $0x220] sm:$0xff]
  %v1350 = vld [vmem:[%s1280 + $0x228] sm:$0xff]
  %v1351 = vld [vmem:[%s1280 + $0x230] sm:$0xff]
  %v1352 = vld [vmem:[%s1280 + $0x238] sm:$0xff]
  %v1353 = vld [vmem:[%s1280 + $0x240] sm:$0xff]
  %v1354 = vld [vmem:[%s1280 + $0x248] sm:$0xff]
  %1355 = vset.pattern.permute.xlu0 3
  %1356 = vperm.xlu0 %1355, %v94
  %v1357 = vpop.permute.xlu0 %1356
  %1359 = vset.pattern.permute.xlu0 3
  %1360 = vperm.xlu0 %1359, %v95
  %v1361 = vpop.permute.xlu0 %1360
  %1363 = vset.pattern.permute.xlu0 3
  %1364 = vperm.xlu0 %1363, %v96
  %v1365 = vpop.permute.xlu0 %1364
  %1367 = vset.pattern.permute.xlu0 3
  %1368 = vperm.xlu0 %1367, %v97
  %v1369 = vpop.permute.xlu0 %1368
  %1371 = vset.pattern.permute.xlu0 3
  %1372 = vperm.xlu0 %1371, %v98
  %v1373 = vpop.permute.xlu0 %1372
  %1375 = vset.pattern.permute.xlu0 3
  %1376 = vperm.xlu0 %1375, %v99
  %v1377 = vpop.permute.xlu0 %1376
  %1379 = vset.pattern.permute.xlu0 3
  %1380 = vperm.xlu0 %1379, %v100
  %v1381 = vpop.permute.xlu0 %1380
  %1383 = vset.pattern.permute.xlu0 3
  %1384 = vperm.xlu0 %1383, %v101
  %v1385 = vpop.permute.xlu0 %1384
  %1387 = vset.pattern.permute.xlu0 3
  %1388 = vperm.xlu0 %1387, %v102
  %v1389 = vpop.permute.xlu0 %1388
  %1391 = vset.pattern.permute.xlu0 3
  %1392 = vperm.xlu0 %1391, %v103
  %v1393 = vpop.permute.xlu0 %1392
  %1395 = vset.pattern.permute.xlu0 3
  %1396 = vperm.xlu0 %1395, %v104
  %v1397 = vpop.permute.xlu0 %1396
  %1399 = vset.pattern.permute.xlu0 3
  %1400 = vperm.xlu0 %1399, %v105
  %v1401 = vpop.permute.xlu0 %1400
  %1403 = vset.pattern.permute.xlu0 3
  %1404 = vperm.xlu0 %1403, %v106
  %v1405 = vpop.permute.xlu0 %1404
  %1407 = vset.pattern.permute.xlu0 3
  %1408 = vperm.xlu0 %1407, %v107
  %v1409 = vpop.permute.xlu0 %1408
  %1411 = vset.pattern.permute.xlu0 3
  %1412 = vperm.xlu0 %1411, %v108
  %v1413 = vpop.permute.xlu0 %1412
  %1415 = vset.pattern.permute.xlu0 3
  %1416 = vperm.xlu0 %1415, %v109
  %v1417 = vpop.permute.xlu0 %1416
  %1419 = vset.pattern.permute.xlu0 3
  %1420 = vperm.xlu0 %1419, %v110
  %v1421 = vpop.permute.xlu0 %1420
  %1423 = vset.pattern.permute.xlu0 3
  %1424 = vperm.xlu0 %1423, %v111
  %v1425 = vpop.permute.xlu0 %1424
  %1427 = vset.pattern.permute.xlu0 3
  %1428 = vperm.xlu0 %1427, %v112
  %v1429 = vpop.permute.xlu0 %1428
  %1431 = vset.pattern.permute.xlu0 3
  %1432 = vperm.xlu0 %1431, %v113
  %v1433 = vpop.permute.xlu0 %1432
  %1435 = vset.pattern.permute.xlu0 3
  %1436 = vperm.xlu0 %1435, %v114
  %v1437 = vpop.permute.xlu0 %1436
  %1439 = vset.pattern.permute.xlu0 3
  %1440 = vperm.xlu0 %1439, %v115
  %v1441 = vpop.permute.xlu0 %1440
  %1443 = vset.pattern.permute.xlu0 3
  %1444 = vperm.xlu0 %1443, %v116
  %v1445 = vpop.permute.xlu0 %1444
  %1447 = vset.pattern.permute.xlu0 3
  %1448 = vperm.xlu0 %1447, %v117
  %v1449 = vpop.permute.xlu0 %1448
  %1451 = vset.pattern.permute.xlu0 3
  %1452 = vperm.xlu0 %1451, %v118
  %v1453 = vpop.permute.xlu0 %1452
  %1455 = vset.pattern.permute.xlu0 3
  %1456 = vperm.xlu0 %1455, %v119
  %v1457 = vpop.permute.xlu0 %1456
  %1459 = vset.pattern.permute.xlu0 3
  %1460 = vperm.xlu0 %1459, %v120
  %v1461 = vpop.permute.xlu0 %1460
  %1463 = vset.pattern.permute.xlu0 3
  %1464 = vperm.xlu0 %1463, %v121
  %v1465 = vpop.permute.xlu0 %1464
  %1467 = vset.pattern.permute.xlu0 3
  %1468 = vperm.xlu0 %1467, %v122
  %v1469 = vpop.permute.xlu0 %1468
  %1471 = vset.pattern.permute.xlu0 3
  %1472 = vperm.xlu0 %1471, %v123
  %v1473 = vpop.permute.xlu0 %1472
  %1475 = vset.pattern.permute.xlu0 3
  %1476 = vperm.xlu0 %1475, %v124
  %v1477 = vpop.permute.xlu0 %1476
  %1479 = vset.pattern.permute.xlu0 3
  %1480 = vperm.xlu0 %1479, %v125
  %v1481 = vpop.permute.xlu0 %1480
  %1483 = vset.pattern.permute.xlu0 3
  %1484 = vperm.xlu0 %1483, %v126
  %v1485 = vpop.permute.xlu0 %1484
  %1487 = vset.pattern.permute.xlu0 3
  %1488 = vperm.xlu0 %1487, %v127
  %v1489 = vpop.permute.xlu0 %1488
  %1491 = vset.pattern.permute.xlu0 3
  %1492 = vperm.xlu0 %1491, %v128
  %v1493 = vpop.permute.xlu0 %1492
  %1495 = vset.pattern.permute.xlu0 3
  %1496 = vperm.xlu0 %1495, %v129
  %v1497 = vpop.permute.xlu0 %1496
  %1499 = vset.pattern.permute.xlu0 3
  %1500 = vperm.xlu0 %1499, %v130
  %v1501 = vpop.permute.xlu0 %1500
  %v1503 = vmul.f32 %v1357, %v1281
  %v1504 = vmul.f32 %v1357, %v1282
  %v1505 = vmul.f32 %v1361, %v1283
  %v1506 = vmul.f32 %v1361, %v1284
  %v1507 = vmul.f32 %v1365, %v1285
  %v1508 = vmul.f32 %v1365, %v1286
  %v1509 = vmul.f32 %v1369, %v1287
  %v1510 = vmul.f32 %v1369, %v1288
  %v1511 = vmul.f32 %v1373, %v1289
  %v1512 = vmul.f32 %v1373, %v1290
  %v1513 = vmul.f32 %v1377, %v1291
  %v1514 = vmul.f32 %v1377, %v1292
  %v1515 = vmul.f32 %v1381, %v1293
  %v1516 = vmul.f32 %v1381, %v1294
  %v1517 = vmul.f32 %v1385, %v1295
  %v1518 = vmul.f32 %v1385, %v1296
  %v1519 = vmul.f32 %v1389, %v1297
  %v1520 = vmul.f32 %v1389, %v1298
  %v1521 = vmul.f32 %v1393, %v1299
  %v1522 = vmul.f32 %v1393, %v1300
  %v1523 = vmul.f32 %v1397, %v1301
  %v1524 = vmul.f32 %v1397, %v1302
  %v1525 = vmul.f32 %v1401, %v1303
  %v1526 = vmul.f32 %v1401, %v1304
  %v1527 = vmul.f32 %v1405, %v1305
  %v1528 = vmul.f32 %v1405, %v1306
  %v1529 = vmul.f32 %v1409, %v1307
  %v1530 = vmul.f32 %v1409, %v1308
  %v1531 = vmul.f32 %v1413, %v1309
  %v1532 = vmul.f32 %v1413, %v1310
  %v1533 = vmul.f32 %v1417, %v1311
  %v1534 = vmul.f32 %v1417, %v1312
  %v1535 = vmul.f32 %v1421, %v1313
  %v1536 = vmul.f32 %v1421, %v1314
  %v1537 = vmul.f32 %v1425, %v1315
  %v1538 = vmul.f32 %v1425, %v1316
  %v1539 = vmul.f32 %v1429, %v1317
  %v1540 = vmul.f32 %v1429, %v1318
  %v1541 = vmul.f32 %v1433, %v1319
  %v1542 = vmul.f32 %v1433, %v1320
  %v1543 = vmul.f32 %v1437, %v1321
  %v1544 = vmul.f32 %v1437, %v1322
  %v1545 = vmul.f32 %v1441, %v1323
  %v1546 = vmul.f32 %v1441, %v1324
  %v1547 = vmul.f32 %v1445, %v1325
  %v1548 = vmul.f32 %v1445, %v1326
  %v1549 = vmul.f32 %v1449, %v1327
  %v1550 = vmul.f32 %v1449, %v1328
  %v1551 = vmul.f32 %v1453, %v1329
  %v1552 = vmul.f32 %v1453, %v1330
  %v1553 = vmul.f32 %v1457, %v1331
  %v1554 = vmul.f32 %v1457, %v1332
  %v1555 = vmul.f32 %v1461, %v1333
  %v1556 = vmul.f32 %v1461, %v1334
  %v1557 = vmul.f32 %v1465, %v1335
  %v1558 = vmul.f32 %v1465, %v1336
  %v1559 = vmul.f32 %v1469, %v1337
  %v1560 = vmul.f32 %v1469, %v1338
  %v1561 = vmul.f32 %v1473, %v1339
  %v1562 = vmul.f32 %v1473, %v1340
  %v1563 = vmul.f32 %v1477, %v1341
  %v1564 = vmul.f32 %v1477, %v1342
  %v1565 = vmul.f32 %v1481, %v1343
  %v1566 = vmul.f32 %v1481, %v1344
  %v1567 = vmul.f32 %v1485, %v1345
  %v1568 = vmul.f32 %v1485, %v1346
  %v1569 = vmul.f32 %v1489, %v1347
  %v1570 = vmul.f32 %v1489, %v1348
  %v1571 = vmul.f32 %v1493, %v1349
  %v1572 = vmul.f32 %v1493, %v1350
  %v1573 = vmul.f32 %v1497, %v1351
  %v1574 = vmul.f32 %v1497, %v1352
  %v1575 = vmul.f32 %v1501, %v1353
  %v1576 = vmul.f32 %v1501, %v1354
  %v1577 = vadd.f32 %v1206, %v1503
  %v1578 = vadd.f32 %v1207, %v1504
  %v1579 = vadd.f32 %v1208, %v1505
  %v1580 = vadd.f32 %v1209, %v1506
  %v1581 = vadd.f32 %v1210, %v1507
  %v1582 = vadd.f32 %v1211, %v1508
  %v1583 = vadd.f32 %v1212, %v1509
  %v1584 = vadd.f32 %v1213, %v1510
  %v1585 = vadd.f32 %v1214, %v1511
  %v1586 = vadd.f32 %v1215, %v1512
  %v1587 = vadd.f32 %v1216, %v1513
  %v1588 = vadd.f32 %v1217, %v1514
  %v1589 = vadd.f32 %v1218, %v1515
  %v1590 = vadd.f32 %v1219, %v1516
  %v1591 = vadd.f32 %v1220, %v1517
  %v1592 = vadd.f32 %v1221, %v1518
  %v1593 = vadd.f32 %v1222, %v1519
  %v1594 = vadd.f32 %v1223, %v1520
  %v1595 = vadd.f32 %v1224, %v1521
  %v1596 = vadd.f32 %v1225, %v1522
  %v1597 = vadd.f32 %v1226, %v1523
  %v1598 = vadd.f32 %v1227, %v1524
  %v1599 = vadd.f32 %v1228, %v1525
  %v1600 = vadd.f32 %v1229, %v1526
  %v1601 = vadd.f32 %v1230, %v1527
  %v1602 = vadd.f32 %v1231, %v1528
  %v1603 = vadd.f32 %v1232, %v1529
  %v1604 = vadd.f32 %v1233, %v1530
  %v1605 = vadd.f32 %v1234, %v1531
  %v1606 = vadd.f32 %v1235, %v1532
  %v1607 = vadd.f32 %v1236, %v1533
  %v1608 = vadd.f32 %v1237, %v1534
  %v1609 = vadd.f32 %v1238, %v1535
  %v1610 = vadd.f32 %v1239, %v1536
  %v1611 = vadd.f32 %v1240, %v1537
  %v1612 = vadd.f32 %v1241, %v1538
  %v1613 = vadd.f32 %v1242, %v1539
  %v1614 = vadd.f32 %v1243, %v1540
  %v1615 = vadd.f32 %v1244, %v1541
  %v1616 = vadd.f32 %v1245, %v1542
  %v1617 = vadd.f32 %v1246, %v1543
  %v1618 = vadd.f32 %v1247, %v1544
  %v1619 = vadd.f32 %v1248, %v1545
  %v1620 = vadd.f32 %v1249, %v1546
  %v1621 = vadd.f32 %v1250, %v1547
  %v1622 = vadd.f32 %v1251, %v1548
  %v1623 = vadd.f32 %v1252, %v1549
  %v1624 = vadd.f32 %v1253, %v1550
  %v1625 = vadd.f32 %v1254, %v1551
  %v1626 = vadd.f32 %v1255, %v1552
  %v1627 = vadd.f32 %v1256, %v1553
  %v1628 = vadd.f32 %v1257, %v1554
  %v1629 = vadd.f32 %v1258, %v1555
  %v1630 = vadd.f32 %v1259, %v1556
  %v1631 = vadd.f32 %v1260, %v1557
  %v1632 = vadd.f32 %v1261, %v1558
  %v1633 = vadd.f32 %v1262, %v1559
  %v1634 = vadd.f32 %v1263, %v1560
  %v1635 = vadd.f32 %v1264, %v1561
  %v1636 = vadd.f32 %v1265, %v1562
  %v1637 = vadd.f32 %v1266, %v1563
  %v1638 = vadd.f32 %v1267, %v1564
  %v1639 = vadd.f32 %v1268, %v1565
  %v1640 = vadd.f32 %v1269, %v1566
  %v1641 = vadd.f32 %v1270, %v1567
  %v1642 = vadd.f32 %v1271, %v1568
  %v1643 = vadd.f32 %v1272, %v1569
  %v1644 = vadd.f32 %v1273, %v1570
  %v1645 = vadd.f32 %v1274, %v1571
  %v1646 = vadd.f32 %v1275, %v1572
  %v1647 = vadd.f32 %v1276, %v1573
  %v1648 = vadd.f32 %v1277, %v1574
  %v1649 = vadd.f32 %v1278, %v1575
  %v1650 = vadd.f32 %v1279, %v1576
  %s1651 = scalar_lea.vmem %s1, 2368
  %v1652 = vld [vmem:[%s1651] sm:$0xff]
  %v1653 = vld [vmem:[%s1651 + $0x8] sm:$0xff]
  %v1654 = vld [vmem:[%s1651 + $0x10] sm:$0xff]
  %v1655 = vld [vmem:[%s1651 + $0x18] sm:$0xff]
  %v1656 = vld [vmem:[%s1651 + $0x20] sm:$0xff]
  %v1657 = vld [vmem:[%s1651 + $0x28] sm:$0xff]
  %v1658 = vld [vmem:[%s1651 + $0x30] sm:$0xff]
  %v1659 = vld [vmem:[%s1651 + $0x38] sm:$0xff]
  %v1660 = vld [vmem:[%s1651 + $0x40] sm:$0xff]
  %v1661 = vld [vmem:[%s1651 + $0x48] sm:$0xff]
  %v1662 = vld [vmem:[%s1651 + $0x50] sm:$0xff]
  %v1663 = vld [vmem:[%s1651 + $0x58] sm:$0xff]
  %v1664 = vld [vmem:[%s1651 + $0x60] sm:$0xff]
  %v1665 = vld [vmem:[%s1651 + $0x68] sm:$0xff]
  %v1666 = vld [vmem:[%s1651 + $0x70] sm:$0xff]
  %v1667 = vld [vmem:[%s1651 + $0x78] sm:$0xff]
  %v1668 = vld [vmem:[%s1651 + $0x80] sm:$0xff]
  %v1669 = vld [vmem:[%s1651 + $0x88] sm:$0xff]
  %v1670 = vld [vmem:[%s1651 + $0x90] sm:$0xff]
  %v1671 = vld [vmem:[%s1651 + $0x98] sm:$0xff]
  %v1672 = vld [vmem:[%s1651 + $0xa0] sm:$0xff]
  %v1673 = vld [vmem:[%s1651 + $0xa8] sm:$0xff]
  %v1674 = vld [vmem:[%s1651 + $0xb0] sm:$0xff]
  %v1675 = vld [vmem:[%s1651 + $0xb8] sm:$0xff]
  %v1676 = vld [vmem:[%s1651 + $0xc0] sm:$0xff]
  %v1677 = vld [vmem:[%s1651 + $0xc8] sm:$0xff]
  %v1678 = vld [vmem:[%s1651 + $0xd0] sm:$0xff]
  %v1679 = vld [vmem:[%s1651 + $0xd8] sm:$0xff]
  %v1680 = vld [vmem:[%s1651 + $0xe0] sm:$0xff]
  %v1681 = vld [vmem:[%s1651 + $0xe8] sm:$0xff]
  %v1682 = vld [vmem:[%s1651 + $0xf0] sm:$0xff]
  %v1683 = vld [vmem:[%s1651 + $0xf8] sm:$0xff]
  %v1684 = vld [vmem:[%s1651 + $0x100] sm:$0xff]
  %v1685 = vld [vmem:[%s1651 + $0x108] sm:$0xff]
  %v1686 = vld [vmem:[%s1651 + $0x110] sm:$0xff]
  %v1687 = vld [vmem:[%s1651 + $0x118] sm:$0xff]
  %v1688 = vld [vmem:[%s1651 + $0x120] sm:$0xff]
  %v1689 = vld [vmem:[%s1651 + $0x128] sm:$0xff]
  %v1690 = vld [vmem:[%s1651 + $0x130] sm:$0xff]
  %v1691 = vld [vmem:[%s1651 + $0x138] sm:$0xff]
  %v1692 = vld [vmem:[%s1651 + $0x140] sm:$0xff]
  %v1693 = vld [vmem:[%s1651 + $0x148] sm:$0xff]
  %v1694 = vld [vmem:[%s1651 + $0x150] sm:$0xff]
  %v1695 = vld [vmem:[%s1651 + $0x158] sm:$0xff]
  %v1696 = vld [vmem:[%s1651 + $0x160] sm:$0xff]
  %v1697 = vld [vmem:[%s1651 + $0x168] sm:$0xff]
  %v1698 = vld [vmem:[%s1651 + $0x170] sm:$0xff]
  %v1699 = vld [vmem:[%s1651 + $0x178] sm:$0xff]
  %v1700 = vld [vmem:[%s1651 + $0x180] sm:$0xff]
  %v1701 = vld [vmem:[%s1651 + $0x188] sm:$0xff]
  %v1702 = vld [vmem:[%s1651 + $0x190] sm:$0xff]
  %v1703 = vld [vmem:[%s1651 + $0x198] sm:$0xff]
  %v1704 = vld [vmem:[%s1651 + $0x1a0] sm:$0xff]
  %v1705 = vld [vmem:[%s1651 + $0x1a8] sm:$0xff]
  %v1706 = vld [vmem:[%s1651 + $0x1b0] sm:$0xff]
  %v1707 = vld [vmem:[%s1651 + $0x1b8] sm:$0xff]
  %v1708 = vld [vmem:[%s1651 + $0x1c0] sm:$0xff]
  %v1709 = vld [vmem:[%s1651 + $0x1c8] sm:$0xff]
  %v1710 = vld [vmem:[%s1651 + $0x1d0] sm:$0xff]
  %v1711 = vld [vmem:[%s1651 + $0x1d8] sm:$0xff]
  %v1712 = vld [vmem:[%s1651 + $0x1e0] sm:$0xff]
  %v1713 = vld [vmem:[%s1651 + $0x1e8] sm:$0xff]
  %v1714 = vld [vmem:[%s1651 + $0x1f0] sm:$0xff]
  %v1715 = vld [vmem:[%s1651 + $0x1f8] sm:$0xff]
  %v1716 = vld [vmem:[%s1651 + $0x200] sm:$0xff]
  %v1717 = vld [vmem:[%s1651 + $0x208] sm:$0xff]
  %v1718 = vld [vmem:[%s1651 + $0x210] sm:$0xff]
  %v1719 = vld [vmem:[%s1651 + $0x218] sm:$0xff]
  %v1720 = vld [vmem:[%s1651 + $0x220] sm:$0xff]
  %v1721 = vld [vmem:[%s1651 + $0x228] sm:$0xff]
  %v1722 = vld [vmem:[%s1651 + $0x230] sm:$0xff]
  %v1723 = vld [vmem:[%s1651 + $0x238] sm:$0xff]
  %v1724 = vld [vmem:[%s1651 + $0x240] sm:$0xff]
  %v1725 = vld [vmem:[%s1651 + $0x248] sm:$0xff]
  %1726 = vset.pattern.permute.xlu0 4
  %1727 = vperm.xlu0 %1726, %v94
  %v1728 = vpop.permute.xlu0 %1727
  %1730 = vset.pattern.permute.xlu0 4
  %1731 = vperm.xlu0 %1730, %v95
  %v1732 = vpop.permute.xlu0 %1731
  %1734 = vset.pattern.permute.xlu0 4
  %1735 = vperm.xlu0 %1734, %v96
  %v1736 = vpop.permute.xlu0 %1735
  %1738 = vset.pattern.permute.xlu0 4
  %1739 = vperm.xlu0 %1738, %v97
  %v1740 = vpop.permute.xlu0 %1739
  %1742 = vset.pattern.permute.xlu0 4
  %1743 = vperm.xlu0 %1742, %v98
  %v1744 = vpop.permute.xlu0 %1743
  %1746 = vset.pattern.permute.xlu0 4
  %1747 = vperm.xlu0 %1746, %v99
  %v1748 = vpop.permute.xlu0 %1747
  %1750 = vset.pattern.permute.xlu0 4
  %1751 = vperm.xlu0 %1750, %v100
  %v1752 = vpop.permute.xlu0 %1751
  %1754 = vset.pattern.permute.xlu0 4
  %1755 = vperm.xlu0 %1754, %v101
  %v1756 = vpop.permute.xlu0 %1755
  %1758 = vset.pattern.permute.xlu0 4
  %1759 = vperm.xlu0 %1758, %v102
  %v1760 = vpop.permute.xlu0 %1759
  %1762 = vset.pattern.permute.xlu0 4
  %1763 = vperm.xlu0 %1762, %v103
  %v1764 = vpop.permute.xlu0 %1763
  %1766 = vset.pattern.permute.xlu0 4
  %1767 = vperm.xlu0 %1766, %v104
  %v1768 = vpop.permute.xlu0 %1767
  %1770 = vset.pattern.permute.xlu0 4
  %1771 = vperm.xlu0 %1770, %v105
  %v1772 = vpop.permute.xlu0 %1771
  %1774 = vset.pattern.permute.xlu0 4
  %1775 = vperm.xlu0 %1774, %v106
  %v1776 = vpop.permute.xlu0 %1775
  %1778 = vset.pattern.permute.xlu0 4
  %1779 = vperm.xlu0 %1778, %v107
  %v1780 = vpop.permute.xlu0 %1779
  %1782 = vset.pattern.permute.xlu0 4
  %1783 = vperm.xlu0 %1782, %v108
  %v1784 = vpop.permute.xlu0 %1783
  %1786 = vset.pattern.permute.xlu0 4
  %1787 = vperm.xlu0 %1786, %v109
  %v1788 = vpop.permute.xlu0 %1787
  %1790 = vset.pattern.permute.xlu0 4
  %1791 = vperm.xlu0 %1790, %v110
  %v1792 = vpop.permute.xlu0 %1791
  %1794 = vset.pattern.permute.xlu0 4
  %1795 = vperm.xlu0 %1794, %v111
  %v1796 = vpop.permute.xlu0 %1795
  %1798 = vset.pattern.permute.xlu0 4
  %1799 = vperm.xlu0 %1798, %v112
  %v1800 = vpop.permute.xlu0 %1799
  %1802 = vset.pattern.permute.xlu0 4
  %1803 = vperm.xlu0 %1802, %v113
  %v1804 = vpop.permute.xlu0 %1803
  %1806 = vset.pattern.permute.xlu0 4
  %1807 = vperm.xlu0 %1806, %v114
  %v1808 = vpop.permute.xlu0 %1807
  %1810 = vset.pattern.permute.xlu0 4
  %1811 = vperm.xlu0 %1810, %v115
  %v1812 = vpop.permute.xlu0 %1811
  %1814 = vset.pattern.permute.xlu0 4
  %1815 = vperm.xlu0 %1814, %v116
  %v1816 = vpop.permute.xlu0 %1815
  %1818 = vset.pattern.permute.xlu0 4
  %1819 = vperm.xlu0 %1818, %v117
  %v1820 = vpop.permute.xlu0 %1819
  %1822 = vset.pattern.permute.xlu0 4
  %1823 = vperm.xlu0 %1822, %v118
  %v1824 = vpop.permute.xlu0 %1823
  %1826 = vset.pattern.permute.xlu0 4
  %1827 = vperm.xlu0 %1826, %v119
  %v1828 = vpop.permute.xlu0 %1827
  %1830 = vset.pattern.permute.xlu0 4
  %1831 = vperm.xlu0 %1830, %v120
  %v1832 = vpop.permute.xlu0 %1831
  %1834 = vset.pattern.permute.xlu0 4
  %1835 = vperm.xlu0 %1834, %v121
  %v1836 = vpop.permute.xlu0 %1835
  %1838 = vset.pattern.permute.xlu0 4
  %1839 = vperm.xlu0 %1838, %v122
  %v1840 = vpop.permute.xlu0 %1839
  %1842 = vset.pattern.permute.xlu0 4
  %1843 = vperm.xlu0 %1842, %v123
  %v1844 = vpop.permute.xlu0 %1843
  %1846 = vset.pattern.permute.xlu0 4
  %1847 = vperm.xlu0 %1846, %v124
  %v1848 = vpop.permute.xlu0 %1847
  %1850 = vset.pattern.permute.xlu0 4
  %1851 = vperm.xlu0 %1850, %v125
  %v1852 = vpop.permute.xlu0 %1851
  %1854 = vset.pattern.permute.xlu0 4
  %1855 = vperm.xlu0 %1854, %v126
  %v1856 = vpop.permute.xlu0 %1855
  %1858 = vset.pattern.permute.xlu0 4
  %1859 = vperm.xlu0 %1858, %v127
  %v1860 = vpop.permute.xlu0 %1859
  %1862 = vset.pattern.permute.xlu0 4
  %1863 = vperm.xlu0 %1862, %v128
  %v1864 = vpop.permute.xlu0 %1863
  %1866 = vset.pattern.permute.xlu0 4
  %1867 = vperm.xlu0 %1866, %v129
  %v1868 = vpop.permute.xlu0 %1867
  %1870 = vset.pattern.permute.xlu0 4
  %1871 = vperm.xlu0 %1870, %v130
  %v1872 = vpop.permute.xlu0 %1871
  %v1874 = vmul.f32 %v1728, %v1652
  %v1875 = vmul.f32 %v1728, %v1653
  %v1876 = vmul.f32 %v1732, %v1654
  %v1877 = vmul.f32 %v1732, %v1655
  %v1878 = vmul.f32 %v1736, %v1656
  %v1879 = vmul.f32 %v1736, %v1657
  %v1880 = vmul.f32 %v1740, %v1658
  %v1881 = vmul.f32 %v1740, %v1659
  %v1882 = vmul.f32 %v1744, %v1660
  %v1883 = vmul.f32 %v1744, %v1661
  %v1884 = vmul.f32 %v1748, %v1662
  %v1885 = vmul.f32 %v1748, %v1663
  %v1886 = vmul.f32 %v1752, %v1664
  %v1887 = vmul.f32 %v1752, %v1665
  %v1888 = vmul.f32 %v1756, %v1666
  %v1889 = vmul.f32 %v1756, %v1667
  %v1890 = vmul.f32 %v1760, %v1668
  %v1891 = vmul.f32 %v1760, %v1669
  %v1892 = vmul.f32 %v1764, %v1670
  %v1893 = vmul.f32 %v1764, %v1671
  %v1894 = vmul.f32 %v1768, %v1672
  %v1895 = vmul.f32 %v1768, %v1673
  %v1896 = vmul.f32 %v1772, %v1674
  %v1897 = vmul.f32 %v1772, %v1675
  %v1898 = vmul.f32 %v1776, %v1676
  %v1899 = vmul.f32 %v1776, %v1677
  %v1900 = vmul.f32 %v1780, %v1678
  %v1901 = vmul.f32 %v1780, %v1679
  %v1902 = vmul.f32 %v1784, %v1680
  %v1903 = vmul.f32 %v1784, %v1681
  %v1904 = vmul.f32 %v1788, %v1682
  %v1905 = vmul.f32 %v1788, %v1683
  %v1906 = vmul.f32 %v1792, %v1684
  %v1907 = vmul.f32 %v1792, %v1685
  %v1908 = vmul.f32 %v1796, %v1686
  %v1909 = vmul.f32 %v1796, %v1687
  %v1910 = vmul.f32 %v1800, %v1688
  %v1911 = vmul.f32 %v1800, %v1689
  %v1912 = vmul.f32 %v1804, %v1690
  %v1913 = vmul.f32 %v1804, %v1691
  %v1914 = vmul.f32 %v1808, %v1692
  %v1915 = vmul.f32 %v1808, %v1693
  %v1916 = vmul.f32 %v1812, %v1694
  %v1917 = vmul.f32 %v1812, %v1695
  %v1918 = vmul.f32 %v1816, %v1696
  %v1919 = vmul.f32 %v1816, %v1697
  %v1920 = vmul.f32 %v1820, %v1698
  %v1921 = vmul.f32 %v1820, %v1699
  %v1922 = vmul.f32 %v1824, %v1700
  %v1923 = vmul.f32 %v1824, %v1701
  %v1924 = vmul.f32 %v1828, %v1702
  %v1925 = vmul.f32 %v1828, %v1703
  %v1926 = vmul.f32 %v1832, %v1704
  %v1927 = vmul.f32 %v1832, %v1705
  %v1928 = vmul.f32 %v1836, %v1706
  %v1929 = vmul.f32 %v1836, %v1707
  %v1930 = vmul.f32 %v1840, %v1708
  %v1931 = vmul.f32 %v1840, %v1709
  %v1932 = vmul.f32 %v1844, %v1710
  %v1933 = vmul.f32 %v1844, %v1711
  %v1934 = vmul.f32 %v1848, %v1712
  %v1935 = vmul.f32 %v1848, %v1713
  %v1936 = vmul.f32 %v1852, %v1714
  %v1937 = vmul.f32 %v1852, %v1715
  %v1938 = vmul.f32 %v1856, %v1716
  %v1939 = vmul.f32 %v1856, %v1717
  %v1940 = vmul.f32 %v1860, %v1718
  %v1941 = vmul.f32 %v1860, %v1719
  %v1942 = vmul.f32 %v1864, %v1720
  %v1943 = vmul.f32 %v1864, %v1721
  %v1944 = vmul.f32 %v1868, %v1722
  %v1945 = vmul.f32 %v1868, %v1723
  %v1946 = vmul.f32 %v1872, %v1724
  %v1947 = vmul.f32 %v1872, %v1725
  %v1948 = vadd.f32 %v1577, %v1874
  %v1949 = vadd.f32 %v1578, %v1875
  %v1950 = vadd.f32 %v1579, %v1876
  %v1951 = vadd.f32 %v1580, %v1877
  %v1952 = vadd.f32 %v1581, %v1878
  %v1953 = vadd.f32 %v1582, %v1879
  %v1954 = vadd.f32 %v1583, %v1880
  %v1955 = vadd.f32 %v1584, %v1881
  %v1956 = vadd.f32 %v1585, %v1882
  %v1957 = vadd.f32 %v1586, %v1883
  %v1958 = vadd.f32 %v1587, %v1884
  %v1959 = vadd.f32 %v1588, %v1885
  %v1960 = vadd.f32 %v1589, %v1886
  %v1961 = vadd.f32 %v1590, %v1887
  %v1962 = vadd.f32 %v1591, %v1888
  %v1963 = vadd.f32 %v1592, %v1889
  %v1964 = vadd.f32 %v1593, %v1890
  %v1965 = vadd.f32 %v1594, %v1891
  %v1966 = vadd.f32 %v1595, %v1892
  %v1967 = vadd.f32 %v1596, %v1893
  %v1968 = vadd.f32 %v1597, %v1894
  %v1969 = vadd.f32 %v1598, %v1895
  %v1970 = vadd.f32 %v1599, %v1896
  %v1971 = vadd.f32 %v1600, %v1897
  %v1972 = vadd.f32 %v1601, %v1898
  %v1973 = vadd.f32 %v1602, %v1899
  %v1974 = vadd.f32 %v1603, %v1900
  %v1975 = vadd.f32 %v1604, %v1901
  %v1976 = vadd.f32 %v1605, %v1902
  %v1977 = vadd.f32 %v1606, %v1903
  %v1978 = vadd.f32 %v1607, %v1904
  %v1979 = vadd.f32 %v1608, %v1905
  %v1980 = vadd.f32 %v1609, %v1906
  %v1981 = vadd.f32 %v1610, %v1907
  %v1982 = vadd.f32 %v1611, %v1908
  %v1983 = vadd.f32 %v1612, %v1909
  %v1984 = vadd.f32 %v1613, %v1910
  %v1985 = vadd.f32 %v1614, %v1911
  %v1986 = vadd.f32 %v1615, %v1912
  %v1987 = vadd.f32 %v1616, %v1913
  %v1988 = vadd.f32 %v1617, %v1914
  %v1989 = vadd.f32 %v1618, %v1915
  %v1990 = vadd.f32 %v1619, %v1916
  %v1991 = vadd.f32 %v1620, %v1917
  %v1992 = vadd.f32 %v1621, %v1918
  %v1993 = vadd.f32 %v1622, %v1919
  %v1994 = vadd.f32 %v1623, %v1920
  %v1995 = vadd.f32 %v1624, %v1921
  %v1996 = vadd.f32 %v1625, %v1922
  %v1997 = vadd.f32 %v1626, %v1923
  %v1998 = vadd.f32 %v1627, %v1924
  %v1999 = vadd.f32 %v1628, %v1925
  %v2000 = vadd.f32 %v1629, %v1926
  %v2001 = vadd.f32 %v1630, %v1927
  %v2002 = vadd.f32 %v1631, %v1928
  %v2003 = vadd.f32 %v1632, %v1929
  %v2004 = vadd.f32 %v1633, %v1930
  %v2005 = vadd.f32 %v1634, %v1931
  %v2006 = vadd.f32 %v1635, %v1932
  %v2007 = vadd.f32 %v1636, %v1933
  %v2008 = vadd.f32 %v1637, %v1934
  %v2009 = vadd.f32 %v1638, %v1935
  %v2010 = vadd.f32 %v1639, %v1936
  %v2011 = vadd.f32 %v1640, %v1937
  %v2012 = vadd.f32 %v1641, %v1938
  %v2013 = vadd.f32 %v1642, %v1939
  %v2014 = vadd.f32 %v1643, %v1940
  %v2015 = vadd.f32 %v1644, %v1941
  %v2016 = vadd.f32 %v1645, %v1942
  %v2017 = vadd.f32 %v1646, %v1943
  %v2018 = vadd.f32 %v1647, %v1944
  %v2019 = vadd.f32 %v1648, %v1945
  %v2020 = vadd.f32 %v1649, %v1946
  %v2021 = vadd.f32 %v1650, %v1947
  %s2022 = scalar_lea.vmem %s1, 2960
  %v2023 = vld [vmem:[%s2022] sm:$0xff]
  %v2024 = vld [vmem:[%s2022 + $0x8] sm:$0xff]
  %v2025 = vld [vmem:[%s2022 + $0x10] sm:$0xff]
  %v2026 = vld [vmem:[%s2022 + $0x18] sm:$0xff]
  %v2027 = vld [vmem:[%s2022 + $0x20] sm:$0xff]
  %v2028 = vld [vmem:[%s2022 + $0x28] sm:$0xff]
  %v2029 = vld [vmem:[%s2022 + $0x30] sm:$0xff]
  %v2030 = vld [vmem:[%s2022 + $0x38] sm:$0xff]
  %v2031 = vld [vmem:[%s2022 + $0x40] sm:$0xff]
  %v2032 = vld [vmem:[%s2022 + $0x48] sm:$0xff]
  %v2033 = vld [vmem:[%s2022 + $0x50] sm:$0xff]
  %v2034 = vld [vmem:[%s2022 + $0x58] sm:$0xff]
  %v2035 = vld [vmem:[%s2022 + $0x60] sm:$0xff]
  %v2036 = vld [vmem:[%s2022 + $0x68] sm:$0xff]
  %v2037 = vld [vmem:[%s2022 + $0x70] sm:$0xff]
  %v2038 = vld [vmem:[%s2022 + $0x78] sm:$0xff]
  %v2039 = vld [vmem:[%s2022 + $0x80] sm:$0xff]
  %v2040 = vld [vmem:[%s2022 + $0x88] sm:$0xff]
  %v2041 = vld [vmem:[%s2022 + $0x90] sm:$0xff]
  %v2042 = vld [vmem:[%s2022 + $0x98] sm:$0xff]
  %v2043 = vld [vmem:[%s2022 + $0xa0] sm:$0xff]
  %v2044 = vld [vmem:[%s2022 + $0xa8] sm:$0xff]
  %v2045 = vld [vmem:[%s2022 + $0xb0] sm:$0xff]
  %v2046 = vld [vmem:[%s2022 + $0xb8] sm:$0xff]
  %v2047 = vld [vmem:[%s2022 + $0xc0] sm:$0xff]
  %v2048 = vld [vmem:[%s2022 + $0xc8] sm:$0xff]
  %v2049 = vld [vmem:[%s2022 + $0xd0] sm:$0xff]
  %v2050 = vld [vmem:[%s2022 + $0xd8] sm:$0xff]
  %v2051 = vld [vmem:[%s2022 + $0xe0] sm:$0xff]
  %v2052 = vld [vmem:[%s2022 + $0xe8] sm:$0xff]
  %v2053 = vld [vmem:[%s2022 + $0xf0] sm:$0xff]
  %v2054 = vld [vmem:[%s2022 + $0xf8] sm:$0xff]
  %v2055 = vld [vmem:[%s2022 + $0x100] sm:$0xff]
  %v2056 = vld [vmem:[%s2022 + $0x108] sm:$0xff]
  %v2057 = vld [vmem:[%s2022 + $0x110] sm:$0xff]
  %v2058 = vld [vmem:[%s2022 + $0x118] sm:$0xff]
  %v2059 = vld [vmem:[%s2022 + $0x120] sm:$0xff]
  %v2060 = vld [vmem:[%s2022 + $0x128] sm:$0xff]
  %v2061 = vld [vmem:[%s2022 + $0x130] sm:$0xff]
  %v2062 = vld [vmem:[%s2022 + $0x138] sm:$0xff]
  %v2063 = vld [vmem:[%s2022 + $0x140] sm:$0xff]
  %v2064 = vld [vmem:[%s2022 + $0x148] sm:$0xff]
  %v2065 = vld [vmem:[%s2022 + $0x150] sm:$0xff]
  %v2066 = vld [vmem:[%s2022 + $0x158] sm:$0xff]
  %v2067 = vld [vmem:[%s2022 + $0x160] sm:$0xff]
  %v2068 = vld [vmem:[%s2022 + $0x168] sm:$0xff]
  %v2069 = vld [vmem:[%s2022 + $0x170] sm:$0xff]
  %v2070 = vld [vmem:[%s2022 + $0x178] sm:$0xff]
  %v2071 = vld [vmem:[%s2022 + $0x180] sm:$0xff]
  %v2072 = vld [vmem:[%s2022 + $0x188] sm:$0xff]
  %v2073 = vld [vmem:[%s2022 + $0x190] sm:$0xff]
  %v2074 = vld [vmem:[%s2022 + $0x198] sm:$0xff]
  %v2075 = vld [vmem:[%s2022 + $0x1a0] sm:$0xff]
  %v2076 = vld [vmem:[%s2022 + $0x1a8] sm:$0xff]
  %v2077 = vld [vmem:[%s2022 + $0x1b0] sm:$0xff]
  %v2078 = vld [vmem:[%s2022 + $0x1b8] sm:$0xff]
  %v2079 = vld [vmem:[%s2022 + $0x1c0] sm:$0xff]
  %v2080 = vld [vmem:[%s2022 + $0x1c8] sm:$0xff]
  %v2081 = vld [vmem:[%s2022 + $0x1d0] sm:$0xff]
  %v2082 = vld [vmem:[%s2022 + $0x1d8] sm:$0xff]
  %v2083 = vld [vmem:[%s2022 + $0x1e0] sm:$0xff]
  %v2084 = vld [vmem:[%s2022 + $0x1e8] sm:$0xff]
  %v2085 = vld [vmem:[%s2022 + $0x1f0] sm:$0xff]
  %v2086 = vld [vmem:[%s2022 + $0x1f8] sm:$0xff]
  %v2087 = vld [vmem:[%s2022 + $0x200] sm:$0xff]
  %v2088 = vld [vmem:[%s2022 + $0x208] sm:$0xff]
  %v2089 = vld [vmem:[%s2022 + $0x210] sm:$0xff]
  %v2090 = vld [vmem:[%s2022 + $0x218] sm:$0xff]
  %v2091 = vld [vmem:[%s2022 + $0x220] sm:$0xff]
  %v2092 = vld [vmem:[%s2022 + $0x228] sm:$0xff]
  %v2093 = vld [vmem:[%s2022 + $0x230] sm:$0xff]
  %v2094 = vld [vmem:[%s2022 + $0x238] sm:$0xff]
  %v2095 = vld [vmem:[%s2022 + $0x240] sm:$0xff]
  %v2096 = vld [vmem:[%s2022 + $0x248] sm:$0xff]
  %2097 = vset.pattern.permute.xlu0 5
  %2098 = vperm.xlu0 %2097, %v94
  %v2099 = vpop.permute.xlu0 %2098
  %2101 = vset.pattern.permute.xlu0 5
  %2102 = vperm.xlu0 %2101, %v95
  %v2103 = vpop.permute.xlu0 %2102
  %2105 = vset.pattern.permute.xlu0 5
  %2106 = vperm.xlu0 %2105, %v96
  %v2107 = vpop.permute.xlu0 %2106
  %2109 = vset.pattern.permute.xlu0 5
  %2110 = vperm.xlu0 %2109, %v97
  %v2111 = vpop.permute.xlu0 %2110
  %2113 = vset.pattern.permute.xlu0 5
  %2114 = vperm.xlu0 %2113, %v98
  %v2115 = vpop.permute.xlu0 %2114
  %2117 = vset.pattern.permute.xlu0 5
  %2118 = vperm.xlu0 %2117, %v99
  %v2119 = vpop.permute.xlu0 %2118
  %2121 = vset.pattern.permute.xlu0 5
  %2122 = vperm.xlu0 %2121, %v100
  %v2123 = vpop.permute.xlu0 %2122
  %2125 = vset.pattern.permute.xlu0 5
  %2126 = vperm.xlu0 %2125, %v101
  %v2127 = vpop.permute.xlu0 %2126
  %2129 = vset.pattern.permute.xlu0 5
  %2130 = vperm.xlu0 %2129, %v102
  %v2131 = vpop.permute.xlu0 %2130
  %2133 = vset.pattern.permute.xlu0 5
  %2134 = vperm.xlu0 %2133, %v103
  %v2135 = vpop.permute.xlu0 %2134
  %2137 = vset.pattern.permute.xlu0 5
  %2138 = vperm.xlu0 %2137, %v104
  %v2139 = vpop.permute.xlu0 %2138
  %2141 = vset.pattern.permute.xlu0 5
  %2142 = vperm.xlu0 %2141, %v105
  %v2143 = vpop.permute.xlu0 %2142
  %2145 = vset.pattern.permute.xlu0 5
  %2146 = vperm.xlu0 %2145, %v106
  %v2147 = vpop.permute.xlu0 %2146
  %2149 = vset.pattern.permute.xlu0 5
  %2150 = vperm.xlu0 %2149, %v107
  %v2151 = vpop.permute.xlu0 %2150
  %2153 = vset.pattern.permute.xlu0 5
  %2154 = vperm.xlu0 %2153, %v108
  %v2155 = vpop.permute.xlu0 %2154
  %2157 = vset.pattern.permute.xlu0 5
  %2158 = vperm.xlu0 %2157, %v109
  %v2159 = vpop.permute.xlu0 %2158
  %2161 = vset.pattern.permute.xlu0 5
  %2162 = vperm.xlu0 %2161, %v110
  %v2163 = vpop.permute.xlu0 %2162
  %2165 = vset.pattern.permute.xlu0 5
  %2166 = vperm.xlu0 %2165, %v111
  %v2167 = vpop.permute.xlu0 %2166
  %2169 = vset.pattern.permute.xlu0 5
  %2170 = vperm.xlu0 %2169, %v112
  %v2171 = vpop.permute.xlu0 %2170
  %2173 = vset.pattern.permute.xlu0 5
  %2174 = vperm.xlu0 %2173, %v113
  %v2175 = vpop.permute.xlu0 %2174
  %2177 = vset.pattern.permute.xlu0 5
  %2178 = vperm.xlu0 %2177, %v114
  %v2179 = vpop.permute.xlu0 %2178
  %2181 = vset.pattern.permute.xlu0 5
  %2182 = vperm.xlu0 %2181, %v115
  %v2183 = vpop.permute.xlu0 %2182
  %2185 = vset.pattern.permute.xlu0 5
  %2186 = vperm.xlu0 %2185, %v116
  %v2187 = vpop.permute.xlu0 %2186
  %2189 = vset.pattern.permute.xlu0 5
  %2190 = vperm.xlu0 %2189, %v117
  %v2191 = vpop.permute.xlu0 %2190
  %2193 = vset.pattern.permute.xlu0 5
  %2194 = vperm.xlu0 %2193, %v118
  %v2195 = vpop.permute.xlu0 %2194
  %2197 = vset.pattern.permute.xlu0 5
  %2198 = vperm.xlu0 %2197, %v119
  %v2199 = vpop.permute.xlu0 %2198
  %2201 = vset.pattern.permute.xlu0 5
  %2202 = vperm.xlu0 %2201, %v120
  %v2203 = vpop.permute.xlu0 %2202
  %2205 = vset.pattern.permute.xlu0 5
  %2206 = vperm.xlu0 %2205, %v121
  %v2207 = vpop.permute.xlu0 %2206
  %2209 = vset.pattern.permute.xlu0 5
  %2210 = vperm.xlu0 %2209, %v122
  %v2211 = vpop.permute.xlu0 %2210
  %2213 = vset.pattern.permute.xlu0 5
  %2214 = vperm.xlu0 %2213, %v123
  %v2215 = vpop.permute.xlu0 %2214
  %2217 = vset.pattern.permute.xlu0 5
  %2218 = vperm.xlu0 %2217, %v124
  %v2219 = vpop.permute.xlu0 %2218
  %2221 = vset.pattern.permute.xlu0 5
  %2222 = vperm.xlu0 %2221, %v125
  %v2223 = vpop.permute.xlu0 %2222
  %2225 = vset.pattern.permute.xlu0 5
  %2226 = vperm.xlu0 %2225, %v126
  %v2227 = vpop.permute.xlu0 %2226
  %2229 = vset.pattern.permute.xlu0 5
  %2230 = vperm.xlu0 %2229, %v127
  %v2231 = vpop.permute.xlu0 %2230
  %2233 = vset.pattern.permute.xlu0 5
  %2234 = vperm.xlu0 %2233, %v128
  %v2235 = vpop.permute.xlu0 %2234
  %2237 = vset.pattern.permute.xlu0 5
  %2238 = vperm.xlu0 %2237, %v129
  %v2239 = vpop.permute.xlu0 %2238
  %2241 = vset.pattern.permute.xlu0 5
  %2242 = vperm.xlu0 %2241, %v130
  %v2243 = vpop.permute.xlu0 %2242
  %v2245 = vmul.f32 %v2099, %v2023
  %v2246 = vmul.f32 %v2099, %v2024
  %v2247 = vmul.f32 %v2103, %v2025
  %v2248 = vmul.f32 %v2103, %v2026
  %v2249 = vmul.f32 %v2107, %v2027
  %v2250 = vmul.f32 %v2107, %v2028
  %v2251 = vmul.f32 %v2111, %v2029
  %v2252 = vmul.f32 %v2111, %v2030
  %v2253 = vmul.f32 %v2115, %v2031
  %v2254 = vmul.f32 %v2115, %v2032
  %v2255 = vmul.f32 %v2119, %v2033
  %v2256 = vmul.f32 %v2119, %v2034
  %v2257 = vmul.f32 %v2123, %v2035
  %v2258 = vmul.f32 %v2123, %v2036
  %v2259 = vmul.f32 %v2127, %v2037
  %v2260 = vmul.f32 %v2127, %v2038
  %v2261 = vmul.f32 %v2131, %v2039
  %v2262 = vmul.f32 %v2131, %v2040
  %v2263 = vmul.f32 %v2135, %v2041
  %v2264 = vmul.f32 %v2135, %v2042
  %v2265 = vmul.f32 %v2139, %v2043
  %v2266 = vmul.f32 %v2139, %v2044
  %v2267 = vmul.f32 %v2143, %v2045
  %v2268 = vmul.f32 %v2143, %v2046
  %v2269 = vmul.f32 %v2147, %v2047
  %v2270 = vmul.f32 %v2147, %v2048
  %v2271 = vmul.f32 %v2151, %v2049
  %v2272 = vmul.f32 %v2151, %v2050
  %v2273 = vmul.f32 %v2155, %v2051
  %v2274 = vmul.f32 %v2155, %v2052
  %v2275 = vmul.f32 %v2159, %v2053
  %v2276 = vmul.f32 %v2159, %v2054
  %v2277 = vmul.f32 %v2163, %v2055
  %v2278 = vmul.f32 %v2163, %v2056
  %v2279 = vmul.f32 %v2167, %v2057
  %v2280 = vmul.f32 %v2167, %v2058
  %v2281 = vmul.f32 %v2171, %v2059
  %v2282 = vmul.f32 %v2171, %v2060
  %v2283 = vmul.f32 %v2175, %v2061
  %v2284 = vmul.f32 %v2175, %v2062
  %v2285 = vmul.f32 %v2179, %v2063
  %v2286 = vmul.f32 %v2179, %v2064
  %v2287 = vmul.f32 %v2183, %v2065
  %v2288 = vmul.f32 %v2183, %v2066
  %v2289 = vmul.f32 %v2187, %v2067
  %v2290 = vmul.f32 %v2187, %v2068
  %v2291 = vmul.f32 %v2191, %v2069
  %v2292 = vmul.f32 %v2191, %v2070
  %v2293 = vmul.f32 %v2195, %v2071
  %v2294 = vmul.f32 %v2195, %v2072
  %v2295 = vmul.f32 %v2199, %v2073
  %v2296 = vmul.f32 %v2199, %v2074
  %v2297 = vmul.f32 %v2203, %v2075
  %v2298 = vmul.f32 %v2203, %v2076
  %v2299 = vmul.f32 %v2207, %v2077
  %v2300 = vmul.f32 %v2207, %v2078
  %v2301 = vmul.f32 %v2211, %v2079
  %v2302 = vmul.f32 %v2211, %v2080
  %v2303 = vmul.f32 %v2215, %v2081
  %v2304 = vmul.f32 %v2215, %v2082
  %v2305 = vmul.f32 %v2219, %v2083
  %v2306 = vmul.f32 %v2219, %v2084
  %v2307 = vmul.f32 %v2223, %v2085
  %v2308 = vmul.f32 %v2223, %v2086
  %v2309 = vmul.f32 %v2227, %v2087
  %v2310 = vmul.f32 %v2227, %v2088
  %v2311 = vmul.f32 %v2231, %v2089
  %v2312 = vmul.f32 %v2231, %v2090
  %v2313 = vmul.f32 %v2235, %v2091
  %v2314 = vmul.f32 %v2235, %v2092
  %v2315 = vmul.f32 %v2239, %v2093
  %v2316 = vmul.f32 %v2239, %v2094
  %v2317 = vmul.f32 %v2243, %v2095
  %v2318 = vmul.f32 %v2243, %v2096
  %v2319 = vadd.f32 %v1948, %v2245
  %v2320 = vadd.f32 %v1949, %v2246
  %v2321 = vadd.f32 %v1950, %v2247
  %v2322 = vadd.f32 %v1951, %v2248
  %v2323 = vadd.f32 %v1952, %v2249
  %v2324 = vadd.f32 %v1953, %v2250
  %v2325 = vadd.f32 %v1954, %v2251
  %v2326 = vadd.f32 %v1955, %v2252
  %v2327 = vadd.f32 %v1956, %v2253
  %v2328 = vadd.f32 %v1957, %v2254
  %v2329 = vadd.f32 %v1958, %v2255
  %v2330 = vadd.f32 %v1959, %v2256
  %v2331 = vadd.f32 %v1960, %v2257
  %v2332 = vadd.f32 %v1961, %v2258
  %v2333 = vadd.f32 %v1962, %v2259
  %v2334 = vadd.f32 %v1963, %v2260
  %v2335 = vadd.f32 %v1964, %v2261
  %v2336 = vadd.f32 %v1965, %v2262
  %v2337 = vadd.f32 %v1966, %v2263
  %v2338 = vadd.f32 %v1967, %v2264
  %v2339 = vadd.f32 %v1968, %v2265
  %v2340 = vadd.f32 %v1969, %v2266
  %v2341 = vadd.f32 %v1970, %v2267
  %v2342 = vadd.f32 %v1971, %v2268
  %v2343 = vadd.f32 %v1972, %v2269
  %v2344 = vadd.f32 %v1973, %v2270
  %v2345 = vadd.f32 %v1974, %v2271
  %v2346 = vadd.f32 %v1975, %v2272
  %v2347 = vadd.f32 %v1976, %v2273
  %v2348 = vadd.f32 %v1977, %v2274
  %v2349 = vadd.f32 %v1978, %v2275
  %v2350 = vadd.f32 %v1979, %v2276
  %v2351 = vadd.f32 %v1980, %v2277
  %v2352 = vadd.f32 %v1981, %v2278
  %v2353 = vadd.f32 %v1982, %v2279
  %v2354 = vadd.f32 %v1983, %v2280
  %v2355 = vadd.f32 %v1984, %v2281
  %v2356 = vadd.f32 %v1985, %v2282
  %v2357 = vadd.f32 %v1986, %v2283
  %v2358 = vadd.f32 %v1987, %v2284
  %v2359 = vadd.f32 %v1988, %v2285
  %v2360 = vadd.f32 %v1989, %v2286
  %v2361 = vadd.f32 %v1990, %v2287
  %v2362 = vadd.f32 %v1991, %v2288
  %v2363 = vadd.f32 %v1992, %v2289
  %v2364 = vadd.f32 %v1993, %v2290
  %v2365 = vadd.f32 %v1994, %v2291
  %v2366 = vadd.f32 %v1995, %v2292
  %v2367 = vadd.f32 %v1996, %v2293
  %v2368 = vadd.f32 %v1997, %v2294
  %v2369 = vadd.f32 %v1998, %v2295
  %v2370 = vadd.f32 %v1999, %v2296
  %v2371 = vadd.f32 %v2000, %v2297
  %v2372 = vadd.f32 %v2001, %v2298
  %v2373 = vadd.f32 %v2002, %v2299
  %v2374 = vadd.f32 %v2003, %v2300
  %v2375 = vadd.f32 %v2004, %v2301
  %v2376 = vadd.f32 %v2005, %v2302
  %v2377 = vadd.f32 %v2006, %v2303
  %v2378 = vadd.f32 %v2007, %v2304
  %v2379 = vadd.f32 %v2008, %v2305
  %v2380 = vadd.f32 %v2009, %v2306
  %v2381 = vadd.f32 %v2010, %v2307
  %v2382 = vadd.f32 %v2011, %v2308
  %v2383 = vadd.f32 %v2012, %v2309
  %v2384 = vadd.f32 %v2013, %v2310
  %v2385 = vadd.f32 %v2014, %v2311
  %v2386 = vadd.f32 %v2015, %v2312
  %v2387 = vadd.f32 %v2016, %v2313
  %v2388 = vadd.f32 %v2017, %v2314
  %v2389 = vadd.f32 %v2018, %v2315
  %v2390 = vadd.f32 %v2019, %v2316
  %v2391 = vadd.f32 %v2020, %v2317
  %v2392 = vadd.f32 %v2021, %v2318
  %s2393 = scalar_lea.vmem %s1, 3552
  %v2394 = vld [vmem:[%s2393] sm:$0xff]
  %v2395 = vld [vmem:[%s2393 + $0x8] sm:$0xff]
  %v2396 = vld [vmem:[%s2393 + $0x10] sm:$0xff]
  %v2397 = vld [vmem:[%s2393 + $0x18] sm:$0xff]
  %v2398 = vld [vmem:[%s2393 + $0x20] sm:$0xff]
  %v2399 = vld [vmem:[%s2393 + $0x28] sm:$0xff]
  %v2400 = vld [vmem:[%s2393 + $0x30] sm:$0xff]
  %v2401 = vld [vmem:[%s2393 + $0x38] sm:$0xff]
  %v2402 = vld [vmem:[%s2393 + $0x40] sm:$0xff]
  %v2403 = vld [vmem:[%s2393 + $0x48] sm:$0xff]
  %v2404 = vld [vmem:[%s2393 + $0x50] sm:$0xff]
  %v2405 = vld [vmem:[%s2393 + $0x58] sm:$0xff]
  %v2406 = vld [vmem:[%s2393 + $0x60] sm:$0xff]
  %v2407 = vld [vmem:[%s2393 + $0x68] sm:$0xff]
  %v2408 = vld [vmem:[%s2393 + $0x70] sm:$0xff]
  %v2409 = vld [vmem:[%s2393 + $0x78] sm:$0xff]
  %v2410 = vld [vmem:[%s2393 + $0x80] sm:$0xff]
  %v2411 = vld [vmem:[%s2393 + $0x88] sm:$0xff]
  %v2412 = vld [vmem:[%s2393 + $0x90] sm:$0xff]
  %v2413 = vld [vmem:[%s2393 + $0x98] sm:$0xff]
  %v2414 = vld [vmem:[%s2393 + $0xa0] sm:$0xff]
  %v2415 = vld [vmem:[%s2393 + $0xa8] sm:$0xff]
  %v2416 = vld [vmem:[%s2393 + $0xb0] sm:$0xff]
  %v2417 = vld [vmem:[%s2393 + $0xb8] sm:$0xff]
  %v2418 = vld [vmem:[%s2393 + $0xc0] sm:$0xff]
  %v2419 = vld [vmem:[%s2393 + $0xc8] sm:$0xff]
  %v2420 = vld [vmem:[%s2393 + $0xd0] sm:$0xff]
  %v2421 = vld [vmem:[%s2393 + $0xd8] sm:$0xff]
  %v2422 = vld [vmem:[%s2393 + $0xe0] sm:$0xff]
  %v2423 = vld [vmem:[%s2393 + $0xe8] sm:$0xff]
  %v2424 = vld [vmem:[%s2393 + $0xf0] sm:$0xff]
  %v2425 = vld [vmem:[%s2393 + $0xf8] sm:$0xff]
  %v2426 = vld [vmem:[%s2393 + $0x100] sm:$0xff]
  %v2427 = vld [vmem:[%s2393 + $0x108] sm:$0xff]
  %v2428 = vld [vmem:[%s2393 + $0x110] sm:$0xff]
  %v2429 = vld [vmem:[%s2393 + $0x118] sm:$0xff]
  %v2430 = vld [vmem:[%s2393 + $0x120] sm:$0xff]
  %v2431 = vld [vmem:[%s2393 + $0x128] sm:$0xff]
  %v2432 = vld [vmem:[%s2393 + $0x130] sm:$0xff]
  %v2433 = vld [vmem:[%s2393 + $0x138] sm:$0xff]
  %v2434 = vld [vmem:[%s2393 + $0x140] sm:$0xff]
  %v2435 = vld [vmem:[%s2393 + $0x148] sm:$0xff]
  %v2436 = vld [vmem:[%s2393 + $0x150] sm:$0xff]
  %v2437 = vld [vmem:[%s2393 + $0x158] sm:$0xff]
  %v2438 = vld [vmem:[%s2393 + $0x160] sm:$0xff]
  %v2439 = vld [vmem:[%s2393 + $0x168] sm:$0xff]
  %v2440 = vld [vmem:[%s2393 + $0x170] sm:$0xff]
  %v2441 = vld [vmem:[%s2393 + $0x178] sm:$0xff]
  %v2442 = vld [vmem:[%s2393 + $0x180] sm:$0xff]
  %v2443 = vld [vmem:[%s2393 + $0x188] sm:$0xff]
  %v2444 = vld [vmem:[%s2393 + $0x190] sm:$0xff]
  %v2445 = vld [vmem:[%s2393 + $0x198] sm:$0xff]
  %v2446 = vld [vmem:[%s2393 + $0x1a0] sm:$0xff]
  %v2447 = vld [vmem:[%s2393 + $0x1a8] sm:$0xff]
  %v2448 = vld [vmem:[%s2393 + $0x1b0] sm:$0xff]
  %v2449 = vld [vmem:[%s2393 + $0x1b8] sm:$0xff]
  %v2450 = vld [vmem:[%s2393 + $0x1c0] sm:$0xff]
  %v2451 = vld [vmem:[%s2393 + $0x1c8] sm:$0xff]
  %v2452 = vld [vmem:[%s2393 + $0x1d0] sm:$0xff]
  %v2453 = vld [vmem:[%s2393 + $0x1d8] sm:$0xff]
  %v2454 = vld [vmem:[%s2393 + $0x1e0] sm:$0xff]
  %v2455 = vld [vmem:[%s2393 + $0x1e8] sm:$0xff]
  %v2456 = vld [vmem:[%s2393 + $0x1f0] sm:$0xff]
  %v2457 = vld [vmem:[%s2393 + $0x1f8] sm:$0xff]
  %v2458 = vld [vmem:[%s2393 + $0x200] sm:$0xff]
  %v2459 = vld [vmem:[%s2393 + $0x208] sm:$0xff]
  %v2460 = vld [vmem:[%s2393 + $0x210] sm:$0xff]
  %v2461 = vld [vmem:[%s2393 + $0x218] sm:$0xff]
  %v2462 = vld [vmem:[%s2393 + $0x220] sm:$0xff]
  %v2463 = vld [vmem:[%s2393 + $0x228] sm:$0xff]
  %v2464 = vld [vmem:[%s2393 + $0x230] sm:$0xff]
  %v2465 = vld [vmem:[%s2393 + $0x238] sm:$0xff]
  %v2466 = vld [vmem:[%s2393 + $0x240] sm:$0xff]
  %v2467 = vld [vmem:[%s2393 + $0x248] sm:$0xff]
  %2468 = vset.pattern.permute.xlu0 6
  %2469 = vperm.xlu0 %2468, %v94
  %v2470 = vpop.permute.xlu0 %2469
  %2472 = vset.pattern.permute.xlu0 6
  %2473 = vperm.xlu0 %2472, %v95
  %v2474 = vpop.permute.xlu0 %2473
  %2476 = vset.pattern.permute.xlu0 6
  %2477 = vperm.xlu0 %2476, %v96
  %v2478 = vpop.permute.xlu0 %2477
  %2480 = vset.pattern.permute.xlu0 6
  %2481 = vperm.xlu0 %2480, %v97
  %v2482 = vpop.permute.xlu0 %2481
  %2484 = vset.pattern.permute.xlu0 6
  %2485 = vperm.xlu0 %2484, %v98
  %v2486 = vpop.permute.xlu0 %2485
  %2488 = vset.pattern.permute.xlu0 6
  %2489 = vperm.xlu0 %2488, %v99
  %v2490 = vpop.permute.xlu0 %2489
  %2492 = vset.pattern.permute.xlu0 6
  %2493 = vperm.xlu0 %2492, %v100
  %v2494 = vpop.permute.xlu0 %2493
  %2496 = vset.pattern.permute.xlu0 6
  %2497 = vperm.xlu0 %2496, %v101
  %v2498 = vpop.permute.xlu0 %2497
  %2500 = vset.pattern.permute.xlu0 6
  %2501 = vperm.xlu0 %2500, %v102
  %v2502 = vpop.permute.xlu0 %2501
  %2504 = vset.pattern.permute.xlu0 6
  %2505 = vperm.xlu0 %2504, %v103
  %v2506 = vpop.permute.xlu0 %2505
  %2508 = vset.pattern.permute.xlu0 6
  %2509 = vperm.xlu0 %2508, %v104
  %v2510 = vpop.permute.xlu0 %2509
  %2512 = vset.pattern.permute.xlu0 6
  %2513 = vperm.xlu0 %2512, %v105
  %v2514 = vpop.permute.xlu0 %2513
  %2516 = vset.pattern.permute.xlu0 6
  %2517 = vperm.xlu0 %2516, %v106
  %v2518 = vpop.permute.xlu0 %2517
  %2520 = vset.pattern.permute.xlu0 6
  %2521 = vperm.xlu0 %2520, %v107
  %v2522 = vpop.permute.xlu0 %2521
  %2524 = vset.pattern.permute.xlu0 6
  %2525 = vperm.xlu0 %2524, %v108
  %v2526 = vpop.permute.xlu0 %2525
  %2528 = vset.pattern.permute.xlu0 6
  %2529 = vperm.xlu0 %2528, %v109
  %v2530 = vpop.permute.xlu0 %2529
  %2532 = vset.pattern.permute.xlu0 6
  %2533 = vperm.xlu0 %2532, %v110
  %v2534 = vpop.permute.xlu0 %2533
  %2536 = vset.pattern.permute.xlu0 6
  %2537 = vperm.xlu0 %2536, %v111
  %v2538 = vpop.permute.xlu0 %2537
  %2540 = vset.pattern.permute.xlu0 6
  %2541 = vperm.xlu0 %2540, %v112
  %v2542 = vpop.permute.xlu0 %2541
  %2544 = vset.pattern.permute.xlu0 6
  %2545 = vperm.xlu0 %2544, %v113
  %v2546 = vpop.permute.xlu0 %2545
  %2548 = vset.pattern.permute.xlu0 6
  %2549 = vperm.xlu0 %2548, %v114
  %v2550 = vpop.permute.xlu0 %2549
  %2552 = vset.pattern.permute.xlu0 6
  %2553 = vperm.xlu0 %2552, %v115
  %v2554 = vpop.permute.xlu0 %2553
  %2556 = vset.pattern.permute.xlu0 6
  %2557 = vperm.xlu0 %2556, %v116
  %v2558 = vpop.permute.xlu0 %2557
  %2560 = vset.pattern.permute.xlu0 6
  %2561 = vperm.xlu0 %2560, %v117
  %v2562 = vpop.permute.xlu0 %2561
  %2564 = vset.pattern.permute.xlu0 6
  %2565 = vperm.xlu0 %2564, %v118
  %v2566 = vpop.permute.xlu0 %2565
  %2568 = vset.pattern.permute.xlu0 6
  %2569 = vperm.xlu0 %2568, %v119
  %v2570 = vpop.permute.xlu0 %2569
  %2572 = vset.pattern.permute.xlu0 6
  %2573 = vperm.xlu0 %2572, %v120
  %v2574 = vpop.permute.xlu0 %2573
  %2576 = vset.pattern.permute.xlu0 6
  %2577 = vperm.xlu0 %2576, %v121
  %v2578 = vpop.permute.xlu0 %2577
  %2580 = vset.pattern.permute.xlu0 6
  %2581 = vperm.xlu0 %2580, %v122
  %v2582 = vpop.permute.xlu0 %2581
  %2584 = vset.pattern.permute.xlu0 6
  %2585 = vperm.xlu0 %2584, %v123
  %v2586 = vpop.permute.xlu0 %2585
  %2588 = vset.pattern.permute.xlu0 6
  %2589 = vperm.xlu0 %2588, %v124
  %v2590 = vpop.permute.xlu0 %2589
  %2592 = vset.pattern.permute.xlu0 6
  %2593 = vperm.xlu0 %2592, %v125
  %v2594 = vpop.permute.xlu0 %2593
  %2596 = vset.pattern.permute.xlu0 6
  %2597 = vperm.xlu0 %2596, %v126
  %v2598 = vpop.permute.xlu0 %2597
  %2600 = vset.pattern.permute.xlu0 6
  %2601 = vperm.xlu0 %2600, %v127
  %v2602 = vpop.permute.xlu0 %2601
  %2604 = vset.pattern.permute.xlu0 6
  %2605 = vperm.xlu0 %2604, %v128
  %v2606 = vpop.permute.xlu0 %2605
  %2608 = vset.pattern.permute.xlu0 6
  %2609 = vperm.xlu0 %2608, %v129
  %v2610 = vpop.permute.xlu0 %2609
  %2612 = vset.pattern.permute.xlu0 6
  %2613 = vperm.xlu0 %2612, %v130
  %v2614 = vpop.permute.xlu0 %2613
  %v2616 = vmul.f32 %v2470, %v2394
  %v2617 = vmul.f32 %v2470, %v2395
  %v2618 = vmul.f32 %v2474, %v2396
  %v2619 = vmul.f32 %v2474, %v2397
  %v2620 = vmul.f32 %v2478, %v2398
  %v2621 = vmul.f32 %v2478, %v2399
  %v2622 = vmul.f32 %v2482, %v2400
  %v2623 = vmul.f32 %v2482, %v2401
  %v2624 = vmul.f32 %v2486, %v2402
  %v2625 = vmul.f32 %v2486, %v2403
  %v2626 = vmul.f32 %v2490, %v2404
  %v2627 = vmul.f32 %v2490, %v2405
  %v2628 = vmul.f32 %v2494, %v2406
  %v2629 = vmul.f32 %v2494, %v2407
  %v2630 = vmul.f32 %v2498, %v2408
  %v2631 = vmul.f32 %v2498, %v2409
  %v2632 = vmul.f32 %v2502, %v2410
  %v2633 = vmul.f32 %v2502, %v2411
  %v2634 = vmul.f32 %v2506, %v2412
  %v2635 = vmul.f32 %v2506, %v2413
  %v2636 = vmul.f32 %v2510, %v2414
  %v2637 = vmul.f32 %v2510, %v2415
  %v2638 = vmul.f32 %v2514, %v2416
  %v2639 = vmul.f32 %v2514, %v2417
  %v2640 = vmul.f32 %v2518, %v2418
  %v2641 = vmul.f32 %v2518, %v2419
  %v2642 = vmul.f32 %v2522, %v2420
  %v2643 = vmul.f32 %v2522, %v2421
  %v2644 = vmul.f32 %v2526, %v2422
  %v2645 = vmul.f32 %v2526, %v2423
  %v2646 = vmul.f32 %v2530, %v2424
  %v2647 = vmul.f32 %v2530, %v2425
  %v2648 = vmul.f32 %v2534, %v2426
  %v2649 = vmul.f32 %v2534, %v2427
  %v2650 = vmul.f32 %v2538, %v2428
  %v2651 = vmul.f32 %v2538, %v2429
  %v2652 = vmul.f32 %v2542, %v2430
  %v2653 = vmul.f32 %v2542, %v2431
  %v2654 = vmul.f32 %v2546, %v2432
  %v2655 = vmul.f32 %v2546, %v2433
  %v2656 = vmul.f32 %v2550, %v2434
  %v2657 = vmul.f32 %v2550, %v2435
  %v2658 = vmul.f32 %v2554, %v2436
  %v2659 = vmul.f32 %v2554, %v2437
  %v2660 = vmul.f32 %v2558, %v2438
  %v2661 = vmul.f32 %v2558, %v2439
  %v2662 = vmul.f32 %v2562, %v2440
  %v2663 = vmul.f32 %v2562, %v2441
  %v2664 = vmul.f32 %v2566, %v2442
  %v2665 = vmul.f32 %v2566, %v2443
  %v2666 = vmul.f32 %v2570, %v2444
  %v2667 = vmul.f32 %v2570, %v2445
  %v2668 = vmul.f32 %v2574, %v2446
  %v2669 = vmul.f32 %v2574, %v2447
  %v2670 = vmul.f32 %v2578, %v2448
  %v2671 = vmul.f32 %v2578, %v2449
  %v2672 = vmul.f32 %v2582, %v2450
  %v2673 = vmul.f32 %v2582, %v2451
  %v2674 = vmul.f32 %v2586, %v2452
  %v2675 = vmul.f32 %v2586, %v2453
  %v2676 = vmul.f32 %v2590, %v2454
  %v2677 = vmul.f32 %v2590, %v2455
  %v2678 = vmul.f32 %v2594, %v2456
  %v2679 = vmul.f32 %v2594, %v2457
  %v2680 = vmul.f32 %v2598, %v2458
  %v2681 = vmul.f32 %v2598, %v2459
  %v2682 = vmul.f32 %v2602, %v2460
  %v2683 = vmul.f32 %v2602, %v2461
  %v2684 = vmul.f32 %v2606, %v2462
  %v2685 = vmul.f32 %v2606, %v2463
  %v2686 = vmul.f32 %v2610, %v2464
  %v2687 = vmul.f32 %v2610, %v2465
  %v2688 = vmul.f32 %v2614, %v2466
  %v2689 = vmul.f32 %v2614, %v2467
  %v2690 = vadd.f32 %v2319, %v2616
  %v2691 = vadd.f32 %v2320, %v2617
  %v2692 = vadd.f32 %v2321, %v2618
  %v2693 = vadd.f32 %v2322, %v2619
  %v2694 = vadd.f32 %v2323, %v2620
  %v2695 = vadd.f32 %v2324, %v2621
  %v2696 = vadd.f32 %v2325, %v2622
  %v2697 = vadd.f32 %v2326, %v2623
  %v2698 = vadd.f32 %v2327, %v2624
  %v2699 = vadd.f32 %v2328, %v2625
  %v2700 = vadd.f32 %v2329, %v2626
  %v2701 = vadd.f32 %v2330, %v2627
  %v2702 = vadd.f32 %v2331, %v2628
  %v2703 = vadd.f32 %v2332, %v2629
  %v2704 = vadd.f32 %v2333, %v2630
  %v2705 = vadd.f32 %v2334, %v2631
  %v2706 = vadd.f32 %v2335, %v2632
  %v2707 = vadd.f32 %v2336, %v2633
  %v2708 = vadd.f32 %v2337, %v2634
  %v2709 = vadd.f32 %v2338, %v2635
  %v2710 = vadd.f32 %v2339, %v2636
  %v2711 = vadd.f32 %v2340, %v2637
  %v2712 = vadd.f32 %v2341, %v2638
  %v2713 = vadd.f32 %v2342, %v2639
  %v2714 = vadd.f32 %v2343, %v2640
  %v2715 = vadd.f32 %v2344, %v2641
  %v2716 = vadd.f32 %v2345, %v2642
  %v2717 = vadd.f32 %v2346, %v2643
  %v2718 = vadd.f32 %v2347, %v2644
  %v2719 = vadd.f32 %v2348, %v2645
  %v2720 = vadd.f32 %v2349, %v2646
  %v2721 = vadd.f32 %v2350, %v2647
  %v2722 = vadd.f32 %v2351, %v2648
  %v2723 = vadd.f32 %v2352, %v2649
  %v2724 = vadd.f32 %v2353, %v2650
  %v2725 = vadd.f32 %v2354, %v2651
  %v2726 = vadd.f32 %v2355, %v2652
  %v2727 = vadd.f32 %v2356, %v2653
  %v2728 = vadd.f32 %v2357, %v2654
  %v2729 = vadd.f32 %v2358, %v2655
  %v2730 = vadd.f32 %v2359, %v2656
  %v2731 = vadd.f32 %v2360, %v2657
  %v2732 = vadd.f32 %v2361, %v2658
  %v2733 = vadd.f32 %v2362, %v2659
  %v2734 = vadd.f32 %v2363, %v2660
  %v2735 = vadd.f32 %v2364, %v2661
  %v2736 = vadd.f32 %v2365, %v2662
  %v2737 = vadd.f32 %v2366, %v2663
  %v2738 = vadd.f32 %v2367, %v2664
  %v2739 = vadd.f32 %v2368, %v2665
  %v2740 = vadd.f32 %v2369, %v2666
  %v2741 = vadd.f32 %v2370, %v2667
  %v2742 = vadd.f32 %v2371, %v2668
  %v2743 = vadd.f32 %v2372, %v2669
  %v2744 = vadd.f32 %v2373, %v2670
  %v2745 = vadd.f32 %v2374, %v2671
  %v2746 = vadd.f32 %v2375, %v2672
  %v2747 = vadd.f32 %v2376, %v2673
  %v2748 = vadd.f32 %v2377, %v2674
  %v2749 = vadd.f32 %v2378, %v2675
  %v2750 = vadd.f32 %v2379, %v2676
  %v2751 = vadd.f32 %v2380, %v2677
  %v2752 = vadd.f32 %v2381, %v2678
  %v2753 = vadd.f32 %v2382, %v2679
  %v2754 = vadd.f32 %v2383, %v2680
  %v2755 = vadd.f32 %v2384, %v2681
  %v2756 = vadd.f32 %v2385, %v2682
  %v2757 = vadd.f32 %v2386, %v2683
  %v2758 = vadd.f32 %v2387, %v2684
  %v2759 = vadd.f32 %v2388, %v2685
  %v2760 = vadd.f32 %v2389, %v2686
  %v2761 = vadd.f32 %v2390, %v2687
  %v2762 = vadd.f32 %v2391, %v2688
  %v2763 = vadd.f32 %v2392, %v2689
  %s2764 = scalar_lea.vmem %s1, 4144
  %v2765 = vld [vmem:[%s2764] sm:$0xff]
  %v2766 = vld [vmem:[%s2764 + $0x8] sm:$0xff]
  %v2767 = vld [vmem:[%s2764 + $0x10] sm:$0xff]
  %v2768 = vld [vmem:[%s2764 + $0x18] sm:$0xff]
  %v2769 = vld [vmem:[%s2764 + $0x20] sm:$0xff]
  %v2770 = vld [vmem:[%s2764 + $0x28] sm:$0xff]
  %v2771 = vld [vmem:[%s2764 + $0x30] sm:$0xff]
  %v2772 = vld [vmem:[%s2764 + $0x38] sm:$0xff]
  %v2773 = vld [vmem:[%s2764 + $0x40] sm:$0xff]
  %v2774 = vld [vmem:[%s2764 + $0x48] sm:$0xff]
  %v2775 = vld [vmem:[%s2764 + $0x50] sm:$0xff]
  %v2776 = vld [vmem:[%s2764 + $0x58] sm:$0xff]
  %v2777 = vld [vmem:[%s2764 + $0x60] sm:$0xff]
  %v2778 = vld [vmem:[%s2764 + $0x68] sm:$0xff]
  %v2779 = vld [vmem:[%s2764 + $0x70] sm:$0xff]
  %v2780 = vld [vmem:[%s2764 + $0x78] sm:$0xff]
  %v2781 = vld [vmem:[%s2764 + $0x80] sm:$0xff]
  %v2782 = vld [vmem:[%s2764 + $0x88] sm:$0xff]
  %v2783 = vld [vmem:[%s2764 + $0x90] sm:$0xff]
  %v2784 = vld [vmem:[%s2764 + $0x98] sm:$0xff]
  %v2785 = vld [vmem:[%s2764 + $0xa0] sm:$0xff]
  %v2786 = vld [vmem:[%s2764 + $0xa8] sm:$0xff]
  %v2787 = vld [vmem:[%s2764 + $0xb0] sm:$0xff]
  %v2788 = vld [vmem:[%s2764 + $0xb8] sm:$0xff]
  %v2789 = vld [vmem:[%s2764 + $0xc0] sm:$0xff]
  %v2790 = vld [vmem:[%s2764 + $0xc8] sm:$0xff]
  %v2791 = vld [vmem:[%s2764 + $0xd0] sm:$0xff]
  %v2792 = vld [vmem:[%s2764 + $0xd8] sm:$0xff]
  %v2793 = vld [vmem:[%s2764 + $0xe0] sm:$0xff]
  %v2794 = vld [vmem:[%s2764 + $0xe8] sm:$0xff]
  %v2795 = vld [vmem:[%s2764 + $0xf0] sm:$0xff]
  %v2796 = vld [vmem:[%s2764 + $0xf8] sm:$0xff]
  %v2797 = vld [vmem:[%s2764 + $0x100] sm:$0xff]
  %v2798 = vld [vmem:[%s2764 + $0x108] sm:$0xff]
  %v2799 = vld [vmem:[%s2764 + $0x110] sm:$0xff]
  %v2800 = vld [vmem:[%s2764 + $0x118] sm:$0xff]
  %v2801 = vld [vmem:[%s2764 + $0x120] sm:$0xff]
  %v2802 = vld [vmem:[%s2764 + $0x128] sm:$0xff]
  %v2803 = vld [vmem:[%s2764 + $0x130] sm:$0xff]
  %v2804 = vld [vmem:[%s2764 + $0x138] sm:$0xff]
  %v2805 = vld [vmem:[%s2764 + $0x140] sm:$0xff]
  %v2806 = vld [vmem:[%s2764 + $0x148] sm:$0xff]
  %v2807 = vld [vmem:[%s2764 + $0x150] sm:$0xff]
  %v2808 = vld [vmem:[%s2764 + $0x158] sm:$0xff]
  %v2809 = vld [vmem:[%s2764 + $0x160] sm:$0xff]
  %v2810 = vld [vmem:[%s2764 + $0x168] sm:$0xff]
  %v2811 = vld [vmem:[%s2764 + $0x170] sm:$0xff]
  %v2812 = vld [vmem:[%s2764 + $0x178] sm:$0xff]
  %v2813 = vld [vmem:[%s2764 + $0x180] sm:$0xff]
  %v2814 = vld [vmem:[%s2764 + $0x188] sm:$0xff]
  %v2815 = vld [vmem:[%s2764 + $0x190] sm:$0xff]
  %v2816 = vld [vmem:[%s2764 + $0x198] sm:$0xff]
  %v2817 = vld [vmem:[%s2764 + $0x1a0] sm:$0xff]
  %v2818 = vld [vmem:[%s2764 + $0x1a8] sm:$0xff]
  %v2819 = vld [vmem:[%s2764 + $0x1b0] sm:$0xff]
  %v2820 = vld [vmem:[%s2764 + $0x1b8] sm:$0xff]
  %v2821 = vld [vmem:[%s2764 + $0x1c0] sm:$0xff]
  %v2822 = vld [vmem:[%s2764 + $0x1c8] sm:$0xff]
  %v2823 = vld [vmem:[%s2764 + $0x1d0] sm:$0xff]
  %v2824 = vld [vmem:[%s2764 + $0x1d8] sm:$0xff]
  %v2825 = vld [vmem:[%s2764 + $0x1e0] sm:$0xff]
  %v2826 = vld [vmem:[%s2764 + $0x1e8] sm:$0xff]
  %v2827 = vld [vmem:[%s2764 + $0x1f0] sm:$0xff]
  %v2828 = vld [vmem:[%s2764 + $0x1f8] sm:$0xff]
  %v2829 = vld [vmem:[%s2764 + $0x200] sm:$0xff]
  %v2830 = vld [vmem:[%s2764 + $0x208] sm:$0xff]
  %v2831 = vld [vmem:[%s2764 + $0x210] sm:$0xff]
  %v2832 = vld [vmem:[%s2764 + $0x218] sm:$0xff]
  %v2833 = vld [vmem:[%s2764 + $0x220] sm:$0xff]
  %v2834 = vld [vmem:[%s2764 + $0x228] sm:$0xff]
  %v2835 = vld [vmem:[%s2764 + $0x230] sm:$0xff]
  %v2836 = vld [vmem:[%s2764 + $0x238] sm:$0xff]
  %v2837 = vld [vmem:[%s2764 + $0x240] sm:$0xff]
  %v2838 = vld [vmem:[%s2764 + $0x248] sm:$0xff]
  %2839 = vset.pattern.permute.xlu0 7
  %2840 = vperm.xlu0 %2839, %v94
  %v2841 = vpop.permute.xlu0 %2840
  %2843 = vset.pattern.permute.xlu0 7
  %2844 = vperm.xlu0 %2843, %v95
  %v2845 = vpop.permute.xlu0 %2844
  %2847 = vset.pattern.permute.xlu0 7
  %2848 = vperm.xlu0 %2847, %v96
  %v2849 = vpop.permute.xlu0 %2848
  %2851 = vset.pattern.permute.xlu0 7
  %2852 = vperm.xlu0 %2851, %v97
  %v2853 = vpop.permute.xlu0 %2852
  %2855 = vset.pattern.permute.xlu0 7
  %2856 = vperm.xlu0 %2855, %v98
  %v2857 = vpop.permute.xlu0 %2856
  %2859 = vset.pattern.permute.xlu0 7
  %2860 = vperm.xlu0 %2859, %v99
  %v2861 = vpop.permute.xlu0 %2860
  %2863 = vset.pattern.permute.xlu0 7
  %2864 = vperm.xlu0 %2863, %v100
  %v2865 = vpop.permute.xlu0 %2864
  %2867 = vset.pattern.permute.xlu0 7
  %2868 = vperm.xlu0 %2867, %v101
  %v2869 = vpop.permute.xlu0 %2868
  %2871 = vset.pattern.permute.xlu0 7
  %2872 = vperm.xlu0 %2871, %v102
  %v2873 = vpop.permute.xlu0 %2872
  %2875 = vset.pattern.permute.xlu0 7
  %2876 = vperm.xlu0 %2875, %v103
  %v2877 = vpop.permute.xlu0 %2876
  %2879 = vset.pattern.permute.xlu0 7
  %2880 = vperm.xlu0 %2879, %v104
  %v2881 = vpop.permute.xlu0 %2880
  %2883 = vset.pattern.permute.xlu0 7
  %2884 = vperm.xlu0 %2883, %v105
  %v2885 = vpop.permute.xlu0 %2884
  %2887 = vset.pattern.permute.xlu0 7
  %2888 = vperm.xlu0 %2887, %v106
  %v2889 = vpop.permute.xlu0 %2888
  %2891 = vset.pattern.permute.xlu0 7
  %2892 = vperm.xlu0 %2891, %v107
  %v2893 = vpop.permute.xlu0 %2892
  %2895 = vset.pattern.permute.xlu0 7
  %2896 = vperm.xlu0 %2895, %v108
  %v2897 = vpop.permute.xlu0 %2896
  %2899 = vset.pattern.permute.xlu0 7
  %2900 = vperm.xlu0 %2899, %v109
  %v2901 = vpop.permute.xlu0 %2900
  %2903 = vset.pattern.permute.xlu0 7
  %2904 = vperm.xlu0 %2903, %v110
  %v2905 = vpop.permute.xlu0 %2904
  %2907 = vset.pattern.permute.xlu0 7
  %2908 = vperm.xlu0 %2907, %v111
  %v2909 = vpop.permute.xlu0 %2908
  %2911 = vset.pattern.permute.xlu0 7
  %2912 = vperm.xlu0 %2911, %v112
  %v2913 = vpop.permute.xlu0 %2912
  %2915 = vset.pattern.permute.xlu0 7
  %2916 = vperm.xlu0 %2915, %v113
  %v2917 = vpop.permute.xlu0 %2916
  %2919 = vset.pattern.permute.xlu0 7
  %2920 = vperm.xlu0 %2919, %v114
  %v2921 = vpop.permute.xlu0 %2920
  %2923 = vset.pattern.permute.xlu0 7
  %2924 = vperm.xlu0 %2923, %v115
  %v2925 = vpop.permute.xlu0 %2924
  %2927 = vset.pattern.permute.xlu0 7
  %2928 = vperm.xlu0 %2927, %v116
  %v2929 = vpop.permute.xlu0 %2928
  %2931 = vset.pattern.permute.xlu0 7
  %2932 = vperm.xlu0 %2931, %v117
  %v2933 = vpop.permute.xlu0 %2932
  %2935 = vset.pattern.permute.xlu0 7
  %2936 = vperm.xlu0 %2935, %v118
  %v2937 = vpop.permute.xlu0 %2936
  %2939 = vset.pattern.permute.xlu0 7
  %2940 = vperm.xlu0 %2939, %v119
  %v2941 = vpop.permute.xlu0 %2940
  %2943 = vset.pattern.permute.xlu0 7
  %2944 = vperm.xlu0 %2943, %v120
  %v2945 = vpop.permute.xlu0 %2944
  %2947 = vset.pattern.permute.xlu0 7
  %2948 = vperm.xlu0 %2947, %v121
  %v2949 = vpop.permute.xlu0 %2948
  %2951 = vset.pattern.permute.xlu0 7
  %2952 = vperm.xlu0 %2951, %v122
  %v2953 = vpop.permute.xlu0 %2952
  %2955 = vset.pattern.permute.xlu0 7
  %2956 = vperm.xlu0 %2955, %v123
  %v2957 = vpop.permute.xlu0 %2956
  %2959 = vset.pattern.permute.xlu0 7
  %2960 = vperm.xlu0 %2959, %v124
  %v2961 = vpop.permute.xlu0 %2960
  %2963 = vset.pattern.permute.xlu0 7
  %2964 = vperm.xlu0 %2963, %v125
  %v2965 = vpop.permute.xlu0 %2964
  %2967 = vset.pattern.permute.xlu0 7
  %2968 = vperm.xlu0 %2967, %v126
  %v2969 = vpop.permute.xlu0 %2968
  %2971 = vset.pattern.permute.xlu0 7
  %2972 = vperm.xlu0 %2971, %v127
  %v2973 = vpop.permute.xlu0 %2972
  %2975 = vset.pattern.permute.xlu0 7
  %2976 = vperm.xlu0 %2975, %v128
  %v2977 = vpop.permute.xlu0 %2976
  %2979 = vset.pattern.permute.xlu0 7
  %2980 = vperm.xlu0 %2979, %v129
  %v2981 = vpop.permute.xlu0 %2980
  %2983 = vset.pattern.permute.xlu0 7
  %2984 = vperm.xlu0 %2983, %v130
  %v2985 = vpop.permute.xlu0 %2984
  %v2987 = vmul.f32 %v2841, %v2765
  %v2988 = vmul.f32 %v2841, %v2766
  %v2989 = vmul.f32 %v2845, %v2767
  %v2990 = vmul.f32 %v2845, %v2768
  %v2991 = vmul.f32 %v2849, %v2769
  %v2992 = vmul.f32 %v2849, %v2770
  %v2993 = vmul.f32 %v2853, %v2771
  %v2994 = vmul.f32 %v2853, %v2772
  %v2995 = vmul.f32 %v2857, %v2773
  %v2996 = vmul.f32 %v2857, %v2774
  %v2997 = vmul.f32 %v2861, %v2775
  %v2998 = vmul.f32 %v2861, %v2776
  %v2999 = vmul.f32 %v2865, %v2777
  %v3000 = vmul.f32 %v2865, %v2778
  %v3001 = vmul.f32 %v2869, %v2779
  %v3002 = vmul.f32 %v2869, %v2780
  %v3003 = vmul.f32 %v2873, %v2781
  %v3004 = vmul.f32 %v2873, %v2782
  %v3005 = vmul.f32 %v2877, %v2783
  %v3006 = vmul.f32 %v2877, %v2784
  %v3007 = vmul.f32 %v2881, %v2785
  %v3008 = vmul.f32 %v2881, %v2786
  %v3009 = vmul.f32 %v2885, %v2787
  %v3010 = vmul.f32 %v2885, %v2788
  %v3011 = vmul.f32 %v2889, %v2789
  %v3012 = vmul.f32 %v2889, %v2790
  %v3013 = vmul.f32 %v2893, %v2791
  %v3014 = vmul.f32 %v2893, %v2792
  %v3015 = vmul.f32 %v2897, %v2793
  %v3016 = vmul.f32 %v2897, %v2794
  %v3017 = vmul.f32 %v2901, %v2795
  %v3018 = vmul.f32 %v2901, %v2796
  %v3019 = vmul.f32 %v2905, %v2797
  %v3020 = vmul.f32 %v2905, %v2798
  %v3021 = vmul.f32 %v2909, %v2799
  %v3022 = vmul.f32 %v2909, %v2800
  %v3023 = vmul.f32 %v2913, %v2801
  %v3024 = vmul.f32 %v2913, %v2802
  %v3025 = vmul.f32 %v2917, %v2803
  %v3026 = vmul.f32 %v2917, %v2804
  %v3027 = vmul.f32 %v2921, %v2805
  %v3028 = vmul.f32 %v2921, %v2806
  %v3029 = vmul.f32 %v2925, %v2807
  %v3030 = vmul.f32 %v2925, %v2808
  %v3031 = vmul.f32 %v2929, %v2809
  %v3032 = vmul.f32 %v2929, %v2810
  %v3033 = vmul.f32 %v2933, %v2811
  %v3034 = vmul.f32 %v2933, %v2812
  %v3035 = vmul.f32 %v2937, %v2813
  %v3036 = vmul.f32 %v2937, %v2814
  %v3037 = vmul.f32 %v2941, %v2815
  %v3038 = vmul.f32 %v2941, %v2816
  %v3039 = vmul.f32 %v2945, %v2817
  %v3040 = vmul.f32 %v2945, %v2818
  %v3041 = vmul.f32 %v2949, %v2819
  %v3042 = vmul.f32 %v2949, %v2820
  %v3043 = vmul.f32 %v2953, %v2821
  %v3044 = vmul.f32 %v2953, %v2822
  %v3045 = vmul.f32 %v2957, %v2823
  %v3046 = vmul.f32 %v2957, %v2824
  %v3047 = vmul.f32 %v2961, %v2825
  %v3048 = vmul.f32 %v2961, %v2826
  %v3049 = vmul.f32 %v2965, %v2827
  %v3050 = vmul.f32 %v2965, %v2828
  %v3051 = vmul.f32 %v2969, %v2829
  %v3052 = vmul.f32 %v2969, %v2830
  %v3053 = vmul.f32 %v2973, %v2831
  %v3054 = vmul.f32 %v2973, %v2832
  %v3055 = vmul.f32 %v2977, %v2833
  %v3056 = vmul.f32 %v2977, %v2834
  %v3057 = vmul.f32 %v2981, %v2835
  %v3058 = vmul.f32 %v2981, %v2836
  %v3059 = vmul.f32 %v2985, %v2837
  %v3060 = vmul.f32 %v2985, %v2838
  %v3061 = vadd.f32 %v2690, %v2987
  %v3062 = vadd.f32 %v2691, %v2988
  %v3063 = vadd.f32 %v2692, %v2989
  %v3064 = vadd.f32 %v2693, %v2990
  %v3065 = vadd.f32 %v2694, %v2991
  %v3066 = vadd.f32 %v2695, %v2992
  %v3067 = vadd.f32 %v2696, %v2993
  %v3068 = vadd.f32 %v2697, %v2994
  %v3069 = vadd.f32 %v2698, %v2995
  %v3070 = vadd.f32 %v2699, %v2996
  %v3071 = vadd.f32 %v2700, %v2997
  %v3072 = vadd.f32 %v2701, %v2998
  %v3073 = vadd.f32 %v2702, %v2999
  %v3074 = vadd.f32 %v2703, %v3000
  %v3075 = vadd.f32 %v2704, %v3001
  %v3076 = vadd.f32 %v2705, %v3002
  %v3077 = vadd.f32 %v2706, %v3003
  %v3078 = vadd.f32 %v2707, %v3004
  %v3079 = vadd.f32 %v2708, %v3005
  %v3080 = vadd.f32 %v2709, %v3006
  %v3081 = vadd.f32 %v2710, %v3007
  %v3082 = vadd.f32 %v2711, %v3008
  %v3083 = vadd.f32 %v2712, %v3009
  %v3084 = vadd.f32 %v2713, %v3010
  %v3085 = vadd.f32 %v2714, %v3011
  %v3086 = vadd.f32 %v2715, %v3012
  %v3087 = vadd.f32 %v2716, %v3013
  %v3088 = vadd.f32 %v2717, %v3014
  %v3089 = vadd.f32 %v2718, %v3015
  %v3090 = vadd.f32 %v2719, %v3016
  %v3091 = vadd.f32 %v2720, %v3017
  %v3092 = vadd.f32 %v2721, %v3018
  %v3093 = vadd.f32 %v2722, %v3019
  %v3094 = vadd.f32 %v2723, %v3020
  %v3095 = vadd.f32 %v2724, %v3021
  %v3096 = vadd.f32 %v2725, %v3022
  %v3097 = vadd.f32 %v2726, %v3023
  %v3098 = vadd.f32 %v2727, %v3024
  %v3099 = vadd.f32 %v2728, %v3025
  %v3100 = vadd.f32 %v2729, %v3026
  %v3101 = vadd.f32 %v2730, %v3027
  %v3102 = vadd.f32 %v2731, %v3028
  %v3103 = vadd.f32 %v2732, %v3029
  %v3104 = vadd.f32 %v2733, %v3030
  %v3105 = vadd.f32 %v2734, %v3031
  %v3106 = vadd.f32 %v2735, %v3032
  %v3107 = vadd.f32 %v2736, %v3033
  %v3108 = vadd.f32 %v2737, %v3034
  %v3109 = vadd.f32 %v2738, %v3035
  %v3110 = vadd.f32 %v2739, %v3036
  %v3111 = vadd.f32 %v2740, %v3037
  %v3112 = vadd.f32 %v2741, %v3038
  %v3113 = vadd.f32 %v2742, %v3039
  %v3114 = vadd.f32 %v2743, %v3040
  %v3115 = vadd.f32 %v2744, %v3041
  %v3116 = vadd.f32 %v2745, %v3042
  %v3117 = vadd.f32 %v2746, %v3043
  %v3118 = vadd.f32 %v2747, %v3044
  %v3119 = vadd.f32 %v2748, %v3045
  %v3120 = vadd.f32 %v2749, %v3046
  %v3121 = vadd.f32 %v2750, %v3047
  %v3122 = vadd.f32 %v2751, %v3048
  %v3123 = vadd.f32 %v2752, %v3049
  %v3124 = vadd.f32 %v2753, %v3050
  %v3125 = vadd.f32 %v2754, %v3051
  %v3126 = vadd.f32 %v2755, %v3052
  %v3127 = vadd.f32 %v2756, %v3053
  %v3128 = vadd.f32 %v2757, %v3054
  %v3129 = vadd.f32 %v2758, %v3055
  %v3130 = vadd.f32 %v2759, %v3056
  %v3131 = vadd.f32 %v2760, %v3057
  %v3132 = vadd.f32 %v2761, %v3058
  %v3133 = vadd.f32 %v2762, %v3059
  %v3134 = vadd.f32 %v2763, %v3060
  %s3135 = scalar_lea.vmem %s1, 4736
  %v3136 = vld [vmem:[%s3135] sm:$0xff]
  %v3137 = vld [vmem:[%s3135 + $0x8] sm:$0xff]
  %v3138 = vld [vmem:[%s3135 + $0x10] sm:$0xff]
  %v3139 = vld [vmem:[%s3135 + $0x18] sm:$0xff]
  %v3140 = vld [vmem:[%s3135 + $0x20] sm:$0xff]
  %v3141 = vld [vmem:[%s3135 + $0x28] sm:$0xff]
  %v3142 = vld [vmem:[%s3135 + $0x30] sm:$0xff]
  %v3143 = vld [vmem:[%s3135 + $0x38] sm:$0xff]
  %v3144 = vld [vmem:[%s3135 + $0x40] sm:$0xff]
  %v3145 = vld [vmem:[%s3135 + $0x48] sm:$0xff]
  %v3146 = vld [vmem:[%s3135 + $0x50] sm:$0xff]
  %v3147 = vld [vmem:[%s3135 + $0x58] sm:$0xff]
  %v3148 = vld [vmem:[%s3135 + $0x60] sm:$0xff]
  %v3149 = vld [vmem:[%s3135 + $0x68] sm:$0xff]
  %v3150 = vld [vmem:[%s3135 + $0x70] sm:$0xff]
  %v3151 = vld [vmem:[%s3135 + $0x78] sm:$0xff]
  %v3152 = vld [vmem:[%s3135 + $0x80] sm:$0xff]
  %v3153 = vld [vmem:[%s3135 + $0x88] sm:$0xff]
  %v3154 = vld [vmem:[%s3135 + $0x90] sm:$0xff]
  %v3155 = vld [vmem:[%s3135 + $0x98] sm:$0xff]
  %v3156 = vld [vmem:[%s3135 + $0xa0] sm:$0xff]
  %v3157 = vld [vmem:[%s3135 + $0xa8] sm:$0xff]
  %v3158 = vld [vmem:[%s3135 + $0xb0] sm:$0xff]
  %v3159 = vld [vmem:[%s3135 + $0xb8] sm:$0xff]
  %v3160 = vld [vmem:[%s3135 + $0xc0] sm:$0xff]
  %v3161 = vld [vmem:[%s3135 + $0xc8] sm:$0xff]
  %v3162 = vld [vmem:[%s3135 + $0xd0] sm:$0xff]
  %v3163 = vld [vmem:[%s3135 + $0xd8] sm:$0xff]
  %v3164 = vld [vmem:[%s3135 + $0xe0] sm:$0xff]
  %v3165 = vld [vmem:[%s3135 + $0xe8] sm:$0xff]
  %v3166 = vld [vmem:[%s3135 + $0xf0] sm:$0xff]
  %v3167 = vld [vmem:[%s3135 + $0xf8] sm:$0xff]
  %v3168 = vld [vmem:[%s3135 + $0x100] sm:$0xff]
  %v3169 = vld [vmem:[%s3135 + $0x108] sm:$0xff]
  %v3170 = vld [vmem:[%s3135 + $0x110] sm:$0xff]
  %v3171 = vld [vmem:[%s3135 + $0x118] sm:$0xff]
  %v3172 = vld [vmem:[%s3135 + $0x120] sm:$0xff]
  %v3173 = vld [vmem:[%s3135 + $0x128] sm:$0xff]
  %v3174 = vld [vmem:[%s3135 + $0x130] sm:$0xff]
  %v3175 = vld [vmem:[%s3135 + $0x138] sm:$0xff]
  %v3176 = vld [vmem:[%s3135 + $0x140] sm:$0xff]
  %v3177 = vld [vmem:[%s3135 + $0x148] sm:$0xff]
  %v3178 = vld [vmem:[%s3135 + $0x150] sm:$0xff]
  %v3179 = vld [vmem:[%s3135 + $0x158] sm:$0xff]
  %v3180 = vld [vmem:[%s3135 + $0x160] sm:$0xff]
  %v3181 = vld [vmem:[%s3135 + $0x168] sm:$0xff]
  %v3182 = vld [vmem:[%s3135 + $0x170] sm:$0xff]
  %v3183 = vld [vmem:[%s3135 + $0x178] sm:$0xff]
  %v3184 = vld [vmem:[%s3135 + $0x180] sm:$0xff]
  %v3185 = vld [vmem:[%s3135 + $0x188] sm:$0xff]
  %v3186 = vld [vmem:[%s3135 + $0x190] sm:$0xff]
  %v3187 = vld [vmem:[%s3135 + $0x198] sm:$0xff]
  %v3188 = vld [vmem:[%s3135 + $0x1a0] sm:$0xff]
  %v3189 = vld [vmem:[%s3135 + $0x1a8] sm:$0xff]
  %v3190 = vld [vmem:[%s3135 + $0x1b0] sm:$0xff]
  %v3191 = vld [vmem:[%s3135 + $0x1b8] sm:$0xff]
  %v3192 = vld [vmem:[%s3135 + $0x1c0] sm:$0xff]
  %v3193 = vld [vmem:[%s3135 + $0x1c8] sm:$0xff]
  %v3194 = vld [vmem:[%s3135 + $0x1d0] sm:$0xff]
  %v3195 = vld [vmem:[%s3135 + $0x1d8] sm:$0xff]
  %v3196 = vld [vmem:[%s3135 + $0x1e0] sm:$0xff]
  %v3197 = vld [vmem:[%s3135 + $0x1e8] sm:$0xff]
  %v3198 = vld [vmem:[%s3135 + $0x1f0] sm:$0xff]
  %v3199 = vld [vmem:[%s3135 + $0x1f8] sm:$0xff]
  %v3200 = vld [vmem:[%s3135 + $0x200] sm:$0xff]
  %v3201 = vld [vmem:[%s3135 + $0x208] sm:$0xff]
  %v3202 = vld [vmem:[%s3135 + $0x210] sm:$0xff]
  %v3203 = vld [vmem:[%s3135 + $0x218] sm:$0xff]
  %v3204 = vld [vmem:[%s3135 + $0x220] sm:$0xff]
  %v3205 = vld [vmem:[%s3135 + $0x228] sm:$0xff]
  %v3206 = vld [vmem:[%s3135 + $0x230] sm:$0xff]
  %v3207 = vld [vmem:[%s3135 + $0x238] sm:$0xff]
  %v3208 = vld [vmem:[%s3135 + $0x240] sm:$0xff]
  %v3209 = vld [vmem:[%s3135 + $0x248] sm:$0xff]
  %3210 = vset.pattern.permute.xlu0 8
  %3211 = vperm.xlu0 %3210, %v94
  %v3212 = vpop.permute.xlu0 %3211
  %3214 = vset.pattern.permute.xlu0 8
  %3215 = vperm.xlu0 %3214, %v95
  %v3216 = vpop.permute.xlu0 %3215
  %3218 = vset.pattern.permute.xlu0 8
  %3219 = vperm.xlu0 %3218, %v96
  %v3220 = vpop.permute.xlu0 %3219
  %3222 = vset.pattern.permute.xlu0 8
  %3223 = vperm.xlu0 %3222, %v97
  %v3224 = vpop.permute.xlu0 %3223
  %3226 = vset.pattern.permute.xlu0 8
  %3227 = vperm.xlu0 %3226, %v98
  %v3228 = vpop.permute.xlu0 %3227
  %3230 = vset.pattern.permute.xlu0 8
  %3231 = vperm.xlu0 %3230, %v99
  %v3232 = vpop.permute.xlu0 %3231
  %3234 = vset.pattern.permute.xlu0 8
  %3235 = vperm.xlu0 %3234, %v100
  %v3236 = vpop.permute.xlu0 %3235
  %3238 = vset.pattern.permute.xlu0 8
  %3239 = vperm.xlu0 %3238, %v101
  %v3240 = vpop.permute.xlu0 %3239
  %3242 = vset.pattern.permute.xlu0 8
  %3243 = vperm.xlu0 %3242, %v102
  %v3244 = vpop.permute.xlu0 %3243
  %3246 = vset.pattern.permute.xlu0 8
  %3247 = vperm.xlu0 %3246, %v103
  %v3248 = vpop.permute.xlu0 %3247
  %3250 = vset.pattern.permute.xlu0 8
  %3251 = vperm.xlu0 %3250, %v104
  %v3252 = vpop.permute.xlu0 %3251
  %3254 = vset.pattern.permute.xlu0 8
  %3255 = vperm.xlu0 %3254, %v105
  %v3256 = vpop.permute.xlu0 %3255
  %3258 = vset.pattern.permute.xlu0 8
  %3259 = vperm.xlu0 %3258, %v106
  %v3260 = vpop.permute.xlu0 %3259
  %3262 = vset.pattern.permute.xlu0 8
  %3263 = vperm.xlu0 %3262, %v107
  %v3264 = vpop.permute.xlu0 %3263
  %3266 = vset.pattern.permute.xlu0 8
  %3267 = vperm.xlu0 %3266, %v108
  %v3268 = vpop.permute.xlu0 %3267
  %3270 = vset.pattern.permute.xlu0 8
  %3271 = vperm.xlu0 %3270, %v109
  %v3272 = vpop.permute.xlu0 %3271
  %3274 = vset.pattern.permute.xlu0 8
  %3275 = vperm.xlu0 %3274, %v110
  %v3276 = vpop.permute.xlu0 %3275
  %3278 = vset.pattern.permute.xlu0 8
  %3279 = vperm.xlu0 %3278, %v111
  %v3280 = vpop.permute.xlu0 %3279
  %3282 = vset.pattern.permute.xlu0 8
  %3283 = vperm.xlu0 %3282, %v112
  %v3284 = vpop.permute.xlu0 %3283
  %3286 = vset.pattern.permute.xlu0 8
  %3287 = vperm.xlu0 %3286, %v113
  %v3288 = vpop.permute.xlu0 %3287
  %3290 = vset.pattern.permute.xlu0 8
  %3291 = vperm.xlu0 %3290, %v114
  %v3292 = vpop.permute.xlu0 %3291
  %3294 = vset.pattern.permute.xlu0 8
  %3295 = vperm.xlu0 %3294, %v115
  %v3296 = vpop.permute.xlu0 %3295
  %3298 = vset.pattern.permute.xlu0 8
  %3299 = vperm.xlu0 %3298, %v116
  %v3300 = vpop.permute.xlu0 %3299
  %3302 = vset.pattern.permute.xlu0 8
  %3303 = vperm.xlu0 %3302, %v117
  %v3304 = vpop.permute.xlu0 %3303
  %3306 = vset.pattern.permute.xlu0 8
  %3307 = vperm.xlu0 %3306, %v118
  %v3308 = vpop.permute.xlu0 %3307
  %3310 = vset.pattern.permute.xlu0 8
  %3311 = vperm.xlu0 %3310, %v119
  %v3312 = vpop.permute.xlu0 %3311
  %3314 = vset.pattern.permute.xlu0 8
  %3315 = vperm.xlu0 %3314, %v120
  %v3316 = vpop.permute.xlu0 %3315
  %3318 = vset.pattern.permute.xlu0 8
  %3319 = vperm.xlu0 %3318, %v121
  %v3320 = vpop.permute.xlu0 %3319
  %3322 = vset.pattern.permute.xlu0 8
  %3323 = vperm.xlu0 %3322, %v122
  %v3324 = vpop.permute.xlu0 %3323
  %3326 = vset.pattern.permute.xlu0 8
  %3327 = vperm.xlu0 %3326, %v123
  %v3328 = vpop.permute.xlu0 %3327
  %3330 = vset.pattern.permute.xlu0 8
  %3331 = vperm.xlu0 %3330, %v124
  %v3332 = vpop.permute.xlu0 %3331
  %3334 = vset.pattern.permute.xlu0 8
  %3335 = vperm.xlu0 %3334, %v125
  %v3336 = vpop.permute.xlu0 %3335
  %3338 = vset.pattern.permute.xlu0 8
  %3339 = vperm.xlu0 %3338, %v126
  %v3340 = vpop.permute.xlu0 %3339
  %3342 = vset.pattern.permute.xlu0 8
  %3343 = vperm.xlu0 %3342, %v127
  %v3344 = vpop.permute.xlu0 %3343
  %3346 = vset.pattern.permute.xlu0 8
  %3347 = vperm.xlu0 %3346, %v128
  %v3348 = vpop.permute.xlu0 %3347
  %3350 = vset.pattern.permute.xlu0 8
  %3351 = vperm.xlu0 %3350, %v129
  %v3352 = vpop.permute.xlu0 %3351
  %3354 = vset.pattern.permute.xlu0 8
  %3355 = vperm.xlu0 %3354, %v130
  %v3356 = vpop.permute.xlu0 %3355
  %v3358 = vmul.f32 %v3212, %v3136
  %v3359 = vmul.f32 %v3212, %v3137
  %v3360 = vmul.f32 %v3216, %v3138
  %v3361 = vmul.f32 %v3216, %v3139
  %v3362 = vmul.f32 %v3220, %v3140
  %v3363 = vmul.f32 %v3220, %v3141
  %v3364 = vmul.f32 %v3224, %v3142
  %v3365 = vmul.f32 %v3224, %v3143
  %v3366 = vmul.f32 %v3228, %v3144
  %v3367 = vmul.f32 %v3228, %v3145
  %v3368 = vmul.f32 %v3232, %v3146
  %v3369 = vmul.f32 %v3232, %v3147
  %v3370 = vmul.f32 %v3236, %v3148
  %v3371 = vmul.f32 %v3236, %v3149
  %v3372 = vmul.f32 %v3240, %v3150
  %v3373 = vmul.f32 %v3240, %v3151
  %v3374 = vmul.f32 %v3244, %v3152
  %v3375 = vmul.f32 %v3244, %v3153
  %v3376 = vmul.f32 %v3248, %v3154
  %v3377 = vmul.f32 %v3248, %v3155
  %v3378 = vmul.f32 %v3252, %v3156
  %v3379 = vmul.f32 %v3252, %v3157
  %v3380 = vmul.f32 %v3256, %v3158
  %v3381 = vmul.f32 %v3256, %v3159
  %v3382 = vmul.f32 %v3260, %v3160
  %v3383 = vmul.f32 %v3260, %v3161
  %v3384 = vmul.f32 %v3264, %v3162
  %v3385 = vmul.f32 %v3264, %v3163
  %v3386 = vmul.f32 %v3268, %v3164
  %v3387 = vmul.f32 %v3268, %v3165
  %v3388 = vmul.f32 %v3272, %v3166
  %v3389 = vmul.f32 %v3272, %v3167
  %v3390 = vmul.f32 %v3276, %v3168
  %v3391 = vmul.f32 %v3276, %v3169
  %v3392 = vmul.f32 %v3280, %v3170
  %v3393 = vmul.f32 %v3280, %v3171
  %v3394 = vmul.f32 %v3284, %v3172
  %v3395 = vmul.f32 %v3284, %v3173
  %v3396 = vmul.f32 %v3288, %v3174
  %v3397 = vmul.f32 %v3288, %v3175
  %v3398 = vmul.f32 %v3292, %v3176
  %v3399 = vmul.f32 %v3292, %v3177
  %v3400 = vmul.f32 %v3296, %v3178
  %v3401 = vmul.f32 %v3296, %v3179
  %v3402 = vmul.f32 %v3300, %v3180
  %v3403 = vmul.f32 %v3300, %v3181
  %v3404 = vmul.f32 %v3304, %v3182
  %v3405 = vmul.f32 %v3304, %v3183
  %v3406 = vmul.f32 %v3308, %v3184
  %v3407 = vmul.f32 %v3308, %v3185
  %v3408 = vmul.f32 %v3312, %v3186
  %v3409 = vmul.f32 %v3312, %v3187
  %v3410 = vmul.f32 %v3316, %v3188
  %v3411 = vmul.f32 %v3316, %v3189
  %v3412 = vmul.f32 %v3320, %v3190
  %v3413 = vmul.f32 %v3320, %v3191
  %v3414 = vmul.f32 %v3324, %v3192
  %v3415 = vmul.f32 %v3324, %v3193
  %v3416 = vmul.f32 %v3328, %v3194
  %v3417 = vmul.f32 %v3328, %v3195
  %v3418 = vmul.f32 %v3332, %v3196
  %v3419 = vmul.f32 %v3332, %v3197
  %v3420 = vmul.f32 %v3336, %v3198
  %v3421 = vmul.f32 %v3336, %v3199
  %v3422 = vmul.f32 %v3340, %v3200
  %v3423 = vmul.f32 %v3340, %v3201
  %v3424 = vmul.f32 %v3344, %v3202
  %v3425 = vmul.f32 %v3344, %v3203
  %v3426 = vmul.f32 %v3348, %v3204
  %v3427 = vmul.f32 %v3348, %v3205
  %v3428 = vmul.f32 %v3352, %v3206
  %v3429 = vmul.f32 %v3352, %v3207
  %v3430 = vmul.f32 %v3356, %v3208
  %v3431 = vmul.f32 %v3356, %v3209
  %v3432 = vadd.f32 %v3061, %v3358
  %v3433 = vadd.f32 %v3062, %v3359
  %v3434 = vadd.f32 %v3063, %v3360
  %v3435 = vadd.f32 %v3064, %v3361
  %v3436 = vadd.f32 %v3065, %v3362
  %v3437 = vadd.f32 %v3066, %v3363
  %v3438 = vadd.f32 %v3067, %v3364
  %v3439 = vadd.f32 %v3068, %v3365
  %v3440 = vadd.f32 %v3069, %v3366
  %v3441 = vadd.f32 %v3070, %v3367
  %v3442 = vadd.f32 %v3071, %v3368
  %v3443 = vadd.f32 %v3072, %v3369
  %v3444 = vadd.f32 %v3073, %v3370
  %v3445 = vadd.f32 %v3074, %v3371
  %v3446 = vadd.f32 %v3075, %v3372
  %v3447 = vadd.f32 %v3076, %v3373
  %v3448 = vadd.f32 %v3077, %v3374
  %v3449 = vadd.f32 %v3078, %v3375
  %v3450 = vadd.f32 %v3079, %v3376
  %v3451 = vadd.f32 %v3080, %v3377
  %v3452 = vadd.f32 %v3081, %v3378
  %v3453 = vadd.f32 %v3082, %v3379
  %v3454 = vadd.f32 %v3083, %v3380
  %v3455 = vadd.f32 %v3084, %v3381
  %v3456 = vadd.f32 %v3085, %v3382
  %v3457 = vadd.f32 %v3086, %v3383
  %v3458 = vadd.f32 %v3087, %v3384
  %v3459 = vadd.f32 %v3088, %v3385
  %v3460 = vadd.f32 %v3089, %v3386
  %v3461 = vadd.f32 %v3090, %v3387
  %v3462 = vadd.f32 %v3091, %v3388
  %v3463 = vadd.f32 %v3092, %v3389
  %v3464 = vadd.f32 %v3093, %v3390
  %v3465 = vadd.f32 %v3094, %v3391
  %v3466 = vadd.f32 %v3095, %v3392
  %v3467 = vadd.f32 %v3096, %v3393
  %v3468 = vadd.f32 %v3097, %v3394
  %v3469 = vadd.f32 %v3098, %v3395
  %v3470 = vadd.f32 %v3099, %v3396
  %v3471 = vadd.f32 %v3100, %v3397
  %v3472 = vadd.f32 %v3101, %v3398
  %v3473 = vadd.f32 %v3102, %v3399
  %v3474 = vadd.f32 %v3103, %v3400
  %v3475 = vadd.f32 %v3104, %v3401
  %v3476 = vadd.f32 %v3105, %v3402
  %v3477 = vadd.f32 %v3106, %v3403
  %v3478 = vadd.f32 %v3107, %v3404
  %v3479 = vadd.f32 %v3108, %v3405
  %v3480 = vadd.f32 %v3109, %v3406
  %v3481 = vadd.f32 %v3110, %v3407
  %v3482 = vadd.f32 %v3111, %v3408
  %v3483 = vadd.f32 %v3112, %v3409
  %v3484 = vadd.f32 %v3113, %v3410
  %v3485 = vadd.f32 %v3114, %v3411
  %v3486 = vadd.f32 %v3115, %v3412
  %v3487 = vadd.f32 %v3116, %v3413
  %v3488 = vadd.f32 %v3117, %v3414
  %v3489 = vadd.f32 %v3118, %v3415
  %v3490 = vadd.f32 %v3119, %v3416
  %v3491 = vadd.f32 %v3120, %v3417
  %v3492 = vadd.f32 %v3121, %v3418
  %v3493 = vadd.f32 %v3122, %v3419
  %v3494 = vadd.f32 %v3123, %v3420
  %v3495 = vadd.f32 %v3124, %v3421
  %v3496 = vadd.f32 %v3125, %v3422
  %v3497 = vadd.f32 %v3126, %v3423
  %v3498 = vadd.f32 %v3127, %v3424
  %v3499 = vadd.f32 %v3128, %v3425
  %v3500 = vadd.f32 %v3129, %v3426
  %v3501 = vadd.f32 %v3130, %v3427
  %v3502 = vadd.f32 %v3131, %v3428
  %v3503 = vadd.f32 %v3132, %v3429
  %v3504 = vadd.f32 %v3133, %v3430
  %v3505 = vadd.f32 %v3134, %v3431
  %s3506 = scalar_lea.vmem %s1, 5328
  %v3507 = vld [vmem:[%s3506] sm:$0xff]
  %v3508 = vld [vmem:[%s3506 + $0x8] sm:$0xff]
  %v3509 = vld [vmem:[%s3506 + $0x10] sm:$0xff]
  %v3510 = vld [vmem:[%s3506 + $0x18] sm:$0xff]
  %v3511 = vld [vmem:[%s3506 + $0x20] sm:$0xff]
  %v3512 = vld [vmem:[%s3506 + $0x28] sm:$0xff]
  %v3513 = vld [vmem:[%s3506 + $0x30] sm:$0xff]
  %v3514 = vld [vmem:[%s3506 + $0x38] sm:$0xff]
  %v3515 = vld [vmem:[%s3506 + $0x40] sm:$0xff]
  %v3516 = vld [vmem:[%s3506 + $0x48] sm:$0xff]
  %v3517 = vld [vmem:[%s3506 + $0x50] sm:$0xff]
  %v3518 = vld [vmem:[%s3506 + $0x58] sm:$0xff]
  %v3519 = vld [vmem:[%s3506 + $0x60] sm:$0xff]
  %v3520 = vld [vmem:[%s3506 + $0x68] sm:$0xff]
  %v3521 = vld [vmem:[%s3506 + $0x70] sm:$0xff]
  %v3522 = vld [vmem:[%s3506 + $0x78] sm:$0xff]
  %v3523 = vld [vmem:[%s3506 + $0x80] sm:$0xff]
  %v3524 = vld [vmem:[%s3506 + $0x88] sm:$0xff]
  %v3525 = vld [vmem:[%s3506 + $0x90] sm:$0xff]
  %v3526 = vld [vmem:[%s3506 + $0x98] sm:$0xff]
  %v3527 = vld [vmem:[%s3506 + $0xa0] sm:$0xff]
  %v3528 = vld [vmem:[%s3506 + $0xa8] sm:$0xff]
  %v3529 = vld [vmem:[%s3506 + $0xb0] sm:$0xff]
  %v3530 = vld [vmem:[%s3506 + $0xb8] sm:$0xff]
  %v3531 = vld [vmem:[%s3506 + $0xc0] sm:$0xff]
  %v3532 = vld [vmem:[%s3506 + $0xc8] sm:$0xff]
  %v3533 = vld [vmem:[%s3506 + $0xd0] sm:$0xff]
  %v3534 = vld [vmem:[%s3506 + $0xd8] sm:$0xff]
  %v3535 = vld [vmem:[%s3506 + $0xe0] sm:$0xff]
  %v3536 = vld [vmem:[%s3506 + $0xe8] sm:$0xff]
  %v3537 = vld [vmem:[%s3506 + $0xf0] sm:$0xff]
  %v3538 = vld [vmem:[%s3506 + $0xf8] sm:$0xff]
  %v3539 = vld [vmem:[%s3506 + $0x100] sm:$0xff]
  %v3540 = vld [vmem:[%s3506 + $0x108] sm:$0xff]
  %v3541 = vld [vmem:[%s3506 + $0x110] sm:$0xff]
  %v3542 = vld [vmem:[%s3506 + $0x118] sm:$0xff]
  %v3543 = vld [vmem:[%s3506 + $0x120] sm:$0xff]
  %v3544 = vld [vmem:[%s3506 + $0x128] sm:$0xff]
  %v3545 = vld [vmem:[%s3506 + $0x130] sm:$0xff]
  %v3546 = vld [vmem:[%s3506 + $0x138] sm:$0xff]
  %v3547 = vld [vmem:[%s3506 + $0x140] sm:$0xff]
  %v3548 = vld [vmem:[%s3506 + $0x148] sm:$0xff]
  %v3549 = vld [vmem:[%s3506 + $0x150] sm:$0xff]
  %v3550 = vld [vmem:[%s3506 + $0x158] sm:$0xff]
  %v3551 = vld [vmem:[%s3506 + $0x160] sm:$0xff]
  %v3552 = vld [vmem:[%s3506 + $0x168] sm:$0xff]
  %v3553 = vld [vmem:[%s3506 + $0x170] sm:$0xff]
  %v3554 = vld [vmem:[%s3506 + $0x178] sm:$0xff]
  %v3555 = vld [vmem:[%s3506 + $0x180] sm:$0xff]
  %v3556 = vld [vmem:[%s3506 + $0x188] sm:$0xff]
  %v3557 = vld [vmem:[%s3506 + $0x190] sm:$0xff]
  %v3558 = vld [vmem:[%s3506 + $0x198] sm:$0xff]
  %v3559 = vld [vmem:[%s3506 + $0x1a0] sm:$0xff]
  %v3560 = vld [vmem:[%s3506 + $0x1a8] sm:$0xff]
  %v3561 = vld [vmem:[%s3506 + $0x1b0] sm:$0xff]
  %v3562 = vld [vmem:[%s3506 + $0x1b8] sm:$0xff]
  %v3563 = vld [vmem:[%s3506 + $0x1c0] sm:$0xff]
  %v3564 = vld [vmem:[%s3506 + $0x1c8] sm:$0xff]
  %v3565 = vld [vmem:[%s3506 + $0x1d0] sm:$0xff]
  %v3566 = vld [vmem:[%s3506 + $0x1d8] sm:$0xff]
  %v3567 = vld [vmem:[%s3506 + $0x1e0] sm:$0xff]
  %v3568 = vld [vmem:[%s3506 + $0x1e8] sm:$0xff]
  %v3569 = vld [vmem:[%s3506 + $0x1f0] sm:$0xff]
  %v3570 = vld [vmem:[%s3506 + $0x1f8] sm:$0xff]
  %v3571 = vld [vmem:[%s3506 + $0x200] sm:$0xff]
  %v3572 = vld [vmem:[%s3506 + $0x208] sm:$0xff]
  %v3573 = vld [vmem:[%s3506 + $0x210] sm:$0xff]
  %v3574 = vld [vmem:[%s3506 + $0x218] sm:$0xff]
  %v3575 = vld [vmem:[%s3506 + $0x220] sm:$0xff]
  %v3576 = vld [vmem:[%s3506 + $0x228] sm:$0xff]
  %v3577 = vld [vmem:[%s3506 + $0x230] sm:$0xff]
  %v3578 = vld [vmem:[%s3506 + $0x238] sm:$0xff]
  %v3579 = vld [vmem:[%s3506 + $0x240] sm:$0xff]
  %v3580 = vld [vmem:[%s3506 + $0x248] sm:$0xff]
  %3581 = vset.pattern.permute.xlu0 9
  %3582 = vperm.xlu0 %3581, %v94
  %v3583 = vpop.permute.xlu0 %3582
  %3585 = vset.pattern.permute.xlu0 9
  %3586 = vperm.xlu0 %3585, %v95
  %v3587 = vpop.permute.xlu0 %3586
  %3589 = vset.pattern.permute.xlu0 9
  %3590 = vperm.xlu0 %3589, %v96
  %v3591 = vpop.permute.xlu0 %3590
  %3593 = vset.pattern.permute.xlu0 9
  %3594 = vperm.xlu0 %3593, %v97
  %v3595 = vpop.permute.xlu0 %3594
  %3597 = vset.pattern.permute.xlu0 9
  %3598 = vperm.xlu0 %3597, %v98
  %v3599 = vpop.permute.xlu0 %3598
  %3601 = vset.pattern.permute.xlu0 9
  %3602 = vperm.xlu0 %3601, %v99
  %v3603 = vpop.permute.xlu0 %3602
  %3605 = vset.pattern.permute.xlu0 9
  %3606 = vperm.xlu0 %3605, %v100
  %v3607 = vpop.permute.xlu0 %3606
  %3609 = vset.pattern.permute.xlu0 9
  %3610 = vperm.xlu0 %3609, %v101
  %v3611 = vpop.permute.xlu0 %3610
  %3613 = vset.pattern.permute.xlu0 9
  %3614 = vperm.xlu0 %3613, %v102
  %v3615 = vpop.permute.xlu0 %3614
  %3617 = vset.pattern.permute.xlu0 9
  %3618 = vperm.xlu0 %3617, %v103
  %v3619 = vpop.permute.xlu0 %3618
  %3621 = vset.pattern.permute.xlu0 9
  %3622 = vperm.xlu0 %3621, %v104
  %v3623 = vpop.permute.xlu0 %3622
  %3625 = vset.pattern.permute.xlu0 9
  %3626 = vperm.xlu0 %3625, %v105
  %v3627 = vpop.permute.xlu0 %3626
  %3629 = vset.pattern.permute.xlu0 9
  %3630 = vperm.xlu0 %3629, %v106
  %v3631 = vpop.permute.xlu0 %3630
  %3633 = vset.pattern.permute.xlu0 9
  %3634 = vperm.xlu0 %3633, %v107
  %v3635 = vpop.permute.xlu0 %3634
  %3637 = vset.pattern.permute.xlu0 9
  %3638 = vperm.xlu0 %3637, %v108
  %v3639 = vpop.permute.xlu0 %3638
  %3641 = vset.pattern.permute.xlu0 9
  %3642 = vperm.xlu0 %3641, %v109
  %v3643 = vpop.permute.xlu0 %3642
  %3645 = vset.pattern.permute.xlu0 9
  %3646 = vperm.xlu0 %3645, %v110
  %v3647 = vpop.permute.xlu0 %3646
  %3649 = vset.pattern.permute.xlu0 9
  %3650 = vperm.xlu0 %3649, %v111
  %v3651 = vpop.permute.xlu0 %3650
  %3653 = vset.pattern.permute.xlu0 9
  %3654 = vperm.xlu0 %3653, %v112
  %v3655 = vpop.permute.xlu0 %3654
  %3657 = vset.pattern.permute.xlu0 9
  %3658 = vperm.xlu0 %3657, %v113
  %v3659 = vpop.permute.xlu0 %3658
  %3661 = vset.pattern.permute.xlu0 9
  %3662 = vperm.xlu0 %3661, %v114
  %v3663 = vpop.permute.xlu0 %3662
  %3665 = vset.pattern.permute.xlu0 9
  %3666 = vperm.xlu0 %3665, %v115
  %v3667 = vpop.permute.xlu0 %3666
  %3669 = vset.pattern.permute.xlu0 9
  %3670 = vperm.xlu0 %3669, %v116
  %v3671 = vpop.permute.xlu0 %3670
  %3673 = vset.pattern.permute.xlu0 9
  %3674 = vperm.xlu0 %3673, %v117
  %v3675 = vpop.permute.xlu0 %3674
  %3677 = vset.pattern.permute.xlu0 9
  %3678 = vperm.xlu0 %3677, %v118
  %v3679 = vpop.permute.xlu0 %3678
  %3681 = vset.pattern.permute.xlu0 9
  %3682 = vperm.xlu0 %3681, %v119
  %v3683 = vpop.permute.xlu0 %3682
  %3685 = vset.pattern.permute.xlu0 9
  %3686 = vperm.xlu0 %3685, %v120
  %v3687 = vpop.permute.xlu0 %3686
  %3689 = vset.pattern.permute.xlu0 9
  %3690 = vperm.xlu0 %3689, %v121
  %v3691 = vpop.permute.xlu0 %3690
  %3693 = vset.pattern.permute.xlu0 9
  %3694 = vperm.xlu0 %3693, %v122
  %v3695 = vpop.permute.xlu0 %3694
  %3697 = vset.pattern.permute.xlu0 9
  %3698 = vperm.xlu0 %3697, %v123
  %v3699 = vpop.permute.xlu0 %3698
  %3701 = vset.pattern.permute.xlu0 9
  %3702 = vperm.xlu0 %3701, %v124
  %v3703 = vpop.permute.xlu0 %3702
  %3705 = vset.pattern.permute.xlu0 9
  %3706 = vperm.xlu0 %3705, %v125
  %v3707 = vpop.permute.xlu0 %3706
  %3709 = vset.pattern.permute.xlu0 9
  %3710 = vperm.xlu0 %3709, %v126
  %v3711 = vpop.permute.xlu0 %3710
  %3713 = vset.pattern.permute.xlu0 9
  %3714 = vperm.xlu0 %3713, %v127
  %v3715 = vpop.permute.xlu0 %3714
  %3717 = vset.pattern.permute.xlu0 9
  %3718 = vperm.xlu0 %3717, %v128
  %v3719 = vpop.permute.xlu0 %3718
  %3721 = vset.pattern.permute.xlu0 9
  %3722 = vperm.xlu0 %3721, %v129
  %v3723 = vpop.permute.xlu0 %3722
  %3725 = vset.pattern.permute.xlu0 9
  %3726 = vperm.xlu0 %3725, %v130
  %v3727 = vpop.permute.xlu0 %3726
  %v3729 = vmul.f32 %v3583, %v3507
  %v3730 = vmul.f32 %v3583, %v3508
  %v3731 = vmul.f32 %v3587, %v3509
  %v3732 = vmul.f32 %v3587, %v3510
  %v3733 = vmul.f32 %v3591, %v3511
  %v3734 = vmul.f32 %v3591, %v3512
  %v3735 = vmul.f32 %v3595, %v3513
  %v3736 = vmul.f32 %v3595, %v3514
  %v3737 = vmul.f32 %v3599, %v3515
  %v3738 = vmul.f32 %v3599, %v3516
  %v3739 = vmul.f32 %v3603, %v3517
  %v3740 = vmul.f32 %v3603, %v3518
  %v3741 = vmul.f32 %v3607, %v3519
  %v3742 = vmul.f32 %v3607, %v3520
  %v3743 = vmul.f32 %v3611, %v3521
  %v3744 = vmul.f32 %v3611, %v3522
  %v3745 = vmul.f32 %v3615, %v3523
  %v3746 = vmul.f32 %v3615, %v3524
  %v3747 = vmul.f32 %v3619, %v3525
  %v3748 = vmul.f32 %v3619, %v3526
  %v3749 = vmul.f32 %v3623, %v3527
  %v3750 = vmul.f32 %v3623, %v3528
  %v3751 = vmul.f32 %v3627, %v3529
  %v3752 = vmul.f32 %v3627, %v3530
  %v3753 = vmul.f32 %v3631, %v3531
  %v3754 = vmul.f32 %v3631, %v3532
  %v3755 = vmul.f32 %v3635, %v3533
  %v3756 = vmul.f32 %v3635, %v3534
  %v3757 = vmul.f32 %v3639, %v3535
  %v3758 = vmul.f32 %v3639, %v3536
  %v3759 = vmul.f32 %v3643, %v3537
  %v3760 = vmul.f32 %v3643, %v3538
  %v3761 = vmul.f32 %v3647, %v3539
  %v3762 = vmul.f32 %v3647, %v3540
  %v3763 = vmul.f32 %v3651, %v3541
  %v3764 = vmul.f32 %v3651, %v3542
  %v3765 = vmul.f32 %v3655, %v3543
  %v3766 = vmul.f32 %v3655, %v3544
  %v3767 = vmul.f32 %v3659, %v3545
  %v3768 = vmul.f32 %v3659, %v3546
  %v3769 = vmul.f32 %v3663, %v3547
  %v3770 = vmul.f32 %v3663, %v3548
  %v3771 = vmul.f32 %v3667, %v3549
  %v3772 = vmul.f32 %v3667, %v3550
  %v3773 = vmul.f32 %v3671, %v3551
  %v3774 = vmul.f32 %v3671, %v3552
  %v3775 = vmul.f32 %v3675, %v3553
  %v3776 = vmul.f32 %v3675, %v3554
  %v3777 = vmul.f32 %v3679, %v3555
  %v3778 = vmul.f32 %v3679, %v3556
  %v3779 = vmul.f32 %v3683, %v3557
  %v3780 = vmul.f32 %v3683, %v3558
  %v3781 = vmul.f32 %v3687, %v3559
  %v3782 = vmul.f32 %v3687, %v3560
  %v3783 = vmul.f32 %v3691, %v3561
  %v3784 = vmul.f32 %v3691, %v3562
  %v3785 = vmul.f32 %v3695, %v3563
  %v3786 = vmul.f32 %v3695, %v3564
  %v3787 = vmul.f32 %v3699, %v3565
  %v3788 = vmul.f32 %v3699, %v3566
  %v3789 = vmul.f32 %v3703, %v3567
  %v3790 = vmul.f32 %v3703, %v3568
  %v3791 = vmul.f32 %v3707, %v3569
  %v3792 = vmul.f32 %v3707, %v3570
  %v3793 = vmul.f32 %v3711, %v3571
  %v3794 = vmul.f32 %v3711, %v3572
  %v3795 = vmul.f32 %v3715, %v3573
  %v3796 = vmul.f32 %v3715, %v3574
  %v3797 = vmul.f32 %v3719, %v3575
  %v3798 = vmul.f32 %v3719, %v3576
  %v3799 = vmul.f32 %v3723, %v3577
  %v3800 = vmul.f32 %v3723, %v3578
  %v3801 = vmul.f32 %v3727, %v3579
  %v3802 = vmul.f32 %v3727, %v3580
  %v3803 = vadd.f32 %v3432, %v3729
  %v3804 = vadd.f32 %v3433, %v3730
  %v3805 = vadd.f32 %v3434, %v3731
  %v3806 = vadd.f32 %v3435, %v3732
  %v3807 = vadd.f32 %v3436, %v3733
  %v3808 = vadd.f32 %v3437, %v3734
  %v3809 = vadd.f32 %v3438, %v3735
  %v3810 = vadd.f32 %v3439, %v3736
  %v3811 = vadd.f32 %v3440, %v3737
  %v3812 = vadd.f32 %v3441, %v3738
  %v3813 = vadd.f32 %v3442, %v3739
  %v3814 = vadd.f32 %v3443, %v3740
  %v3815 = vadd.f32 %v3444, %v3741
  %v3816 = vadd.f32 %v3445, %v3742
  %v3817 = vadd.f32 %v3446, %v3743
  %v3818 = vadd.f32 %v3447, %v3744
  %v3819 = vadd.f32 %v3448, %v3745
  %v3820 = vadd.f32 %v3449, %v3746
  %v3821 = vadd.f32 %v3450, %v3747
  %v3822 = vadd.f32 %v3451, %v3748
  %v3823 = vadd.f32 %v3452, %v3749
  %v3824 = vadd.f32 %v3453, %v3750
  %v3825 = vadd.f32 %v3454, %v3751
  %v3826 = vadd.f32 %v3455, %v3752
  %v3827 = vadd.f32 %v3456, %v3753
  %v3828 = vadd.f32 %v3457, %v3754
  %v3829 = vadd.f32 %v3458, %v3755
  %v3830 = vadd.f32 %v3459, %v3756
  %v3831 = vadd.f32 %v3460, %v3757
  %v3832 = vadd.f32 %v3461, %v3758
  %v3833 = vadd.f32 %v3462, %v3759
  %v3834 = vadd.f32 %v3463, %v3760
  %v3835 = vadd.f32 %v3464, %v3761
  %v3836 = vadd.f32 %v3465, %v3762
  %v3837 = vadd.f32 %v3466, %v3763
  %v3838 = vadd.f32 %v3467, %v3764
  %v3839 = vadd.f32 %v3468, %v3765
  %v3840 = vadd.f32 %v3469, %v3766
  %v3841 = vadd.f32 %v3470, %v3767
  %v3842 = vadd.f32 %v3471, %v3768
  %v3843 = vadd.f32 %v3472, %v3769
  %v3844 = vadd.f32 %v3473, %v3770
  %v3845 = vadd.f32 %v3474, %v3771
  %v3846 = vadd.f32 %v3475, %v3772
  %v3847 = vadd.f32 %v3476, %v3773
  %v3848 = vadd.f32 %v3477, %v3774
  %v3849 = vadd.f32 %v3478, %v3775
  %v3850 = vadd.f32 %v3479, %v3776
  %v3851 = vadd.f32 %v3480, %v3777
  %v3852 = vadd.f32 %v3481, %v3778
  %v3853 = vadd.f32 %v3482, %v3779
  %v3854 = vadd.f32 %v3483, %v3780
  %v3855 = vadd.f32 %v3484, %v3781
  %v3856 = vadd.f32 %v3485, %v3782
  %v3857 = vadd.f32 %v3486, %v3783
  %v3858 = vadd.f32 %v3487, %v3784
  %v3859 = vadd.f32 %v3488, %v3785
  %v3860 = vadd.f32 %v3489, %v3786
  %v3861 = vadd.f32 %v3490, %v3787
  %v3862 = vadd.f32 %v3491, %v3788
  %v3863 = vadd.f32 %v3492, %v3789
  %v3864 = vadd.f32 %v3493, %v3790
  %v3865 = vadd.f32 %v3494, %v3791
  %v3866 = vadd.f32 %v3495, %v3792
  %v3867 = vadd.f32 %v3496, %v3793
  %v3868 = vadd.f32 %v3497, %v3794
  %v3869 = vadd.f32 %v3498, %v3795
  %v3870 = vadd.f32 %v3499, %v3796
  %v3871 = vadd.f32 %v3500, %v3797
  %v3872 = vadd.f32 %v3501, %v3798
  %v3873 = vadd.f32 %v3502, %v3799
  %v3874 = vadd.f32 %v3503, %v3800
  %v3875 = vadd.f32 %v3504, %v3801
  %v3876 = vadd.f32 %v3505, %v3802
  %s3877 = scalar_lea.vmem %s1, 5920
  %v3878 = vld [vmem:[%s3877] sm:$0xff]
  %v3879 = vld [vmem:[%s3877 + $0x8] sm:$0xff]
  %v3880 = vld [vmem:[%s3877 + $0x10] sm:$0xff]
  %v3881 = vld [vmem:[%s3877 + $0x18] sm:$0xff]
  %v3882 = vld [vmem:[%s3877 + $0x20] sm:$0xff]
  %v3883 = vld [vmem:[%s3877 + $0x28] sm:$0xff]
  %v3884 = vld [vmem:[%s3877 + $0x30] sm:$0xff]
  %v3885 = vld [vmem:[%s3877 + $0x38] sm:$0xff]
  %v3886 = vld [vmem:[%s3877 + $0x40] sm:$0xff]
  %v3887 = vld [vmem:[%s3877 + $0x48] sm:$0xff]
  %v3888 = vld [vmem:[%s3877 + $0x50] sm:$0xff]
  %v3889 = vld [vmem:[%s3877 + $0x58] sm:$0xff]
  %v3890 = vld [vmem:[%s3877 + $0x60] sm:$0xff]
  %v3891 = vld [vmem:[%s3877 + $0x68] sm:$0xff]
  %v3892 = vld [vmem:[%s3877 + $0x70] sm:$0xff]
  %v3893 = vld [vmem:[%s3877 + $0x78] sm:$0xff]
  %v3894 = vld [vmem:[%s3877 + $0x80] sm:$0xff]
  %v3895 = vld [vmem:[%s3877 + $0x88] sm:$0xff]
  %v3896 = vld [vmem:[%s3877 + $0x90] sm:$0xff]
  %v3897 = vld [vmem:[%s3877 + $0x98] sm:$0xff]
  %v3898 = vld [vmem:[%s3877 + $0xa0] sm:$0xff]
  %v3899 = vld [vmem:[%s3877 + $0xa8] sm:$0xff]
  %v3900 = vld [vmem:[%s3877 + $0xb0] sm:$0xff]
  %v3901 = vld [vmem:[%s3877 + $0xb8] sm:$0xff]
  %v3902 = vld [vmem:[%s3877 + $0xc0] sm:$0xff]
  %v3903 = vld [vmem:[%s3877 + $0xc8] sm:$0xff]
  %v3904 = vld [vmem:[%s3877 + $0xd0] sm:$0xff]
  %v3905 = vld [vmem:[%s3877 + $0xd8] sm:$0xff]
  %v3906 = vld [vmem:[%s3877 + $0xe0] sm:$0xff]
  %v3907 = vld [vmem:[%s3877 + $0xe8] sm:$0xff]
  %v3908 = vld [vmem:[%s3877 + $0xf0] sm:$0xff]
  %v3909 = vld [vmem:[%s3877 + $0xf8] sm:$0xff]
  %v3910 = vld [vmem:[%s3877 + $0x100] sm:$0xff]
  %v3911 = vld [vmem:[%s3877 + $0x108] sm:$0xff]
  %v3912 = vld [vmem:[%s3877 + $0x110] sm:$0xff]
  %v3913 = vld [vmem:[%s3877 + $0x118] sm:$0xff]
  %v3914 = vld [vmem:[%s3877 + $0x120] sm:$0xff]
  %v3915 = vld [vmem:[%s3877 + $0x128] sm:$0xff]
  %v3916 = vld [vmem:[%s3877 + $0x130] sm:$0xff]
  %v3917 = vld [vmem:[%s3877 + $0x138] sm:$0xff]
  %v3918 = vld [vmem:[%s3877 + $0x140] sm:$0xff]
  %v3919 = vld [vmem:[%s3877 + $0x148] sm:$0xff]
  %v3920 = vld [vmem:[%s3877 + $0x150] sm:$0xff]
  %v3921 = vld [vmem:[%s3877 + $0x158] sm:$0xff]
  %v3922 = vld [vmem:[%s3877 + $0x160] sm:$0xff]
  %v3923 = vld [vmem:[%s3877 + $0x168] sm:$0xff]
  %v3924 = vld [vmem:[%s3877 + $0x170] sm:$0xff]
  %v3925 = vld [vmem:[%s3877 + $0x178] sm:$0xff]
  %v3926 = vld [vmem:[%s3877 + $0x180] sm:$0xff]
  %v3927 = vld [vmem:[%s3877 + $0x188] sm:$0xff]
  %v3928 = vld [vmem:[%s3877 + $0x190] sm:$0xff]
  %v3929 = vld [vmem:[%s3877 + $0x198] sm:$0xff]
  %v3930 = vld [vmem:[%s3877 + $0x1a0] sm:$0xff]
  %v3931 = vld [vmem:[%s3877 + $0x1a8] sm:$0xff]
  %v3932 = vld [vmem:[%s3877 + $0x1b0] sm:$0xff]
  %v3933 = vld [vmem:[%s3877 + $0x1b8] sm:$0xff]
  %v3934 = vld [vmem:[%s3877 + $0x1c0] sm:$0xff]
  %v3935 = vld [vmem:[%s3877 + $0x1c8] sm:$0xff]
  %v3936 = vld [vmem:[%s3877 + $0x1d0] sm:$0xff]
  %v3937 = vld [vmem:[%s3877 + $0x1d8] sm:$0xff]
  %v3938 = vld [vmem:[%s3877 + $0x1e0] sm:$0xff]
  %v3939 = vld [vmem:[%s3877 + $0x1e8] sm:$0xff]
  %v3940 = vld [vmem:[%s3877 + $0x1f0] sm:$0xff]
  %v3941 = vld [vmem:[%s3877 + $0x1f8] sm:$0xff]
  %v3942 = vld [vmem:[%s3877 + $0x200] sm:$0xff]
  %v3943 = vld [vmem:[%s3877 + $0x208] sm:$0xff]
  %v3944 = vld [vmem:[%s3877 + $0x210] sm:$0xff]
  %v3945 = vld [vmem:[%s3877 + $0x218] sm:$0xff]
  %v3946 = vld [vmem:[%s3877 + $0x220] sm:$0xff]
  %v3947 = vld [vmem:[%s3877 + $0x228] sm:$0xff]
  %v3948 = vld [vmem:[%s3877 + $0x230] sm:$0xff]
  %v3949 = vld [vmem:[%s3877 + $0x238] sm:$0xff]
  %v3950 = vld [vmem:[%s3877 + $0x240] sm:$0xff]
  %v3951 = vld [vmem:[%s3877 + $0x248] sm:$0xff]
  %3952 = vset.pattern.permute.xlu0 10
  %3953 = vperm.xlu0 %3952, %v94
  %v3954 = vpop.permute.xlu0 %3953
  %3956 = vset.pattern.permute.xlu0 10
  %3957 = vperm.xlu0 %3956, %v95
  %v3958 = vpop.permute.xlu0 %3957
  %3960 = vset.pattern.permute.xlu0 10
  %3961 = vperm.xlu0 %3960, %v96
  %v3962 = vpop.permute.xlu0 %3961
  %3964 = vset.pattern.permute.xlu0 10
  %3965 = vperm.xlu0 %3964, %v97
  %v3966 = vpop.permute.xlu0 %3965
  %3968 = vset.pattern.permute.xlu0 10
  %3969 = vperm.xlu0 %3968, %v98
  %v3970 = vpop.permute.xlu0 %3969
  %3972 = vset.pattern.permute.xlu0 10
  %3973 = vperm.xlu0 %3972, %v99
  %v3974 = vpop.permute.xlu0 %3973
  %3976 = vset.pattern.permute.xlu0 10
  %3977 = vperm.xlu0 %3976, %v100
  %v3978 = vpop.permute.xlu0 %3977
  %3980 = vset.pattern.permute.xlu0 10
  %3981 = vperm.xlu0 %3980, %v101
  %v3982 = vpop.permute.xlu0 %3981
  %3984 = vset.pattern.permute.xlu0 10
  %3985 = vperm.xlu0 %3984, %v102
  %v3986 = vpop.permute.xlu0 %3985
  %3988 = vset.pattern.permute.xlu0 10
  %3989 = vperm.xlu0 %3988, %v103
  %v3990 = vpop.permute.xlu0 %3989
  %3992 = vset.pattern.permute.xlu0 10
  %3993 = vperm.xlu0 %3992, %v104
  %v3994 = vpop.permute.xlu0 %3993
  %3996 = vset.pattern.permute.xlu0 10
  %3997 = vperm.xlu0 %3996, %v105
  %v3998 = vpop.permute.xlu0 %3997
  %4000 = vset.pattern.permute.xlu0 10
  %4001 = vperm.xlu0 %4000, %v106
  %v4002 = vpop.permute.xlu0 %4001
  %4004 = vset.pattern.permute.xlu0 10
  %4005 = vperm.xlu0 %4004, %v107
  %v4006 = vpop.permute.xlu0 %4005
  %4008 = vset.pattern.permute.xlu0 10
  %4009 = vperm.xlu0 %4008, %v108
  %v4010 = vpop.permute.xlu0 %4009
  %4012 = vset.pattern.permute.xlu0 10
  %4013 = vperm.xlu0 %4012, %v109
  %v4014 = vpop.permute.xlu0 %4013
  %4016 = vset.pattern.permute.xlu0 10
  %4017 = vperm.xlu0 %4016, %v110
  %v4018 = vpop.permute.xlu0 %4017
  %4020 = vset.pattern.permute.xlu0 10
  %4021 = vperm.xlu0 %4020, %v111
  %v4022 = vpop.permute.xlu0 %4021
  %4024 = vset.pattern.permute.xlu0 10
  %4025 = vperm.xlu0 %4024, %v112
  %v4026 = vpop.permute.xlu0 %4025
  %4028 = vset.pattern.permute.xlu0 10
  %4029 = vperm.xlu0 %4028, %v113
  %v4030 = vpop.permute.xlu0 %4029
  %4032 = vset.pattern.permute.xlu0 10
  %4033 = vperm.xlu0 %4032, %v114
  %v4034 = vpop.permute.xlu0 %4033
  %4036 = vset.pattern.permute.xlu0 10
  %4037 = vperm.xlu0 %4036, %v115
  %v4038 = vpop.permute.xlu0 %4037
  %4040 = vset.pattern.permute.xlu0 10
  %4041 = vperm.xlu0 %4040, %v116
  %v4042 = vpop.permute.xlu0 %4041
  %4044 = vset.pattern.permute.xlu0 10
  %4045 = vperm.xlu0 %4044, %v117
  %v4046 = vpop.permute.xlu0 %4045
  %4048 = vset.pattern.permute.xlu0 10
  %4049 = vperm.xlu0 %4048, %v118
  %v4050 = vpop.permute.xlu0 %4049
  %4052 = vset.pattern.permute.xlu0 10
  %4053 = vperm.xlu0 %4052, %v119
  %v4054 = vpop.permute.xlu0 %4053
  %4056 = vset.pattern.permute.xlu0 10
  %4057 = vperm.xlu0 %4056, %v120
  %v4058 = vpop.permute.xlu0 %4057
  %4060 = vset.pattern.permute.xlu0 10
  %4061 = vperm.xlu0 %4060, %v121
  %v4062 = vpop.permute.xlu0 %4061
  %4064 = vset.pattern.permute.xlu0 10
  %4065 = vperm.xlu0 %4064, %v122
  %v4066 = vpop.permute.xlu0 %4065
  %4068 = vset.pattern.permute.xlu0 10
  %4069 = vperm.xlu0 %4068, %v123
  %v4070 = vpop.permute.xlu0 %4069
  %4072 = vset.pattern.permute.xlu0 10
  %4073 = vperm.xlu0 %4072, %v124
  %v4074 = vpop.permute.xlu0 %4073
  %4076 = vset.pattern.permute.xlu0 10
  %4077 = vperm.xlu0 %4076, %v125
  %v4078 = vpop.permute.xlu0 %4077
  %4080 = vset.pattern.permute.xlu0 10
  %4081 = vperm.xlu0 %4080, %v126
  %v4082 = vpop.permute.xlu0 %4081
  %4084 = vset.pattern.permute.xlu0 10
  %4085 = vperm.xlu0 %4084, %v127
  %v4086 = vpop.permute.xlu0 %4085
  %4088 = vset.pattern.permute.xlu0 10
  %4089 = vperm.xlu0 %4088, %v128
  %v4090 = vpop.permute.xlu0 %4089
  %4092 = vset.pattern.permute.xlu0 10
  %4093 = vperm.xlu0 %4092, %v129
  %v4094 = vpop.permute.xlu0 %4093
  %4096 = vset.pattern.permute.xlu0 10
  %4097 = vperm.xlu0 %4096, %v130
  %v4098 = vpop.permute.xlu0 %4097
  %v4100 = vmul.f32 %v3954, %v3878
  %v4101 = vmul.f32 %v3954, %v3879
  %v4102 = vmul.f32 %v3958, %v3880
  %v4103 = vmul.f32 %v3958, %v3881
  %v4104 = vmul.f32 %v3962, %v3882
  %v4105 = vmul.f32 %v3962, %v3883
  %v4106 = vmul.f32 %v3966, %v3884
  %v4107 = vmul.f32 %v3966, %v3885
  %v4108 = vmul.f32 %v3970, %v3886
  %v4109 = vmul.f32 %v3970, %v3887
  %v4110 = vmul.f32 %v3974, %v3888
  %v4111 = vmul.f32 %v3974, %v3889
  %v4112 = vmul.f32 %v3978, %v3890
  %v4113 = vmul.f32 %v3978, %v3891
  %v4114 = vmul.f32 %v3982, %v3892
  %v4115 = vmul.f32 %v3982, %v3893
  %v4116 = vmul.f32 %v3986, %v3894
  %v4117 = vmul.f32 %v3986, %v3895
  %v4118 = vmul.f32 %v3990, %v3896
  %v4119 = vmul.f32 %v3990, %v3897
  %v4120 = vmul.f32 %v3994, %v3898
  %v4121 = vmul.f32 %v3994, %v3899
  %v4122 = vmul.f32 %v3998, %v3900
  %v4123 = vmul.f32 %v3998, %v3901
  %v4124 = vmul.f32 %v4002, %v3902
  %v4125 = vmul.f32 %v4002, %v3903
  %v4126 = vmul.f32 %v4006, %v3904
  %v4127 = vmul.f32 %v4006, %v3905
  %v4128 = vmul.f32 %v4010, %v3906
  %v4129 = vmul.f32 %v4010, %v3907
  %v4130 = vmul.f32 %v4014, %v3908
  %v4131 = vmul.f32 %v4014, %v3909
  %v4132 = vmul.f32 %v4018, %v3910
  %v4133 = vmul.f32 %v4018, %v3911
  %v4134 = vmul.f32 %v4022, %v3912
  %v4135 = vmul.f32 %v4022, %v3913
  %v4136 = vmul.f32 %v4026, %v3914
  %v4137 = vmul.f32 %v4026, %v3915
  %v4138 = vmul.f32 %v4030, %v3916
  %v4139 = vmul.f32 %v4030, %v3917
  %v4140 = vmul.f32 %v4034, %v3918
  %v4141 = vmul.f32 %v4034, %v3919
  %v4142 = vmul.f32 %v4038, %v3920
  %v4143 = vmul.f32 %v4038, %v3921
  %v4144 = vmul.f32 %v4042, %v3922
  %v4145 = vmul.f32 %v4042, %v3923
  %v4146 = vmul.f32 %v4046, %v3924
  %v4147 = vmul.f32 %v4046, %v3925
  %v4148 = vmul.f32 %v4050, %v3926
  %v4149 = vmul.f32 %v4050, %v3927
  %v4150 = vmul.f32 %v4054, %v3928
  %v4151 = vmul.f32 %v4054, %v3929
  %v4152 = vmul.f32 %v4058, %v3930
  %v4153 = vmul.f32 %v4058, %v3931
  %v4154 = vmul.f32 %v4062, %v3932
  %v4155 = vmul.f32 %v4062, %v3933
  %v4156 = vmul.f32 %v4066, %v3934
  %v4157 = vmul.f32 %v4066, %v3935
  %v4158 = vmul.f32 %v4070, %v3936
  %v4159 = vmul.f32 %v4070, %v3937
  %v4160 = vmul.f32 %v4074, %v3938
  %v4161 = vmul.f32 %v4074, %v3939
  %v4162 = vmul.f32 %v4078, %v3940
  %v4163 = vmul.f32 %v4078, %v3941
  %v4164 = vmul.f32 %v4082, %v3942
  %v4165 = vmul.f32 %v4082, %v3943
  %v4166 = vmul.f32 %v4086, %v3944
  %v4167 = vmul.f32 %v4086, %v3945
  %v4168 = vmul.f32 %v4090, %v3946
  %v4169 = vmul.f32 %v4090, %v3947
  %v4170 = vmul.f32 %v4094, %v3948
  %v4171 = vmul.f32 %v4094, %v3949
  %v4172 = vmul.f32 %v4098, %v3950
  %v4173 = vmul.f32 %v4098, %v3951
  %v4174 = vadd.f32 %v3803, %v4100
  %v4175 = vadd.f32 %v3804, %v4101
  %v4176 = vadd.f32 %v3805, %v4102
  %v4177 = vadd.f32 %v3806, %v4103
  %v4178 = vadd.f32 %v3807, %v4104
  %v4179 = vadd.f32 %v3808, %v4105
  %v4180 = vadd.f32 %v3809, %v4106
  %v4181 = vadd.f32 %v3810, %v4107
  %v4182 = vadd.f32 %v3811, %v4108
  %v4183 = vadd.f32 %v3812, %v4109
  %v4184 = vadd.f32 %v3813, %v4110
  %v4185 = vadd.f32 %v3814, %v4111
  %v4186 = vadd.f32 %v3815, %v4112
  %v4187 = vadd.f32 %v3816, %v4113
  %v4188 = vadd.f32 %v3817, %v4114
  %v4189 = vadd.f32 %v3818, %v4115
  %v4190 = vadd.f32 %v3819, %v4116
  %v4191 = vadd.f32 %v3820, %v4117
  %v4192 = vadd.f32 %v3821, %v4118
  %v4193 = vadd.f32 %v3822, %v4119
  %v4194 = vadd.f32 %v3823, %v4120
  %v4195 = vadd.f32 %v3824, %v4121
  %v4196 = vadd.f32 %v3825, %v4122
  %v4197 = vadd.f32 %v3826, %v4123
  %v4198 = vadd.f32 %v3827, %v4124
  %v4199 = vadd.f32 %v3828, %v4125
  %v4200 = vadd.f32 %v3829, %v4126
  %v4201 = vadd.f32 %v3830, %v4127
  %v4202 = vadd.f32 %v3831, %v4128
  %v4203 = vadd.f32 %v3832, %v4129
  %v4204 = vadd.f32 %v3833, %v4130
  %v4205 = vadd.f32 %v3834, %v4131
  %v4206 = vadd.f32 %v3835, %v4132
  %v4207 = vadd.f32 %v3836, %v4133
  %v4208 = vadd.f32 %v3837, %v4134
  %v4209 = vadd.f32 %v3838, %v4135
  %v4210 = vadd.f32 %v3839, %v4136
  %v4211 = vadd.f32 %v3840, %v4137
  %v4212 = vadd.f32 %v3841, %v4138
  %v4213 = vadd.f32 %v3842, %v4139
  %v4214 = vadd.f32 %v3843, %v4140
  %v4215 = vadd.f32 %v3844, %v4141
  %v4216 = vadd.f32 %v3845, %v4142
  %v4217 = vadd.f32 %v3846, %v4143
  %v4218 = vadd.f32 %v3847, %v4144
  %v4219 = vadd.f32 %v3848, %v4145
  %v4220 = vadd.f32 %v3849, %v4146
  %v4221 = vadd.f32 %v3850, %v4147
  %v4222 = vadd.f32 %v3851, %v4148
  %v4223 = vadd.f32 %v3852, %v4149
  %v4224 = vadd.f32 %v3853, %v4150
  %v4225 = vadd.f32 %v3854, %v4151
  %v4226 = vadd.f32 %v3855, %v4152
  %v4227 = vadd.f32 %v3856, %v4153
  %v4228 = vadd.f32 %v3857, %v4154
  %v4229 = vadd.f32 %v3858, %v4155
  %v4230 = vadd.f32 %v3859, %v4156
  %v4231 = vadd.f32 %v3860, %v4157
  %v4232 = vadd.f32 %v3861, %v4158
  %v4233 = vadd.f32 %v3862, %v4159
  %v4234 = vadd.f32 %v3863, %v4160
  %v4235 = vadd.f32 %v3864, %v4161
  %v4236 = vadd.f32 %v3865, %v4162
  %v4237 = vadd.f32 %v3866, %v4163
  %v4238 = vadd.f32 %v3867, %v4164
  %v4239 = vadd.f32 %v3868, %v4165
  %v4240 = vadd.f32 %v3869, %v4166
  %v4241 = vadd.f32 %v3870, %v4167
  %v4242 = vadd.f32 %v3871, %v4168
  %v4243 = vadd.f32 %v3872, %v4169
  %v4244 = vadd.f32 %v3873, %v4170
  %v4245 = vadd.f32 %v3874, %v4171
  %v4246 = vadd.f32 %v3875, %v4172
  %v4247 = vadd.f32 %v3876, %v4173
  %v4248 = vld [vmem:[%s3] sm:$0xff]
  %v4249 = vld [vmem:[%s3 + $0x8] sm:$0xff]
  %v4250 = vld [vmem:[%s3 + $0x10] sm:$0xff]
  %v4251 = vld [vmem:[%s3 + $0x18] sm:$0xff]
  %v4252 = vld [vmem:[%s3 + $0x20] sm:$0xff]
  %v4253 = vld [vmem:[%s3 + $0x28] sm:$0xff]
  %v4254 = vld [vmem:[%s3 + $0x30] sm:$0xff]
  %v4255 = vld [vmem:[%s3 + $0x38] sm:$0xff]
  %v4256 = vld [vmem:[%s3 + $0x40] sm:$0xff]
  %v4257 = vld [vmem:[%s3 + $0x48] sm:$0xff]
  %v4258 = vld [vmem:[%s3 + $0x50] sm:$0xff]
  %v4259 = vld [vmem:[%s3 + $0x58] sm:$0xff]
  %v4260 = vld [vmem:[%s3 + $0x60] sm:$0xff]
  %v4261 = vld [vmem:[%s3 + $0x68] sm:$0xff]
  %v4262 = vld [vmem:[%s3 + $0x70] sm:$0xff]
  %v4263 = vld [vmem:[%s3 + $0x78] sm:$0xff]
  %v4264 = vld [vmem:[%s3 + $0x80] sm:$0xff]
  %v4265 = vld [vmem:[%s3 + $0x88] sm:$0xff]
  %v4266 = vld [vmem:[%s3 + $0x90] sm:$0xff]
  %v4267 = vld [vmem:[%s3 + $0x98] sm:$0xff]
  %v4268 = vld [vmem:[%s3 + $0xa0] sm:$0xff]
  %v4269 = vld [vmem:[%s3 + $0xa8] sm:$0xff]
  %v4270 = vld [vmem:[%s3 + $0xb0] sm:$0xff]
  %v4271 = vld [vmem:[%s3 + $0xb8] sm:$0xff]
  %v4272 = vld [vmem:[%s3 + $0xc0] sm:$0xff]
  %v4273 = vld [vmem:[%s3 + $0xc8] sm:$0xff]
  %v4274 = vld [vmem:[%s3 + $0xd0] sm:$0xff]
  %v4275 = vld [vmem:[%s3 + $0xd8] sm:$0xff]
  %v4276 = vld [vmem:[%s3 + $0xe0] sm:$0xff]
  %v4277 = vld [vmem:[%s3 + $0xe8] sm:$0xff]
  %v4278 = vld [vmem:[%s3 + $0xf0] sm:$0xff]
  %v4279 = vld [vmem:[%s3 + $0xf8] sm:$0xff]
  %v4280 = vld [vmem:[%s3 + $0x100] sm:$0xff]
  %v4281 = vld [vmem:[%s3 + $0x108] sm:$0xff]
  %v4282 = vld [vmem:[%s3 + $0x110] sm:$0xff]
  %v4283 = vld [vmem:[%s3 + $0x118] sm:$0xff]
  %v4284 = vld [vmem:[%s3 + $0x120] sm:$0xff]
  %v4285 = vlaneseq
  %v4286 = vand.u32 %v4285, 127
  %4287 = vset.pattern.permute.xlu0 0
  %4288 = vperm.xlu0 %4287, %v4248
  %v4289 = vpop.permute.xlu0 %4288
  %4290 = vset.pattern.permute.xlu0 0
  %4291 = vperm.xlu0 %4290, %v4249
  %v4292 = vpop.permute.xlu0 %4291
  %4293 = vset.pattern.permute.xlu0 0
  %4294 = vperm.xlu0 %4293, %v4250
  %v4295 = vpop.permute.xlu0 %4294
  %4296 = vset.pattern.permute.xlu0 0
  %4297 = vperm.xlu0 %4296, %v4251
  %v4298 = vpop.permute.xlu0 %4297
  %4299 = vset.pattern.permute.xlu0 0
  %4300 = vperm.xlu0 %4299, %v4252
  %v4301 = vpop.permute.xlu0 %4300
  %4302 = vset.pattern.permute.xlu0 0
  %4303 = vperm.xlu0 %4302, %v4253
  %v4304 = vpop.permute.xlu0 %4303
  %4305 = vset.pattern.permute.xlu0 0
  %4306 = vperm.xlu0 %4305, %v4254
  %v4307 = vpop.permute.xlu0 %4306
  %4308 = vset.pattern.permute.xlu0 0
  %4309 = vperm.xlu0 %4308, %v4255
  %v4310 = vpop.permute.xlu0 %4309
  %4311 = vset.pattern.permute.xlu0 0
  %4312 = vperm.xlu0 %4311, %v4256
  %v4313 = vpop.permute.xlu0 %4312
  %4314 = vset.pattern.permute.xlu0 0
  %4315 = vperm.xlu0 %4314, %v4257
  %v4316 = vpop.permute.xlu0 %4315
  %4317 = vset.pattern.permute.xlu0 0
  %4318 = vperm.xlu0 %4317, %v4258
  %v4319 = vpop.permute.xlu0 %4318
  %4320 = vset.pattern.permute.xlu0 0
  %4321 = vperm.xlu0 %4320, %v4259
  %v4322 = vpop.permute.xlu0 %4321
  %4323 = vset.pattern.permute.xlu0 0
  %4324 = vperm.xlu0 %4323, %v4260
  %v4325 = vpop.permute.xlu0 %4324
  %4326 = vset.pattern.permute.xlu0 0
  %4327 = vperm.xlu0 %4326, %v4261
  %v4328 = vpop.permute.xlu0 %4327
  %4329 = vset.pattern.permute.xlu0 0
  %4330 = vperm.xlu0 %4329, %v4262
  %v4331 = vpop.permute.xlu0 %4330
  %4332 = vset.pattern.permute.xlu0 0
  %4333 = vperm.xlu0 %4332, %v4263
  %v4334 = vpop.permute.xlu0 %4333
  %4335 = vset.pattern.permute.xlu0 0
  %4336 = vperm.xlu0 %4335, %v4264
  %v4337 = vpop.permute.xlu0 %4336
  %4338 = vset.pattern.permute.xlu0 0
  %4339 = vperm.xlu0 %4338, %v4265
  %v4340 = vpop.permute.xlu0 %4339
  %4341 = vset.pattern.permute.xlu0 0
  %4342 = vperm.xlu0 %4341, %v4266
  %v4343 = vpop.permute.xlu0 %4342
  %4344 = vset.pattern.permute.xlu0 0
  %4345 = vperm.xlu0 %4344, %v4267
  %v4346 = vpop.permute.xlu0 %4345
  %4347 = vset.pattern.permute.xlu0 0
  %4348 = vperm.xlu0 %4347, %v4268
  %v4349 = vpop.permute.xlu0 %4348
  %4350 = vset.pattern.permute.xlu0 0
  %4351 = vperm.xlu0 %4350, %v4269
  %v4352 = vpop.permute.xlu0 %4351
  %4353 = vset.pattern.permute.xlu0 0
  %4354 = vperm.xlu0 %4353, %v4270
  %v4355 = vpop.permute.xlu0 %4354
  %4356 = vset.pattern.permute.xlu0 0
  %4357 = vperm.xlu0 %4356, %v4271
  %v4358 = vpop.permute.xlu0 %4357
  %4359 = vset.pattern.permute.xlu0 0
  %4360 = vperm.xlu0 %4359, %v4272
  %v4361 = vpop.permute.xlu0 %4360
  %4362 = vset.pattern.permute.xlu0 0
  %4363 = vperm.xlu0 %4362, %v4273
  %v4364 = vpop.permute.xlu0 %4363
  %4365 = vset.pattern.permute.xlu0 0
  %4366 = vperm.xlu0 %4365, %v4274
  %v4367 = vpop.permute.xlu0 %4366
  %4368 = vset.pattern.permute.xlu0 0
  %4369 = vperm.xlu0 %4368, %v4275
  %v4370 = vpop.permute.xlu0 %4369
  %4371 = vset.pattern.permute.xlu0 0
  %4372 = vperm.xlu0 %4371, %v4276
  %v4373 = vpop.permute.xlu0 %4372
  %4374 = vset.pattern.permute.xlu0 0
  %4375 = vperm.xlu0 %4374, %v4277
  %v4376 = vpop.permute.xlu0 %4375
  %4377 = vset.pattern.permute.xlu0 0
  %4378 = vperm.xlu0 %4377, %v4278
  %v4379 = vpop.permute.xlu0 %4378
  %4380 = vset.pattern.permute.xlu0 0
  %4381 = vperm.xlu0 %4380, %v4279
  %v4382 = vpop.permute.xlu0 %4381
  %4383 = vset.pattern.permute.xlu0 0
  %4384 = vperm.xlu0 %4383, %v4280
  %v4385 = vpop.permute.xlu0 %4384
  %4386 = vset.pattern.permute.xlu0 0
  %4387 = vperm.xlu0 %4386, %v4281
  %v4388 = vpop.permute.xlu0 %4387
  %4389 = vset.pattern.permute.xlu0 0
  %4390 = vperm.xlu0 %4389, %v4282
  %v4391 = vpop.permute.xlu0 %4390
  %4392 = vset.pattern.permute.xlu0 0
  %4393 = vperm.xlu0 %4392, %v4283
  %v4394 = vpop.permute.xlu0 %4393
  %4395 = vset.pattern.permute.xlu0 0
  %4396 = vperm.xlu0 %4395, %v4284
  %v4397 = vpop.permute.xlu0 %4396
  %vm4398 = vcmp.eq.s32.totalorder %v4289, %v4286
  %vm4399 = vcmp.eq.s32.totalorder %v4292, %v4286
  %vm4400 = vcmp.eq.s32.totalorder %v4295, %v4286
  %vm4401 = vcmp.eq.s32.totalorder %v4298, %v4286
  %vm4402 = vcmp.eq.s32.totalorder %v4301, %v4286
  %vm4403 = vcmp.eq.s32.totalorder %v4304, %v4286
  %vm4404 = vcmp.eq.s32.totalorder %v4307, %v4286
  %vm4405 = vcmp.eq.s32.totalorder %v4310, %v4286
  %vm4406 = vcmp.eq.s32.totalorder %v4313, %v4286
  %vm4407 = vcmp.eq.s32.totalorder %v4316, %v4286
  %vm4408 = vcmp.eq.s32.totalorder %v4319, %v4286
  %vm4409 = vcmp.eq.s32.totalorder %v4322, %v4286
  %vm4410 = vcmp.eq.s32.totalorder %v4325, %v4286
  %vm4411 = vcmp.eq.s32.totalorder %v4328, %v4286
  %vm4412 = vcmp.eq.s32.totalorder %v4331, %v4286
  %vm4413 = vcmp.eq.s32.totalorder %v4334, %v4286
  %vm4414 = vcmp.eq.s32.totalorder %v4337, %v4286
  %vm4415 = vcmp.eq.s32.totalorder %v4340, %v4286
  %vm4416 = vcmp.eq.s32.totalorder %v4343, %v4286
  %vm4417 = vcmp.eq.s32.totalorder %v4346, %v4286
  %vm4418 = vcmp.eq.s32.totalorder %v4349, %v4286
  %vm4419 = vcmp.eq.s32.totalorder %v4352, %v4286
  %vm4420 = vcmp.eq.s32.totalorder %v4355, %v4286
  %vm4421 = vcmp.eq.s32.totalorder %v4358, %v4286
  %vm4422 = vcmp.eq.s32.totalorder %v4361, %v4286
  %vm4423 = vcmp.eq.s32.totalorder %v4364, %v4286
  %vm4424 = vcmp.eq.s32.totalorder %v4367, %v4286
  %vm4425 = vcmp.eq.s32.totalorder %v4370, %v4286
  %vm4426 = vcmp.eq.s32.totalorder %v4373, %v4286
  %vm4427 = vcmp.eq.s32.totalorder %v4376, %v4286
  %vm4428 = vcmp.eq.s32.totalorder %v4379, %v4286
  %vm4429 = vcmp.eq.s32.totalorder %v4382, %v4286
  %vm4430 = vcmp.eq.s32.totalorder %v4385, %v4286
  %vm4431 = vcmp.eq.s32.totalorder %v4388, %v4286
  %vm4432 = vcmp.eq.s32.totalorder %v4391, %v4286
  %vm4433 = vcmp.eq.s32.totalorder %v4394, %v4286
  %vm4434 = vcmp.eq.s32.totalorder %v4397, %v4286
  %v4435 = vsel %vm4398, 1, 0
  %v4436 = vsel %vm4399, 1, 0
  %v4437 = vsel %vm4400, 1, 0
  %v4438 = vsel %vm4401, 1, 0
  %v4439 = vsel %vm4402, 1, 0
  %v4440 = vsel %vm4403, 1, 0
  %v4441 = vsel %vm4404, 1, 0
  %v4442 = vsel %vm4405, 1, 0
  %v4443 = vsel %vm4406, 1, 0
  %v4444 = vsel %vm4407, 1, 0
  %v4445 = vsel %vm4408, 1, 0
  %v4446 = vsel %vm4409, 1, 0
  %v4447 = vsel %vm4410, 1, 0
  %v4448 = vsel %vm4411, 1, 0
  %v4449 = vsel %vm4412, 1, 0
  %v4450 = vsel %vm4413, 1, 0
  %v4451 = vsel %vm4414, 1, 0
  %v4452 = vsel %vm4415, 1, 0
  %v4453 = vsel %vm4416, 1, 0
  %v4454 = vsel %vm4417, 1, 0
  %v4455 = vsel %vm4418, 1, 0
  %v4456 = vsel %vm4419, 1, 0
  %v4457 = vsel %vm4420, 1, 0
  %v4458 = vsel %vm4421, 1, 0
  %v4459 = vsel %vm4422, 1, 0
  %v4460 = vsel %vm4423, 1, 0
  %v4461 = vsel %vm4424, 1, 0
  %v4462 = vsel %vm4425, 1, 0
  %v4463 = vsel %vm4426, 1, 0
  %v4464 = vsel %vm4427, 1, 0
  %v4465 = vsel %vm4428, 1, 0
  %v4466 = vsel %vm4429, 1, 0
  %v4467 = vsel %vm4430, 1, 0
  %v4468 = vsel %vm4431, 1, 0
  %v4469 = vsel %vm4432, 1, 0
  %v4470 = vsel %vm4433, 1, 0
  %v4471 = vsel %vm4434, 1, 0
  %v4472 = vcvt.s32.f32 %v4435
  %v4473 = vcvt.s32.f32 %v4436
  %v4474 = vcvt.s32.f32 %v4437
  %v4475 = vcvt.s32.f32 %v4438
  %v4476 = vcvt.s32.f32 %v4439
  %v4477 = vcvt.s32.f32 %v4440
  %v4478 = vcvt.s32.f32 %v4441
  %v4479 = vcvt.s32.f32 %v4442
  %v4480 = vcvt.s32.f32 %v4443
  %v4481 = vcvt.s32.f32 %v4444
  %v4482 = vcvt.s32.f32 %v4445
  %v4483 = vcvt.s32.f32 %v4446
  %v4484 = vcvt.s32.f32 %v4447
  %v4485 = vcvt.s32.f32 %v4448
  %v4486 = vcvt.s32.f32 %v4449
  %v4487 = vcvt.s32.f32 %v4450
  %v4488 = vcvt.s32.f32 %v4451
  %v4489 = vcvt.s32.f32 %v4452
  %v4490 = vcvt.s32.f32 %v4453
  %v4491 = vcvt.s32.f32 %v4454
  %v4492 = vcvt.s32.f32 %v4455
  %v4493 = vcvt.s32.f32 %v4456
  %v4494 = vcvt.s32.f32 %v4457
  %v4495 = vcvt.s32.f32 %v4458
  %v4496 = vcvt.s32.f32 %v4459
  %v4497 = vcvt.s32.f32 %v4460
  %v4498 = vcvt.s32.f32 %v4461
  %v4499 = vcvt.s32.f32 %v4462
  %v4500 = vcvt.s32.f32 %v4463
  %v4501 = vcvt.s32.f32 %v4464
  %v4502 = vcvt.s32.f32 %v4465
  %v4503 = vcvt.s32.f32 %v4466
  %v4504 = vcvt.s32.f32 %v4467
  %v4505 = vcvt.s32.f32 %v4468
  %v4506 = vcvt.s32.f32 %v4469
  %v4507 = vcvt.s32.f32 %v4470
  %v4508 = vcvt.s32.f32 %v4471
  %v4509 = vadd.f32 %v4472, 0.0
  %v4510 = vadd.f32 %v4473, 0.0
  %v4511 = vadd.f32 %v4474, 0.0
  %v4512 = vadd.f32 %v4475, 0.0
  %v4513 = vadd.f32 %v4476, 0.0
  %v4514 = vadd.f32 %v4477, 0.0
  %v4515 = vadd.f32 %v4478, 0.0
  %v4516 = vadd.f32 %v4479, 0.0
  %v4517 = vadd.f32 %v4480, 0.0
  %v4518 = vadd.f32 %v4481, 0.0
  %v4519 = vadd.f32 %v4482, 0.0
  %v4520 = vadd.f32 %v4483, 0.0
  %v4521 = vadd.f32 %v4484, 0.0
  %v4522 = vadd.f32 %v4485, 0.0
  %v4523 = vadd.f32 %v4486, 0.0
  %v4524 = vadd.f32 %v4487, 0.0
  %v4525 = vadd.f32 %v4488, 0.0
  %v4526 = vadd.f32 %v4489, 0.0
  %v4527 = vadd.f32 %v4490, 0.0
  %v4528 = vadd.f32 %v4491, 0.0
  %v4529 = vadd.f32 %v4492, 0.0
  %v4530 = vadd.f32 %v4493, 0.0
  %v4531 = vadd.f32 %v4494, 0.0
  %v4532 = vadd.f32 %v4495, 0.0
  %v4533 = vadd.f32 %v4496, 0.0
  %v4534 = vadd.f32 %v4497, 0.0
  %v4535 = vadd.f32 %v4498, 0.0
  %v4536 = vadd.f32 %v4499, 0.0
  %v4537 = vadd.f32 %v4500, 0.0
  %v4538 = vadd.f32 %v4501, 0.0
  %v4539 = vadd.f32 %v4502, 0.0
  %v4540 = vadd.f32 %v4503, 0.0
  %v4541 = vadd.f32 %v4504, 0.0
  %v4542 = vadd.f32 %v4505, 0.0
  %v4543 = vadd.f32 %v4506, 0.0
  %v4544 = vadd.f32 %v4507, 0.0
  %v4545 = vadd.f32 %v4508, 0.0
  %4546 = vset.pattern.permute.xlu0 1
  %4547 = vperm.xlu0 %4546, %v4248
  %v4548 = vpop.permute.xlu0 %4547
  %4549 = vset.pattern.permute.xlu0 1
  %4550 = vperm.xlu0 %4549, %v4249
  %v4551 = vpop.permute.xlu0 %4550
  %4552 = vset.pattern.permute.xlu0 1
  %4553 = vperm.xlu0 %4552, %v4250
  %v4554 = vpop.permute.xlu0 %4553
  %4555 = vset.pattern.permute.xlu0 1
  %4556 = vperm.xlu0 %4555, %v4251
  %v4557 = vpop.permute.xlu0 %4556
  %4558 = vset.pattern.permute.xlu0 1
  %4559 = vperm.xlu0 %4558, %v4252
  %v4560 = vpop.permute.xlu0 %4559
  %4561 = vset.pattern.permute.xlu0 1
  %4562 = vperm.xlu0 %4561, %v4253
  %v4563 = vpop.permute.xlu0 %4562
  %4564 = vset.pattern.permute.xlu0 1
  %4565 = vperm.xlu0 %4564, %v4254
  %v4566 = vpop.permute.xlu0 %4565
  %4567 = vset.pattern.permute.xlu0 1
  %4568 = vperm.xlu0 %4567, %v4255
  %v4569 = vpop.permute.xlu0 %4568
  %4570 = vset.pattern.permute.xlu0 1
  %4571 = vperm.xlu0 %4570, %v4256
  %v4572 = vpop.permute.xlu0 %4571
  %4573 = vset.pattern.permute.xlu0 1
  %4574 = vperm.xlu0 %4573, %v4257
  %v4575 = vpop.permute.xlu0 %4574
  %4576 = vset.pattern.permute.xlu0 1
  %4577 = vperm.xlu0 %4576, %v4258
  %v4578 = vpop.permute.xlu0 %4577
  %4579 = vset.pattern.permute.xlu0 1
  %4580 = vperm.xlu0 %4579, %v4259
  %v4581 = vpop.permute.xlu0 %4580
  %4582 = vset.pattern.permute.xlu0 1
  %4583 = vperm.xlu0 %4582, %v4260
  %v4584 = vpop.permute.xlu0 %4583
  %4585 = vset.pattern.permute.xlu0 1
  %4586 = vperm.xlu0 %4585, %v4261
  %v4587 = vpop.permute.xlu0 %4586
  %4588 = vset.pattern.permute.xlu0 1
  %4589 = vperm.xlu0 %4588, %v4262
  %v4590 = vpop.permute.xlu0 %4589
  %4591 = vset.pattern.permute.xlu0 1
  %4592 = vperm.xlu0 %4591, %v4263
  %v4593 = vpop.permute.xlu0 %4592
  %4594 = vset.pattern.permute.xlu0 1
  %4595 = vperm.xlu0 %4594, %v4264
  %v4596 = vpop.permute.xlu0 %4595
  %4597 = vset.pattern.permute.xlu0 1
  %4598 = vperm.xlu0 %4597, %v4265
  %v4599 = vpop.permute.xlu0 %4598
  %4600 = vset.pattern.permute.xlu0 1
  %4601 = vperm.xlu0 %4600, %v4266
  %v4602 = vpop.permute.xlu0 %4601
  %4603 = vset.pattern.permute.xlu0 1
  %4604 = vperm.xlu0 %4603, %v4267
  %v4605 = vpop.permute.xlu0 %4604
  %4606 = vset.pattern.permute.xlu0 1
  %4607 = vperm.xlu0 %4606, %v4268
  %v4608 = vpop.permute.xlu0 %4607
  %4609 = vset.pattern.permute.xlu0 1
  %4610 = vperm.xlu0 %4609, %v4269
  %v4611 = vpop.permute.xlu0 %4610
  %4612 = vset.pattern.permute.xlu0 1
  %4613 = vperm.xlu0 %4612, %v4270
  %v4614 = vpop.permute.xlu0 %4613
  %4615 = vset.pattern.permute.xlu0 1
  %4616 = vperm.xlu0 %4615, %v4271
  %v4617 = vpop.permute.xlu0 %4616
  %4618 = vset.pattern.permute.xlu0 1
  %4619 = vperm.xlu0 %4618, %v4272
  %v4620 = vpop.permute.xlu0 %4619
  %4621 = vset.pattern.permute.xlu0 1
  %4622 = vperm.xlu0 %4621, %v4273
  %v4623 = vpop.permute.xlu0 %4622
  %4624 = vset.pattern.permute.xlu0 1
  %4625 = vperm.xlu0 %4624, %v4274
  %v4626 = vpop.permute.xlu0 %4625
  %4627 = vset.pattern.permute.xlu0 1
  %4628 = vperm.xlu0 %4627, %v4275
  %v4629 = vpop.permute.xlu0 %4628
  %4630 = vset.pattern.permute.xlu0 1
  %4631 = vperm.xlu0 %4630, %v4276
  %v4632 = vpop.permute.xlu0 %4631
  %4633 = vset.pattern.permute.xlu0 1
  %4634 = vperm.xlu0 %4633, %v4277
  %v4635 = vpop.permute.xlu0 %4634
  %4636 = vset.pattern.permute.xlu0 1
  %4637 = vperm.xlu0 %4636, %v4278
  %v4638 = vpop.permute.xlu0 %4637
  %4639 = vset.pattern.permute.xlu0 1
  %4640 = vperm.xlu0 %4639, %v4279
  %v4641 = vpop.permute.xlu0 %4640
  %4642 = vset.pattern.permute.xlu0 1
  %4643 = vperm.xlu0 %4642, %v4280
  %v4644 = vpop.permute.xlu0 %4643
  %4645 = vset.pattern.permute.xlu0 1
  %4646 = vperm.xlu0 %4645, %v4281
  %v4647 = vpop.permute.xlu0 %4646
  %4648 = vset.pattern.permute.xlu0 1
  %4649 = vperm.xlu0 %4648, %v4282
  %v4650 = vpop.permute.xlu0 %4649
  %4651 = vset.pattern.permute.xlu0 1
  %4652 = vperm.xlu0 %4651, %v4283
  %v4653 = vpop.permute.xlu0 %4652
  %4654 = vset.pattern.permute.xlu0 1
  %4655 = vperm.xlu0 %4654, %v4284
  %v4656 = vpop.permute.xlu0 %4655
  %vm4657 = vcmp.eq.s32.totalorder %v4548, %v4286
  %vm4658 = vcmp.eq.s32.totalorder %v4551, %v4286
  %vm4659 = vcmp.eq.s32.totalorder %v4554, %v4286
  %vm4660 = vcmp.eq.s32.totalorder %v4557, %v4286
  %vm4661 = vcmp.eq.s32.totalorder %v4560, %v4286
  %vm4662 = vcmp.eq.s32.totalorder %v4563, %v4286
  %vm4663 = vcmp.eq.s32.totalorder %v4566, %v4286
  %vm4664 = vcmp.eq.s32.totalorder %v4569, %v4286
  %vm4665 = vcmp.eq.s32.totalorder %v4572, %v4286
  %vm4666 = vcmp.eq.s32.totalorder %v4575, %v4286
  %vm4667 = vcmp.eq.s32.totalorder %v4578, %v4286
  %vm4668 = vcmp.eq.s32.totalorder %v4581, %v4286
  %vm4669 = vcmp.eq.s32.totalorder %v4584, %v4286
  %vm4670 = vcmp.eq.s32.totalorder %v4587, %v4286
  %vm4671 = vcmp.eq.s32.totalorder %v4590, %v4286
  %vm4672 = vcmp.eq.s32.totalorder %v4593, %v4286
  %vm4673 = vcmp.eq.s32.totalorder %v4596, %v4286
  %vm4674 = vcmp.eq.s32.totalorder %v4599, %v4286
  %vm4675 = vcmp.eq.s32.totalorder %v4602, %v4286
  %vm4676 = vcmp.eq.s32.totalorder %v4605, %v4286
  %vm4677 = vcmp.eq.s32.totalorder %v4608, %v4286
  %vm4678 = vcmp.eq.s32.totalorder %v4611, %v4286
  %vm4679 = vcmp.eq.s32.totalorder %v4614, %v4286
  %vm4680 = vcmp.eq.s32.totalorder %v4617, %v4286
  %vm4681 = vcmp.eq.s32.totalorder %v4620, %v4286
  %vm4682 = vcmp.eq.s32.totalorder %v4623, %v4286
  %vm4683 = vcmp.eq.s32.totalorder %v4626, %v4286
  %vm4684 = vcmp.eq.s32.totalorder %v4629, %v4286
  %vm4685 = vcmp.eq.s32.totalorder %v4632, %v4286
  %vm4686 = vcmp.eq.s32.totalorder %v4635, %v4286
  %vm4687 = vcmp.eq.s32.totalorder %v4638, %v4286
  %vm4688 = vcmp.eq.s32.totalorder %v4641, %v4286
  %vm4689 = vcmp.eq.s32.totalorder %v4644, %v4286
  %vm4690 = vcmp.eq.s32.totalorder %v4647, %v4286
  %vm4691 = vcmp.eq.s32.totalorder %v4650, %v4286
  %vm4692 = vcmp.eq.s32.totalorder %v4653, %v4286
  %vm4693 = vcmp.eq.s32.totalorder %v4656, %v4286
  %v4694 = vsel %vm4657, 1, 0
  %v4695 = vsel %vm4658, 1, 0
  %v4696 = vsel %vm4659, 1, 0
  %v4697 = vsel %vm4660, 1, 0
  %v4698 = vsel %vm4661, 1, 0
  %v4699 = vsel %vm4662, 1, 0
  %v4700 = vsel %vm4663, 1, 0
  %v4701 = vsel %vm4664, 1, 0
  %v4702 = vsel %vm4665, 1, 0
  %v4703 = vsel %vm4666, 1, 0
  %v4704 = vsel %vm4667, 1, 0
  %v4705 = vsel %vm4668, 1, 0
  %v4706 = vsel %vm4669, 1, 0
  %v4707 = vsel %vm4670, 1, 0
  %v4708 = vsel %vm4671, 1, 0
  %v4709 = vsel %vm4672, 1, 0
  %v4710 = vsel %vm4673, 1, 0
  %v4711 = vsel %vm4674, 1, 0
  %v4712 = vsel %vm4675, 1, 0
  %v4713 = vsel %vm4676, 1, 0
  %v4714 = vsel %vm4677, 1, 0
  %v4715 = vsel %vm4678, 1, 0
  %v4716 = vsel %vm4679, 1, 0
  %v4717 = vsel %vm4680, 1, 0
  %v4718 = vsel %vm4681, 1, 0
  %v4719 = vsel %vm4682, 1, 0
  %v4720 = vsel %vm4683, 1, 0
  %v4721 = vsel %vm4684, 1, 0
  %v4722 = vsel %vm4685, 1, 0
  %v4723 = vsel %vm4686, 1, 0
  %v4724 = vsel %vm4687, 1, 0
  %v4725 = vsel %vm4688, 1, 0
  %v4726 = vsel %vm4689, 1, 0
  %v4727 = vsel %vm4690, 1, 0
  %v4728 = vsel %vm4691, 1, 0
  %v4729 = vsel %vm4692, 1, 0
  %v4730 = vsel %vm4693, 1, 0
  %v4731 = vcvt.s32.f32 %v4694
  %v4732 = vcvt.s32.f32 %v4695
  %v4733 = vcvt.s32.f32 %v4696
  %v4734 = vcvt.s32.f32 %v4697
  %v4735 = vcvt.s32.f32 %v4698
  %v4736 = vcvt.s32.f32 %v4699
  %v4737 = vcvt.s32.f32 %v4700
  %v4738 = vcvt.s32.f32 %v4701
  %v4739 = vcvt.s32.f32 %v4702
  %v4740 = vcvt.s32.f32 %v4703
  %v4741 = vcvt.s32.f32 %v4704
  %v4742 = vcvt.s32.f32 %v4705
  %v4743 = vcvt.s32.f32 %v4706
  %v4744 = vcvt.s32.f32 %v4707
  %v4745 = vcvt.s32.f32 %v4708
  %v4746 = vcvt.s32.f32 %v4709
  %v4747 = vcvt.s32.f32 %v4710
  %v4748 = vcvt.s32.f32 %v4711
  %v4749 = vcvt.s32.f32 %v4712
  %v4750 = vcvt.s32.f32 %v4713
  %v4751 = vcvt.s32.f32 %v4714
  %v4752 = vcvt.s32.f32 %v4715
  %v4753 = vcvt.s32.f32 %v4716
  %v4754 = vcvt.s32.f32 %v4717
  %v4755 = vcvt.s32.f32 %v4718
  %v4756 = vcvt.s32.f32 %v4719
  %v4757 = vcvt.s32.f32 %v4720
  %v4758 = vcvt.s32.f32 %v4721
  %v4759 = vcvt.s32.f32 %v4722
  %v4760 = vcvt.s32.f32 %v4723
  %v4761 = vcvt.s32.f32 %v4724
  %v4762 = vcvt.s32.f32 %v4725
  %v4763 = vcvt.s32.f32 %v4726
  %v4764 = vcvt.s32.f32 %v4727
  %v4765 = vcvt.s32.f32 %v4728
  %v4766 = vcvt.s32.f32 %v4729
  %v4767 = vcvt.s32.f32 %v4730
  %v4768 = vadd.f32 %v4509, %v4731
  %v4769 = vadd.f32 %v4510, %v4732
  %v4770 = vadd.f32 %v4511, %v4733
  %v4771 = vadd.f32 %v4512, %v4734
  %v4772 = vadd.f32 %v4513, %v4735
  %v4773 = vadd.f32 %v4514, %v4736
  %v4774 = vadd.f32 %v4515, %v4737
  %v4775 = vadd.f32 %v4516, %v4738
  %v4776 = vadd.f32 %v4517, %v4739
  %v4777 = vadd.f32 %v4518, %v4740
  %v4778 = vadd.f32 %v4519, %v4741
  %v4779 = vadd.f32 %v4520, %v4742
  %v4780 = vadd.f32 %v4521, %v4743
  %v4781 = vadd.f32 %v4522, %v4744
  %v4782 = vadd.f32 %v4523, %v4745
  %v4783 = vadd.f32 %v4524, %v4746
  %v4784 = vadd.f32 %v4525, %v4747
  %v4785 = vadd.f32 %v4526, %v4748
  %v4786 = vadd.f32 %v4527, %v4749
  %v4787 = vadd.f32 %v4528, %v4750
  %v4788 = vadd.f32 %v4529, %v4751
  %v4789 = vadd.f32 %v4530, %v4752
  %v4790 = vadd.f32 %v4531, %v4753
  %v4791 = vadd.f32 %v4532, %v4754
  %v4792 = vadd.f32 %v4533, %v4755
  %v4793 = vadd.f32 %v4534, %v4756
  %v4794 = vadd.f32 %v4535, %v4757
  %v4795 = vadd.f32 %v4536, %v4758
  %v4796 = vadd.f32 %v4537, %v4759
  %v4797 = vadd.f32 %v4538, %v4760
  %v4798 = vadd.f32 %v4539, %v4761
  %v4799 = vadd.f32 %v4540, %v4762
  %v4800 = vadd.f32 %v4541, %v4763
  %v4801 = vadd.f32 %v4542, %v4764
  %v4802 = vadd.f32 %v4543, %v4765
  %v4803 = vadd.f32 %v4544, %v4766
  %v4804 = vadd.f32 %v4545, %v4767
  %4805 = vset.pattern.permute.xlu0 2
  %4806 = vperm.xlu0 %4805, %v4248
  %v4807 = vpop.permute.xlu0 %4806
  %4808 = vset.pattern.permute.xlu0 2
  %4809 = vperm.xlu0 %4808, %v4249
  %v4810 = vpop.permute.xlu0 %4809
  %4811 = vset.pattern.permute.xlu0 2
  %4812 = vperm.xlu0 %4811, %v4250
  %v4813 = vpop.permute.xlu0 %4812
  %4814 = vset.pattern.permute.xlu0 2
  %4815 = vperm.xlu0 %4814, %v4251
  %v4816 = vpop.permute.xlu0 %4815
  %4817 = vset.pattern.permute.xlu0 2
  %4818 = vperm.xlu0 %4817, %v4252
  %v4819 = vpop.permute.xlu0 %4818
  %4820 = vset.pattern.permute.xlu0 2
  %4821 = vperm.xlu0 %4820, %v4253
  %v4822 = vpop.permute.xlu0 %4821
  %4823 = vset.pattern.permute.xlu0 2
  %4824 = vperm.xlu0 %4823, %v4254
  %v4825 = vpop.permute.xlu0 %4824
  %4826 = vset.pattern.permute.xlu0 2
  %4827 = vperm.xlu0 %4826, %v4255
  %v4828 = vpop.permute.xlu0 %4827
  %4829 = vset.pattern.permute.xlu0 2
  %4830 = vperm.xlu0 %4829, %v4256
  %v4831 = vpop.permute.xlu0 %4830
  %4832 = vset.pattern.permute.xlu0 2
  %4833 = vperm.xlu0 %4832, %v4257
  %v4834 = vpop.permute.xlu0 %4833
  %4835 = vset.pattern.permute.xlu0 2
  %4836 = vperm.xlu0 %4835, %v4258
  %v4837 = vpop.permute.xlu0 %4836
  %4838 = vset.pattern.permute.xlu0 2
  %4839 = vperm.xlu0 %4838, %v4259
  %v4840 = vpop.permute.xlu0 %4839
  %4841 = vset.pattern.permute.xlu0 2
  %4842 = vperm.xlu0 %4841, %v4260
  %v4843 = vpop.permute.xlu0 %4842
  %4844 = vset.pattern.permute.xlu0 2
  %4845 = vperm.xlu0 %4844, %v4261
  %v4846 = vpop.permute.xlu0 %4845
  %4847 = vset.pattern.permute.xlu0 2
  %4848 = vperm.xlu0 %4847, %v4262
  %v4849 = vpop.permute.xlu0 %4848
  %4850 = vset.pattern.permute.xlu0 2
  %4851 = vperm.xlu0 %4850, %v4263
  %v4852 = vpop.permute.xlu0 %4851
  %4853 = vset.pattern.permute.xlu0 2
  %4854 = vperm.xlu0 %4853, %v4264
  %v4855 = vpop.permute.xlu0 %4854
  %4856 = vset.pattern.permute.xlu0 2
  %4857 = vperm.xlu0 %4856, %v4265
  %v4858 = vpop.permute.xlu0 %4857
  %4859 = vset.pattern.permute.xlu0 2
  %4860 = vperm.xlu0 %4859, %v4266
  %v4861 = vpop.permute.xlu0 %4860
  %4862 = vset.pattern.permute.xlu0 2
  %4863 = vperm.xlu0 %4862, %v4267
  %v4864 = vpop.permute.xlu0 %4863
  %4865 = vset.pattern.permute.xlu0 2
  %4866 = vperm.xlu0 %4865, %v4268
  %v4867 = vpop.permute.xlu0 %4866
  %4868 = vset.pattern.permute.xlu0 2
  %4869 = vperm.xlu0 %4868, %v4269
  %v4870 = vpop.permute.xlu0 %4869
  %4871 = vset.pattern.permute.xlu0 2
  %4872 = vperm.xlu0 %4871, %v4270
  %v4873 = vpop.permute.xlu0 %4872
  %4874 = vset.pattern.permute.xlu0 2
  %4875 = vperm.xlu0 %4874, %v4271
  %v4876 = vpop.permute.xlu0 %4875
  %4877 = vset.pattern.permute.xlu0 2
  %4878 = vperm.xlu0 %4877, %v4272
  %v4879 = vpop.permute.xlu0 %4878
  %4880 = vset.pattern.permute.xlu0 2
  %4881 = vperm.xlu0 %4880, %v4273
  %v4882 = vpop.permute.xlu0 %4881
  %4883 = vset.pattern.permute.xlu0 2
  %4884 = vperm.xlu0 %4883, %v4274
  %v4885 = vpop.permute.xlu0 %4884
  %4886 = vset.pattern.permute.xlu0 2
  %4887 = vperm.xlu0 %4886, %v4275
  %v4888 = vpop.permute.xlu0 %4887
  %4889 = vset.pattern.permute.xlu0 2
  %4890 = vperm.xlu0 %4889, %v4276
  %v4891 = vpop.permute.xlu0 %4890
  %4892 = vset.pattern.permute.xlu0 2
  %4893 = vperm.xlu0 %4892, %v4277
  %v4894 = vpop.permute.xlu0 %4893
  %4895 = vset.pattern.permute.xlu0 2
  %4896 = vperm.xlu0 %4895, %v4278
  %v4897 = vpop.permute.xlu0 %4896
  %4898 = vset.pattern.permute.xlu0 2
  %4899 = vperm.xlu0 %4898, %v4279
  %v4900 = vpop.permute.xlu0 %4899
  %4901 = vset.pattern.permute.xlu0 2
  %4902 = vperm.xlu0 %4901, %v4280
  %v4903 = vpop.permute.xlu0 %4902
  %4904 = vset.pattern.permute.xlu0 2
  %4905 = vperm.xlu0 %4904, %v4281
  %v4906 = vpop.permute.xlu0 %4905
  %4907 = vset.pattern.permute.xlu0 2
  %4908 = vperm.xlu0 %4907, %v4282
  %v4909 = vpop.permute.xlu0 %4908
  %4910 = vset.pattern.permute.xlu0 2
  %4911 = vperm.xlu0 %4910, %v4283
  %v4912 = vpop.permute.xlu0 %4911
  %4913 = vset.pattern.permute.xlu0 2
  %4914 = vperm.xlu0 %4913, %v4284
  %v4915 = vpop.permute.xlu0 %4914
  %vm4916 = vcmp.eq.s32.totalorder %v4807, %v4286
  %vm4917 = vcmp.eq.s32.totalorder %v4810, %v4286
  %vm4918 = vcmp.eq.s32.totalorder %v4813, %v4286
  %vm4919 = vcmp.eq.s32.totalorder %v4816, %v4286
  %vm4920 = vcmp.eq.s32.totalorder %v4819, %v4286
  %vm4921 = vcmp.eq.s32.totalorder %v4822, %v4286
  %vm4922 = vcmp.eq.s32.totalorder %v4825, %v4286
  %vm4923 = vcmp.eq.s32.totalorder %v4828, %v4286
  %vm4924 = vcmp.eq.s32.totalorder %v4831, %v4286
  %vm4925 = vcmp.eq.s32.totalorder %v4834, %v4286
  %vm4926 = vcmp.eq.s32.totalorder %v4837, %v4286
  %vm4927 = vcmp.eq.s32.totalorder %v4840, %v4286
  %vm4928 = vcmp.eq.s32.totalorder %v4843, %v4286
  %vm4929 = vcmp.eq.s32.totalorder %v4846, %v4286
  %vm4930 = vcmp.eq.s32.totalorder %v4849, %v4286
  %vm4931 = vcmp.eq.s32.totalorder %v4852, %v4286
  %vm4932 = vcmp.eq.s32.totalorder %v4855, %v4286
  %vm4933 = vcmp.eq.s32.totalorder %v4858, %v4286
  %vm4934 = vcmp.eq.s32.totalorder %v4861, %v4286
  %vm4935 = vcmp.eq.s32.totalorder %v4864, %v4286
  %vm4936 = vcmp.eq.s32.totalorder %v4867, %v4286
  %vm4937 = vcmp.eq.s32.totalorder %v4870, %v4286
  %vm4938 = vcmp.eq.s32.totalorder %v4873, %v4286
  %vm4939 = vcmp.eq.s32.totalorder %v4876, %v4286
  %vm4940 = vcmp.eq.s32.totalorder %v4879, %v4286
  %vm4941 = vcmp.eq.s32.totalorder %v4882, %v4286
  %vm4942 = vcmp.eq.s32.totalorder %v4885, %v4286
  %vm4943 = vcmp.eq.s32.totalorder %v4888, %v4286
  %vm4944 = vcmp.eq.s32.totalorder %v4891, %v4286
  %vm4945 = vcmp.eq.s32.totalorder %v4894, %v4286
  %vm4946 = vcmp.eq.s32.totalorder %v4897, %v4286
  %vm4947 = vcmp.eq.s32.totalorder %v4900, %v4286
  %vm4948 = vcmp.eq.s32.totalorder %v4903, %v4286
  %vm4949 = vcmp.eq.s32.totalorder %v4906, %v4286
  %vm4950 = vcmp.eq.s32.totalorder %v4909, %v4286
  %vm4951 = vcmp.eq.s32.totalorder %v4912, %v4286
  %vm4952 = vcmp.eq.s32.totalorder %v4915, %v4286
  %v4953 = vsel %vm4916, 1, 0
  %v4954 = vsel %vm4917, 1, 0
  %v4955 = vsel %vm4918, 1, 0
  %v4956 = vsel %vm4919, 1, 0
  %v4957 = vsel %vm4920, 1, 0
  %v4958 = vsel %vm4921, 1, 0
  %v4959 = vsel %vm4922, 1, 0
  %v4960 = vsel %vm4923, 1, 0
  %v4961 = vsel %vm4924, 1, 0
  %v4962 = vsel %vm4925, 1, 0
  %v4963 = vsel %vm4926, 1, 0
  %v4964 = vsel %vm4927, 1, 0
  %v4965 = vsel %vm4928, 1, 0
  %v4966 = vsel %vm4929, 1, 0
  %v4967 = vsel %vm4930, 1, 0
  %v4968 = vsel %vm4931, 1, 0
  %v4969 = vsel %vm4932, 1, 0
  %v4970 = vsel %vm4933, 1, 0
  %v4971 = vsel %vm4934, 1, 0
  %v4972 = vsel %vm4935, 1, 0
  %v4973 = vsel %vm4936, 1, 0
  %v4974 = vsel %vm4937, 1, 0
  %v4975 = vsel %vm4938, 1, 0
  %v4976 = vsel %vm4939, 1, 0
  %v4977 = vsel %vm4940, 1, 0
  %v4978 = vsel %vm4941, 1, 0
  %v4979 = vsel %vm4942, 1, 0
  %v4980 = vsel %vm4943, 1, 0
  %v4981 = vsel %vm4944, 1, 0
  %v4982 = vsel %vm4945, 1, 0
  %v4983 = vsel %vm4946, 1, 0
  %v4984 = vsel %vm4947, 1, 0
  %v4985 = vsel %vm4948, 1, 0
  %v4986 = vsel %vm4949, 1, 0
  %v4987 = vsel %vm4950, 1, 0
  %v4988 = vsel %vm4951, 1, 0
  %v4989 = vsel %vm4952, 1, 0
  %v4990 = vcvt.s32.f32 %v4953
  %v4991 = vcvt.s32.f32 %v4954
  %v4992 = vcvt.s32.f32 %v4955
  %v4993 = vcvt.s32.f32 %v4956
  %v4994 = vcvt.s32.f32 %v4957
  %v4995 = vcvt.s32.f32 %v4958
  %v4996 = vcvt.s32.f32 %v4959
  %v4997 = vcvt.s32.f32 %v4960
  %v4998 = vcvt.s32.f32 %v4961
  %v4999 = vcvt.s32.f32 %v4962
  %v5000 = vcvt.s32.f32 %v4963
  %v5001 = vcvt.s32.f32 %v4964
  %v5002 = vcvt.s32.f32 %v4965
  %v5003 = vcvt.s32.f32 %v4966
  %v5004 = vcvt.s32.f32 %v4967
  %v5005 = vcvt.s32.f32 %v4968
  %v5006 = vcvt.s32.f32 %v4969
  %v5007 = vcvt.s32.f32 %v4970
  %v5008 = vcvt.s32.f32 %v4971
  %v5009 = vcvt.s32.f32 %v4972
  %v5010 = vcvt.s32.f32 %v4973
  %v5011 = vcvt.s32.f32 %v4974
  %v5012 = vcvt.s32.f32 %v4975
  %v5013 = vcvt.s32.f32 %v4976
  %v5014 = vcvt.s32.f32 %v4977
  %v5015 = vcvt.s32.f32 %v4978
  %v5016 = vcvt.s32.f32 %v4979
  %v5017 = vcvt.s32.f32 %v4980
  %v5018 = vcvt.s32.f32 %v4981
  %v5019 = vcvt.s32.f32 %v4982
  %v5020 = vcvt.s32.f32 %v4983
  %v5021 = vcvt.s32.f32 %v4984
  %v5022 = vcvt.s32.f32 %v4985
  %v5023 = vcvt.s32.f32 %v4986
  %v5024 = vcvt.s32.f32 %v4987
  %v5025 = vcvt.s32.f32 %v4988
  %v5026 = vcvt.s32.f32 %v4989
  %v5027 = vadd.f32 %v4768, %v4990
  %v5028 = vadd.f32 %v4769, %v4991
  %v5029 = vadd.f32 %v4770, %v4992
  %v5030 = vadd.f32 %v4771, %v4993
  %v5031 = vadd.f32 %v4772, %v4994
  %v5032 = vadd.f32 %v4773, %v4995
  %v5033 = vadd.f32 %v4774, %v4996
  %v5034 = vadd.f32 %v4775, %v4997
  %v5035 = vadd.f32 %v4776, %v4998
  %v5036 = vadd.f32 %v4777, %v4999
  %v5037 = vadd.f32 %v4778, %v5000
  %v5038 = vadd.f32 %v4779, %v5001
  %v5039 = vadd.f32 %v4780, %v5002
  %v5040 = vadd.f32 %v4781, %v5003
  %v5041 = vadd.f32 %v4782, %v5004
  %v5042 = vadd.f32 %v4783, %v5005
  %v5043 = vadd.f32 %v4784, %v5006
  %v5044 = vadd.f32 %v4785, %v5007
  %v5045 = vadd.f32 %v4786, %v5008
  %v5046 = vadd.f32 %v4787, %v5009
  %v5047 = vadd.f32 %v4788, %v5010
  %v5048 = vadd.f32 %v4789, %v5011
  %v5049 = vadd.f32 %v4790, %v5012
  %v5050 = vadd.f32 %v4791, %v5013
  %v5051 = vadd.f32 %v4792, %v5014
  %v5052 = vadd.f32 %v4793, %v5015
  %v5053 = vadd.f32 %v4794, %v5016
  %v5054 = vadd.f32 %v4795, %v5017
  %v5055 = vadd.f32 %v4796, %v5018
  %v5056 = vadd.f32 %v4797, %v5019
  %v5057 = vadd.f32 %v4798, %v5020
  %v5058 = vadd.f32 %v4799, %v5021
  %v5059 = vadd.f32 %v4800, %v5022
  %v5060 = vadd.f32 %v4801, %v5023
  %v5061 = vadd.f32 %v4802, %v5024
  %v5062 = vadd.f32 %v4803, %v5025
  %v5063 = vadd.f32 %v4804, %v5026
  %5064 = vset.pattern.permute.xlu0 3
  %5065 = vperm.xlu0 %5064, %v4248
  %v5066 = vpop.permute.xlu0 %5065
  %5067 = vset.pattern.permute.xlu0 3
  %5068 = vperm.xlu0 %5067, %v4249
  %v5069 = vpop.permute.xlu0 %5068
  %5070 = vset.pattern.permute.xlu0 3
  %5071 = vperm.xlu0 %5070, %v4250
  %v5072 = vpop.permute.xlu0 %5071
  %5073 = vset.pattern.permute.xlu0 3
  %5074 = vperm.xlu0 %5073, %v4251
  %v5075 = vpop.permute.xlu0 %5074
  %5076 = vset.pattern.permute.xlu0 3
  %5077 = vperm.xlu0 %5076, %v4252
  %v5078 = vpop.permute.xlu0 %5077
  %5079 = vset.pattern.permute.xlu0 3
  %5080 = vperm.xlu0 %5079, %v4253
  %v5081 = vpop.permute.xlu0 %5080
  %5082 = vset.pattern.permute.xlu0 3
  %5083 = vperm.xlu0 %5082, %v4254
  %v5084 = vpop.permute.xlu0 %5083
  %5085 = vset.pattern.permute.xlu0 3
  %5086 = vperm.xlu0 %5085, %v4255
  %v5087 = vpop.permute.xlu0 %5086
  %5088 = vset.pattern.permute.xlu0 3
  %5089 = vperm.xlu0 %5088, %v4256
  %v5090 = vpop.permute.xlu0 %5089
  %5091 = vset.pattern.permute.xlu0 3
  %5092 = vperm.xlu0 %5091, %v4257
  %v5093 = vpop.permute.xlu0 %5092
  %5094 = vset.pattern.permute.xlu0 3
  %5095 = vperm.xlu0 %5094, %v4258
  %v5096 = vpop.permute.xlu0 %5095
  %5097 = vset.pattern.permute.xlu0 3
  %5098 = vperm.xlu0 %5097, %v4259
  %v5099 = vpop.permute.xlu0 %5098
  %5100 = vset.pattern.permute.xlu0 3
  %5101 = vperm.xlu0 %5100, %v4260
  %v5102 = vpop.permute.xlu0 %5101
  %5103 = vset.pattern.permute.xlu0 3
  %5104 = vperm.xlu0 %5103, %v4261
  %v5105 = vpop.permute.xlu0 %5104
  %5106 = vset.pattern.permute.xlu0 3
  %5107 = vperm.xlu0 %5106, %v4262
  %v5108 = vpop.permute.xlu0 %5107
  %5109 = vset.pattern.permute.xlu0 3
  %5110 = vperm.xlu0 %5109, %v4263
  %v5111 = vpop.permute.xlu0 %5110
  %5112 = vset.pattern.permute.xlu0 3
  %5113 = vperm.xlu0 %5112, %v4264
  %v5114 = vpop.permute.xlu0 %5113
  %5115 = vset.pattern.permute.xlu0 3
  %5116 = vperm.xlu0 %5115, %v4265
  %v5117 = vpop.permute.xlu0 %5116
  %5118 = vset.pattern.permute.xlu0 3
  %5119 = vperm.xlu0 %5118, %v4266
  %v5120 = vpop.permute.xlu0 %5119
  %5121 = vset.pattern.permute.xlu0 3
  %5122 = vperm.xlu0 %5121, %v4267
  %v5123 = vpop.permute.xlu0 %5122
  %5124 = vset.pattern.permute.xlu0 3
  %5125 = vperm.xlu0 %5124, %v4268
  %v5126 = vpop.permute.xlu0 %5125
  %5127 = vset.pattern.permute.xlu0 3
  %5128 = vperm.xlu0 %5127, %v4269
  %v5129 = vpop.permute.xlu0 %5128
  %5130 = vset.pattern.permute.xlu0 3
  %5131 = vperm.xlu0 %5130, %v4270
  %v5132 = vpop.permute.xlu0 %5131
  %5133 = vset.pattern.permute.xlu0 3
  %5134 = vperm.xlu0 %5133, %v4271
  %v5135 = vpop.permute.xlu0 %5134
  %5136 = vset.pattern.permute.xlu0 3
  %5137 = vperm.xlu0 %5136, %v4272
  %v5138 = vpop.permute.xlu0 %5137
  %5139 = vset.pattern.permute.xlu0 3
  %5140 = vperm.xlu0 %5139, %v4273
  %v5141 = vpop.permute.xlu0 %5140
  %5142 = vset.pattern.permute.xlu0 3
  %5143 = vperm.xlu0 %5142, %v4274
  %v5144 = vpop.permute.xlu0 %5143
  %5145 = vset.pattern.permute.xlu0 3
  %5146 = vperm.xlu0 %5145, %v4275
  %v5147 = vpop.permute.xlu0 %5146
  %5148 = vset.pattern.permute.xlu0 3
  %5149 = vperm.xlu0 %5148, %v4276
  %v5150 = vpop.permute.xlu0 %5149
  %5151 = vset.pattern.permute.xlu0 3
  %5152 = vperm.xlu0 %5151, %v4277
  %v5153 = vpop.permute.xlu0 %5152
  %5154 = vset.pattern.permute.xlu0 3
  %5155 = vperm.xlu0 %5154, %v4278
  %v5156 = vpop.permute.xlu0 %5155
  %5157 = vset.pattern.permute.xlu0 3
  %5158 = vperm.xlu0 %5157, %v4279
  %v5159 = vpop.permute.xlu0 %5158
  %5160 = vset.pattern.permute.xlu0 3
  %5161 = vperm.xlu0 %5160, %v4280
  %v5162 = vpop.permute.xlu0 %5161
  %5163 = vset.pattern.permute.xlu0 3
  %5164 = vperm.xlu0 %5163, %v4281
  %v5165 = vpop.permute.xlu0 %5164
  %5166 = vset.pattern.permute.xlu0 3
  %5167 = vperm.xlu0 %5166, %v4282
  %v5168 = vpop.permute.xlu0 %5167
  %5169 = vset.pattern.permute.xlu0 3
  %5170 = vperm.xlu0 %5169, %v4283
  %v5171 = vpop.permute.xlu0 %5170
  %5172 = vset.pattern.permute.xlu0 3
  %5173 = vperm.xlu0 %5172, %v4284
  %v5174 = vpop.permute.xlu0 %5173
  %vm5175 = vcmp.eq.s32.totalorder %v5066, %v4286
  %vm5176 = vcmp.eq.s32.totalorder %v5069, %v4286
  %vm5177 = vcmp.eq.s32.totalorder %v5072, %v4286
  %vm5178 = vcmp.eq.s32.totalorder %v5075, %v4286
  %vm5179 = vcmp.eq.s32.totalorder %v5078, %v4286
  %vm5180 = vcmp.eq.s32.totalorder %v5081, %v4286
  %vm5181 = vcmp.eq.s32.totalorder %v5084, %v4286
  %vm5182 = vcmp.eq.s32.totalorder %v5087, %v4286
  %vm5183 = vcmp.eq.s32.totalorder %v5090, %v4286
  %vm5184 = vcmp.eq.s32.totalorder %v5093, %v4286
  %vm5185 = vcmp.eq.s32.totalorder %v5096, %v4286
  %vm5186 = vcmp.eq.s32.totalorder %v5099, %v4286
  %vm5187 = vcmp.eq.s32.totalorder %v5102, %v4286
  %vm5188 = vcmp.eq.s32.totalorder %v5105, %v4286
  %vm5189 = vcmp.eq.s32.totalorder %v5108, %v4286
  %vm5190 = vcmp.eq.s32.totalorder %v5111, %v4286
  %vm5191 = vcmp.eq.s32.totalorder %v5114, %v4286
  %vm5192 = vcmp.eq.s32.totalorder %v5117, %v4286
  %vm5193 = vcmp.eq.s32.totalorder %v5120, %v4286
  %vm5194 = vcmp.eq.s32.totalorder %v5123, %v4286
  %vm5195 = vcmp.eq.s32.totalorder %v5126, %v4286
  %vm5196 = vcmp.eq.s32.totalorder %v5129, %v4286
  %vm5197 = vcmp.eq.s32.totalorder %v5132, %v4286
  %vm5198 = vcmp.eq.s32.totalorder %v5135, %v4286
  %vm5199 = vcmp.eq.s32.totalorder %v5138, %v4286
  %vm5200 = vcmp.eq.s32.totalorder %v5141, %v4286
  %vm5201 = vcmp.eq.s32.totalorder %v5144, %v4286
  %vm5202 = vcmp.eq.s32.totalorder %v5147, %v4286
  %vm5203 = vcmp.eq.s32.totalorder %v5150, %v4286
  %vm5204 = vcmp.eq.s32.totalorder %v5153, %v4286
  %vm5205 = vcmp.eq.s32.totalorder %v5156, %v4286
  %vm5206 = vcmp.eq.s32.totalorder %v5159, %v4286
  %vm5207 = vcmp.eq.s32.totalorder %v5162, %v4286
  %vm5208 = vcmp.eq.s32.totalorder %v5165, %v4286
  %vm5209 = vcmp.eq.s32.totalorder %v5168, %v4286
  %vm5210 = vcmp.eq.s32.totalorder %v5171, %v4286
  %vm5211 = vcmp.eq.s32.totalorder %v5174, %v4286
  %v5212 = vsel %vm5175, 1, 0
  %v5213 = vsel %vm5176, 1, 0
  %v5214 = vsel %vm5177, 1, 0
  %v5215 = vsel %vm5178, 1, 0
  %v5216 = vsel %vm5179, 1, 0
  %v5217 = vsel %vm5180, 1, 0
  %v5218 = vsel %vm5181, 1, 0
  %v5219 = vsel %vm5182, 1, 0
  %v5220 = vsel %vm5183, 1, 0
  %v5221 = vsel %vm5184, 1, 0
  %v5222 = vsel %vm5185, 1, 0
  %v5223 = vsel %vm5186, 1, 0
  %v5224 = vsel %vm5187, 1, 0
  %v5225 = vsel %vm5188, 1, 0
  %v5226 = vsel %vm5189, 1, 0
  %v5227 = vsel %vm5190, 1, 0
  %v5228 = vsel %vm5191, 1, 0
  %v5229 = vsel %vm5192, 1, 0
  %v5230 = vsel %vm5193, 1, 0
  %v5231 = vsel %vm5194, 1, 0
  %v5232 = vsel %vm5195, 1, 0
  %v5233 = vsel %vm5196, 1, 0
  %v5234 = vsel %vm5197, 1, 0
  %v5235 = vsel %vm5198, 1, 0
  %v5236 = vsel %vm5199, 1, 0
  %v5237 = vsel %vm5200, 1, 0
  %v5238 = vsel %vm5201, 1, 0
  %v5239 = vsel %vm5202, 1, 0
  %v5240 = vsel %vm5203, 1, 0
  %v5241 = vsel %vm5204, 1, 0
  %v5242 = vsel %vm5205, 1, 0
  %v5243 = vsel %vm5206, 1, 0
  %v5244 = vsel %vm5207, 1, 0
  %v5245 = vsel %vm5208, 1, 0
  %v5246 = vsel %vm5209, 1, 0
  %v5247 = vsel %vm5210, 1, 0
  %v5248 = vsel %vm5211, 1, 0
  %v5249 = vcvt.s32.f32 %v5212
  %v5250 = vcvt.s32.f32 %v5213
  %v5251 = vcvt.s32.f32 %v5214
  %v5252 = vcvt.s32.f32 %v5215
  %v5253 = vcvt.s32.f32 %v5216
  %v5254 = vcvt.s32.f32 %v5217
  %v5255 = vcvt.s32.f32 %v5218
  %v5256 = vcvt.s32.f32 %v5219
  %v5257 = vcvt.s32.f32 %v5220
  %v5258 = vcvt.s32.f32 %v5221
  %v5259 = vcvt.s32.f32 %v5222
  %v5260 = vcvt.s32.f32 %v5223
  %v5261 = vcvt.s32.f32 %v5224
  %v5262 = vcvt.s32.f32 %v5225
  %v5263 = vcvt.s32.f32 %v5226
  %v5264 = vcvt.s32.f32 %v5227
  %v5265 = vcvt.s32.f32 %v5228
  %v5266 = vcvt.s32.f32 %v5229
  %v5267 = vcvt.s32.f32 %v5230
  %v5268 = vcvt.s32.f32 %v5231
  %v5269 = vcvt.s32.f32 %v5232
  %v5270 = vcvt.s32.f32 %v5233
  %v5271 = vcvt.s32.f32 %v5234
  %v5272 = vcvt.s32.f32 %v5235
  %v5273 = vcvt.s32.f32 %v5236
  %v5274 = vcvt.s32.f32 %v5237
  %v5275 = vcvt.s32.f32 %v5238
  %v5276 = vcvt.s32.f32 %v5239
  %v5277 = vcvt.s32.f32 %v5240
  %v5278 = vcvt.s32.f32 %v5241
  %v5279 = vcvt.s32.f32 %v5242
  %v5280 = vcvt.s32.f32 %v5243
  %v5281 = vcvt.s32.f32 %v5244
  %v5282 = vcvt.s32.f32 %v5245
  %v5283 = vcvt.s32.f32 %v5246
  %v5284 = vcvt.s32.f32 %v5247
  %v5285 = vcvt.s32.f32 %v5248
  %v5286 = vadd.f32 %v5027, %v5249
  %v5287 = vadd.f32 %v5028, %v5250
  %v5288 = vadd.f32 %v5029, %v5251
  %v5289 = vadd.f32 %v5030, %v5252
  %v5290 = vadd.f32 %v5031, %v5253
  %v5291 = vadd.f32 %v5032, %v5254
  %v5292 = vadd.f32 %v5033, %v5255
  %v5293 = vadd.f32 %v5034, %v5256
  %v5294 = vadd.f32 %v5035, %v5257
  %v5295 = vadd.f32 %v5036, %v5258
  %v5296 = vadd.f32 %v5037, %v5259
  %v5297 = vadd.f32 %v5038, %v5260
  %v5298 = vadd.f32 %v5039, %v5261
  %v5299 = vadd.f32 %v5040, %v5262
  %v5300 = vadd.f32 %v5041, %v5263
  %v5301 = vadd.f32 %v5042, %v5264
  %v5302 = vadd.f32 %v5043, %v5265
  %v5303 = vadd.f32 %v5044, %v5266
  %v5304 = vadd.f32 %v5045, %v5267
  %v5305 = vadd.f32 %v5046, %v5268
  %v5306 = vadd.f32 %v5047, %v5269
  %v5307 = vadd.f32 %v5048, %v5270
  %v5308 = vadd.f32 %v5049, %v5271
  %v5309 = vadd.f32 %v5050, %v5272
  %v5310 = vadd.f32 %v5051, %v5273
  %v5311 = vadd.f32 %v5052, %v5274
  %v5312 = vadd.f32 %v5053, %v5275
  %v5313 = vadd.f32 %v5054, %v5276
  %v5314 = vadd.f32 %v5055, %v5277
  %v5315 = vadd.f32 %v5056, %v5278
  %v5316 = vadd.f32 %v5057, %v5279
  %v5317 = vadd.f32 %v5058, %v5280
  %v5318 = vadd.f32 %v5059, %v5281
  %v5319 = vadd.f32 %v5060, %v5282
  %v5320 = vadd.f32 %v5061, %v5283
  %v5321 = vadd.f32 %v5062, %v5284
  %v5322 = vadd.f32 %v5063, %v5285
  %v5323 = vld [vmem:[%s4] sm:$0xff]
  %v5324 = vld [vmem:[%s4 + $0x8] sm:$0xff]
  %v5325 = vld [vmem:[%s4 + $0x10] sm:$0xff]
  %v5326 = vld [vmem:[%s4 + $0x18] sm:$0xff]
  %v5327 = vld [vmem:[%s4 + $0x20] sm:$0xff]
  %v5328 = vld [vmem:[%s4 + $0x28] sm:$0xff]
  %v5329 = vld [vmem:[%s4 + $0x30] sm:$0xff]
  %v5330 = vld [vmem:[%s4 + $0x38] sm:$0xff]
  %v5331 = vld [vmem:[%s4 + $0x40] sm:$0xff]
  %v5332 = vld [vmem:[%s4 + $0x48] sm:$0xff]
  %v5333 = vld [vmem:[%s4 + $0x50] sm:$0xff]
  %v5334 = vld [vmem:[%s4 + $0x58] sm:$0xff]
  %v5335 = vld [vmem:[%s4 + $0x60] sm:$0xff]
  %v5336 = vld [vmem:[%s4 + $0x68] sm:$0xff]
  %v5337 = vld [vmem:[%s4 + $0x70] sm:$0xff]
  %v5338 = vld [vmem:[%s4 + $0x78] sm:$0xff]
  %v5339 = vld [vmem:[%s4 + $0x80] sm:$0xff]
  %v5340 = vld [vmem:[%s4 + $0x88] sm:$0xff]
  %v5341 = vld [vmem:[%s4 + $0x90] sm:$0xf]
  %v5342 = vld [vmem:[%s4 + $0x98] sm:$0xf]
  %vm5343 = vcmask 621568
  %v5345 = vsel %vm5343, %v5286, 0
  %v5348 = vsel %vm5343, %v5287, 0
  %v5351 = vsel %vm5343, %v5288, 0
  %v5354 = vsel %vm5343, %v5289, 0
  %v5357 = vsel %vm5343, %v5290, 0
  %v5360 = vsel %vm5343, %v5291, 0
  %v5363 = vsel %vm5343, %v5292, 0
  %v5366 = vsel %vm5343, %v5293, 0
  %v5369 = vsel %vm5343, %v5294, 0
  %v5372 = vsel %vm5343, %v5295, 0
  %v5375 = vsel %vm5343, %v5296, 0
  %v5378 = vsel %vm5343, %v5297, 0
  %v5381 = vsel %vm5343, %v5298, 0
  %v5384 = vsel %vm5343, %v5299, 0
  %v5387 = vsel %vm5343, %v5300, 0
  %v5390 = vsel %vm5343, %v5301, 0
  %v5393 = vsel %vm5343, %v5302, 0
  %v5396 = vsel %vm5343, %v5303, 0
  %v5399 = vsel %vm5343, %v5304, 0
  %v5402 = vsel %vm5343, %v5305, 0
  %v5405 = vsel %vm5343, %v5306, 0
  %v5408 = vsel %vm5343, %v5307, 0
  %v5411 = vsel %vm5343, %v5308, 0
  %v5414 = vsel %vm5343, %v5309, 0
  %v5417 = vsel %vm5343, %v5310, 0
  %v5420 = vsel %vm5343, %v5311, 0
  %v5423 = vsel %vm5343, %v5312, 0
  %v5426 = vsel %vm5343, %v5313, 0
  %v5429 = vsel %vm5343, %v5314, 0
  %v5432 = vsel %vm5343, %v5315, 0
  %v5435 = vsel %vm5343, %v5316, 0
  %v5438 = vsel %vm5343, %v5317, 0
  %v5441 = vsel %vm5343, %v5318, 0
  %v5444 = vsel %vm5343, %v5319, 0
  %v5447 = vsel %vm5343, %v5320, 0
  %v5450 = vsel %vm5343, %v5321, 0
  %v5453 = vsel %vm5343, %v5322, 0
  %vm5455 = vcmask 1043456
  %v5457 = vsel %vm5455, %v5341, 0
  %v5460 = vsel %vm5455, %v5342, 0
  %5462 = vmatprep.subr.mxu0 %v5324
  %5463 = vmatpush1.msra.mxu0 %v5323
  %5464 = vmatprep.subr.mxu0 %v5326
  %5465 = vmatpush1.msra.mxu0 %v5325
  %5466 = vmatprep.subr.mxu0 %v5328
  %5467 = vmatpush1.msra.mxu0 %v5327
  %5468 = vmatprep.subr.mxu0 %v5330
  %5469 = vmatpush1.msra.mxu0 %v5329
  %5470 = vmatprep.subr.mxu0 %v5332
  %5471 = vmatpush1.msra.mxu0 %v5331
  %5472 = vmatprep.subr.mxu0 %v5334
  %5473 = vmatpush1.msra.mxu0 %v5333
  %5474 = vmatprep.subr.mxu0 %v5336
  %5475 = vmatpush1.msra.mxu0 %v5335
  %5476 = vmatprep.subr.mxu0 %v5338
  %5477 = vmatpush1.msra.mxu0 %v5337
  %5478 = vmatprep.subr.mxu0 %v5340
  %5479 = vmatpush1.msra.mxu0 %v5339
  %5480 = vmatprep.subr.mxu0 %v5460
  %5481 = vmatpush1.msra.mxu0 %v5457
  %5482 = vmatprep.subr.mxu0 0.0
  %5483 = vmatpush1.msra.mxu0 0.0
  %5484 = vmatprep.subr.mxu0 0.0
  %5485 = vmatpush1.msra.mxu0 0.0
  %5486 = vmatprep.subr.mxu0 0.0
  %5487 = vmatpush1.msra.mxu0 0.0
  %5488 = vmatprep.subr.mxu0 0.0
  %5489 = vmatpush1.msra.mxu0 0.0
  %5490 = vmatprep.subr.mxu0 0.0
  %5491 = vmatpush1.msra.mxu0 0.0
  %5492 = vmatprep.subr.mxu0 0.0
  %5493 = vmatpush1.msra.mxu0 0.0
  %5494 = vmatprep.subr.mxu0 0.0
  %5495 = vmatpush1.msra.mxu0 0.0
  %5496 = vmatprep.subr.mxu0 0.0
  %5497 = vmatpush1.msra.mxu0 0.0
  %5498 = vmatprep.subr.mxu0 0.0
  %5499 = vmatpush1.msra.mxu0 0.0
  %5500 = vmatprep.subr.mxu0 0.0
  %5501 = vmatpush1.msra.mxu0 0.0
  %5502 = vmatprep.subr.mxu0 0.0
  %5503 = vmatpush1.msra.mxu0 0.0
  %5504 = vmatprep.subr.mxu0 0.0
  %5505 = vmatpush1.msra.mxu0 0.0
  %5506 = vmatprep.subr.mxu0 0.0
  %5507 = vmatpush1.msra.mxu0 0.0
  %5508 = vmatprep.subr.mxu0 0.0
  %5509 = vmatpush1.msra.mxu0 0.0
  %5510 = vmatprep.subr.mxu0 0.0
  %5511 = vmatpush1.msra.mxu0 0.0
  %5512 = vmatprep.subr.mxu0 0.0
  %5513 = vmatpush1.msra.mxu0 0.0
  %5514 = vmatprep.subr.mxu0 0.0
  %5515 = vmatpush1.msra.mxu0 0.0
  %5516 = vmatprep.subr.mxu0 0.0
  %5517 = vmatpush1.msra.mxu0 0.0
  %5518 = vmatprep.subr.mxu0 0.0
  %5519 = vmatpush1.msra.mxu0 0.0
  %5520 = vmatprep.subr.mxu0 0.0
  %5521 = vmatpush1.msra.mxu0 0.0
  %5522 = vmatprep.subr.mxu0 0.0
  %5523 = vmatpush1.msra.mxu0 0.0
  %5524 = vmatprep.subr.mxu0 0.0
  %5525 = vmatpush1.msra.mxu0 0.0
  %5526 = vmatprep.mubr.f32.mxu0 0.0
  %5527 = vmatmul.mubr.f32.gmra.mrb[0].mxu0 %v5345
  %v5528 = vpop.f32.mrb[0].mxu0
  %v5529 = vadd.f32 0.0, %v5528
  %v5530 = vpop.f32.mrb[0].mxu0
  %v5531 = vadd.f32 0.0, %v5530
  %5532 = vmatprep.mubr.f32.mxu0 0.0
  %5533 = vmatmul.mubr.f32.gmra.mrb[0].mxu0 %v5348
  %v5534 = vpop.f32.mrb[0].mxu0
  %v5535 = vadd.f32 0.0, %v5534
  %v5536 = vpop.f32.mrb[0].mxu0
  %v5537 = vadd.f32 0.0, %v5536
  %5538 = vmatprep.mubr.f32.mxu0 0.0
  %5539 = vmatmul.mubr.f32.gmra.mrb[0].mxu0 %v5351
  %v5540 = vpop.f32.mrb[0].mxu0
  %v5541 = vadd.f32 0.0, %v5540
  %v5542 = vpop.f32.mrb[0].mxu0
  %v5543 = vadd.f32 0.0, %v5542
  %5544 = vmatprep.mubr.f32.mxu0 0.0
  %5545 = vmatmul.mubr.f32.gmra.mrb[0].mxu0 %v5354
  %v5546 = vpop.f32.mrb[0].mxu0
  %v5547 = vadd.f32 0.0, %v5546
  %v5548 = vpop.f32.mrb[0].mxu0
  %v5549 = vadd.f32 0.0, %v5548
  %5550 = vmatprep.mubr.f32.mxu0 0.0
  %5551 = vmatmul.mubr.f32.gmra.mrb[0].mxu0 %v5357
  %v5552 = vpop.f32.mrb[0].mxu0
  %v5553 = vadd.f32 0.0, %v5552
  %v5554 = vpop.f32.mrb[0].mxu0
  %v5555 = vadd.f32 0.0, %v5554
  %5556 = vmatprep.mubr.f32.mxu0 0.0
  %5557 = vmatmul.mubr.f32.gmra.mrb[0].mxu0 %v5360
  %v5558 = vpop.f32.mrb[0].mxu0
  %v5559 = vadd.f32 0.0, %v5558
  %v5560 = vpop.f32.mrb[0].mxu0
  %v5561 = vadd.f32 0.0, %v5560
  %5562 = vmatprep.mubr.f32.mxu0 0.0
  %5563 = vmatmul.mubr.f32.gmra.mrb[0].mxu0 %v5363
  %v5564 = vpop.f32.mrb[0].mxu0
  %v5565 = vadd.f32 0.0, %v5564
  %v5566 = vpop.f32.mrb[0].mxu0
  %v5567 = vadd.f32 0.0, %v5566
  %5568 = vmatprep.mubr.f32.mxu0 0.0
  %5569 = vmatmul.mubr.f32.gmra.mrb[0].mxu0 %v5366
  %v5570 = vpop.f32.mrb[0].mxu0
  %v5571 = vadd.f32 0.0, %v5570
  %v5572 = vpop.f32.mrb[0].mxu0
  %v5573 = vadd.f32 0.0, %v5572
  %5574 = vmatprep.mubr.f32.mxu0 0.0
  %5575 = vmatmul.mubr.f32.gmra.mrb[0].mxu0 %v5369
  %v5576 = vpop.f32.mrb[0].mxu0
  %v5577 = vadd.f32 0.0, %v5576
  %v5578 = vpop.f32.mrb[0].mxu0
  %v5579 = vadd.f32 0.0, %v5578
  %5580 = vmatprep.mubr.f32.mxu0 0.0
  %5581 = vmatmul.mubr.f32.gmra.mrb[0].mxu0 %v5372
  %v5582 = vpop.f32.mrb[0].mxu0
  %v5583 = vadd.f32 0.0, %v5582
  %v5584 = vpop.f32.mrb[0].mxu0
  %v5585 = vadd.f32 0.0, %v5584
  %5586 = vmatprep.mubr.f32.mxu0 0.0
  %5587 = vmatmul.mubr.f32.gmra.mrb[0].mxu0 %v5375
  %v5588 = vpop.f32.mrb[0].mxu0
  %v5589 = vadd.f32 0.0, %v5588
  %v5590 = vpop.f32.mrb[0].mxu0
  %v5591 = vadd.f32 0.0, %v5590
  %5592 = vmatprep.mubr.f32.mxu0 0.0
  %5593 = vmatmul.mubr.f32.gmra.mrb[0].mxu0 %v5378
  %v5594 = vpop.f32.mrb[0].mxu0
  %v5595 = vadd.f32 0.0, %v5594
  %v5596 = vpop.f32.mrb[0].mxu0
  %v5597 = vadd.f32 0.0, %v5596
  %5598 = vmatprep.mubr.f32.mxu0 0.0
  %5599 = vmatmul.mubr.f32.gmra.mrb[0].mxu0 %v5381
  %v5600 = vpop.f32.mrb[0].mxu0
  %v5601 = vadd.f32 0.0, %v5600
  %v5602 = vpop.f32.mrb[0].mxu0
  %v5603 = vadd.f32 0.0, %v5602
  %5604 = vmatprep.mubr.f32.mxu0 0.0
  %5605 = vmatmul.mubr.f32.gmra.mrb[0].mxu0 %v5384
  %v5606 = vpop.f32.mrb[0].mxu0
  %v5607 = vadd.f32 0.0, %v5606
  %v5608 = vpop.f32.mrb[0].mxu0
  %v5609 = vadd.f32 0.0, %v5608
  %5610 = vmatprep.mubr.f32.mxu0 0.0
  %5611 = vmatmul.mubr.f32.gmra.mrb[0].mxu0 %v5387
  %v5612 = vpop.f32.mrb[0].mxu0
  %v5613 = vadd.f32 0.0, %v5612
  %v5614 = vpop.f32.mrb[0].mxu0
  %v5615 = vadd.f32 0.0, %v5614
  %5616 = vmatprep.mubr.f32.mxu0 0.0
  %5617 = vmatmul.mubr.f32.gmra.mrb[0].mxu0 %v5390
  %v5618 = vpop.f32.mrb[0].mxu0
  %v5619 = vadd.f32 0.0, %v5618
  %v5620 = vpop.f32.mrb[0].mxu0
  %v5621 = vadd.f32 0.0, %v5620
  %5622 = vmatprep.mubr.f32.mxu0 0.0
  %5623 = vmatmul.mubr.f32.gmra.mrb[0].mxu0 %v5393
  %v5624 = vpop.f32.mrb[0].mxu0
  %v5625 = vadd.f32 0.0, %v5624
  %v5626 = vpop.f32.mrb[0].mxu0
  %v5627 = vadd.f32 0.0, %v5626
  %5628 = vmatprep.mubr.f32.mxu0 0.0
  %5629 = vmatmul.mubr.f32.gmra.mrb[0].mxu0 %v5396
  %v5630 = vpop.f32.mrb[0].mxu0
  %v5631 = vadd.f32 0.0, %v5630
  %v5632 = vpop.f32.mrb[0].mxu0
  %v5633 = vadd.f32 0.0, %v5632
  %5634 = vmatprep.mubr.f32.mxu0 0.0
  %5635 = vmatmul.mubr.f32.gmra.mrb[0].mxu0 %v5399
  %v5636 = vpop.f32.mrb[0].mxu0
  %v5637 = vadd.f32 0.0, %v5636
  %v5638 = vpop.f32.mrb[0].mxu0
  %v5639 = vadd.f32 0.0, %v5638
  %5640 = vmatprep.mubr.f32.mxu0 0.0
  %5641 = vmatmul.mubr.f32.gmra.mrb[0].mxu0 %v5402
  %v5642 = vpop.f32.mrb[0].mxu0
  %v5643 = vadd.f32 0.0, %v5642
  %v5644 = vpop.f32.mrb[0].mxu0
  %v5645 = vadd.f32 0.0, %v5644
  %5646 = vmatprep.mubr.f32.mxu0 0.0
  %5647 = vmatmul.mubr.f32.gmra.mrb[0].mxu0 %v5405
  %v5648 = vpop.f32.mrb[0].mxu0
  %v5649 = vadd.f32 0.0, %v5648
  %v5650 = vpop.f32.mrb[0].mxu0
  %v5651 = vadd.f32 0.0, %v5650
  %5652 = vmatprep.mubr.f32.mxu0 0.0
  %5653 = vmatmul.mubr.f32.gmra.mrb[0].mxu0 %v5408
  %v5654 = vpop.f32.mrb[0].mxu0
  %v5655 = vadd.f32 0.0, %v5654
  %v5656 = vpop.f32.mrb[0].mxu0
  %v5657 = vadd.f32 0.0, %v5656
  %5658 = vmatprep.mubr.f32.mxu0 0.0
  %5659 = vmatmul.mubr.f32.gmra.mrb[0].mxu0 %v5411
  %v5660 = vpop.f32.mrb[0].mxu0
  %v5661 = vadd.f32 0.0, %v5660
  %v5662 = vpop.f32.mrb[0].mxu0
  %v5663 = vadd.f32 0.0, %v5662
  %5664 = vmatprep.mubr.f32.mxu0 0.0
  %5665 = vmatmul.mubr.f32.gmra.mrb[0].mxu0 %v5414
  %v5666 = vpop.f32.mrb[0].mxu0
  %v5667 = vadd.f32 0.0, %v5666
  %v5668 = vpop.f32.mrb[0].mxu0
  %v5669 = vadd.f32 0.0, %v5668
  %5670 = vmatprep.mubr.f32.mxu0 0.0
  %5671 = vmatmul.mubr.f32.gmra.mrb[0].mxu0 %v5417
  %v5672 = vpop.f32.mrb[0].mxu0
  %v5673 = vadd.f32 0.0, %v5672
  %v5674 = vpop.f32.mrb[0].mxu0
  %v5675 = vadd.f32 0.0, %v5674
  %5676 = vmatprep.mubr.f32.mxu0 0.0
  %5677 = vmatmul.mubr.f32.gmra.mrb[0].mxu0 %v5420
  %v5678 = vpop.f32.mrb[0].mxu0
  %v5679 = vadd.f32 0.0, %v5678
  %v5680 = vpop.f32.mrb[0].mxu0
  %v5681 = vadd.f32 0.0, %v5680
  %5682 = vmatprep.mubr.f32.mxu0 0.0
  %5683 = vmatmul.mubr.f32.gmra.mrb[0].mxu0 %v5423
  %v5684 = vpop.f32.mrb[0].mxu0
  %v5685 = vadd.f32 0.0, %v5684
  %v5686 = vpop.f32.mrb[0].mxu0
  %v5687 = vadd.f32 0.0, %v5686
  %5688 = vmatprep.mubr.f32.mxu0 0.0
  %5689 = vmatmul.mubr.f32.gmra.mrb[0].mxu0 %v5426
  %v5690 = vpop.f32.mrb[0].mxu0
  %v5691 = vadd.f32 0.0, %v5690
  %v5692 = vpop.f32.mrb[0].mxu0
  %v5693 = vadd.f32 0.0, %v5692
  %5694 = vmatprep.mubr.f32.mxu0 0.0
  %5695 = vmatmul.mubr.f32.gmra.mrb[0].mxu0 %v5429
  %v5696 = vpop.f32.mrb[0].mxu0
  %v5697 = vadd.f32 0.0, %v5696
  %v5698 = vpop.f32.mrb[0].mxu0
  %v5699 = vadd.f32 0.0, %v5698
  %5700 = vmatprep.mubr.f32.mxu0 0.0
  %5701 = vmatmul.mubr.f32.gmra.mrb[0].mxu0 %v5432
  %v5702 = vpop.f32.mrb[0].mxu0
  %v5703 = vadd.f32 0.0, %v5702
  %v5704 = vpop.f32.mrb[0].mxu0
  %v5705 = vadd.f32 0.0, %v5704
  %5706 = vmatprep.mubr.f32.mxu0 0.0
  %5707 = vmatmul.mubr.f32.gmra.mrb[0].mxu0 %v5435
  %v5708 = vpop.f32.mrb[0].mxu0
  %v5709 = vadd.f32 0.0, %v5708
  %v5710 = vpop.f32.mrb[0].mxu0
  %v5711 = vadd.f32 0.0, %v5710
  %5712 = vmatprep.mubr.f32.mxu0 0.0
  %5713 = vmatmul.mubr.f32.gmra.mrb[0].mxu0 %v5438
  %v5714 = vpop.f32.mrb[0].mxu0
  %v5715 = vadd.f32 0.0, %v5714
  %v5716 = vpop.f32.mrb[0].mxu0
  %v5717 = vadd.f32 0.0, %v5716
  %5718 = vmatprep.mubr.f32.mxu0 0.0
  %5719 = vmatmul.mubr.f32.gmra.mrb[0].mxu0 %v5441
  %v5720 = vpop.f32.mrb[0].mxu0
  %v5721 = vadd.f32 0.0, %v5720
  %v5722 = vpop.f32.mrb[0].mxu0
  %v5723 = vadd.f32 0.0, %v5722
  %5724 = vmatprep.mubr.f32.mxu0 0.0
  %5725 = vmatmul.mubr.f32.gmra.mrb[0].mxu0 %v5444
  %v5726 = vpop.f32.mrb[0].mxu0
  %v5727 = vadd.f32 0.0, %v5726
  %v5728 = vpop.f32.mrb[0].mxu0
  %v5729 = vadd.f32 0.0, %v5728
  %5730 = vmatprep.mubr.f32.mxu0 0.0
  %5731 = vmatmul.mubr.f32.gmra.mrb[0].mxu0 %v5447
  %v5732 = vpop.f32.mrb[0].mxu0
  %v5733 = vadd.f32 0.0, %v5732
  %v5734 = vpop.f32.mrb[0].mxu0
  %v5735 = vadd.f32 0.0, %v5734
  %5736 = vmatprep.mubr.f32.mxu0 0.0
  %5737 = vmatmul.mubr.f32.gmra.mrb[0].mxu0 %v5450
  %v5738 = vpop.f32.mrb[0].mxu0
  %v5739 = vadd.f32 0.0, %v5738
  %v5740 = vpop.f32.mrb[0].mxu0
  %v5741 = vadd.f32 0.0, %v5740
  %5742 = vmatprep.mubr.f32.mxu0 0.0
  %5743 = vmatmul.mubr.f32.gmra.mrb[0].mxu0 %v5453
  %v5744 = vpop.f32.mrb[0].mxu0
  %v5745 = vadd.f32 0.0, %v5744
  %v5746 = vpop.f32.mrb[0].mxu0
  %v5747 = vadd.f32 0.0, %v5746
  %5748 = vdwg.mxu0
  %v5749 = vadd.f32 %v4174, %v5529
  %v5750 = vadd.f32 %v4175, %v5531
  %v5751 = vadd.f32 %v4176, %v5535
  %v5752 = vadd.f32 %v4177, %v5537
  %v5753 = vadd.f32 %v4178, %v5541
  %v5754 = vadd.f32 %v4179, %v5543
  %v5755 = vadd.f32 %v4180, %v5547
  %v5756 = vadd.f32 %v4181, %v5549
  %v5757 = vadd.f32 %v4182, %v5553
  %v5758 = vadd.f32 %v4183, %v5555
  %v5759 = vadd.f32 %v4184, %v5559
  %v5760 = vadd.f32 %v4185, %v5561
  %v5761 = vadd.f32 %v4186, %v5565
  %v5762 = vadd.f32 %v4187, %v5567
  %v5763 = vadd.f32 %v4188, %v5571
  %v5764 = vadd.f32 %v4189, %v5573
  %v5765 = vadd.f32 %v4190, %v5577
  %v5766 = vadd.f32 %v4191, %v5579
  %v5767 = vadd.f32 %v4192, %v5583
  %v5768 = vadd.f32 %v4193, %v5585
  %v5769 = vadd.f32 %v4194, %v5589
  %v5770 = vadd.f32 %v4195, %v5591
  %v5771 = vadd.f32 %v4196, %v5595
  %v5772 = vadd.f32 %v4197, %v5597
  %v5773 = vadd.f32 %v4198, %v5601
  %v5774 = vadd.f32 %v4199, %v5603
  %v5775 = vadd.f32 %v4200, %v5607
  %v5776 = vadd.f32 %v4201, %v5609
  %v5777 = vadd.f32 %v4202, %v5613
  %v5778 = vadd.f32 %v4203, %v5615
  %v5779 = vadd.f32 %v4204, %v5619
  %v5780 = vadd.f32 %v4205, %v5621
  %v5781 = vadd.f32 %v4206, %v5625
  %v5782 = vadd.f32 %v4207, %v5627
  %v5783 = vadd.f32 %v4208, %v5631
  %v5784 = vadd.f32 %v4209, %v5633
  %v5785 = vadd.f32 %v4210, %v5637
  %v5786 = vadd.f32 %v4211, %v5639
  %v5787 = vadd.f32 %v4212, %v5643
  %v5788 = vadd.f32 %v4213, %v5645
  %v5789 = vadd.f32 %v4214, %v5649
  %v5790 = vadd.f32 %v4215, %v5651
  %v5791 = vadd.f32 %v4216, %v5655
  %v5792 = vadd.f32 %v4217, %v5657
  %v5793 = vadd.f32 %v4218, %v5661
  %v5794 = vadd.f32 %v4219, %v5663
  %v5795 = vadd.f32 %v4220, %v5667
  %v5796 = vadd.f32 %v4221, %v5669
  %v5797 = vadd.f32 %v4222, %v5673
  %v5798 = vadd.f32 %v4223, %v5675
  %v5799 = vadd.f32 %v4224, %v5679
  %v5800 = vadd.f32 %v4225, %v5681
  %v5801 = vadd.f32 %v4226, %v5685
  %v5802 = vadd.f32 %v4227, %v5687
  %v5803 = vadd.f32 %v4228, %v5691
  %v5804 = vadd.f32 %v4229, %v5693
  %v5805 = vadd.f32 %v4230, %v5697
  %v5806 = vadd.f32 %v4231, %v5699
  %v5807 = vadd.f32 %v4232, %v5703
  %v5808 = vadd.f32 %v4233, %v5705
  %v5809 = vadd.f32 %v4234, %v5709
  %v5810 = vadd.f32 %v4235, %v5711
  %v5811 = vadd.f32 %v4236, %v5715
  %v5812 = vadd.f32 %v4237, %v5717
  %v5813 = vadd.f32 %v4238, %v5721
  %v5814 = vadd.f32 %v4239, %v5723
  %v5815 = vadd.f32 %v4240, %v5727
  %v5816 = vadd.f32 %v4241, %v5729
  %v5817 = vadd.f32 %v4242, %v5733
  %v5818 = vadd.f32 %v4243, %v5735
  %v5819 = vadd.f32 %v4244, %v5739
  %v5820 = vadd.f32 %v4245, %v5741
  %v5821 = vadd.f32 %v4246, %v5745
  %v5822 = vadd.f32 %v4247, %v5747
  %5823 = vst [vmem:[%s5] sm:$0xff] %v5749
  %vm5824 = vcmask 785408
  %5825 = vst.msk [vmem:[%s5 + $0x8] sm:$0xff] %vm5824, %v5750
  %5826 = vst [vmem:[%s5 + $0x10] sm:$0xff] %v5751
  %5827 = vst.msk [vmem:[%s5 + $0x18] sm:$0xff] %vm5824, %v5752
  %5828 = vst [vmem:[%s5 + $0x20] sm:$0xff] %v5753
  %5829 = vst.msk [vmem:[%s5 + $0x28] sm:$0xff] %vm5824, %v5754
  %5830 = vst [vmem:[%s5 + $0x30] sm:$0xff] %v5755
  %5831 = vst.msk [vmem:[%s5 + $0x38] sm:$0xff] %vm5824, %v5756
  %5832 = vst [vmem:[%s5 + $0x40] sm:$0xff] %v5757
  %5833 = vst.msk [vmem:[%s5 + $0x48] sm:$0xff] %vm5824, %v5758
  %5834 = vst [vmem:[%s5 + $0x50] sm:$0xff] %v5759
  %5835 = vst.msk [vmem:[%s5 + $0x58] sm:$0xff] %vm5824, %v5760
  %5836 = vst [vmem:[%s5 + $0x60] sm:$0xff] %v5761
  %5837 = vst.msk [vmem:[%s5 + $0x68] sm:$0xff] %vm5824, %v5762
  %5838 = vst [vmem:[%s5 + $0x70] sm:$0xff] %v5763
  %5839 = vst.msk [vmem:[%s5 + $0x78] sm:$0xff] %vm5824, %v5764
  %5840 = vst [vmem:[%s5 + $0x80] sm:$0xff] %v5765
  %5841 = vst.msk [vmem:[%s5 + $0x88] sm:$0xff] %vm5824, %v5766
  %5842 = vst [vmem:[%s5 + $0x90] sm:$0xff] %v5767
  %5843 = vst.msk [vmem:[%s5 + $0x98] sm:$0xff] %vm5824, %v5768
  %5844 = vst [vmem:[%s5 + $0xa0] sm:$0xff] %v5769
  %5845 = vst.msk [vmem:[%s5 + $0xa8] sm:$0xff] %vm5824, %v5770
  %5846 = vst [vmem:[%s5 + $0xb0] sm:$0xff] %v5771
  %5847 = vst.msk [vmem:[%s5 + $0xb8] sm:$0xff] %vm5824, %v5772
  %5848 = vst [vmem:[%s5 + $0xc0] sm:$0xff] %v5773
  %5849 = vst.msk [vmem:[%s5 + $0xc8] sm:$0xff] %vm5824, %v5774
  %5850 = vst [vmem:[%s5 + $0xd0] sm:$0xff] %v5775
  %5851 = vst.msk [vmem:[%s5 + $0xd8] sm:$0xff] %vm5824, %v5776
  %5852 = vst [vmem:[%s5 + $0xe0] sm:$0xff] %v5777
  %5853 = vst.msk [vmem:[%s5 + $0xe8] sm:$0xff] %vm5824, %v5778
  %5854 = vst [vmem:[%s5 + $0xf0] sm:$0xff] %v5779
  %5855 = vst.msk [vmem:[%s5 + $0xf8] sm:$0xff] %vm5824, %v5780
  %5856 = vst [vmem:[%s5 + $0x100] sm:$0xff] %v5781
  %5857 = vst.msk [vmem:[%s5 + $0x108] sm:$0xff] %vm5824, %v5782
  %5858 = vst [vmem:[%s5 + $0x110] sm:$0xff] %v5783
  %5859 = vst.msk [vmem:[%s5 + $0x118] sm:$0xff] %vm5824, %v5784
  %5860 = vst [vmem:[%s5 + $0x120] sm:$0xff] %v5785
  %5861 = vst.msk [vmem:[%s5 + $0x128] sm:$0xff] %vm5824, %v5786
  %5862 = vst [vmem:[%s5 + $0x130] sm:$0xff] %v5787
  %5863 = vst.msk [vmem:[%s5 + $0x138] sm:$0xff] %vm5824, %v5788
  %5864 = vst [vmem:[%s5 + $0x140] sm:$0xff] %v5789
  %5865 = vst.msk [vmem:[%s5 + $0x148] sm:$0xff] %vm5824, %v5790
  %5866 = vst [vmem:[%s5 + $0x150] sm:$0xff] %v5791
  %5867 = vst.msk [vmem:[%s5 + $0x158] sm:$0xff] %vm5824, %v5792
  %5868 = vst [vmem:[%s5 + $0x160] sm:$0xff] %v5793
  %5869 = vst.msk [vmem:[%s5 + $0x168] sm:$0xff] %vm5824, %v5794
  %5870 = vst [vmem:[%s5 + $0x170] sm:$0xff] %v5795
  %5871 = vst.msk [vmem:[%s5 + $0x178] sm:$0xff] %vm5824, %v5796
  %5872 = vst [vmem:[%s5 + $0x180] sm:$0xff] %v5797
  %5873 = vst.msk [vmem:[%s5 + $0x188] sm:$0xff] %vm5824, %v5798
  %5874 = vst [vmem:[%s5 + $0x190] sm:$0xff] %v5799
  %5875 = vst.msk [vmem:[%s5 + $0x198] sm:$0xff] %vm5824, %v5800
  %5876 = vst [vmem:[%s5 + $0x1a0] sm:$0xff] %v5801
  %5877 = vst.msk [vmem:[%s5 + $0x1a8] sm:$0xff] %vm5824, %v5802
  %5878 = vst [vmem:[%s5 + $0x1b0] sm:$0xff] %v5803
  %5879 = vst.msk [vmem:[%s5 + $0x1b8] sm:$0xff] %vm5824, %v5804
  %5880 = vst [vmem:[%s5 + $0x1c0] sm:$0xff] %v5805
  %5881 = vst.msk [vmem:[%s5 + $0x1c8] sm:$0xff] %vm5824, %v5806
  %5882 = vst [vmem:[%s5 + $0x1d0] sm:$0xff] %v5807
  %5883 = vst.msk [vmem:[%s5 + $0x1d8] sm:$0xff] %vm5824, %v5808
  %5884 = vst [vmem:[%s5 + $0x1e0] sm:$0xff] %v5809
  %5885 = vst.msk [vmem:[%s5 + $0x1e8] sm:$0xff] %vm5824, %v5810
  %5886 = vst [vmem:[%s5 + $0x1f0] sm:$0xff] %v5811
  %5887 = vst.msk [vmem:[%s5 + $0x1f8] sm:$0xff] %vm5824, %v5812
  %5888 = vst [vmem:[%s5 + $0x200] sm:$0xff] %v5813
  %5889 = vst.msk [vmem:[%s5 + $0x208] sm:$0xff] %vm5824, %v5814
  %5890 = vst [vmem:[%s5 + $0x210] sm:$0xff] %v5815
  %5891 = vst.msk [vmem:[%s5 + $0x218] sm:$0xff] %vm5824, %v5816
  %5892 = vst [vmem:[%s5 + $0x220] sm:$0xff] %v5817
  %5893 = vst.msk [vmem:[%s5 + $0x228] sm:$0xff] %vm5824, %v5818
  %5894 = vst [vmem:[%s5 + $0x230] sm:$0xff] %v5819
  %5895 = vst.msk [vmem:[%s5 + $0x238] sm:$0xff] %vm5824, %v5820
  %5896 = vst [vmem:[%s5 + $0x240] sm:$0xff] %v5821
  %5897 = vst.msk [vmem:[%s5 + $0x248] sm:$0xff] %vm5824, %v5822
  // Predicated region
  $region22: #{data_embedding.1} parent=0 // pred_check
    _
  $region23: #{data_embedding.1} parent=0 // pred_check_branch
    %5899 = sbr.rel (0) target = $region25
  $region24: #{data_embedding.1} parent=0 // pred_region
    _
  $region25: #{data_embedding.1} parent=0 // pred_fallthru
    _
  // Predicated region
  $region26: #{data_embedding.1} parent=0 // pred_check
    _
  $region27: #{data_embedding.1} parent=0 // pred_check_branch
    %5901 = sbr.rel (0) target = $region29
  $region28: #{data_embedding.1} parent=0 // pred_region
    _
  $region29: #{data_embedding.1} parent=0 // pred_fallthru
    _

</llo_original>
